<compile_context>
chip_gen: v5e
topology: v5e:2x2
jax: 0.10.0
libtpu: 0.0.40
codegen_flags: <defaults>
</compile_context>

<pallas_src>
import functools

import jax
import jax.numpy as jnp
from jax.experimental import pallas as pl
from jax.experimental.pallas import tpu as pltpu

LANE = 128          # channel padding target -> lane-dense stores / VPU ops
NEG = -1e30         # additive mask value (acts like -inf for softmax, no NaNs)
BN_EPS = 1e-5


# ---------------------------------------------------------------------------
# Kernel 1: 3x3 'same' conv (in-kernel im2col) + train-mode BatchNorm + ReLU.
# grid = (phase, batch):
#   phase 0: conv -> accumulate per-channel sum / sumsq across batch tiles
#   phase 1: conv again -> normalize with the finalized batch stats, ReLU, store
# Re-running the tiny conv in phase 1 is far cheaper than materializing the
# pre-BN activation in HBM and racing an aliased read-back against the
# pipeline's write-back.
# ---------------------------------------------------------------------------
def _conv3x3_bn_relu_kernel(x_ref, w_ref, g_ref, beta_ref, o_ref,
                            sum_ref, ssq_ref, *, H, W, Cin, n_total):
    phase = pl.program_id(0)
    b = pl.program_id(1)
    nb = pl.num_programs(1)
    cp = o_ref.shape[-1]

    # --- conv as 9 shifted tap matmuls on the halo'd (H+2, W+2, Cin) tile ---
    acc = jnp.zeros((H * W, cp), jnp.float32)
    for dh in range(3):
        for dw in range(3):
            xs = x_ref[0, dh:dh + H, dw:dw + W, :].reshape(H * W, Cin)
            wt = w_ref[(dh * 3 + dw) * Cin:(dh * 3 + dw + 1) * Cin, :]
            acc = acc + jnp.dot(xs, wt, preferred_element_type=jnp.float32)

    inv_n = 1.0 / float(n_total)

    @pl.when(phase == 0)
    def _():
        @pl.when(b == 0)
        def _():
            sum_ref[...] = jnp.zeros_like(sum_ref)
            ssq_ref[...] = jnp.zeros_like(ssq_ref)

        sum_ref[...] = sum_ref[...] + jnp.sum(acc, axis=0, keepdims=True)
        ssq_ref[...] = ssq_ref[...] + jnp.sum(acc * acc, axis=0, keepdims=True)

        @pl.when(b == nb - 1)
        def _():
            mean = sum_ref[...] * inv_n
            var = ssq_ref[...] * inv_n - mean * mean        # biased variance
            sum_ref[...] = mean                             # scratch reuse: mean
            ssq_ref[...] = jax.lax.rsqrt(var + BN_EPS)      # scratch reuse: rstd

    @pl.when(phase == 1)
    def _():
        y = (acc - sum_ref[...]) * ssq_ref[...] * g_ref[...] + beta_ref[...]
        o_ref[0] = jnp.maximum(y, 0.0)


def conv3x3_bn_relu(x, w, bn_g, bn_b, cout_pad=LANE):
    """x: (B,H,W,Cin) f32; w: (3,3,Cin,Cout); bn_g/bn_b: (Cout,).

    Returns (B, H*W, cout_pad) f32; channels >= Cout are exact zeros (so they
    can flow through the rest of the pipeline untouched).
    """
    B, H, W, Cin = x.shape
    Cout = w.shape[-1]
    CP = cout_pad
    assert CP >= Cout

    xp = jnp.pad(x, ((0, 0), (1, 1), (1, 1), (0, 0)))               # 'same' halo
    wp = jnp.pad(w.reshape(9 * Cin, Cout), ((0, 0), (0, CP - Cout)))
    gp = jnp.pad(bn_g, (0, CP - Cout)).reshape(1, CP)
    bp = jnp.pad(bn_b, (0, CP - Cout)).reshape(1, CP)

    kernel = functools.partial(_conv3x3_bn_relu_kernel,
                               H=H, W=W, Cin=Cin, n_total=B * H * W)
    return pl.pallas_call(
        kernel,
        out_shape=jax.ShapeDtypeStruct((B, H * W, CP), jnp.float32),
        grid=(2, B),                                   # (BN phase, batch tile)
        in_specs=[
            pl.BlockSpec((1, H + 2, W + 2, Cin), lambda p, b: (b, 0, 0, 0)),
            pl.BlockSpec((9 * Cin, CP), lambda p, b: (0, 0)),
            pl.BlockSpec((1, CP), lambda p, b: (0, 0)),
            pl.BlockSpec((1, CP), lambda p, b: (0, 0)),
        ],
        # Phase 0 never writes the output; mapping all phase-0 steps to block 0
        # keeps that block resident (no garbage write-back) until phase 1 fills
        # it, after which consecutive batch blocks stream out normally.
        out_specs=pl.BlockSpec((1, H * W, CP), lambda p, b: (p * b, 0, 0)),
        scratch_shapes=[pltpu.VMEM((1, CP), jnp.float32),
                        pltpu.VMEM((1, CP), jnp.float32)],
        compiler_params=pltpu.CompilerParams(
            dimension_semantics=("arbitrary", "arbitrary"),  # BN reduction carried
            vmem_limit_bytes=32 * 1024 * 1024),
    )(xp, wp, gp, bp)


# ---------------------------------------------------------------------------
# Kernel 2: CrissCrossAttention applied twice (shared weights), fused.
# x is (HW, 128)-channel-padded; one (HW x HW) logit matmul serves both the
# H-branch and W-branch attentions via additive masks:
#   mask_h: +1 on the diagonal (the reference's eye), 0 on same-column pairs,
#           -1e30 elsewhere            -> softmax == per-column H attention
#   mask_w: 0 on same-row pairs, -1e30 elsewhere -> per-row W attention
# (att_h + att_w) @ V reproduces out_h + out_w exactly with one matmul.
# ---------------------------------------------------------------------------
def _cca_twice_kernel(x_ref, wq_ref, bq_ref, wk_ref, bk_ref, wv_ref, bv_ref,
                      mask_h_ref, mask_w_ref, gamma_ref, o_ref):
    x = x_ref[0]                       # (HW, CP), lane-dense
    gamma = gamma_ref[0]               # scalar from SMEM
    wq = wq_ref[...]; bq = bq_ref[...]
    wk = wk_ref[...]; bk = bk_ref[...]
    wv = wv_ref[...]; bv = bv_ref[...]
    mask_h = mask_h_ref[...]
    mask_w = mask_w_ref[...]

    def masked_softmax(logits):
        m = jnp.max(logits, axis=-1, keepdims=True)
        e = jnp.exp(logits - m)        # masked entries underflow to exact 0
        return e * pl.reciprocal(jnp.sum(e, axis=-1, keepdims=True), approx=True)

    def cca(xin):
        q = jnp.dot(xin, wq, preferred_element_type=jnp.float32) + bq
        k = jnp.dot(xin, wk, preferred_element_type=jnp.float32) + bk
        v = jnp.dot(xin, wv, preferred_element_type=jnp.float32) + bv
        # q @ k^T without an explicit transpose (rhs contracts on its last dim).
        logits = jnp.einsum('ic,jc->ij', q, k,
                            preferred_element_type=jnp.float32)   # (HW, HW)
        att = masked_softmax(logits + mask_h) + masked_softmax(logits + mask_w)
        out = jnp.dot(att, v, preferred_element_type=jnp.float32)
        return gamma * out + xin

    # The PyTorch module applies the same CrissCrossAttention module twice.
    o_ref[0] = cca(cca(x))


def criss_cross_attention_x2(x, wq, bq, wk, bk, wv, bv, gamma, *, height, width):
    """x: (B, H*W, CP) channel-padded; all weights already padded to CP lanes."""
    B, HW, CP = x.shape
    assert HW == height * width
    # Note: the reference PyTorch eye-mask construction requires H == W; the
    # flattened additive-mask formulation below is equivalent when H == W.

    ii = jnp.arange(HW, dtype=jnp.int32)
    same_col = (ii[:, None] % width) == (ii[None, :] % width)
    same_row = (ii[:, None] // width) == (ii[None, :] // width)
    eye = (ii[:, None] == ii[None, :]).astype(jnp.float32)
    mask_h = jnp.where(same_col, eye, NEG).astype(jnp.float32)
    mask_w = jnp.where(same_row, 0.0, NEG).astype(jnp.float32)

    return pl.pallas_call(
        _cca_twice_kernel,
        out_shape=jax.ShapeDtypeStruct((B, HW, CP), jnp.float32),
        grid=(B,),
        in_specs=[
            pl.BlockSpec((1, HW, CP), lambda b: (b, 0, 0)),
            pl.BlockSpec((CP, CP), lambda b: (0, 0)),
            pl.BlockSpec((1, CP), lambda b: (0, 0)),
            pl.BlockSpec((CP, CP), lambda b: (0, 0)),
            pl.BlockSpec((1, CP), lambda b: (0, 0)),
            pl.BlockSpec((CP, CP), lambda b: (0, 0)),
            pl.BlockSpec((1, CP), lambda b: (0, 0)),
            pl.BlockSpec((HW, HW), lambda b: (0, 0)),      # masks resident across grid
            pl.BlockSpec((HW, HW), lambda b: (0, 0)),
            pl.BlockSpec(memory_space=pltpu.MemorySpace.SMEM),   # gamma scalar
        ],
        out_specs=pl.BlockSpec((1, HW, CP), lambda b: (b, 0, 0)),
        compiler_params=pltpu.CompilerParams(
            dimension_semantics=("parallel",),       # shard batch over v7x cores
            vmem_limit_bytes=32 * 1024 * 1024),
    )(x, wq, bq, wk, bk, wv, bv, mask_h, mask_w, gamma)


# ---------------------------------------------------------------------------
# Full module forward
# ---------------------------------------------------------------------------
def recurrent_criss_cross_attention(x_nchw, p):
    x = jnp.transpose(x_nchw, (0, 2, 3, 1))          # NCHW -> NHWC
    B, H, W, Cin = x.shape
    Cinner = p['conv1_w'].shape[-1]
    Cq = p['wq'].shape[-1]
    CP = LANE

    # conv1 + BN + ReLU  (conv biases p['conv1_b'] / p['conv2_b'] are omitted:
    # exactly cancelled by train-mode BatchNorm's mean subtraction).
    h = conv3x3_bn_relu(x, p['conv1_w'], p['bn1_g'], p['bn1_b'], cout_pad=CP)

    # shared CrissCrossAttention applied twice, fused into one kernel.
    wq = jnp.pad(p['wq'], ((0, CP - Cinner), (0, CP - Cq)))
    wk = jnp.pad(p['wk'], ((0, CP - Cinner), (0, CP - Cq)))
    wv = jnp.pad(p['wv'], ((0, CP - Cinner), (0, CP - Cinner)))
    bq = jnp.pad(p['bq'], (0, CP - Cq)).reshape(1, CP)
    bk = jnp.pad(p['bk'], (0, CP - Cq)).reshape(1, CP)
    bv = jnp.pad(p['bv'], (0, CP - Cinner)).reshape(1, CP)
    gamma = jnp.asarray(p['gamma'], jnp.float32).reshape(1)
    h = criss_cross_attention_x2(h, wq, bq, wk, bk, wv, bv, gamma,
                                 height=H, width=W)

    # conv2 + BN + ReLU.  Channels >= Cinner of the CCA output are exact zeros,
    # so slicing them off is mathematically identical and cuts conv2's MXU work
    # and input DMA by CP/Cinner (the slice fuses with the halo pad in XLA).
    h = h.reshape(B, H, W, CP)[..., :Cinner]
    h = conv3x3_bn_relu(h, p['conv2_w'], p['bn2_g'], p['bn2_b'], cout_pad=CP)

    y = h.reshape(B, H, W, CP)[..., :Cin]            # drop channel padding
    return jnp.transpose(y, (0, 3, 1, 2))            # NHWC -> NCHW


if __name__ == "__main__":
    B, Cin, H, W = 2, 4, 16, 16      # spatial square, as the reference requires
    Cinner = 32
    reduction_factor = 8
    Cq = Cinner // reduction_factor

    key = jax.random.PRNGKey(0)
    keys = jax.random.split(key, 16)

    def nrm(k, shape, scale=0.1):
        return scale * jax.random.normal(k, shape, dtype=jnp.float32)

    params = dict(
        conv1_w=nrm(keys[0], (3, 3, Cin, Cinner)),
        conv1_b=nrm(keys[1], (Cinner,)),   # unused: cancelled by train-mode BN
        bn1_g=1.0 + nrm(keys[2], (Cinner,)),
        bn1_b=nrm(keys[3], (Cinner,)),
        wq=nrm(keys[4], (Cinner, Cq)),
        bq=nrm(keys[5], (Cq,)),
        wk=nrm(keys[6], (Cinner, Cq)),
        bk=nrm(keys[7], (Cq,)),
        wv=nrm(keys[8], (Cinner, Cinner)),
        bv=nrm(keys[9], (Cinner,)),
        # nn.Parameter(torch.tensor(0.0)); set nonzero so attention contributes.
        gamma=jnp.float32(0.5),
        conv2_w=nrm(keys[10], (3, 3, Cinner, Cin)),
        conv2_b=nrm(keys[11], (Cin,)),     # unused: cancelled by train-mode BN
        bn2_g=1.0 + nrm(keys[12], (Cin,)),
        bn2_b=nrm(keys[13], (Cin,)),
    )

    x = jax.random.normal(keys[14], (B, Cin, H, W), dtype=jnp.float32)  # NCHW

    fwd = jax.jit(recurrent_criss_cross_attention)
    y = fwd(x, params)
    jax.block_until_ready(y)
    assert y.shape == (B, Cin, H, W) and y.dtype == jnp.float32
    assert bool(jnp.all(jnp.isfinite(y)))
    print("KERNEL_OK")
</pallas_src>

<mosaic_0001>
module attributes {stable_mosaic.version = 11 : i64} {
  func.func @_conv3x3_bn_relu_kernel(%arg0: i32, %arg1: i32, %arg2: memref<1x18x18x4xf32, #tpu.memory_space<vmem>>, %arg3: memref<36x128xf32, #tpu.memory_space<vmem>>, %arg4: memref<1x128xf32, #tpu.memory_space<vmem>>, %arg5: memref<1x128xf32, #tpu.memory_space<vmem>>, %arg6: memref<1x256x128xf32, #tpu.memory_space<vmem>>, %arg7: memref<1x128xf32, #tpu.memory_space<vmem>>, %arg8: memref<1x128xf32, #tpu.memory_space<vmem>>) attributes {dimension_semantics = [#tpu.dimension_semantics<arbitrary>, #tpu.dimension_semantics<arbitrary>], iteration_bounds = array<i64: 2, 2>, scalar_prefetch = 0 : i64, scratch_operands = 2 : i64, tpu.core_type = #tpu.core_type<tc>, window_params = [{transform_indices = @transform_0, window_bounds = array<i64: 1, 18, 18, 4>}, {pipeline_mode = #tpu.pipeline_mode<synchronous>, transform_indices = @transform_1, window_bounds = array<i64: 36, 128>}, {pipeline_mode = #tpu.pipeline_mode<synchronous>, transform_indices = @transform_2, window_bounds = array<i64: 1, 128>}, {pipeline_mode = #tpu.pipeline_mode<synchronous>, transform_indices = @transform_3, window_bounds = array<i64: 1, 128>}, {transform_indices = @transform_4, window_bounds = array<i64: 1, 256, 128>}]} {
    %cst = arith.constant 0.000000e+00 : f32
    %0 = vector.broadcast %cst : f32 to vector<256x128xf32>
    %c0 = arith.constant 0 : index
    %c0_0 = arith.constant 0 : index
    %c0_1 = arith.constant 0 : index
    %c0_2 = arith.constant 0 : index
    %1 = vector.load %arg2[%c0, %c0_0, %c0_1, %c0_2] : memref<1x18x18x4xf32, #tpu.memory_space<vmem>>, vector<1x16x16x4xf32>
    %2 = vector.shape_cast %1 : vector<1x16x16x4xf32> to vector<16x16x4xf32>
    %3 = vector.shape_cast %2 : vector<16x16x4xf32> to vector<256x4xf32>
    %c0_3 = arith.constant 0 : index
    %c0_4 = arith.constant 0 : index
    %4 = vector.load %arg3[%c0_3, %c0_4] : memref<36x128xf32, #tpu.memory_space<vmem>>, vector<4x128xf32>
    %cst_5 = arith.constant dense<0.000000e+00> : vector<256x128xf32>
    %5 = tpu.matmul %3, %4, %cst_5 {dimension_numbers = #tpu.dot_dimension_numbers<[1], [0], [0], [1], [0, 0, 1, 1], [], []>} : vector<256x4xf32>, vector<4x128xf32>, vector<256x128xf32> -> vector<256x128xf32>
    %6 = arith.addf %0, %5 : vector<256x128xf32>
    %c0_6 = arith.constant 0 : index
    %c0_7 = arith.constant 0 : index
    %c1 = arith.constant 1 : index
    %c0_8 = arith.constant 0 : index
    %7 = vector.load %arg2[%c0_6, %c0_7, %c1, %c0_8] : memref<1x18x18x4xf32, #tpu.memory_space<vmem>>, vector<1x16x16x4xf32>
    %8 = vector.shape_cast %7 : vector<1x16x16x4xf32> to vector<16x16x4xf32>
    %9 = vector.shape_cast %8 : vector<16x16x4xf32> to vector<256x4xf32>
    %c4 = arith.constant 4 : index
    %c0_9 = arith.constant 0 : index
    %10 = vector.load %arg3[%c4, %c0_9] : memref<36x128xf32, #tpu.memory_space<vmem>>, vector<4x128xf32>
    %cst_10 = arith.constant dense<0.000000e+00> : vector<256x128xf32>
    %11 = tpu.matmul %9, %10, %cst_10 {dimension_numbers = #tpu.dot_dimension_numbers<[1], [0], [0], [1], [0, 0, 1, 1], [], []>} : vector<256x4xf32>, vector<4x128xf32>, vector<256x128xf32> -> vector<256x128xf32>
    %12 = arith.addf %6, %11 : vector<256x128xf32>
    %c0_11 = arith.constant 0 : index
    %c0_12 = arith.constant 0 : index
    %c2 = arith.constant 2 : index
    %c0_13 = arith.constant 0 : index
    %13 = vector.load %arg2[%c0_11, %c0_12, %c2, %c0_13] : memref<1x18x18x4xf32, #tpu.memory_space<vmem>>, vector<1x16x16x4xf32>
    %14 = vector.shape_cast %13 : vector<1x16x16x4xf32> to vector<16x16x4xf32>
    %15 = vector.shape_cast %14 : vector<16x16x4xf32> to vector<256x4xf32>
    %c8 = arith.constant 8 : index
    %c0_14 = arith.constant 0 : index
    %16 = vector.load %arg3[%c8, %c0_14] : memref<36x128xf32, #tpu.memory_space<vmem>>, vector<4x128xf32>
    %cst_15 = arith.constant dense<0.000000e+00> : vector<256x128xf32>
    %17 = tpu.matmul %15, %16, %cst_15 {dimension_numbers = #tpu.dot_dimension_numbers<[1], [0], [0], [1], [0, 0, 1, 1], [], []>} : vector<256x4xf32>, vector<4x128xf32>, vector<256x128xf32> -> vector<256x128xf32>
    %18 = arith.addf %12, %17 : vector<256x128xf32>
    %c0_16 = arith.constant 0 : index
    %c1_17 = arith.constant 1 : index
    %c0_18 = arith.constant 0 : index
    %c0_19 = arith.constant 0 : index
    %19 = vector.load %arg2[%c0_16, %c1_17, %c0_18, %c0_19] : memref<1x18x18x4xf32, #tpu.memory_space<vmem>>, vector<1x16x16x4xf32>
    %20 = vector.shape_cast %19 : vector<1x16x16x4xf32> to vector<16x16x4xf32>
    %21 = vector.shape_cast %20 : vector<16x16x4xf32> to vector<256x4xf32>
    %c12 = arith.constant 12 : index
    %c0_20 = arith.constant 0 : index
    %22 = vector.load %arg3[%c12, %c0_20] : memref<36x128xf32, #tpu.memory_space<vmem>>, vector<4x128xf32>
    %cst_21 = arith.constant dense<0.000000e+00> : vector<256x128xf32>
    %23 = tpu.matmul %21, %22, %cst_21 {dimension_numbers = #tpu.dot_dimension_numbers<[1], [0], [0], [1], [0, 0, 1, 1], [], []>} : vector<256x4xf32>, vector<4x128xf32>, vector<256x128xf32> -> vector<256x128xf32>
    %24 = arith.addf %18, %23 : vector<256x128xf32>
    %c0_22 = arith.constant 0 : index
    %c1_23 = arith.constant 1 : index
    %c1_24 = arith.constant 1 : index
    %c0_25 = arith.constant 0 : index
    %25 = vector.load %arg2[%c0_22, %c1_23, %c1_24, %c0_25] : memref<1x18x18x4xf32, #tpu.memory_space<vmem>>, vector<1x16x16x4xf32>
    %26 = vector.shape_cast %25 : vector<1x16x16x4xf32> to vector<16x16x4xf32>
    %27 = vector.shape_cast %26 : vector<16x16x4xf32> to vector<256x4xf32>
    %c16 = arith.constant 16 : index
    %c0_26 = arith.constant 0 : index
    %28 = vector.load %arg3[%c16, %c0_26] : memref<36x128xf32, #tpu.memory_space<vmem>>, vector<4x128xf32>
    %cst_27 = arith.constant dense<0.000000e+00> : vector<256x128xf32>
    %29 = tpu.matmul %27, %28, %cst_27 {dimension_numbers = #tpu.dot_dimension_numbers<[1], [0], [0], [1], [0, 0, 1, 1], [], []>} : vector<256x4xf32>, vector<4x128xf32>, vector<256x128xf32> -> vector<256x128xf32>
    %30 = arith.addf %24, %29 : vector<256x128xf32>
    %c0_28 = arith.constant 0 : index
    %c1_29 = arith.constant 1 : index
    %c2_30 = arith.constant 2 : index
    %c0_31 = arith.constant 0 : index
    %31 = vector.load %arg2[%c0_28, %c1_29, %c2_30, %c0_31] : memref<1x18x18x4xf32, #tpu.memory_space<vmem>>, vector<1x16x16x4xf32>
    %32 = vector.shape_cast %31 : vector<1x16x16x4xf32> to vector<16x16x4xf32>
    %33 = vector.shape_cast %32 : vector<16x16x4xf32> to vector<256x4xf32>
    %c20 = arith.constant 20 : index
    %c0_32 = arith.constant 0 : index
    %34 = vector.load %arg3[%c20, %c0_32] : memref<36x128xf32, #tpu.memory_space<vmem>>, vector<4x128xf32>
    %cst_33 = arith.constant dense<0.000000e+00> : vector<256x128xf32>
    %35 = tpu.matmul %33, %34, %cst_33 {dimension_numbers = #tpu.dot_dimension_numbers<[1], [0], [0], [1], [0, 0, 1, 1], [], []>} : vector<256x4xf32>, vector<4x128xf32>, vector<256x128xf32> -> vector<256x128xf32>
    %36 = arith.addf %30, %35 : vector<256x128xf32>
    %c0_34 = arith.constant 0 : index
    %c2_35 = arith.constant 2 : index
    %c0_36 = arith.constant 0 : index
    %c0_37 = arith.constant 0 : index
    %37 = vector.load %arg2[%c0_34, %c2_35, %c0_36, %c0_37] : memref<1x18x18x4xf32, #tpu.memory_space<vmem>>, vector<1x16x16x4xf32>
    %38 = vector.shape_cast %37 : vector<1x16x16x4xf32> to vector<16x16x4xf32>
    %39 = vector.shape_cast %38 : vector<16x16x4xf32> to vector<256x4xf32>
    %c24 = arith.constant 24 : index
    %c0_38 = arith.constant 0 : index
    %40 = vector.load %arg3[%c24, %c0_38] : memref<36x128xf32, #tpu.memory_space<vmem>>, vector<4x128xf32>
    %cst_39 = arith.constant dense<0.000000e+00> : vector<256x128xf32>
    %41 = tpu.matmul %39, %40, %cst_39 {dimension_numbers = #tpu.dot_dimension_numbers<[1], [0], [0], [1], [0, 0, 1, 1], [], []>} : vector<256x4xf32>, vector<4x128xf32>, vector<256x128xf32> -> vector<256x128xf32>
    %42 = arith.addf %36, %41 : vector<256x128xf32>
    %c0_40 = arith.constant 0 : index
    %c2_41 = arith.constant 2 : index
    %c1_42 = arith.constant 1 : index
    %c0_43 = arith.constant 0 : index
    %43 = vector.load %arg2[%c0_40, %c2_41, %c1_42, %c0_43] : memref<1x18x18x4xf32, #tpu.memory_space<vmem>>, vector<1x16x16x4xf32>
    %44 = vector.shape_cast %43 : vector<1x16x16x4xf32> to vector<16x16x4xf32>
    %45 = vector.shape_cast %44 : vector<16x16x4xf32> to vector<256x4xf32>
    %c28 = arith.constant 28 : index
    %c0_44 = arith.constant 0 : index
    %46 = vector.load %arg3[%c28, %c0_44] : memref<36x128xf32, #tpu.memory_space<vmem>>, vector<4x128xf32>
    %cst_45 = arith.constant dense<0.000000e+00> : vector<256x128xf32>
    %47 = tpu.matmul %45, %46, %cst_45 {dimension_numbers = #tpu.dot_dimension_numbers<[1], [0], [0], [1], [0, 0, 1, 1], [], []>} : vector<256x4xf32>, vector<4x128xf32>, vector<256x128xf32> -> vector<256x128xf32>
    %48 = arith.addf %42, %47 : vector<256x128xf32>
    %c0_46 = arith.constant 0 : index
    %c2_47 = arith.constant 2 : index
    %c2_48 = arith.constant 2 : index
    %c0_49 = arith.constant 0 : index
    %49 = vector.load %arg2[%c0_46, %c2_47, %c2_48, %c0_49] : memref<1x18x18x4xf32, #tpu.memory_space<vmem>>, vector<1x16x16x4xf32>
    %50 = vector.shape_cast %49 : vector<1x16x16x4xf32> to vector<16x16x4xf32>
    %51 = vector.shape_cast %50 : vector<16x16x4xf32> to vector<256x4xf32>
    %c32 = arith.constant 32 : index
    %c0_50 = arith.constant 0 : index
    %52 = vector.load %arg3[%c32, %c0_50] : memref<36x128xf32, #tpu.memory_space<vmem>>, vector<4x128xf32>
    %cst_51 = arith.constant dense<0.000000e+00> : vector<256x128xf32>
    %53 = tpu.matmul %51, %52, %cst_51 {dimension_numbers = #tpu.dot_dimension_numbers<[1], [0], [0], [1], [0, 0, 1, 1], [], []>} : vector<256x4xf32>, vector<4x128xf32>, vector<256x128xf32> -> vector<256x128xf32>
    %54 = arith.addf %48, %53 : vector<256x128xf32>
    %c0_i32 = arith.constant 0 : i32
    %55 = arith.cmpi eq, %arg0, %c0_i32 : i32
    %56 = arith.extui %55 : i1 to i32
    %c0_i32_52 = arith.constant 0 : i32
    %57 = arith.cmpi ne, %56, %c0_i32_52 : i32
    scf.if %57 {
      %c0_i32_54 = arith.constant 0 : i32
      %61 = arith.cmpi eq, %arg1, %c0_i32_54 : i32
      %62 = arith.extui %61 : i1 to i32
      %c0_i32_55 = arith.constant 0 : i32
      %63 = arith.cmpi ne, %62, %c0_i32_55 : i32
      scf.if %63 {
        %cst_68 = arith.constant 0.000000e+00 : f32
        %78 = vector.broadcast %cst_68 : f32 to vector<1x128xf32>
        %c0_69 = arith.constant 0 : index
        %c0_70 = arith.constant 0 : index
        %79 = vector.load %arg7[%c0_69, %c0_70] : memref<1x128xf32, #tpu.memory_space<vmem>>, vector<1x128xf32>
        tpu.vector_store %arg7[%c0_69, %c0_70], %78 {strides = array<i32>} : memref<1x128xf32, #tpu.memory_space<vmem>>, vector<1x128xf32>,
        %cst_71 = arith.constant 0.000000e+00 : f32
        %80 = vector.broadcast %cst_71 : f32 to vector<1x128xf32>
        %c0_72 = arith.constant 0 : index
        %c0_73 = arith.constant 0 : index
        %81 = vector.load %arg8[%c0_72, %c0_73] : memref<1x128xf32, #tpu.memory_space<vmem>>, vector<1x128xf32>
        tpu.vector_store %arg8[%c0_72, %c0_73], %80 {strides = array<i32>} : memref<1x128xf32, #tpu.memory_space<vmem>>, vector<1x128xf32>,
      } else {
      }
      %c0_56 = arith.constant 0 : index
      %c0_57 = arith.constant 0 : index
      %64 = vector.load %arg7[%c0_56, %c0_57] : memref<1x128xf32, #tpu.memory_space<vmem>>, vector<1x128xf32>
      %cst_58 = arith.constant dense<0.000000e+00> : vector<128xf32>
      %65 = vector.multi_reduction <add>, %54, %cst_58 [0] : vector<256x128xf32> to vector<128xf32>
      %66 = vector.shape_cast %65 : vector<128xf32> to vector<1x128xf32>
      %67 = arith.addf %64, %66 : vector<1x128xf32>
      %c0_59 = arith.constant 0 : index
      %c0_60 = arith.constant 0 : index
      %68 = vector.load %arg7[%c0_59, %c0_60] : memref<1x128xf32, #tpu.memory_space<vmem>>, vector<1x128xf32>
      tpu.vector_store %arg7[%c0_59, %c0_60], %67 {strides = array<i32>} : memref<1x128xf32, #tpu.memory_space<vmem>>, vector<1x128xf32>,
      %c0_61 = arith.constant 0 : index
      %c0_62 = arith.constant 0 : index
      %69 = vector.load %arg8[%c0_61, %c0_62] : memref<1x128xf32, #tpu.memory_space<vmem>>, vector<1x128xf32>
      %70 = arith.mulf %54, %54 : vector<256x128xf32>
      %cst_63 = arith.constant dense<0.000000e+00> : vector<128xf32>
      %71 = vector.multi_reduction <add>, %70, %cst_63 [0] : vector<256x128xf32> to vector<128xf32>
      %72 = vector.shape_cast %71 : vector<128xf32> to vector<1x128xf32>
      %73 = arith.addf %69, %72 : vector<1x128xf32>
      %c0_64 = arith.constant 0 : index
      %c0_65 = arith.constant 0 : index
      %74 = vector.load %arg8[%c0_64, %c0_65] : memref<1x128xf32, #tpu.memory_space<vmem>>, vector<1x128xf32>
      tpu.vector_store %arg8[%c0_64, %c0_65], %73 {strides = array<i32>} : memref<1x128xf32, #tpu.memory_space<vmem>>, vector<1x128xf32>,
      %c1_i32_66 = arith.constant 1 : i32
      %75 = arith.cmpi eq, %arg1, %c1_i32_66 : i32
      %76 = arith.extui %75 : i1 to i32
      %c0_i32_67 = arith.constant 0 : i32
      %77 = arith.cmpi ne, %76, %c0_i32_67 : i32
      scf.if %77 {
        %c0_68 = arith.constant 0 : index
        %c0_69 = arith.constant 0 : index
        %78 = vector.load %arg7[%c0_68, %c0_69] : memref<1x128xf32, #tpu.memory_space<vmem>>, vector<1x128xf32>
        %cst_70 = arith.constant 0.001953125 : f32
        %79 = vector.broadcast %cst_70 : f32 to vector<1x128xf32>
        %80 = arith.mulf %78, %79 : vector<1x128xf32>
        %c0_71 = arith.constant 0 : index
        %c0_72 = arith.constant 0 : index
        %81 = vector.load %arg8[%c0_71, %c0_72] : memref<1x128xf32, #tpu.memory_space<vmem>>, vector<1x128xf32>
        %cst_73 = arith.constant 0.001953125 : f32
        %82 = vector.broadcast %cst_73 : f32 to vector<1x128xf32>
        %83 = arith.mulf %81, %82 : vector<1x128xf32>
        %84 = arith.mulf %80, %80 : vector<1x128xf32>
        %85 = arith.subf %83, %84 : vector<1x128xf32>
        %c0_74 = arith.constant 0 : index
        %c0_75 = arith.constant 0 : index
        %86 = vector.load %arg7[%c0_74, %c0_75] : memref<1x128xf32, #tpu.memory_space<vmem>>, vector<1x128xf32>
        tpu.vector_store %arg7[%c0_74, %c0_75], %80 {strides = array<i32>} : memref<1x128xf32, #tpu.memory_space<vmem>>, vector<1x128xf32>,
        %cst_76 = arith.constant 9.99999974E-6 : f32
        %87 = vector.broadcast %cst_76 : f32 to vector<1x128xf32>
        %88 = arith.addf %85, %87 : vector<1x128xf32>
        %89 = math.rsqrt %88 : vector<1x128xf32>
        %c0_77 = arith.constant 0 : index
        %c0_78 = arith.constant 0 : index
        %90 = vector.load %arg8[%c0_77, %c0_78] : memref<1x128xf32, #tpu.memory_space<vmem>>, vector<1x128xf32>
        tpu.vector_store %arg8[%c0_77, %c0_78], %89 {strides = array<i32>} : memref<1x128xf32, #tpu.memory_space<vmem>>, vector<1x128xf32>,
      } else {
      }
    } else {
    }
    %c1_i32 = arith.constant 1 : i32
    %58 = arith.cmpi eq, %arg0, %c1_i32 : i32
    %59 = arith.extui %58 : i1 to i32
    %c0_i32_53 = arith.constant 0 : i32
    %60 = arith.cmpi ne, %59, %c0_i32_53 : i32
    scf.if %60 {
      %c0_54 = arith.constant 0 : index
      %c0_55 = arith.constant 0 : index
      %61 = vector.load %arg7[%c0_54, %c0_55] : memref<1x128xf32, #tpu.memory_space<vmem>>, vector<1x128xf32>
      %62 = vector.broadcast %61 : vector<1x128xf32> to vector<256x128xf32>
      %63 = arith.subf %54, %62 : vector<256x128xf32>
      %c0_56 = arith.constant 0 : index
      %c0_57 = arith.constant 0 : index
      %64 = vector.load %arg8[%c0_56, %c0_57] : memref<1x128xf32, #tpu.memory_space<vmem>>, vector<1x128xf32>
      %65 = vector.broadcast %64 : vector<1x128xf32> to vector<256x128xf32>
      %66 = arith.mulf %63, %65 : vector<256x128xf32>
      %c0_58 = arith.constant 0 : index
      %c0_59 = arith.constant 0 : index
      %67 = vector.load %arg4[%c0_58, %c0_59] : memref<1x128xf32, #tpu.memory_space<vmem>>, vector<1x128xf32>
      %68 = vector.broadcast %67 : vector<1x128xf32> to vector<256x128xf32>
      %69 = arith.mulf %66, %68 : vector<256x128xf32>
      %c0_60 = arith.constant 0 : index
      %c0_61 = arith.constant 0 : index
      %70 = vector.load %arg5[%c0_60, %c0_61] : memref<1x128xf32, #tpu.memory_space<vmem>>, vector<1x128xf32>
      %71 = vector.broadcast %70 : vector<1x128xf32> to vector<256x128xf32>
      %72 = arith.addf %69, %71 : vector<256x128xf32>
      %cst_62 = arith.constant 0.000000e+00 : f32
      %73 = vector.broadcast %cst_62 : f32 to vector<256x128xf32>
      %74 = arith.maximumf %72, %73 : vector<256x128xf32>
      %c0_63 = arith.constant 0 : index
      %c0_64 = arith.constant 0 : index
      %c0_65 = arith.constant 0 : index
      %75 = vector.load %arg6[%c0_63, %c0_64, %c0_65] : memref<1x256x128xf32, #tpu.memory_space<vmem>>, vector<1x256x128xf32>
      %76 = vector.shape_cast %75 : vector<1x256x128xf32> to vector<256x128xf32>
      %77 = vector.shape_cast %74 : vector<256x128xf32> to vector<1x256x128xf32>
      tpu.vector_store %arg6[%c0_63, %c0_64, %c0_65], %77 {strides = array<i32>} : memref<1x256x128xf32, #tpu.memory_space<vmem>>, vector<1x256x128xf32>,
    } else {
    }
    return
  }
  func.func @transform_0(%arg0: i32, %arg1: i32) -> (i32, i32, i32, i32) {
    %c0_i32 = arith.constant 0 : i32
    %c0_i32_0 = arith.constant 0 : i32
    %c0_i32_1 = arith.constant 0 : i32
    %c0_i32_2 = arith.constant 0 : i32
    return %arg1, %c0_i32, %c0_i32_0, %c0_i32_1 : i32, i32, i32, i32
  }
  func.func @transform_1(%arg0: i32, %arg1: i32) -> (i32, i32) {
    %c0_i32 = arith.constant 0 : i32
    %c0_i32_0 = arith.constant 0 : i32
    %c0_i32_1 = arith.constant 0 : i32
    return %c0_i32, %c0_i32_0 : i32, i32
  }
  func.func @transform_2(%arg0: i32, %arg1: i32) -> (i32, i32) {
    %c0_i32 = arith.constant 0 : i32
    %c0_i32_0 = arith.constant 0 : i32
    %c0_i32_1 = arith.constant 0 : i32
    return %c0_i32, %c0_i32_0 : i32, i32
  }
  func.func @transform_3(%arg0: i32, %arg1: i32) -> (i32, i32) {
    %c0_i32 = arith.constant 0 : i32
    %c0_i32_0 = arith.constant 0 : i32
    %c0_i32_1 = arith.constant 0 : i32
    return %c0_i32, %c0_i32_0 : i32, i32
  }
  func.func @transform_4(%arg0: i32, %arg1: i32) -> (i32, i32, i32) {
    %0 = arith.muli %arg0, %arg1 : i32
    %c0_i32 = arith.constant 0 : i32
    %c0_i32_0 = arith.constant 0 : i32
    %c0_i32_1 = arith.constant 0 : i32
    return %0, %c0_i32, %c0_i32_0 : i32, i32, i32
  }
}

module attributes {stable_mosaic.version = 11 : i64} {
  func.func @_cca_twice_kernel(%arg0: i32, %arg1: memref<1x256x128xf32, #tpu.memory_space<vmem>>, %arg2: memref<128x128xf32, #tpu.memory_space<vmem>>, %arg3: memref<1x128xf32, #tpu.memory_space<vmem>>, %arg4: memref<128x128xf32, #tpu.memory_space<vmem>>, %arg5: memref<1x128xf32, #tpu.memory_space<vmem>>, %arg6: memref<128x128xf32, #tpu.memory_space<vmem>>, %arg7: memref<1x128xf32, #tpu.memory_space<vmem>>, %arg8: memref<256x256xf32, #tpu.memory_space<vmem>>, %arg9: memref<256x256xf32, #tpu.memory_space<vmem>>, %arg10: memref<1xf32, #tpu.memory_space<smem>>, %arg11: memref<1x256x128xf32, #tpu.memory_space<vmem>>) attributes {dimension_semantics = [#tpu.dimension_semantics<parallel>], iteration_bounds = array<i64: 2>, scalar_prefetch = 0 : i64, scratch_operands = 0 : i64, tpu.core_type = #tpu.core_type<tc>, window_params = [{transform_indices = @transform_0, window_bounds = array<i64: 1, 256, 128>}, {pipeline_mode = #tpu.pipeline_mode<synchronous>, transform_indices = @transform_1, window_bounds = array<i64: 128, 128>}, {pipeline_mode = #tpu.pipeline_mode<synchronous>, transform_indices = @transform_2, window_bounds = array<i64: 1, 128>}, {pipeline_mode = #tpu.pipeline_mode<synchronous>, transform_indices = @transform_3, window_bounds = array<i64: 128, 128>}, {pipeline_mode = #tpu.pipeline_mode<synchronous>, transform_indices = @transform_4, window_bounds = array<i64: 1, 128>}, {pipeline_mode = #tpu.pipeline_mode<synchronous>, transform_indices = @transform_5, window_bounds = array<i64: 128, 128>}, {pipeline_mode = #tpu.pipeline_mode<synchronous>, transform_indices = @transform_6, window_bounds = array<i64: 1, 128>}, {pipeline_mode = #tpu.pipeline_mode<synchronous>, transform_indices = @transform_7, window_bounds = array<i64: 256, 256>}, {pipeline_mode = #tpu.pipeline_mode<synchronous>, transform_indices = @transform_8, window_bounds = array<i64: 256, 256>}, {transform_indices = @transform_9, window_bounds = array<i64: 1>}, {transform_indices = @transform_10, window_bounds = array<i64: 1, 256, 128>}]} {
    %c0 = arith.constant 0 : index
    %c0_0 = arith.constant 0 : index
    %c0_1 = arith.constant 0 : index
    %0 = vector.load %arg1[%c0, %c0_0, %c0_1] : memref<1x256x128xf32, #tpu.memory_space<vmem>>, vector<1x256x128xf32>
    %1 = vector.shape_cast %0 : vector<1x256x128xf32> to vector<256x128xf32>
    %c0_2 = arith.constant 0 : index
    %2 = memref.load %arg10[%c0_2] : memref<1xf32, #tpu.memory_space<smem>>
    %c0_3 = arith.constant 0 : index
    %c0_4 = arith.constant 0 : index
    %3 = vector.load %arg2[%c0_3, %c0_4] : memref<128x128xf32, #tpu.memory_space<vmem>>, vector<128x128xf32>
    %c0_5 = arith.constant 0 : index
    %c0_6 = arith.constant 0 : index
    %4 = vector.load %arg3[%c0_5, %c0_6] : memref<1x128xf32, #tpu.memory_space<vmem>>, vector<1x128xf32>
    %c0_7 = arith.constant 0 : index
    %c0_8 = arith.constant 0 : index
    %5 = vector.load %arg4[%c0_7, %c0_8] : memref<128x128xf32, #tpu.memory_space<vmem>>, vector<128x128xf32>
    %c0_9 = arith.constant 0 : index
    %c0_10 = arith.constant 0 : index
    %6 = vector.load %arg5[%c0_9, %c0_10] : memref<1x128xf32, #tpu.memory_space<vmem>>, vector<1x128xf32>
    %c0_11 = arith.constant 0 : index
    %c0_12 = arith.constant 0 : index
    %7 = vector.load %arg6[%c0_11, %c0_12] : memref<128x128xf32, #tpu.memory_space<vmem>>, vector<128x128xf32>
    %c0_13 = arith.constant 0 : index
    %c0_14 = arith.constant 0 : index
    %8 = vector.load %arg7[%c0_13, %c0_14] : memref<1x128xf32, #tpu.memory_space<vmem>>, vector<1x128xf32>
    %c0_15 = arith.constant 0 : index
    %c0_16 = arith.constant 0 : index
    %9 = vector.load %arg8[%c0_15, %c0_16] : memref<256x256xf32, #tpu.memory_space<vmem>>, vector<256x256xf32>
    %c0_17 = arith.constant 0 : index
    %c0_18 = arith.constant 0 : index
    %10 = vector.load %arg9[%c0_17, %c0_18] : memref<256x256xf32, #tpu.memory_space<vmem>>, vector<256x256xf32>
    %cst = arith.constant dense<0.000000e+00> : vector<256x128xf32>
    %11 = tpu.matmul %1, %3, %cst {dimension_numbers = #tpu.dot_dimension_numbers<[1], [0], [0], [1], [0, 0, 1, 1], [], []>} : vector<256x128xf32>, vector<128x128xf32>, vector<256x128xf32> -> vector<256x128xf32>
    %12 = vector.broadcast %4 : vector<1x128xf32> to vector<256x128xf32>
    %13 = arith.addf %11, %12 : vector<256x128xf32>
    %cst_19 = arith.constant dense<0.000000e+00> : vector<256x128xf32>
    %14 = tpu.matmul %1, %5, %cst_19 {dimension_numbers = #tpu.dot_dimension_numbers<[1], [0], [0], [1], [0, 0, 1, 1], [], []>} : vector<256x128xf32>, vector<128x128xf32>, vector<256x128xf32> -> vector<256x128xf32>
    %15 = vector.broadcast %6 : vector<1x128xf32> to vector<256x128xf32>
    %16 = arith.addf %14, %15 : vector<256x128xf32>
    %cst_20 = arith.constant dense<0.000000e+00> : vector<256x128xf32>
    %17 = tpu.matmul %1, %7, %cst_20 {dimension_numbers = #tpu.dot_dimension_numbers<[1], [0], [0], [1], [0, 0, 1, 1], [], []>} : vector<256x128xf32>, vector<128x128xf32>, vector<256x128xf32> -> vector<256x128xf32>
    %18 = vector.broadcast %8 : vector<1x128xf32> to vector<256x128xf32>
    %19 = arith.addf %17, %18 : vector<256x128xf32>
    "tpu.trace_start"() <{level = 10 : i32, message = "ic,jc->ij"}> : () -> ()
    %cst_21 = arith.constant dense<0.000000e+00> : vector<256x256xf32>
    %20 = tpu.matmul %13, %16, %cst_21 {dimension_numbers = #tpu.dot_dimension_numbers<[1], [1], [0], [0], [0, 0, 1, 0], [], []>} : vector<256x128xf32>, vector<256x128xf32>, vector<256x256xf32> -> vector<256x256xf32>
    "tpu.trace_stop"() : () -> ()
    %21 = arith.addf %20, %9 : vector<256x256xf32>
    %cst_22 = arith.constant dense<0xFF800000> : vector<256xf32>
    %22 = vector.multi_reduction <maximumf>, %21, %cst_22 [1] : vector<256x256xf32> to vector<256xf32>
    %23 = vector.shape_cast %22 : vector<256xf32> to vector<256x1xf32>
    %24 = vector.broadcast %23 : vector<256x1xf32> to vector<256x256xf32>
    %25 = arith.subf %21, %24 : vector<256x256xf32>
    %26 = math.exp %25 : vector<256x256xf32>
    %cst_23 = arith.constant dense<0.000000e+00> : vector<256xf32>
    %27 = vector.multi_reduction <add>, %26, %cst_23 [1] : vector<256x256xf32> to vector<256xf32>
    %28 = vector.shape_cast %27 : vector<256xf32> to vector<256x1xf32>
    %29 = tpu.reciprocal %28 {approx = true} : vector<256x1xf32> -> vector<256x1xf32>
    %30 = vector.broadcast %29 : vector<256x1xf32> to vector<256x256xf32>
    %31 = arith.mulf %26, %30 : vector<256x256xf32>
    %32 = arith.addf %20, %10 : vector<256x256xf32>
    %cst_24 = arith.constant dense<0xFF800000> : vector<256xf32>
    %33 = vector.multi_reduction <maximumf>, %32, %cst_24 [1] : vector<256x256xf32> to vector<256xf32>
    %34 = vector.shape_cast %33 : vector<256xf32> to vector<256x1xf32>
    %35 = vector.broadcast %34 : vector<256x1xf32> to vector<256x256xf32>
    %36 = arith.subf %32, %35 : vector<256x256xf32>
    %37 = math.exp %36 : vector<256x256xf32>
    %cst_25 = arith.constant dense<0.000000e+00> : vector<256xf32>
    %38 = vector.multi_reduction <add>, %37, %cst_25 [1] : vector<256x256xf32> to vector<256xf32>
    %39 = vector.shape_cast %38 : vector<256xf32> to vector<256x1xf32>
    %40 = tpu.reciprocal %39 {approx = true} : vector<256x1xf32> -> vector<256x1xf32>
    %41 = vector.broadcast %40 : vector<256x1xf32> to vector<256x256xf32>
    %42 = arith.mulf %37, %41 : vector<256x256xf32>
    %43 = arith.addf %31, %42 : vector<256x256xf32>
    %cst_26 = arith.constant dense<0.000000e+00> : vector<256x128xf32>
    %44 = tpu.matmul %43, %19, %cst_26 {dimension_numbers = #tpu.dot_dimension_numbers<[1], [0], [0], [1], [0, 0, 1, 1], [], []>} : vector<256x256xf32>, vector<256x128xf32>, vector<256x128xf32> -> vector<256x128xf32>
    %45 = vector.broadcast %2 : f32 to vector<256x128xf32>
    %46 = arith.mulf %45, %44 : vector<256x128xf32>
    %47 = arith.addf %46, %1 : vector<256x128xf32>
    %cst_27 = arith.constant dense<0.000000e+00> : vector<256x128xf32>
    %48 = tpu.matmul %47, %3, %cst_27 {dimension_numbers = #tpu.dot_dimension_numbers<[1], [0], [0], [1], [0, 0, 1, 1], [], []>} : vector<256x128xf32>, vector<128x128xf32>, vector<256x128xf32> -> vector<256x128xf32>
    %49 = vector.broadcast %4 : vector<1x128xf32> to vector<256x128xf32>
    %50 = arith.addf %48, %49 : vector<256x128xf32>
    %cst_28 = arith.constant dense<0.000000e+00> : vector<256x128xf32>
    %51 = tpu.matmul %47, %5, %cst_28 {dimension_numbers = #tpu.dot_dimension_numbers<[1], [0], [0], [1], [0, 0, 1, 1], [], []>} : vector<256x128xf32>, vector<128x128xf32>, vector<256x128xf32> -> vector<256x128xf32>
    %52 = vector.broadcast %6 : vector<1x128xf32> to vector<256x128xf32>
    %53 = arith.addf %51, %52 : vector<256x128xf32>
    %cst_29 = arith.constant dense<0.000000e+00> : vector<256x128xf32>
    %54 = tpu.matmul %47, %7, %cst_29 {dimension_numbers = #tpu.dot_dimension_numbers<[1], [0], [0], [1], [0, 0, 1, 1], [], []>} : vector<256x128xf32>, vector<128x128xf32>, vector<256x128xf32> -> vector<256x128xf32>
    %55 = vector.broadcast %8 : vector<1x128xf32> to vector<256x128xf32>
    %56 = arith.addf %54, %55 : vector<256x128xf32>
    "tpu.trace_start"() <{level = 10 : i32, message = "ic,jc->ij"}> : () -> ()
    %cst_30 = arith.constant dense<0.000000e+00> : vector<256x256xf32>
    %57 = tpu.matmul %50, %53, %cst_30 {dimension_numbers = #tpu.dot_dimension_numbers<[1], [1], [0], [0], [0, 0, 1, 0], [], []>} : vector<256x128xf32>, vector<256x128xf32>, vector<256x256xf32> -> vector<256x256xf32>
    "tpu.trace_stop"() : () -> ()
    %58 = arith.addf %57, %9 : vector<256x256xf32>
    %cst_31 = arith.constant dense<0xFF800000> : vector<256xf32>
    %59 = vector.multi_reduction <maximumf>, %58, %cst_31 [1] : vector<256x256xf32> to vector<256xf32>
    %60 = vector.shape_cast %59 : vector<256xf32> to vector<256x1xf32>
    %61 = vector.broadcast %60 : vector<256x1xf32> to vector<256x256xf32>
    %62 = arith.subf %58, %61 : vector<256x256xf32>
    %63 = math.exp %62 : vector<256x256xf32>
    %cst_32 = arith.constant dense<0.000000e+00> : vector<256xf32>
    %64 = vector.multi_reduction <add>, %63, %cst_32 [1] : vector<256x256xf32> to vector<256xf32>
    %65 = vector.shape_cast %64 : vector<256xf32> to vector<256x1xf32>
    %66 = tpu.reciprocal %65 {approx = true} : vector<256x1xf32> -> vector<256x1xf32>
    %67 = vector.broadcast %66 : vector<256x1xf32> to vector<256x256xf32>
    %68 = arith.mulf %63, %67 : vector<256x256xf32>
    %69 = arith.addf %57, %10 : vector<256x256xf32>
    %cst_33 = arith.constant dense<0xFF800000> : vector<256xf32>
    %70 = vector.multi_reduction <maximumf>, %69, %cst_33 [1] : vector<256x256xf32> to vector<256xf32>
    %71 = vector.shape_cast %70 : vector<256xf32> to vector<256x1xf32>
    %72 = vector.broadcast %71 : vector<256x1xf32> to vector<256x256xf32>
    %73 = arith.subf %69, %72 : vector<256x256xf32>
    %74 = math.exp %73 : vector<256x256xf32>
    %cst_34 = arith.constant dense<0.000000e+00> : vector<256xf32>
    %75 = vector.multi_reduction <add>, %74, %cst_34 [1] : vector<256x256xf32> to vector<256xf32>
    %76 = vector.shape_cast %75 : vector<256xf32> to vector<256x1xf32>
    %77 = tpu.reciprocal %76 {approx = true} : vector<256x1xf32> -> vector<256x1xf32>
    %78 = vector.broadcast %77 : vector<256x1xf32> to vector<256x256xf32>
    %79 = arith.mulf %74, %78 : vector<256x256xf32>
    %80 = arith.addf %68, %79 : vector<256x256xf32>
    %cst_35 = arith.constant dense<0.000000e+00> : vector<256x128xf32>
    %81 = tpu.matmul %80, %56, %cst_35 {dimension_numbers = #tpu.dot_dimension_numbers<[1], [0], [0], [1], [0, 0, 1, 1], [], []>} : vector<256x256xf32>, vector<256x128xf32>, vector<256x128xf32> -> vector<256x128xf32>
    %82 = vector.broadcast %2 : f32 to vector<256x128xf32>
    %83 = arith.mulf %82, %81 : vector<256x128xf32>
    %84 = arith.addf %83, %47 : vector<256x128xf32>
    %c0_36 = arith.constant 0 : index
    %c0_37 = arith.constant 0 : index
    %c0_38 = arith.constant 0 : index
    %85 = vector.load %arg11[%c0_36, %c0_37, %c0_38] : memref<1x256x128xf32, #tpu.memory_space<vmem>>, vector<1x256x128xf32>
    %86 = vector.shape_cast %85 : vector<1x256x128xf32> to vector<256x128xf32>
    %87 = vector.shape_cast %84 : vector<256x128xf32> to vector<1x256x128xf32>
    tpu.vector_store %arg11[%c0_36, %c0_37, %c0_38], %87 {strides = array<i32>} : memref<1x256x128xf32, #tpu.memory_space<vmem>>, vector<1x256x128xf32>,
    return
  }
  func.func @transform_0(%arg0: i32) -> (i32, i32, i32) {
    %c0_i32 = arith.constant 0 : i32
    %c0_i32_0 = arith.constant 0 : i32
    %c0_i32_1 = arith.constant 0 : i32
    return %arg0, %c0_i32, %c0_i32_0 : i32, i32, i32
  }
  func.func @transform_1(%arg0: i32) -> (i32, i32) {
    %c0_i32 = arith.constant 0 : i32
    %c0_i32_0 = arith.constant 0 : i32
    %c0_i32_1 = arith.constant 0 : i32
    return %c0_i32, %c0_i32_0 : i32, i32
  }
  func.func @transform_2(%arg0: i32) -> (i32, i32) {
    %c0_i32 = arith.constant 0 : i32
    %c0_i32_0 = arith.constant 0 : i32
    %c0_i32_1 = arith.constant 0 : i32
    return %c0_i32, %c0_i32_0 : i32, i32
  }
  func.func @transform_3(%arg0: i32) -> (i32, i32) {
    %c0_i32 = arith.constant 0 : i32
    %c0_i32_0 = arith.constant 0 : i32
    %c0_i32_1 = arith.constant 0 : i32
    return %c0_i32, %c0_i32_0 : i32, i32
  }
  func.func @transform_4(%arg0: i32) -> (i32, i32) {
    %c0_i32 = arith.constant 0 : i32
    %c0_i32_0 = arith.constant 0 : i32
    %c0_i32_1 = arith.constant 0 : i32
    return %c0_i32, %c0_i32_0 : i32, i32
  }
  func.func @transform_5(%arg0: i32) -> (i32, i32) {
    %c0_i32 = arith.constant 0 : i32
    %c0_i32_0 = arith.constant 0 : i32
    %c0_i32_1 = arith.constant 0 : i32
    return %c0_i32, %c0_i32_0 : i32, i32
  }
  func.func @transform_6(%arg0: i32) -> (i32, i32) {
    %c0_i32 = arith.constant 0 : i32
    %c0_i32_0 = arith.constant 0 : i32
    %c0_i32_1 = arith.constant 0 : i32
    return %c0_i32, %c0_i32_0 : i32, i32
  }
  func.func @transform_7(%arg0: i32) -> (i32, i32) {
    %c0_i32 = arith.constant 0 : i32
    %c0_i32_0 = arith.constant 0 : i32
    %c0_i32_1 = arith.constant 0 : i32
    return %c0_i32, %c0_i32_0 : i32, i32
  }
  func.func @transform_8(%arg0: i32) -> (i32, i32) {
    %c0_i32 = arith.constant 0 : i32
    %c0_i32_0 = arith.constant 0 : i32
    %c0_i32_1 = arith.constant 0 : i32
    return %c0_i32, %c0_i32_0 : i32, i32
  }
  func.func @transform_9(%arg0: i32) -> i32 {
    %c0_i32 = arith.constant 0 : i32
    %c0_i32_0 = arith.constant 0 : i32
    return %c0_i32 : i32
  }
  func.func @transform_10(%arg0: i32) -> (i32, i32, i32) {
    %c0_i32 = arith.constant 0 : i32
    %c0_i32_0 = arith.constant 0 : i32
    %c0_i32_1 = arith.constant 0 : i32
    return %arg0, %c0_i32, %c0_i32_0 : i32, i32, i32
  }
}

module attributes {stable_mosaic.version = 11 : i64} {
  func.func @_conv3x3_bn_relu_kernel(%arg0: i32, %arg1: i32, %arg2: memref<1x18x18x32xf32, #tpu.memory_space<vmem>>, %arg3: memref<288x128xf32, #tpu.memory_space<vmem>>, %arg4: memref<1x128xf32, #tpu.memory_space<vmem>>, %arg5: memref<1x128xf32, #tpu.memory_space<vmem>>, %arg6: memref<1x256x128xf32, #tpu.memory_space<vmem>>, %arg7: memref<1x128xf32, #tpu.memory_space<vmem>>, %arg8: memref<1x128xf32, #tpu.memory_space<vmem>>) attributes {dimension_semantics = [#tpu.dimension_semantics<arbitrary>, #tpu.dimension_semantics<arbitrary>], iteration_bounds = array<i64: 2, 2>, scalar_prefetch = 0 : i64, scratch_operands = 2 : i64, tpu.core_type = #tpu.core_type<tc>, window_params = [{transform_indices = @transform_0, window_bounds = array<i64: 1, 18, 18, 32>}, {pipeline_mode = #tpu.pipeline_mode<synchronous>, transform_indices = @transform_1, window_bounds = array<i64: 288, 128>}, {pipeline_mode = #tpu.pipeline_mode<synchronous>, transform_indices = @transform_2, window_bounds = array<i64: 1, 128>}, {pipeline_mode = #tpu.pipeline_mode<synchronous>, transform_indices = @transform_3, window_bounds = array<i64: 1, 128>}, {transform_indices = @transform_4, window_bounds = array<i64: 1, 256, 128>}]} {
    %cst = arith.constant 0.000000e+00 : f32
    %0 = vector.broadcast %cst : f32 to vector<256x128xf32>
    %c0 = arith.constant 0 : index
    %c0_0 = arith.constant 0 : index
    %c0_1 = arith.constant 0 : index
    %c0_2 = arith.constant 0 : index
    %1 = vector.load %arg2[%c0, %c0_0, %c0_1, %c0_2] : memref<1x18x18x32xf32, #tpu.memory_space<vmem>>, vector<1x16x16x32xf32>
    %2 = vector.shape_cast %1 : vector<1x16x16x32xf32> to vector<16x16x32xf32>
    %3 = vector.shape_cast %2 : vector<16x16x32xf32> to vector<256x32xf32>
    %c0_3 = arith.constant 0 : index
    %c0_4 = arith.constant 0 : index
    %4 = vector.load %arg3[%c0_3, %c0_4] : memref<288x128xf32, #tpu.memory_space<vmem>>, vector<32x128xf32>
    %cst_5 = arith.constant dense<0.000000e+00> : vector<256x128xf32>
    %5 = tpu.matmul %3, %4, %cst_5 {dimension_numbers = #tpu.dot_dimension_numbers<[1], [0], [0], [1], [0, 0, 1, 1], [], []>} : vector<256x32xf32>, vector<32x128xf32>, vector<256x128xf32> -> vector<256x128xf32>
    %6 = arith.addf %0, %5 : vector<256x128xf32>
    %c0_6 = arith.constant 0 : index
    %c0_7 = arith.constant 0 : index
    %c1 = arith.constant 1 : index
    %c0_8 = arith.constant 0 : index
    %7 = vector.load %arg2[%c0_6, %c0_7, %c1, %c0_8] : memref<1x18x18x32xf32, #tpu.memory_space<vmem>>, vector<1x16x16x32xf32>
    %8 = vector.shape_cast %7 : vector<1x16x16x32xf32> to vector<16x16x32xf32>
    %9 = vector.shape_cast %8 : vector<16x16x32xf32> to vector<256x32xf32>
    %c32 = arith.constant 32 : index
    %c0_9 = arith.constant 0 : index
    %10 = vector.load %arg3[%c32, %c0_9] : memref<288x128xf32, #tpu.memory_space<vmem>>, vector<32x128xf32>
    %cst_10 = arith.constant dense<0.000000e+00> : vector<256x128xf32>
    %11 = tpu.matmul %9, %10, %cst_10 {dimension_numbers = #tpu.dot_dimension_numbers<[1], [0], [0], [1], [0, 0, 1, 1], [], []>} : vector<256x32xf32>, vector<32x128xf32>, vector<256x128xf32> -> vector<256x128xf32>
    %12 = arith.addf %6, %11 : vector<256x128xf32>
    %c0_11 = arith.constant 0 : index
    %c0_12 = arith.constant 0 : index
    %c2 = arith.constant 2 : index
    %c0_13 = arith.constant 0 : index
    %13 = vector.load %arg2[%c0_11, %c0_12, %c2, %c0_13] : memref<1x18x18x32xf32, #tpu.memory_space<vmem>>, vector<1x16x16x32xf32>
    %14 = vector.shape_cast %13 : vector<1x16x16x32xf32> to vector<16x16x32xf32>
    %15 = vector.shape_cast %14 : vector<16x16x32xf32> to vector<256x32xf32>
    %c64 = arith.constant 64 : index
    %c0_14 = arith.constant 0 : index
    %16 = vector.load %arg3[%c64, %c0_14] : memref<288x128xf32, #tpu.memory_space<vmem>>, vector<32x128xf32>
    %cst_15 = arith.constant dense<0.000000e+00> : vector<256x128xf32>
    %17 = tpu.matmul %15, %16, %cst_15 {dimension_numbers = #tpu.dot_dimension_numbers<[1], [0], [0], [1], [0, 0, 1, 1], [], []>} : vector<256x32xf32>, vector<32x128xf32>, vector<256x128xf32> -> vector<256x128xf32>
    %18 = arith.addf %12, %17 : vector<256x128xf32>
    %c0_16 = arith.constant 0 : index
    %c1_17 = arith.constant 1 : index
    %c0_18 = arith.constant 0 : index
    %c0_19 = arith.constant 0 : index
    %19 = vector.load %arg2[%c0_16, %c1_17, %c0_18, %c0_19] : memref<1x18x18x32xf32, #tpu.memory_space<vmem>>, vector<1x16x16x32xf32>
    %20 = vector.shape_cast %19 : vector<1x16x16x32xf32> to vector<16x16x32xf32>
    %21 = vector.shape_cast %20 : vector<16x16x32xf32> to vector<256x32xf32>
    %c96 = arith.constant 96 : index
    %c0_20 = arith.constant 0 : index
    %22 = vector.load %arg3[%c96, %c0_20] : memref<288x128xf32, #tpu.memory_space<vmem>>, vector<32x128xf32>
    %cst_21 = arith.constant dense<0.000000e+00> : vector<256x128xf32>
    %23 = tpu.matmul %21, %22, %cst_21 {dimension_numbers = #tpu.dot_dimension_numbers<[1], [0], [0], [1], [0, 0, 1, 1], [], []>} : vector<256x32xf32>, vector<32x128xf32>, vector<256x128xf32> -> vector<256x128xf32>
    %24 = arith.addf %18, %23 : vector<256x128xf32>
    %c0_22 = arith.constant 0 : index
    %c1_23 = arith.constant 1 : index
    %c1_24 = arith.constant 1 : index
    %c0_25 = arith.constant 0 : index
    %25 = vector.load %arg2[%c0_22, %c1_23, %c1_24, %c0_25] : memref<1x18x18x32xf32, #tpu.memory_space<vmem>>, vector<1x16x16x32xf32>
    %26 = vector.shape_cast %25 : vector<1x16x16x32xf32> to vector<16x16x32xf32>
    %27 = vector.shape_cast %26 : vector<16x16x32xf32> to vector<256x32xf32>
    %c128 = arith.constant 128 : index
    %c0_26 = arith.constant 0 : index
    %28 = vector.load %arg3[%c128, %c0_26] : memref<288x128xf32, #tpu.memory_space<vmem>>, vector<32x128xf32>
    %cst_27 = arith.constant dense<0.000000e+00> : vector<256x128xf32>
    %29 = tpu.matmul %27, %28, %cst_27 {dimension_numbers = #tpu.dot_dimension_numbers<[1], [0], [0], [1], [0, 0, 1, 1], [], []>} : vector<256x32xf32>, vector<32x128xf32>, vector<256x128xf32> -> vector<256x128xf32>
    %30 = arith.addf %24, %29 : vector<256x128xf32>
    %c0_28 = arith.constant 0 : index
    %c1_29 = arith.constant 1 : index
    %c2_30 = arith.constant 2 : index
    %c0_31 = arith.constant 0 : index
    %31 = vector.load %arg2[%c0_28, %c1_29, %c2_30, %c0_31] : memref<1x18x18x32xf32, #tpu.memory_space<vmem>>, vector<1x16x16x32xf32>
    %32 = vector.shape_cast %31 : vector<1x16x16x32xf32> to vector<16x16x32xf32>
    %33 = vector.shape_cast %32 : vector<16x16x32xf32> to vector<256x32xf32>
    %c160 = arith.constant 160 : index
    %c0_32 = arith.constant 0 : index
    %34 = vector.load %arg3[%c160, %c0_32] : memref<288x128xf32, #tpu.memory_space<vmem>>, vector<32x128xf32>
    %cst_33 = arith.constant dense<0.000000e+00> : vector<256x128xf32>
    %35 = tpu.matmul %33, %34, %cst_33 {dimension_numbers = #tpu.dot_dimension_numbers<[1], [0], [0], [1], [0, 0, 1, 1], [], []>} : vector<256x32xf32>, vector<32x128xf32>, vector<256x128xf32> -> vector<256x128xf32>
    %36 = arith.addf %30, %35 : vector<256x128xf32>
    %c0_34 = arith.constant 0 : index
    %c2_35 = arith.constant 2 : index
    %c0_36 = arith.constant 0 : index
    %c0_37 = arith.constant 0 : index
    %37 = vector.load %arg2[%c0_34, %c2_35, %c0_36, %c0_37] : memref<1x18x18x32xf32, #tpu.memory_space<vmem>>, vector<1x16x16x32xf32>
    %38 = vector.shape_cast %37 : vector<1x16x16x32xf32> to vector<16x16x32xf32>
    %39 = vector.shape_cast %38 : vector<16x16x32xf32> to vector<256x32xf32>
    %c192 = arith.constant 192 : index
    %c0_38 = arith.constant 0 : index
    %40 = vector.load %arg3[%c192, %c0_38] : memref<288x128xf32, #tpu.memory_space<vmem>>, vector<32x128xf32>
    %cst_39 = arith.constant dense<0.000000e+00> : vector<256x128xf32>
    %41 = tpu.matmul %39, %40, %cst_39 {dimension_numbers = #tpu.dot_dimension_numbers<[1], [0], [0], [1], [0, 0, 1, 1], [], []>} : vector<256x32xf32>, vector<32x128xf32>, vector<256x128xf32> -> vector<256x128xf32>
    %42 = arith.addf %36, %41 : vector<256x128xf32>
    %c0_40 = arith.constant 0 : index
    %c2_41 = arith.constant 2 : index
    %c1_42 = arith.constant 1 : index
    %c0_43 = arith.constant 0 : index
    %43 = vector.load %arg2[%c0_40, %c2_41, %c1_42, %c0_43] : memref<1x18x18x32xf32, #tpu.memory_space<vmem>>, vector<1x16x16x32xf32>
    %44 = vector.shape_cast %43 : vector<1x16x16x32xf32> to vector<16x16x32xf32>
    %45 = vector.shape_cast %44 : vector<16x16x32xf32> to vector<256x32xf32>
    %c224 = arith.constant 224 : index
    %c0_44 = arith.constant 0 : index
    %46 = vector.load %arg3[%c224, %c0_44] : memref<288x128xf32, #tpu.memory_space<vmem>>, vector<32x128xf32>
    %cst_45 = arith.constant dense<0.000000e+00> : vector<256x128xf32>
    %47 = tpu.matmul %45, %46, %cst_45 {dimension_numbers = #tpu.dot_dimension_numbers<[1], [0], [0], [1], [0, 0, 1, 1], [], []>} : vector<256x32xf32>, vector<32x128xf32>, vector<256x128xf32> -> vector<256x128xf32>
    %48 = arith.addf %42, %47 : vector<256x128xf32>
    %c0_46 = arith.constant 0 : index
    %c2_47 = arith.constant 2 : index
    %c2_48 = arith.constant 2 : index
    %c0_49 = arith.constant 0 : index
    %49 = vector.load %arg2[%c0_46, %c2_47, %c2_48, %c0_49] : memref<1x18x18x32xf32, #tpu.memory_space<vmem>>, vector<1x16x16x32xf32>
    %50 = vector.shape_cast %49 : vector<1x16x16x32xf32> to vector<16x16x32xf32>
    %51 = vector.shape_cast %50 : vector<16x16x32xf32> to vector<256x32xf32>
    %c256 = arith.constant 256 : index
    %c0_50 = arith.constant 0 : index
    %52 = vector.load %arg3[%c256, %c0_50] : memref<288x128xf32, #tpu.memory_space<vmem>>, vector<32x128xf32>
    %cst_51 = arith.constant dense<0.000000e+00> : vector<256x128xf32>
    %53 = tpu.matmul %51, %52, %cst_51 {dimension_numbers = #tpu.dot_dimension_numbers<[1], [0], [0], [1], [0, 0, 1, 1], [], []>} : vector<256x32xf32>, vector<32x128xf32>, vector<256x128xf32> -> vector<256x128xf32>
    %54 = arith.addf %48, %53 : vector<256x128xf32>
    %c0_i32 = arith.constant 0 : i32
    %55 = arith.cmpi eq, %arg0, %c0_i32 : i32
    %56 = arith.extui %55 : i1 to i32
    %c0_i32_52 = arith.constant 0 : i32
    %57 = arith.cmpi ne, %56, %c0_i32_52 : i32
    scf.if %57 {
      %c0_i32_54 = arith.constant 0 : i32
      %61 = arith.cmpi eq, %arg1, %c0_i32_54 : i32
      %62 = arith.extui %61 : i1 to i32
      %c0_i32_55 = arith.constant 0 : i32
      %63 = arith.cmpi ne, %62, %c0_i32_55 : i32
      scf.if %63 {
        %cst_68 = arith.constant 0.000000e+00 : f32
        %78 = vector.broadcast %cst_68 : f32 to vector<1x128xf32>
        %c0_69 = arith.constant 0 : index
        %c0_70 = arith.constant 0 : index
        %79 = vector.load %arg7[%c0_69, %c0_70] : memref<1x128xf32, #tpu.memory_space<vmem>>, vector<1x128xf32>
        tpu.vector_store %arg7[%c0_69, %c0_70], %78 {strides = array<i32>} : memref<1x128xf32, #tpu.memory_space<vmem>>, vector<1x128xf32>,
        %cst_71 = arith.constant 0.000000e+00 : f32
        %80 = vector.broadcast %cst_71 : f32 to vector<1x128xf32>
        %c0_72 = arith.constant 0 : index
        %c0_73 = arith.constant 0 : index
        %81 = vector.load %arg8[%c0_72, %c0_73] : memref<1x128xf32, #tpu.memory_space<vmem>>, vector<1x128xf32>
        tpu.vector_store %arg8[%c0_72, %c0_73], %80 {strides = array<i32>} : memref<1x128xf32, #tpu.memory_space<vmem>>, vector<1x128xf32>,
      } else {
      }
      %c0_56 = arith.constant 0 : index
      %c0_57 = arith.constant 0 : index
      %64 = vector.load %arg7[%c0_56, %c0_57] : memref<1x128xf32, #tpu.memory_space<vmem>>, vector<1x128xf32>
      %cst_58 = arith.constant dense<0.000000e+00> : vector<128xf32>
      %65 = vector.multi_reduction <add>, %54, %cst_58 [0] : vector<256x128xf32> to vector<128xf32>
      %66 = vector.shape_cast %65 : vector<128xf32> to vector<1x128xf32>
      %67 = arith.addf %64, %66 : vector<1x128xf32>
      %c0_59 = arith.constant 0 : index
      %c0_60 = arith.constant 0 : index
      %68 = vector.load %arg7[%c0_59, %c0_60] : memref<1x128xf32, #tpu.memory_space<vmem>>, vector<1x128xf32>
      tpu.vector_store %arg7[%c0_59, %c0_60], %67 {strides = array<i32>} : memref<1x128xf32, #tpu.memory_space<vmem>>, vector<1x128xf32>,
      %c0_61 = arith.constant 0 : index
      %c0_62 = arith.constant 0 : index
      %69 = vector.load %arg8[%c0_61, %c0_62] : memref<1x128xf32, #tpu.memory_space<vmem>>, vector<1x128xf32>
      %70 = arith.mulf %54, %54 : vector<256x128xf32>
      %cst_63 = arith.constant dense<0.000000e+00> : vector<128xf32>
      %71 = vector.multi_reduction <add>, %70, %cst_63 [0] : vector<256x128xf32> to vector<128xf32>
      %72 = vector.shape_cast %71 : vector<128xf32> to vector<1x128xf32>
      %73 = arith.addf %69, %72 : vector<1x128xf32>
      %c0_64 = arith.constant 0 : index
      %c0_65 = arith.constant 0 : index
      %74 = vector.load %arg8[%c0_64, %c0_65] : memref<1x128xf32, #tpu.memory_space<vmem>>, vector<1x128xf32>
      tpu.vector_store %arg8[%c0_64, %c0_65], %73 {strides = array<i32>} : memref<1x128xf32, #tpu.memory_space<vmem>>, vector<1x128xf32>,
      %c1_i32_66 = arith.constant 1 : i32
      %75 = arith.cmpi eq, %arg1, %c1_i32_66 : i32
      %76 = arith.extui %75 : i1 to i32
      %c0_i32_67 = arith.constant 0 : i32
      %77 = arith.cmpi ne, %76, %c0_i32_67 : i32
      scf.if %77 {
        %c0_68 = arith.constant 0 : index
        %c0_69 = arith.constant 0 : index
        %78 = vector.load %arg7[%c0_68, %c0_69] : memref<1x128xf32, #tpu.memory_space<vmem>>, vector<1x128xf32>
        %cst_70 = arith.constant 0.001953125 : f32
        %79 = vector.broadcast %cst_70 : f32 to vector<1x128xf32>
        %80 = arith.mulf %78, %79 : vector<1x128xf32>
        %c0_71 = arith.constant 0 : index
        %c0_72 = arith.constant 0 : index
        %81 = vector.load %arg8[%c0_71, %c0_72] : memref<1x128xf32, #tpu.memory_space<vmem>>, vector<1x128xf32>
        %cst_73 = arith.constant 0.001953125 : f32
        %82 = vector.broadcast %cst_73 : f32 to vector<1x128xf32>
        %83 = arith.mulf %81, %82 : vector<1x128xf32>
        %84 = arith.mulf %80, %80 : vector<1x128xf32>
        %85 = arith.subf %83, %84 : vector<1x128xf32>
        %c0_74 = arith.constant 0 : index
        %c0_75 = arith.constant 0 : index
        %86 = vector.load %arg7[%c0_74, %c0_75] : memref<1x128xf32, #tpu.memory_space<vmem>>, vector<1x128xf32>
        tpu.vector_store %arg7[%c0_74, %c0_75], %80 {strides = array<i32>} : memref<1x128xf32, #tpu.memory_space<vmem>>, vector<1x128xf32>,
        %cst_76 = arith.constant 9.99999974E-6 : f32
        %87 = vector.broadcast %cst_76 : f32 to vector<1x128xf32>
        %88 = arith.addf %85, %87 : vector<1x128xf32>
        %89 = math.rsqrt %88 : vector<1x128xf32>
        %c0_77 = arith.constant 0 : index
        %c0_78 = arith.constant 0 : index
        %90 = vector.load %arg8[%c0_77, %c0_78] : memref<1x128xf32, #tpu.memory_space<vmem>>, vector<1x128xf32>
        tpu.vector_store %arg8[%c0_77, %c0_78], %89 {strides = array<i32>} : memref<1x128xf32, #tpu.memory_space<vmem>>, vector<1x128xf32>,
      } else {
      }
    } else {
    }
    %c1_i32 = arith.constant 1 : i32
    %58 = arith.cmpi eq, %arg0, %c1_i32 : i32
    %59 = arith.extui %58 : i1 to i32
    %c0_i32_53 = arith.constant 0 : i32
    %60 = arith.cmpi ne, %59, %c0_i32_53 : i32
    scf.if %60 {
      %c0_54 = arith.constant 0 : index
      %c0_55 = arith.constant 0 : index
      %61 = vector.load %arg7[%c0_54, %c0_55] : memref<1x128xf32, #tpu.memory_space<vmem>>, vector<1x128xf32>
      %62 = vector.broadcast %61 : vector<1x128xf32> to vector<256x128xf32>
      %63 = arith.subf %54, %62 : vector<256x128xf32>
      %c0_56 = arith.constant 0 : index
      %c0_57 = arith.constant 0 : index
      %64 = vector.load %arg8[%c0_56, %c0_57] : memref<1x128xf32, #tpu.memory_space<vmem>>, vector<1x128xf32>
      %65 = vector.broadcast %64 : vector<1x128xf32> to vector<256x128xf32>
      %66 = arith.mulf %63, %65 : vector<256x128xf32>
      %c0_58 = arith.constant 0 : index
      %c0_59 = arith.constant 0 : index
      %67 = vector.load %arg4[%c0_58, %c0_59] : memref<1x128xf32, #tpu.memory_space<vmem>>, vector<1x128xf32>
      %68 = vector.broadcast %67 : vector<1x128xf32> to vector<256x128xf32>
      %69 = arith.mulf %66, %68 : vector<256x128xf32>
      %c0_60 = arith.constant 0 : index
      %c0_61 = arith.constant 0 : index
      %70 = vector.load %arg5[%c0_60, %c0_61] : memref<1x128xf32, #tpu.memory_space<vmem>>, vector<1x128xf32>
      %71 = vector.broadcast %70 : vector<1x128xf32> to vector<256x128xf32>
      %72 = arith.addf %69, %71 : vector<256x128xf32>
      %cst_62 = arith.constant 0.000000e+00 : f32
      %73 = vector.broadcast %cst_62 : f32 to vector<256x128xf32>
      %74 = arith.maximumf %72, %73 : vector<256x128xf32>
      %c0_63 = arith.constant 0 : index
      %c0_64 = arith.constant 0 : index
      %c0_65 = arith.constant 0 : index
      %75 = vector.load %arg6[%c0_63, %c0_64, %c0_65] : memref<1x256x128xf32, #tpu.memory_space<vmem>>, vector<1x256x128xf32>
      %76 = vector.shape_cast %75 : vector<1x256x128xf32> to vector<256x128xf32>
      %77 = vector.shape_cast %74 : vector<256x128xf32> to vector<1x256x128xf32>
      tpu.vector_store %arg6[%c0_63, %c0_64, %c0_65], %77 {strides = array<i32>} : memref<1x256x128xf32, #tpu.memory_space<vmem>>, vector<1x256x128xf32>,
    } else {
    }
    return
  }
  func.func @transform_0(%arg0: i32, %arg1: i32) -> (i32, i32, i32, i32) {
    %c0_i32 = arith.constant 0 : i32
    %c0_i32_0 = arith.constant 0 : i32
    %c0_i32_1 = arith.constant 0 : i32
    %c0_i32_2 = arith.constant 0 : i32
    return %arg1, %c0_i32, %c0_i32_0, %c0_i32_1 : i32, i32, i32, i32
  }
  func.func @transform_1(%arg0: i32, %arg1: i32) -> (i32, i32) {
    %c0_i32 = arith.constant 0 : i32
    %c0_i32_0 = arith.constant 0 : i32
    %c0_i32_1 = arith.constant 0 : i32
    return %c0_i32, %c0_i32_0 : i32, i32
  }
  func.func @transform_2(%arg0: i32, %arg1: i32) -> (i32, i32) {
    %c0_i32 = arith.constant 0 : i32
    %c0_i32_0 = arith.constant 0 : i32
    %c0_i32_1 = arith.constant 0 : i32
    return %c0_i32, %c0_i32_0 : i32, i32
  }
  func.func @transform_3(%arg0: i32, %arg1: i32) -> (i32, i32) {
    %c0_i32 = arith.constant 0 : i32
    %c0_i32_0 = arith.constant 0 : i32
    %c0_i32_1 = arith.constant 0 : i32
    return %c0_i32, %c0_i32_0 : i32, i32
  }
  func.func @transform_4(%arg0: i32, %arg1: i32) -> (i32, i32, i32) {
    %0 = arith.muli %arg0, %arg1 : i32
    %c0_i32 = arith.constant 0 : i32
    %c0_i32_0 = arith.constant 0 : i32
    %c0_i32_1 = arith.constant 0 : i32
    return %0, %c0_i32, %c0_i32_0 : i32, i32, i32
  }
}

</mosaic_0001>

<llo_original>
// kernel: recurrent_criss_cross_attention.3
$region0: #{recurrent_criss_cross_attention.3}
  #allocation0 [shape = 'u32[]', space=smem, size = 0x4, offset = 0x4, fixed_abs, tag = 'smem constant byte address 0x4 - core index']
  #allocation1 [shape = 'u32[72,128]{1,0:T(1,128)}', space=vmem, size = 0x9000, scoped, tag = 'internal scratch']
  #allocation2 [shape = 'f32[1,128]{1,0:T(1,128)}', space=vmem, size = 0x200, scoped, tag = 'scratch operand']
  #allocation3 [shape = 'f32[1,128]{1,0:T(1,128)}', space=vmem, size = 0x200, scoped, tag = 'scratch operand']
  %s0 = inlined_call_operand.vmem [shape: f32[2,18,18,4], index: 0, kind: input, shape index: {}]
  %s1 = inlined_call_operand.vmem [shape: f32[36,128], index: 1, kind: input, shape index: {}]
  %s2 = inlined_call_operand.vmem [shape: f32[1,128], index: 2, kind: input, shape index: {}]
  %s3 = inlined_call_operand.vmem [shape: f32[1,128], index: 3, kind: input, shape index: {}]
  %s4 = inlined_call_operand.vmem [shape: f32[2,256,128], index: 4, kind: output, shape index: {}]
  %s5 = sld [smem:[#allocation0]]
  $region65: #{recurrent_criss_cross_attention.3} parent=0
    _
  %s7 = ssub.s32 1, %s5
  %s8 = scalar_select 0, %s7, %s5
  loop: start=0, step=1, limit=6
  $region2: #{recurrent_criss_cross_attention.3} parent=0 // loop_pre_header
    _
  $region3: #{recurrent_criss_cross_attention.3} parent=0 // loop_header
    %s10 = sphi 0, %s14
    %p11 = scmp.ge.s32.totalorder %s10, 6
    %s17 = sphi 0, %s29
    %s18 = sphi 0, %s25
    %s19 = sphi 0, %s17
    %s20 = sphi 0, %s18
    %s21 = sphi 0, %s19
    %s22 = sphi 0, %s20
    %s32 = sphi 0, %s34
    %s35 = sphi 0, %s32
    %s36 = sphi 0, %s35
    %s52 = sphi 0, %s36
    %s56 = sphi 0, %s56
    %s58 = sphi 0, %s56
    %s59 = sphi 0, %s58
    %s73 = sphi 0, %s59
    %s77 = sphi 0, %s77
    %s79 = sphi 0, %s77
    %s80 = sphi 0, %s79
    %s94 = sphi 0, %s80
    %s98 = sphi 0, %s98
    %s100 = sphi 0, %s98
    %s101 = sphi 0, %s100
    %s115 = sphi 0, %s101
    %s123 = sphi 0, %s125
    %s126 = sphi 0, %s123
    %s127 = sphi 0, %s126
    %s143 = sphi 0, %s127
  $region4: #{recurrent_criss_cross_attention.3} parent=0 // loop_header_branch
    %13 = sbr.rel (%p11) target = $region8
  $region5: #{recurrent_criss_cross_attention.3} parent=0 // loop_body
    %s15 = ssub.s32 %s10, 1
    %s16 = ssub.s32 %s10, 2
    %s23 = sadd.s32 1, %s18
    %p24 = scmp.ge.s32.totalorder %s23, 2
    %s25 = scalar_select %p24, 0, %s23
    %s26 = sadd.s32 1, %s17
    %s27 = scalar_select %p24, %s26, %s17
    %p28 = scmp.ge.s32.totalorder %s27, 2
    %s29 = scalar_select %p28, 0, %s27
    %s30 = ssub.s32 %s18, %s25
    %p31 = scmp.eq.s32.totalorder %s30, 0
    %s33 = sadd.s32 %s32, 1
    %s34 = scalar_select %p31, %s32, %s33
    %p37 = pneg %p31
    %p38 = scmp.eq.s32.totalorder %s10, 3
    %p39 = por %p37, %p38
    %p40 = scmp.ne.s32.totalorder %s32, %s35
    %p41 = scmp.eq.s32.totalorder %s10, 0
    %p42 = por %p40, %p41
    %p43 = scmp.ne.s32.totalorder %s32, %s35
    %p44 = scmp.eq.s32.totalorder %s15, 3
    %p45 = por %p43, %p44
    %p46 = scmp.ne.s32.totalorder %s35, %s36
    %p47 = scmp.eq.s32.totalorder %s15, 0
    %p48 = por %p46, %p47
    %p49 = scmp.ne.s32.totalorder %s35, %s36
    %p50 = scmp.eq.s32.totalorder %s16, 3
    %p51 = por %p49, %p50
    %p53 = scmp.ne.s32.totalorder %s36, %s52
    %p54 = scmp.eq.s32.totalorder %s16, 0
    %p55 = por %p53, %p54
    %s57 = sadd.s32 %s56, 1
    %p60 = scmp.eq.s32.totalorder %s10, 3
    %p61 = scmp.ne.s32.totalorder %s56, %s58
    %p62 = scmp.eq.s32.totalorder %s10, 0
    %p63 = por %p61, %p62
    %p64 = scmp.ne.s32.totalorder %s56, %s58
    %p65 = scmp.eq.s32.totalorder %s15, 3
    %p66 = por %p64, %p65
    %p67 = scmp.ne.s32.totalorder %s58, %s59
    %p68 = scmp.eq.s32.totalorder %s15, 0
    %p69 = por %p67, %p68
    %p70 = scmp.ne.s32.totalorder %s58, %s59
    %p71 = scmp.eq.s32.totalorder %s16, 3
    %p72 = por %p70, %p71
    %p74 = scmp.ne.s32.totalorder %s59, %s73
    %p75 = scmp.eq.s32.totalorder %s16, 0
    %p76 = por %p74, %p75
    %s78 = sadd.s32 %s77, 1
    %p81 = scmp.eq.s32.totalorder %s10, 3
    %p82 = scmp.ne.s32.totalorder %s77, %s79
    %p83 = scmp.eq.s32.totalorder %s10, 0
    %p84 = por %p82, %p83
    %p85 = scmp.ne.s32.totalorder %s77, %s79
    %p86 = scmp.eq.s32.totalorder %s15, 3
    %p87 = por %p85, %p86
    %p88 = scmp.ne.s32.totalorder %s79, %s80
    %p89 = scmp.eq.s32.totalorder %s15, 0
    %p90 = por %p88, %p89
    %p91 = scmp.ne.s32.totalorder %s79, %s80
    %p92 = scmp.eq.s32.totalorder %s16, 3
    %p93 = por %p91, %p92
    %p95 = scmp.ne.s32.totalorder %s80, %s94
    %p96 = scmp.eq.s32.totalorder %s16, 0
    %p97 = por %p95, %p96
    %s99 = sadd.s32 %s98, 1
    %p102 = scmp.eq.s32.totalorder %s10, 3
    %p103 = scmp.ne.s32.totalorder %s98, %s100
    %p104 = scmp.eq.s32.totalorder %s10, 0
    %p105 = por %p103, %p104
    %p106 = scmp.ne.s32.totalorder %s98, %s100
    %p107 = scmp.eq.s32.totalorder %s15, 3
    %p108 = por %p106, %p107
    %p109 = scmp.ne.s32.totalorder %s100, %s101
    %p110 = scmp.eq.s32.totalorder %s15, 0
    %p111 = por %p109, %p110
    %p112 = scmp.ne.s32.totalorder %s100, %s101
    %p113 = scmp.eq.s32.totalorder %s16, 3
    %p114 = por %p112, %p113
    %p116 = scmp.ne.s32.totalorder %s101, %s115
    %p117 = scmp.eq.s32.totalorder %s16, 0
    %p118 = por %p116, %p117
    %s119 = smul.u32 %s17, %s18
    %s120 = smul.u32 %s29, %s25
    %s121 = ssub.s32 %s119, %s120
    %p122 = scmp.eq.s32.totalorder %s121, 0
    %s124 = sadd.s32 %s123, 1
    %s125 = scalar_select %p122, %s123, %s124
    %p128 = pneg %p122
    %p129 = scmp.eq.s32.totalorder %s10, 3
    %p130 = por %p128, %p129
    %p131 = scmp.ne.s32.totalorder %s123, %s126
    %p132 = scmp.eq.s32.totalorder %s10, 0
    %p133 = por %p131, %p132
    %p134 = scmp.ne.s32.totalorder %s123, %s126
    %p135 = scmp.eq.s32.totalorder %s15, 3
    %p136 = por %p134, %p135
    %p137 = scmp.ne.s32.totalorder %s126, %s127
    %p138 = scmp.eq.s32.totalorder %s15, 0
    %p139 = por %p137, %p138
    %p140 = scmp.ne.s32.totalorder %s126, %s127
    %p141 = scmp.eq.s32.totalorder %s16, 3
    %p142 = por %p140, %p141
    %p144 = scmp.ne.s32.totalorder %s127, %s143
    %p145 = scmp.eq.s32.totalorder %s16, 0
    %p146 = por %p144, %p145
    %p147 = scmp.le.s32.totalorder 1, %s10
    %p148 = scmp.lt.s32.totalorder %s10, 5
    %p149 = pnand %p147, %p148
    %p150 = pneg %p149
    // Predicated region
    $region9: #{recurrent_criss_cross_attention.3} parent=5 // pred_check
      _
    $region10: #{recurrent_criss_cross_attention.3} parent=5 // pred_check_branch
      %152 = sbr.rel (%p149) target = $region12
    $region11: #{recurrent_criss_cross_attention.3} parent=5 // pred_region
      %s153 = ssub.s32 %s10, 1
      // Predicated region
      $region13: #{recurrent_criss_cross_attention.3} parent=11 // pred_check
        %p154 = pneg %p69
      $region14: #{recurrent_criss_cross_attention.3} parent=11 // pred_check_branch
        %156 = sbr.rel (%p154) target = $region16
      $region15: #{recurrent_criss_cross_attention.3} parent=11 // pred_region
        _
      $region16: #{recurrent_criss_cross_attention.3} parent=11 // pred_fallthru
        _
      // Predicated region
      $region17: #{recurrent_criss_cross_attention.3} parent=11 // pred_check
        %p157 = pneg %p90
      $region18: #{recurrent_criss_cross_attention.3} parent=11 // pred_check_branch
        %159 = sbr.rel (%p157) target = $region20
      $region19: #{recurrent_criss_cross_attention.3} parent=11 // pred_region
        _
      $region20: #{recurrent_criss_cross_attention.3} parent=11 // pred_fallthru
        _
      // Predicated region
      $region21: #{recurrent_criss_cross_attention.3} parent=11 // pred_check
        %p160 = pneg %p111
      $region22: #{recurrent_criss_cross_attention.3} parent=11 // pred_check_branch
        %162 = sbr.rel (%p160) target = $region24
      $region23: #{recurrent_criss_cross_attention.3} parent=11 // pred_region
        _
      $region24: #{recurrent_criss_cross_attention.3} parent=11 // pred_fallthru
        _
    $region12: #{recurrent_criss_cross_attention.3} parent=5 // pred_fallthru
      _
    %p163 = scmp.lt.s32.totalorder %s10, 4
    // Predicated region
    $region25: #{recurrent_criss_cross_attention.3} parent=5 // pred_check
      %p164 = pneg %p163
    $region26: #{recurrent_criss_cross_attention.3} parent=5 // pred_check_branch
      %166 = sbr.rel (%p164) target = $region28
    $region27: #{recurrent_criss_cross_attention.3} parent=5 // pred_region
      // Predicated region
      $region29: #{recurrent_criss_cross_attention.3} parent=27 // pred_check
        %p167 = pneg %p42
      $region30: #{recurrent_criss_cross_attention.3} parent=27 // pred_check_branch
        %169 = sbr.rel (%p167) target = $region32
      $region31: #{recurrent_criss_cross_attention.3} parent=27 // pred_region
        %p170 = scmp.lt.s32.totalorder %s18, 1
        %s171 = scalar_select %p170, %s18, 1
        %s172 = smul.addr %s171, 54
        %s173 = smul.addr %s172, 8
        %s174 = scalar_lea.vmem %s0, %s173
      $region32: #{recurrent_criss_cross_attention.3} parent=27 // pred_fallthru
        _
    $region28: #{recurrent_criss_cross_attention.3} parent=5 // pred_fallthru
      _
    %p175 = scmp.le.s32.totalorder 1, %s10
    %p176 = scmp.lt.s32.totalorder %s10, 5
    %p177 = pnand %p175, %p176
    %p178 = pneg %p177
    // Predicated region
    $region33: #{recurrent_criss_cross_attention.3} parent=5 // pred_check
      _
    $region34: #{recurrent_criss_cross_attention.3} parent=5 // pred_check_branch
      %180 = sbr.rel (%p177) target = $region36
    $region35: #{recurrent_criss_cross_attention.3} parent=5 // pred_region
      %s181 = ssub.s32 %s10, 1
      %p182 = scmp.lt.s32.totalorder %s20, 1
      %s183 = scalar_select %p182, %s20, 1
      %s184 = smul.addr %s183, 54
      %s185 = smul.addr %s184, 8
      %s186 = scalar_lea.vmem %s0, %s185
      %p187 = pneg %p48
      %p188 = pneg %p45
      %p189 = pneg %p69
      %p190 = pneg %p66
      %p191 = pneg %p90
      %p192 = pneg %p87
      %p193 = pneg %p111
      %p194 = pneg %p108
      %p195 = pneg %p139
      %p196 = pneg %p136
      %s197 = smul.u32 %s19, %s20
      %p198 = scmp.lt.s32.totalorder %s197, 1
      %s199 = scalar_select %p198, %s197, 1
      %s200 = smul.addr %s199, 32
      %s201 = smul.addr %s200, 8
      %s202 = scalar_lea.vmem %s4, %s201
      %p203 = scmp.lt.s32.totalorder %s20, 1
      %s204 = scalar_select %p203, %s20, 1
      %s205 = smul.addr %s204, 54
      %s206 = smul.addr %s205, 8
      %s207 = scalar_lea.vmem %s0, %s206
      %s208 = smul.u32 %s19, %s20
      %p209 = scmp.lt.s32.totalorder %s208, 1
      %s210 = scalar_select %p209, %s208, 1
      %s211 = smul.addr %s210, 32
      %s212 = smul.addr %s211, 8
      %s213 = scalar_lea.vmem %s4, %s212
      %s214 = smul.u32 %s19, %s20
      %v215 = vld [vmem:[%s207] sm:$0xff]
      %v216 = vld [vmem:[%s207 + $0x8] sm:$0xff]
      %v217 = vld [vmem:[%s207 + $0x18] sm:$0xff]
      %v218 = vld [vmem:[%s207 + $0x20] sm:$0xff]
      %v219 = vld [vmem:[%s207 + $0x30] sm:$0xff]
      %v220 = vld [vmem:[%s207 + $0x38] sm:$0xff]
      %v221 = vld [vmem:[%s207 + $0x48] sm:$0xff]
      %v222 = vld [vmem:[%s207 + $0x50] sm:$0xff]
      %v223 = vld [vmem:[%s207 + $0x60] sm:$0xff]
      %v224 = vld [vmem:[%s207 + $0x68] sm:$0xff]
      %v225 = vld [vmem:[%s207 + $0x78] sm:$0xff]
      %v226 = vld [vmem:[%s207 + $0x80] sm:$0xff]
      %v227 = vld [vmem:[%s207 + $0x90] sm:$0xff]
      %v228 = vld [vmem:[%s207 + $0x98] sm:$0xff]
      %v229 = vld [vmem:[%s207 + $0xa8] sm:$0xff]
      %v230 = vld [vmem:[%s207 + $0xb0] sm:$0xff]
      %v231 = vld [vmem:[%s207 + $0xc0] sm:$0xff]
      %v232 = vld [vmem:[%s207 + $0xc8] sm:$0xff]
      %v233 = vld [vmem:[%s207 + $0xd8] sm:$0xff]
      %v234 = vld [vmem:[%s207 + $0xe0] sm:$0xff]
      %v235 = vld [vmem:[%s207 + $0xf0] sm:$0xff]
      %v236 = vld [vmem:[%s207 + $0xf8] sm:$0xff]
      %v237 = vld [vmem:[%s207 + $0x108] sm:$0xff]
      %v238 = vld [vmem:[%s207 + $0x110] sm:$0xff]
      %v239 = vld [vmem:[%s207 + $0x120] sm:$0xff]
      %v240 = vld [vmem:[%s207 + $0x128] sm:$0xff]
      %v241 = vld [vmem:[%s207 + $0x138] sm:$0xff]
      %v242 = vld [vmem:[%s207 + $0x140] sm:$0xff]
      %v243 = vld [vmem:[%s207 + $0x150] sm:$0xff]
      %v244 = vld [vmem:[%s207 + $0x158] sm:$0xff]
      %v245 = vld [vmem:[%s207 + $0x168] sm:$0xff]
      %v246 = vld [vmem:[%s207 + $0x170] sm:$0xff]
      %v247 = vld [vmem:[%s1] sm:$0xf]
      %v248 = vld [vmem:[%s207 + $0x1] sm:$0xff]
      %v249 = vld [vmem:[%s207 + $0x9] sm:$0xff]
      %v250 = vld [vmem:[%s207 + $0x19] sm:$0xff]
      %v251 = vld [vmem:[%s207 + $0x21] sm:$0xff]
      %v252 = vld [vmem:[%s207 + $0x31] sm:$0xff]
      %v253 = vld [vmem:[%s207 + $0x39] sm:$0xff]
      %v254 = vld [vmem:[%s207 + $0x49] sm:$0xff]
      %v255 = vld [vmem:[%s207 + $0x51] sm:$0xff]
      %v256 = vld [vmem:[%s207 + $0x61] sm:$0xff]
      %v257 = vld [vmem:[%s207 + $0x69] sm:$0xff]
      %v258 = vld [vmem:[%s207 + $0x79] sm:$0xff]
      %v259 = vld [vmem:[%s207 + $0x81] sm:$0xff]
      %v260 = vld [vmem:[%s207 + $0x91] sm:$0xff]
      %v261 = vld [vmem:[%s207 + $0x99] sm:$0xff]
      %v262 = vld [vmem:[%s207 + $0xa9] sm:$0xff]
      %v263 = vld [vmem:[%s207 + $0xb1] sm:$0xff]
      %v264 = vld [vmem:[%s207 + $0xc1] sm:$0xff]
      %v265 = vld [vmem:[%s207 + $0xc9] sm:$0xff]
      %v266 = vld [vmem:[%s207 + $0xd9] sm:$0xff]
      %v267 = vld [vmem:[%s207 + $0xe1] sm:$0xff]
      %v268 = vld [vmem:[%s207 + $0xf1] sm:$0xff]
      %v269 = vld [vmem:[%s207 + $0xf9] sm:$0xff]
      %v270 = vld [vmem:[%s207 + $0x109] sm:$0xff]
      %v271 = vld [vmem:[%s207 + $0x111] sm:$0xff]
      %v272 = vld [vmem:[%s207 + $0x121] sm:$0xff]
      %v273 = vld [vmem:[%s207 + $0x129] sm:$0xff]
      %v274 = vld [vmem:[%s207 + $0x139] sm:$0xff]
      %v275 = vld [vmem:[%s207 + $0x141] sm:$0xff]
      %v276 = vld [vmem:[%s207 + $0x151] sm:$0xff]
      %v277 = vld [vmem:[%s207 + $0x159] sm:$0xff]
      %v278 = vld [vmem:[%s207 + $0x169] sm:$0xff]
      %v279 = vld [vmem:[%s207 + $0x171] sm:$0xff]
      %v280 = vld [vmem:[%s1 + $0x4] sm:$0xf]
      %vm281 = vcmask 31744
      %v283 = vsel %vm281, %v248, 0
      %v286 = vsel %vm281, %v249, 0
      %v289 = vsel %vm281, %v250, 0
      %v292 = vsel %vm281, %v251, 0
      %v295 = vsel %vm281, %v252, 0
      %v298 = vsel %vm281, %v253, 0
      %v301 = vsel %vm281, %v254, 0
      %v304 = vsel %vm281, %v255, 0
      %v307 = vsel %vm281, %v256, 0
      %v310 = vsel %vm281, %v257, 0
      %v313 = vsel %vm281, %v258, 0
      %v316 = vsel %vm281, %v259, 0
      %v319 = vsel %vm281, %v260, 0
      %v322 = vsel %vm281, %v261, 0
      %v325 = vsel %vm281, %v262, 0
      %v328 = vsel %vm281, %v263, 0
      %v331 = vsel %vm281, %v264, 0
      %v334 = vsel %vm281, %v265, 0
      %v337 = vsel %vm281, %v266, 0
      %v340 = vsel %vm281, %v267, 0
      %v343 = vsel %vm281, %v268, 0
      %v346 = vsel %vm281, %v269, 0
      %v349 = vsel %vm281, %v270, 0
      %v352 = vsel %vm281, %v271, 0
      %v355 = vsel %vm281, %v272, 0
      %v358 = vsel %vm281, %v273, 0
      %v361 = vsel %vm281, %v274, 0
      %v364 = vsel %vm281, %v275, 0
      %v367 = vsel %vm281, %v276, 0
      %v370 = vsel %vm281, %v277, 0
      %v373 = vsel %vm281, %v278, 0
      %v376 = vsel %vm281, %v279, 0
      %vm378 = vcmask 1043456
      %v380 = vsel %vm378, %v280, 0
      %382 = vmatpush.msra.mxu0 0.0
      %383 = vmatpush.msra.mxu0 0.0
      %384 = vmatpush.msra.mxu0 0.0
      %385 = vmatpush.msra.mxu0 0.0
      %386 = vmatpush.msra.mxu0 0.0
      %387 = vmatpush.msra.mxu0 0.0
      %388 = vmatpush.msra.mxu0 0.0
      %389 = vmatpush.msra.mxu0 0.0
      %390 = vmatpush.msra.mxu0 0.0
      %391 = vmatpush.msra.mxu0 0.0
      %392 = vmatpush.msra.mxu0 0.0
      %393 = vmatpush.msra.mxu0 0.0
      %394 = vmatpush.msra.mxu0 0.0
      %395 = vmatpush.msra.mxu0 0.0
      %396 = vmatpush.msra.mxu0 0.0
      %397 = vmatpush.msra.mxu0 %v380
      %398 = vmatmul.f32.gmra.mxu0 %v283
      %v399 = vpop.f32.mrf.mxu0
      %v400 = vadd.f32 0.0, %v399
      %401 = vmatmul.f32.gmra.mxu0 %v286
      %v402 = vpop.f32.mrf.mxu0
      %v403 = vadd.f32 0.0, %v402
      %404 = vmatmul.f32.gmra.mxu0 %v289
      %v405 = vpop.f32.mrf.mxu0
      %v406 = vadd.f32 0.0, %v405
      %407 = vmatmul.f32.gmra.mxu0 %v292
      %v408 = vpop.f32.mrf.mxu0
      %v409 = vadd.f32 0.0, %v408
      %410 = vmatmul.f32.gmra.mxu0 %v295
      %v411 = vpop.f32.mrf.mxu0
      %v412 = vadd.f32 0.0, %v411
      %413 = vmatmul.f32.gmra.mxu0 %v298
      %v414 = vpop.f32.mrf.mxu0
      %v415 = vadd.f32 0.0, %v414
      %416 = vmatmul.f32.gmra.mxu0 %v301
      %v417 = vpop.f32.mrf.mxu0
      %v418 = vadd.f32 0.0, %v417
      %419 = vmatmul.f32.gmra.mxu0 %v304
      %v420 = vpop.f32.mrf.mxu0
      %v421 = vadd.f32 0.0, %v420
      %422 = vmatmul.f32.gmra.mxu0 %v307
      %v423 = vpop.f32.mrf.mxu0
      %v424 = vadd.f32 0.0, %v423
      %425 = vmatmul.f32.gmra.mxu0 %v310
      %v426 = vpop.f32.mrf.mxu0
      %v427 = vadd.f32 0.0, %v426
      %428 = vmatmul.f32.gmra.mxu0 %v313
      %v429 = vpop.f32.mrf.mxu0
      %v430 = vadd.f32 0.0, %v429
      %431 = vmatmul.f32.gmra.mxu0 %v316
      %v432 = vpop.f32.mrf.mxu0
      %v433 = vadd.f32 0.0, %v432
      %434 = vmatmul.f32.gmra.mxu0 %v319
      %v435 = vpop.f32.mrf.mxu0
      %v436 = vadd.f32 0.0, %v435
      %437 = vmatmul.f32.gmra.mxu0 %v322
      %v438 = vpop.f32.mrf.mxu0
      %v439 = vadd.f32 0.0, %v438
      %440 = vmatmul.f32.gmra.mxu0 %v325
      %v441 = vpop.f32.mrf.mxu0
      %v442 = vadd.f32 0.0, %v441
      %443 = vmatmul.f32.gmra.mxu0 %v328
      %v444 = vpop.f32.mrf.mxu0
      %v445 = vadd.f32 0.0, %v444
      %446 = vmatmul.f32.gmra.mxu0 %v331
      %v447 = vpop.f32.mrf.mxu0
      %v448 = vadd.f32 0.0, %v447
      %449 = vmatmul.f32.gmra.mxu0 %v334
      %v450 = vpop.f32.mrf.mxu0
      %v451 = vadd.f32 0.0, %v450
      %452 = vmatmul.f32.gmra.mxu0 %v337
      %v453 = vpop.f32.mrf.mxu0
      %v454 = vadd.f32 0.0, %v453
      %455 = vmatmul.f32.gmra.mxu0 %v340
      %v456 = vpop.f32.mrf.mxu0
      %v457 = vadd.f32 0.0, %v456
      %458 = vmatmul.f32.gmra.mxu0 %v343
      %v459 = vpop.f32.mrf.mxu0
      %v460 = vadd.f32 0.0, %v459
      %461 = vmatmul.f32.gmra.mxu0 %v346
      %v462 = vpop.f32.mrf.mxu0
      %v463 = vadd.f32 0.0, %v462
      %464 = vmatmul.f32.gmra.mxu0 %v349
      %v465 = vpop.f32.mrf.mxu0
      %v466 = vadd.f32 0.0, %v465
      %467 = vmatmul.f32.gmra.mxu0 %v352
      %v468 = vpop.f32.mrf.mxu0
      %v469 = vadd.f32 0.0, %v468
      %470 = vmatmul.f32.gmra.mxu0 %v355
      %v471 = vpop.f32.mrf.mxu0
      %v472 = vadd.f32 0.0, %v471
      %473 = vmatmul.f32.gmra.mxu0 %v358
      %v474 = vpop.f32.mrf.mxu0
      %v475 = vadd.f32 0.0, %v474
      %476 = vmatmul.f32.gmra.mxu0 %v361
      %v477 = vpop.f32.mrf.mxu0
      %v478 = vadd.f32 0.0, %v477
      %479 = vmatmul.f32.gmra.mxu0 %v364
      %v480 = vpop.f32.mrf.mxu0
      %v481 = vadd.f32 0.0, %v480
      %482 = vmatmul.f32.gmra.mxu0 %v367
      %v483 = vpop.f32.mrf.mxu0
      %v484 = vadd.f32 0.0, %v483
      %485 = vmatmul.f32.gmra.mxu0 %v370
      %v486 = vpop.f32.mrf.mxu0
      %v487 = vadd.f32 0.0, %v486
      %488 = vmatmul.f32.gmra.mxu0 %v373
      %v489 = vpop.f32.mrf.mxu0
      %v490 = vadd.f32 0.0, %v489
      %491 = vmatmul.f32.gmra.mxu0 %v376
      %v492 = vpop.f32.mrf.mxu0
      %v493 = vadd.f32 0.0, %v492
      %494 = vdwg.mxu0
      %v496 = vsel %vm281, %v215, 0
      %v499 = vsel %vm281, %v216, 0
      %v502 = vsel %vm281, %v217, 0
      %v505 = vsel %vm281, %v218, 0
      %v508 = vsel %vm281, %v219, 0
      %v511 = vsel %vm281, %v220, 0
      %v514 = vsel %vm281, %v221, 0
      %v517 = vsel %vm281, %v222, 0
      %v520 = vsel %vm281, %v223, 0
      %v523 = vsel %vm281, %v224, 0
      %v526 = vsel %vm281, %v225, 0
      %v529 = vsel %vm281, %v226, 0
      %v532 = vsel %vm281, %v227, 0
      %v535 = vsel %vm281, %v228, 0
      %v538 = vsel %vm281, %v229, 0
      %v541 = vsel %vm281, %v230, 0
      %v544 = vsel %vm281, %v231, 0
      %v547 = vsel %vm281, %v232, 0
      %v550 = vsel %vm281, %v233, 0
      %v553 = vsel %vm281, %v234, 0
      %v556 = vsel %vm281, %v235, 0
      %v559 = vsel %vm281, %v236, 0
      %v562 = vsel %vm281, %v237, 0
      %v565 = vsel %vm281, %v238, 0
      %v568 = vsel %vm281, %v239, 0
      %v571 = vsel %vm281, %v240, 0
      %v574 = vsel %vm281, %v241, 0
      %v577 = vsel %vm281, %v242, 0
      %v580 = vsel %vm281, %v243, 0
      %v583 = vsel %vm281, %v244, 0
      %v586 = vsel %vm281, %v245, 0
      %v589 = vsel %vm281, %v246, 0
      %v592 = vsel %vm378, %v247, 0
      %594 = vmatpush.msra.mxu0 0.0
      %595 = vmatpush.msra.mxu0 0.0
      %596 = vmatpush.msra.mxu0 0.0
      %597 = vmatpush.msra.mxu0 0.0
      %598 = vmatpush.msra.mxu0 0.0
      %599 = vmatpush.msra.mxu0 0.0
      %600 = vmatpush.msra.mxu0 0.0
      %601 = vmatpush.msra.mxu0 0.0
      %602 = vmatpush.msra.mxu0 0.0
      %603 = vmatpush.msra.mxu0 0.0
      %604 = vmatpush.msra.mxu0 0.0
      %605 = vmatpush.msra.mxu0 0.0
      %606 = vmatpush.msra.mxu0 0.0
      %607 = vmatpush.msra.mxu0 0.0
      %608 = vmatpush.msra.mxu0 0.0
      %609 = vmatpush.msra.mxu0 %v592
      %610 = vmatmul.f32.gmra.mxu0 %v496
      %v611 = vpop.f32.mrf.mxu0
      %v612 = vadd.f32 %v400, %v611
      %613 = vmatmul.f32.gmra.mxu0 %v499
      %v614 = vpop.f32.mrf.mxu0
      %v615 = vadd.f32 %v403, %v614
      %616 = vmatmul.f32.gmra.mxu0 %v502
      %v617 = vpop.f32.mrf.mxu0
      %v618 = vadd.f32 %v406, %v617
      %619 = vmatmul.f32.gmra.mxu0 %v505
      %v620 = vpop.f32.mrf.mxu0
      %v621 = vadd.f32 %v409, %v620
      %622 = vmatmul.f32.gmra.mxu0 %v508
      %v623 = vpop.f32.mrf.mxu0
      %v624 = vadd.f32 %v412, %v623
      %625 = vmatmul.f32.gmra.mxu0 %v511
      %v626 = vpop.f32.mrf.mxu0
      %v627 = vadd.f32 %v415, %v626
      %628 = vmatmul.f32.gmra.mxu0 %v514
      %v629 = vpop.f32.mrf.mxu0
      %v630 = vadd.f32 %v418, %v629
      %631 = vmatmul.f32.gmra.mxu0 %v517
      %v632 = vpop.f32.mrf.mxu0
      %v633 = vadd.f32 %v421, %v632
      %634 = vmatmul.f32.gmra.mxu0 %v520
      %v635 = vpop.f32.mrf.mxu0
      %v636 = vadd.f32 %v424, %v635
      %637 = vmatmul.f32.gmra.mxu0 %v523
      %v638 = vpop.f32.mrf.mxu0
      %v639 = vadd.f32 %v427, %v638
      %640 = vmatmul.f32.gmra.mxu0 %v526
      %v641 = vpop.f32.mrf.mxu0
      %v642 = vadd.f32 %v430, %v641
      %643 = vmatmul.f32.gmra.mxu0 %v529
      %v644 = vpop.f32.mrf.mxu0
      %v645 = vadd.f32 %v433, %v644
      %646 = vmatmul.f32.gmra.mxu0 %v532
      %v647 = vpop.f32.mrf.mxu0
      %v648 = vadd.f32 %v436, %v647
      %649 = vmatmul.f32.gmra.mxu0 %v535
      %v650 = vpop.f32.mrf.mxu0
      %v651 = vadd.f32 %v439, %v650
      %652 = vmatmul.f32.gmra.mxu0 %v538
      %v653 = vpop.f32.mrf.mxu0
      %v654 = vadd.f32 %v442, %v653
      %655 = vmatmul.f32.gmra.mxu0 %v541
      %v656 = vpop.f32.mrf.mxu0
      %v657 = vadd.f32 %v445, %v656
      %658 = vmatmul.f32.gmra.mxu0 %v544
      %v659 = vpop.f32.mrf.mxu0
      %v660 = vadd.f32 %v448, %v659
      %661 = vmatmul.f32.gmra.mxu0 %v547
      %v662 = vpop.f32.mrf.mxu0
      %v663 = vadd.f32 %v451, %v662
      %664 = vmatmul.f32.gmra.mxu0 %v550
      %v665 = vpop.f32.mrf.mxu0
      %v666 = vadd.f32 %v454, %v665
      %667 = vmatmul.f32.gmra.mxu0 %v553
      %v668 = vpop.f32.mrf.mxu0
      %v669 = vadd.f32 %v457, %v668
      %670 = vmatmul.f32.gmra.mxu0 %v556
      %v671 = vpop.f32.mrf.mxu0
      %v672 = vadd.f32 %v460, %v671
      %673 = vmatmul.f32.gmra.mxu0 %v559
      %v674 = vpop.f32.mrf.mxu0
      %v675 = vadd.f32 %v463, %v674
      %676 = vmatmul.f32.gmra.mxu0 %v562
      %v677 = vpop.f32.mrf.mxu0
      %v678 = vadd.f32 %v466, %v677
      %679 = vmatmul.f32.gmra.mxu0 %v565
      %v680 = vpop.f32.mrf.mxu0
      %v681 = vadd.f32 %v469, %v680
      %682 = vmatmul.f32.gmra.mxu0 %v568
      %v683 = vpop.f32.mrf.mxu0
      %v684 = vadd.f32 %v472, %v683
      %685 = vmatmul.f32.gmra.mxu0 %v571
      %v686 = vpop.f32.mrf.mxu0
      %v687 = vadd.f32 %v475, %v686
      %688 = vmatmul.f32.gmra.mxu0 %v574
      %v689 = vpop.f32.mrf.mxu0
      %v690 = vadd.f32 %v478, %v689
      %691 = vmatmul.f32.gmra.mxu0 %v577
      %v692 = vpop.f32.mrf.mxu0
      %v693 = vadd.f32 %v481, %v692
      %694 = vmatmul.f32.gmra.mxu0 %v580
      %v695 = vpop.f32.mrf.mxu0
      %v696 = vadd.f32 %v484, %v695
      %697 = vmatmul.f32.gmra.mxu0 %v583
      %v698 = vpop.f32.mrf.mxu0
      %v699 = vadd.f32 %v487, %v698
      %700 = vmatmul.f32.gmra.mxu0 %v586
      %v701 = vpop.f32.mrf.mxu0
      %v702 = vadd.f32 %v490, %v701
      %703 = vmatmul.f32.gmra.mxu0 %v589
      %v704 = vpop.f32.mrf.mxu0
      %v705 = vadd.f32 %v493, %v704
      %706 = vdwg.mxu0
      %v707 = vld [vmem:[%s207 + $0x2] sm:$0xff]
      %v708 = vld [vmem:[%s207 + $0xa] sm:$0xff]
      %v709 = vld [vmem:[%s207 + $0x1a] sm:$0xff]
      %v710 = vld [vmem:[%s207 + $0x22] sm:$0xff]
      %v711 = vld [vmem:[%s207 + $0x32] sm:$0xff]
      %v712 = vld [vmem:[%s207 + $0x3a] sm:$0xff]
      %v713 = vld [vmem:[%s207 + $0x4a] sm:$0xff]
      %v714 = vld [vmem:[%s207 + $0x52] sm:$0xff]
      %v715 = vld [vmem:[%s207 + $0x62] sm:$0xff]
      %v716 = vld [vmem:[%s207 + $0x6a] sm:$0xff]
      %v717 = vld [vmem:[%s207 + $0x7a] sm:$0xff]
      %v718 = vld [vmem:[%s207 + $0x82] sm:$0xff]
      %v719 = vld [vmem:[%s207 + $0x92] sm:$0xff]
      %v720 = vld [vmem:[%s207 + $0x9a] sm:$0xff]
      %v721 = vld [vmem:[%s207 + $0xaa] sm:$0xff]
      %v722 = vld [vmem:[%s207 + $0xb2] sm:$0xff]
      %v723 = vld [vmem:[%s207 + $0xc2] sm:$0xff]
      %v724 = vld [vmem:[%s207 + $0xca] sm:$0xff]
      %v725 = vld [vmem:[%s207 + $0xda] sm:$0xff]
      %v726 = vld [vmem:[%s207 + $0xe2] sm:$0xff]
      %v727 = vld [vmem:[%s207 + $0xf2] sm:$0xff]
      %v728 = vld [vmem:[%s207 + $0xfa] sm:$0xff]
      %v729 = vld [vmem:[%s207 + $0x10a] sm:$0xff]
      %v730 = vld [vmem:[%s207 + $0x112] sm:$0xff]
      %v731 = vld [vmem:[%s207 + $0x122] sm:$0xff]
      %v732 = vld [vmem:[%s207 + $0x12a] sm:$0xff]
      %v733 = vld [vmem:[%s207 + $0x13a] sm:$0xff]
      %v734 = vld [vmem:[%s207 + $0x142] sm:$0xff]
      %v735 = vld [vmem:[%s207 + $0x152] sm:$0xff]
      %v736 = vld [vmem:[%s207 + $0x15a] sm:$0xff]
      %v737 = vld [vmem:[%s207 + $0x16a] sm:$0xff]
      %v738 = vld [vmem:[%s207 + $0x172] sm:$0xff]
      %v739 = vld [vmem:[%s1 + $0x8] sm:$0xf]
      %v741 = vsel %vm281, %v707, 0
      %v744 = vsel %vm281, %v708, 0
      %v747 = vsel %vm281, %v709, 0
      %v750 = vsel %vm281, %v710, 0
      %v753 = vsel %vm281, %v711, 0
      %v756 = vsel %vm281, %v712, 0
      %v759 = vsel %vm281, %v713, 0
      %v762 = vsel %vm281, %v714, 0
      %v765 = vsel %vm281, %v715, 0
      %v768 = vsel %vm281, %v716, 0
      %v771 = vsel %vm281, %v717, 0
      %v774 = vsel %vm281, %v718, 0
      %v777 = vsel %vm281, %v719, 0
      %v780 = vsel %vm281, %v720, 0
      %v783 = vsel %vm281, %v721, 0
      %v786 = vsel %vm281, %v722, 0
      %v789 = vsel %vm281, %v723, 0
      %v792 = vsel %vm281, %v724, 0
      %v795 = vsel %vm281, %v725, 0
      %v798 = vsel %vm281, %v726, 0
      %v801 = vsel %vm281, %v727, 0
      %v804 = vsel %vm281, %v728, 0
      %v807 = vsel %vm281, %v729, 0
      %v810 = vsel %vm281, %v730, 0
      %v813 = vsel %vm281, %v731, 0
      %v816 = vsel %vm281, %v732, 0
      %v819 = vsel %vm281, %v733, 0
      %v822 = vsel %vm281, %v734, 0
      %v825 = vsel %vm281, %v735, 0
      %v828 = vsel %vm281, %v736, 0
      %v831 = vsel %vm281, %v737, 0
      %v834 = vsel %vm281, %v738, 0
      %v837 = vsel %vm378, %v739, 0
      %839 = vmatpush.msra.mxu0 0.0
      %840 = vmatpush.msra.mxu0 0.0
      %841 = vmatpush.msra.mxu0 0.0
      %842 = vmatpush.msra.mxu0 0.0
      %843 = vmatpush.msra.mxu0 0.0
      %844 = vmatpush.msra.mxu0 0.0
      %845 = vmatpush.msra.mxu0 0.0
      %846 = vmatpush.msra.mxu0 0.0
      %847 = vmatpush.msra.mxu0 0.0
      %848 = vmatpush.msra.mxu0 0.0
      %849 = vmatpush.msra.mxu0 0.0
      %850 = vmatpush.msra.mxu0 0.0
      %851 = vmatpush.msra.mxu0 0.0
      %852 = vmatpush.msra.mxu0 0.0
      %853 = vmatpush.msra.mxu0 0.0
      %854 = vmatpush.msra.mxu0 %v837
      %855 = vmatmul.f32.gmra.mxu0 %v741
      %v856 = vpop.f32.mrf.mxu0
      %v857 = vadd.f32 0.0, %v856
      %858 = vmatmul.f32.gmra.mxu0 %v744
      %v859 = vpop.f32.mrf.mxu0
      %v860 = vadd.f32 0.0, %v859
      %861 = vmatmul.f32.gmra.mxu0 %v747
      %v862 = vpop.f32.mrf.mxu0
      %v863 = vadd.f32 0.0, %v862
      %864 = vmatmul.f32.gmra.mxu0 %v750
      %v865 = vpop.f32.mrf.mxu0
      %v866 = vadd.f32 0.0, %v865
      %867 = vmatmul.f32.gmra.mxu0 %v753
      %v868 = vpop.f32.mrf.mxu0
      %v869 = vadd.f32 0.0, %v868
      %870 = vmatmul.f32.gmra.mxu0 %v756
      %v871 = vpop.f32.mrf.mxu0
      %v872 = vadd.f32 0.0, %v871
      %873 = vmatmul.f32.gmra.mxu0 %v759
      %v874 = vpop.f32.mrf.mxu0
      %v875 = vadd.f32 0.0, %v874
      %876 = vmatmul.f32.gmra.mxu0 %v762
      %v877 = vpop.f32.mrf.mxu0
      %v878 = vadd.f32 0.0, %v877
      %879 = vmatmul.f32.gmra.mxu0 %v765
      %v880 = vpop.f32.mrf.mxu0
      %v881 = vadd.f32 0.0, %v880
      %882 = vmatmul.f32.gmra.mxu0 %v768
      %v883 = vpop.f32.mrf.mxu0
      %v884 = vadd.f32 0.0, %v883
      %885 = vmatmul.f32.gmra.mxu0 %v771
      %v886 = vpop.f32.mrf.mxu0
      %v887 = vadd.f32 0.0, %v886
      %888 = vmatmul.f32.gmra.mxu0 %v774
      %v889 = vpop.f32.mrf.mxu0
      %v890 = vadd.f32 0.0, %v889
      %891 = vmatmul.f32.gmra.mxu0 %v777
      %v892 = vpop.f32.mrf.mxu0
      %v893 = vadd.f32 0.0, %v892
      %894 = vmatmul.f32.gmra.mxu0 %v780
      %v895 = vpop.f32.mrf.mxu0
      %v896 = vadd.f32 0.0, %v895
      %897 = vmatmul.f32.gmra.mxu0 %v783
      %v898 = vpop.f32.mrf.mxu0
      %v899 = vadd.f32 0.0, %v898
      %900 = vmatmul.f32.gmra.mxu0 %v786
      %v901 = vpop.f32.mrf.mxu0
      %v902 = vadd.f32 0.0, %v901
      %903 = vmatmul.f32.gmra.mxu0 %v789
      %v904 = vpop.f32.mrf.mxu0
      %v905 = vadd.f32 0.0, %v904
      %906 = vmatmul.f32.gmra.mxu0 %v792
      %v907 = vpop.f32.mrf.mxu0
      %v908 = vadd.f32 0.0, %v907
      %909 = vmatmul.f32.gmra.mxu0 %v795
      %v910 = vpop.f32.mrf.mxu0
      %v911 = vadd.f32 0.0, %v910
      %912 = vmatmul.f32.gmra.mxu0 %v798
      %v913 = vpop.f32.mrf.mxu0
      %v914 = vadd.f32 0.0, %v913
      %915 = vmatmul.f32.gmra.mxu0 %v801
      %v916 = vpop.f32.mrf.mxu0
      %v917 = vadd.f32 0.0, %v916
      %918 = vmatmul.f32.gmra.mxu0 %v804
      %v919 = vpop.f32.mrf.mxu0
      %v920 = vadd.f32 0.0, %v919
      %921 = vmatmul.f32.gmra.mxu0 %v807
      %v922 = vpop.f32.mrf.mxu0
      %v923 = vadd.f32 0.0, %v922
      %924 = vmatmul.f32.gmra.mxu0 %v810
      %v925 = vpop.f32.mrf.mxu0
      %v926 = vadd.f32 0.0, %v925
      %927 = vmatmul.f32.gmra.mxu0 %v813
      %v928 = vpop.f32.mrf.mxu0
      %v929 = vadd.f32 0.0, %v928
      %930 = vmatmul.f32.gmra.mxu0 %v816
      %v931 = vpop.f32.mrf.mxu0
      %v932 = vadd.f32 0.0, %v931
      %933 = vmatmul.f32.gmra.mxu0 %v819
      %v934 = vpop.f32.mrf.mxu0
      %v935 = vadd.f32 0.0, %v934
      %936 = vmatmul.f32.gmra.mxu0 %v822
      %v937 = vpop.f32.mrf.mxu0
      %v938 = vadd.f32 0.0, %v937
      %939 = vmatmul.f32.gmra.mxu0 %v825
      %v940 = vpop.f32.mrf.mxu0
      %v941 = vadd.f32 0.0, %v940
      %942 = vmatmul.f32.gmra.mxu0 %v828
      %v943 = vpop.f32.mrf.mxu0
      %v944 = vadd.f32 0.0, %v943
      %945 = vmatmul.f32.gmra.mxu0 %v831
      %v946 = vpop.f32.mrf.mxu0
      %v947 = vadd.f32 0.0, %v946
      %948 = vmatmul.f32.gmra.mxu0 %v834
      %v949 = vpop.f32.mrf.mxu0
      %v950 = vadd.f32 0.0, %v949
      %951 = vdwg.mxu0
      %v952 = vadd.f32 %v612, %v857
      %v953 = vadd.f32 %v615, %v860
      %v954 = vadd.f32 %v618, %v863
      %v955 = vadd.f32 %v621, %v866
      %v956 = vadd.f32 %v624, %v869
      %v957 = vadd.f32 %v627, %v872
      %v958 = vadd.f32 %v630, %v875
      %v959 = vadd.f32 %v633, %v878
      %v960 = vadd.f32 %v636, %v881
      %v961 = vadd.f32 %v639, %v884
      %v962 = vadd.f32 %v642, %v887
      %v963 = vadd.f32 %v645, %v890
      %v964 = vadd.f32 %v648, %v893
      %v965 = vadd.f32 %v651, %v896
      %v966 = vadd.f32 %v654, %v899
      %v967 = vadd.f32 %v657, %v902
      %v968 = vadd.f32 %v660, %v905
      %v969 = vadd.f32 %v663, %v908
      %v970 = vadd.f32 %v666, %v911
      %v971 = vadd.f32 %v669, %v914
      %v972 = vadd.f32 %v672, %v917
      %v973 = vadd.f32 %v675, %v920
      %v974 = vadd.f32 %v678, %v923
      %v975 = vadd.f32 %v681, %v926
      %v976 = vadd.f32 %v684, %v929
      %v977 = vadd.f32 %v687, %v932
      %v978 = vadd.f32 %v690, %v935
      %v979 = vadd.f32 %v693, %v938
      %v980 = vadd.f32 %v696, %v941
      %v981 = vadd.f32 %v699, %v944
      %v982 = vadd.f32 %v702, %v947
      %v983 = vadd.f32 %v705, %v950
      %s984 = scalar_lea.vmem %s207, 24
      %v985 = vld [vmem:[%s984] sm:$0xff]
      %v986 = vld [vmem:[%s984 + $0x8] sm:$0xff]
      %v987 = vld [vmem:[%s984 + $0x18] sm:$0xff]
      %v988 = vld [vmem:[%s984 + $0x20] sm:$0xff]
      %v989 = vld [vmem:[%s984 + $0x30] sm:$0xff]
      %v990 = vld [vmem:[%s984 + $0x38] sm:$0xff]
      %v991 = vld [vmem:[%s984 + $0x48] sm:$0xff]
      %v992 = vld [vmem:[%s984 + $0x50] sm:$0xff]
      %v993 = vld [vmem:[%s984 + $0x60] sm:$0xff]
      %v994 = vld [vmem:[%s984 + $0x68] sm:$0xff]
      %v995 = vld [vmem:[%s984 + $0x78] sm:$0xff]
      %v996 = vld [vmem:[%s984 + $0x80] sm:$0xff]
      %v997 = vld [vmem:[%s984 + $0x90] sm:$0xff]
      %v998 = vld [vmem:[%s984 + $0x98] sm:$0xff]
      %v999 = vld [vmem:[%s984 + $0xa8] sm:$0xff]
      %v1000 = vld [vmem:[%s984 + $0xb0] sm:$0xff]
      %v1001 = vld [vmem:[%s984 + $0xc0] sm:$0xff]
      %v1002 = vld [vmem:[%s984 + $0xc8] sm:$0xff]
      %v1003 = vld [vmem:[%s984 + $0xd8] sm:$0xff]
      %v1004 = vld [vmem:[%s984 + $0xe0] sm:$0xff]
      %v1005 = vld [vmem:[%s984 + $0xf0] sm:$0xff]
      %v1006 = vld [vmem:[%s984 + $0xf8] sm:$0xff]
      %v1007 = vld [vmem:[%s984 + $0x108] sm:$0xff]
      %v1008 = vld [vmem:[%s984 + $0x110] sm:$0xff]
      %v1009 = vld [vmem:[%s984 + $0x120] sm:$0xff]
      %v1010 = vld [vmem:[%s984 + $0x128] sm:$0xff]
      %v1011 = vld [vmem:[%s984 + $0x138] sm:$0xff]
      %v1012 = vld [vmem:[%s984 + $0x140] sm:$0xff]
      %v1013 = vld [vmem:[%s984 + $0x150] sm:$0xff]
      %v1014 = vld [vmem:[%s984 + $0x158] sm:$0xff]
      %v1015 = vld [vmem:[%s984 + $0x168] sm:$0xff]
      %v1016 = vld [vmem:[%s984 + $0x170] sm:$0xff]
      %v1017 = vld [vmem:[%s1 + $0xc] sm:$0xf]
      %v1019 = vsel %vm281, %v985, 0
      %v1022 = vsel %vm281, %v986, 0
      %v1025 = vsel %vm281, %v987, 0
      %v1028 = vsel %vm281, %v988, 0
      %v1031 = vsel %vm281, %v989, 0
      %v1034 = vsel %vm281, %v990, 0
      %v1037 = vsel %vm281, %v991, 0
      %v1040 = vsel %vm281, %v992, 0
      %v1043 = vsel %vm281, %v993, 0
      %v1046 = vsel %vm281, %v994, 0
      %v1049 = vsel %vm281, %v995, 0
      %v1052 = vsel %vm281, %v996, 0
      %v1055 = vsel %vm281, %v997, 0
      %v1058 = vsel %vm281, %v998, 0
      %v1061 = vsel %vm281, %v999, 0
      %v1064 = vsel %vm281, %v1000, 0
      %v1067 = vsel %vm281, %v1001, 0
      %v1070 = vsel %vm281, %v1002, 0
      %v1073 = vsel %vm281, %v1003, 0
      %v1076 = vsel %vm281, %v1004, 0
      %v1079 = vsel %vm281, %v1005, 0
      %v1082 = vsel %vm281, %v1006, 0
      %v1085 = vsel %vm281, %v1007, 0
      %v1088 = vsel %vm281, %v1008, 0
      %v1091 = vsel %vm281, %v1009, 0
      %v1094 = vsel %vm281, %v1010, 0
      %v1097 = vsel %vm281, %v1011, 0
      %v1100 = vsel %vm281, %v1012, 0
      %v1103 = vsel %vm281, %v1013, 0
      %v1106 = vsel %vm281, %v1014, 0
      %v1109 = vsel %vm281, %v1015, 0
      %v1112 = vsel %vm281, %v1016, 0
      %v1115 = vsel %vm378, %v1017, 0
      %1117 = vmatpush.msra.mxu0 0.0
      %1118 = vmatpush.msra.mxu0 0.0
      %1119 = vmatpush.msra.mxu0 0.0
      %1120 = vmatpush.msra.mxu0 0.0
      %1121 = vmatpush.msra.mxu0 0.0
      %1122 = vmatpush.msra.mxu0 0.0
      %1123 = vmatpush.msra.mxu0 0.0
      %1124 = vmatpush.msra.mxu0 0.0
      %1125 = vmatpush.msra.mxu0 0.0
      %1126 = vmatpush.msra.mxu0 0.0
      %1127 = vmatpush.msra.mxu0 0.0
      %1128 = vmatpush.msra.mxu0 0.0
      %1129 = vmatpush.msra.mxu0 0.0
      %1130 = vmatpush.msra.mxu0 0.0
      %1131 = vmatpush.msra.mxu0 0.0
      %1132 = vmatpush.msra.mxu0 %v1115
      %1133 = vmatmul.f32.gmra.mxu0 %v1019
      %v1134 = vpop.f32.mrf.mxu0
      %v1135 = vadd.f32 0.0, %v1134
      %1136 = vmatmul.f32.gmra.mxu0 %v1022
      %v1137 = vpop.f32.mrf.mxu0
      %v1138 = vadd.f32 0.0, %v1137
      %1139 = vmatmul.f32.gmra.mxu0 %v1025
      %v1140 = vpop.f32.mrf.mxu0
      %v1141 = vadd.f32 0.0, %v1140
      %1142 = vmatmul.f32.gmra.mxu0 %v1028
      %v1143 = vpop.f32.mrf.mxu0
      %v1144 = vadd.f32 0.0, %v1143
      %1145 = vmatmul.f32.gmra.mxu0 %v1031
      %v1146 = vpop.f32.mrf.mxu0
      %v1147 = vadd.f32 0.0, %v1146
      %1148 = vmatmul.f32.gmra.mxu0 %v1034
      %v1149 = vpop.f32.mrf.mxu0
      %v1150 = vadd.f32 0.0, %v1149
      %1151 = vmatmul.f32.gmra.mxu0 %v1037
      %v1152 = vpop.f32.mrf.mxu0
      %v1153 = vadd.f32 0.0, %v1152
      %1154 = vmatmul.f32.gmra.mxu0 %v1040
      %v1155 = vpop.f32.mrf.mxu0
      %v1156 = vadd.f32 0.0, %v1155
      %1157 = vmatmul.f32.gmra.mxu0 %v1043
      %v1158 = vpop.f32.mrf.mxu0
      %v1159 = vadd.f32 0.0, %v1158
      %1160 = vmatmul.f32.gmra.mxu0 %v1046
      %v1161 = vpop.f32.mrf.mxu0
      %v1162 = vadd.f32 0.0, %v1161
      %1163 = vmatmul.f32.gmra.mxu0 %v1049
      %v1164 = vpop.f32.mrf.mxu0
      %v1165 = vadd.f32 0.0, %v1164
      %1166 = vmatmul.f32.gmra.mxu0 %v1052
      %v1167 = vpop.f32.mrf.mxu0
      %v1168 = vadd.f32 0.0, %v1167
      %1169 = vmatmul.f32.gmra.mxu0 %v1055
      %v1170 = vpop.f32.mrf.mxu0
      %v1171 = vadd.f32 0.0, %v1170
      %1172 = vmatmul.f32.gmra.mxu0 %v1058
      %v1173 = vpop.f32.mrf.mxu0
      %v1174 = vadd.f32 0.0, %v1173
      %1175 = vmatmul.f32.gmra.mxu0 %v1061
      %v1176 = vpop.f32.mrf.mxu0
      %v1177 = vadd.f32 0.0, %v1176
      %1178 = vmatmul.f32.gmra.mxu0 %v1064
      %v1179 = vpop.f32.mrf.mxu0
      %v1180 = vadd.f32 0.0, %v1179
      %1181 = vmatmul.f32.gmra.mxu0 %v1067
      %v1182 = vpop.f32.mrf.mxu0
      %v1183 = vadd.f32 0.0, %v1182
      %1184 = vmatmul.f32.gmra.mxu0 %v1070
      %v1185 = vpop.f32.mrf.mxu0
      %v1186 = vadd.f32 0.0, %v1185
      %1187 = vmatmul.f32.gmra.mxu0 %v1073
      %v1188 = vpop.f32.mrf.mxu0
      %v1189 = vadd.f32 0.0, %v1188
      %1190 = vmatmul.f32.gmra.mxu0 %v1076
      %v1191 = vpop.f32.mrf.mxu0
      %v1192 = vadd.f32 0.0, %v1191
      %1193 = vmatmul.f32.gmra.mxu0 %v1079
      %v1194 = vpop.f32.mrf.mxu0
      %v1195 = vadd.f32 0.0, %v1194
      %1196 = vmatmul.f32.gmra.mxu0 %v1082
      %v1197 = vpop.f32.mrf.mxu0
      %v1198 = vadd.f32 0.0, %v1197
      %1199 = vmatmul.f32.gmra.mxu0 %v1085
      %v1200 = vpop.f32.mrf.mxu0
      %v1201 = vadd.f32 0.0, %v1200
      %1202 = vmatmul.f32.gmra.mxu0 %v1088
      %v1203 = vpop.f32.mrf.mxu0
      %v1204 = vadd.f32 0.0, %v1203
      %1205 = vmatmul.f32.gmra.mxu0 %v1091
      %v1206 = vpop.f32.mrf.mxu0
      %v1207 = vadd.f32 0.0, %v1206
      %1208 = vmatmul.f32.gmra.mxu0 %v1094
      %v1209 = vpop.f32.mrf.mxu0
      %v1210 = vadd.f32 0.0, %v1209
      %1211 = vmatmul.f32.gmra.mxu0 %v1097
      %v1212 = vpop.f32.mrf.mxu0
      %v1213 = vadd.f32 0.0, %v1212
      %1214 = vmatmul.f32.gmra.mxu0 %v1100
      %v1215 = vpop.f32.mrf.mxu0
      %v1216 = vadd.f32 0.0, %v1215
      %1217 = vmatmul.f32.gmra.mxu0 %v1103
      %v1218 = vpop.f32.mrf.mxu0
      %v1219 = vadd.f32 0.0, %v1218
      %1220 = vmatmul.f32.gmra.mxu0 %v1106
      %v1221 = vpop.f32.mrf.mxu0
      %v1222 = vadd.f32 0.0, %v1221
      %1223 = vmatmul.f32.gmra.mxu0 %v1109
      %v1224 = vpop.f32.mrf.mxu0
      %v1225 = vadd.f32 0.0, %v1224
      %1226 = vmatmul.f32.gmra.mxu0 %v1112
      %v1227 = vpop.f32.mrf.mxu0
      %v1228 = vadd.f32 0.0, %v1227
      %1229 = vdwg.mxu0
      %v1230 = vadd.f32 %v952, %v1135
      %v1231 = vadd.f32 %v953, %v1138
      %v1232 = vadd.f32 %v954, %v1141
      %v1233 = vadd.f32 %v955, %v1144
      %v1234 = vadd.f32 %v956, %v1147
      %v1235 = vadd.f32 %v957, %v1150
      %v1236 = vadd.f32 %v958, %v1153
      %v1237 = vadd.f32 %v959, %v1156
      %v1238 = vadd.f32 %v960, %v1159
      %v1239 = vadd.f32 %v961, %v1162
      %v1240 = vadd.f32 %v962, %v1165
      %v1241 = vadd.f32 %v963, %v1168
      %v1242 = vadd.f32 %v964, %v1171
      %v1243 = vadd.f32 %v965, %v1174
      %v1244 = vadd.f32 %v966, %v1177
      %v1245 = vadd.f32 %v967, %v1180
      %v1246 = vadd.f32 %v968, %v1183
      %v1247 = vadd.f32 %v969, %v1186
      %v1248 = vadd.f32 %v970, %v1189
      %v1249 = vadd.f32 %v971, %v1192
      %v1250 = vadd.f32 %v972, %v1195
      %v1251 = vadd.f32 %v973, %v1198
      %v1252 = vadd.f32 %v974, %v1201
      %v1253 = vadd.f32 %v975, %v1204
      %v1254 = vadd.f32 %v976, %v1207
      %v1255 = vadd.f32 %v977, %v1210
      %v1256 = vadd.f32 %v978, %v1213
      %v1257 = vadd.f32 %v979, %v1216
      %v1258 = vadd.f32 %v980, %v1219
      %v1259 = vadd.f32 %v981, %v1222
      %v1260 = vadd.f32 %v982, %v1225
      %v1261 = vadd.f32 %v983, %v1228
      %v1262 = vld [vmem:[%s984 + $0x1] sm:$0xff]
      %v1263 = vld [vmem:[%s984 + $0x9] sm:$0xff]
      %v1264 = vld [vmem:[%s984 + $0x19] sm:$0xff]
      %v1265 = vld [vmem:[%s984 + $0x21] sm:$0xff]
      %v1266 = vld [vmem:[%s984 + $0x31] sm:$0xff]
      %v1267 = vld [vmem:[%s984 + $0x39] sm:$0xff]
      %v1268 = vld [vmem:[%s984 + $0x49] sm:$0xff]
      %v1269 = vld [vmem:[%s984 + $0x51] sm:$0xff]
      %v1270 = vld [vmem:[%s984 + $0x61] sm:$0xff]
      %v1271 = vld [vmem:[%s984 + $0x69] sm:$0xff]
      %v1272 = vld [vmem:[%s984 + $0x79] sm:$0xff]
      %v1273 = vld [vmem:[%s984 + $0x81] sm:$0xff]
      %v1274 = vld [vmem:[%s984 + $0x91] sm:$0xff]
      %v1275 = vld [vmem:[%s984 + $0x99] sm:$0xff]
      %v1276 = vld [vmem:[%s984 + $0xa9] sm:$0xff]
      %v1277 = vld [vmem:[%s984 + $0xb1] sm:$0xff]
      %v1278 = vld [vmem:[%s984 + $0xc1] sm:$0xff]
      %v1279 = vld [vmem:[%s984 + $0xc9] sm:$0xff]
      %v1280 = vld [vmem:[%s984 + $0xd9] sm:$0xff]
      %v1281 = vld [vmem:[%s984 + $0xe1] sm:$0xff]
      %v1282 = vld [vmem:[%s984 + $0xf1] sm:$0xff]
      %v1283 = vld [vmem:[%s984 + $0xf9] sm:$0xff]
      %v1284 = vld [vmem:[%s984 + $0x109] sm:$0xff]
      %v1285 = vld [vmem:[%s984 + $0x111] sm:$0xff]
      %v1286 = vld [vmem:[%s984 + $0x121] sm:$0xff]
      %v1287 = vld [vmem:[%s984 + $0x129] sm:$0xff]
      %v1288 = vld [vmem:[%s984 + $0x139] sm:$0xff]
      %v1289 = vld [vmem:[%s984 + $0x141] sm:$0xff]
      %v1290 = vld [vmem:[%s984 + $0x151] sm:$0xff]
      %v1291 = vld [vmem:[%s984 + $0x159] sm:$0xff]
      %v1292 = vld [vmem:[%s984 + $0x169] sm:$0xff]
      %v1293 = vld [vmem:[%s984 + $0x171] sm:$0xff]
      %v1294 = vld [vmem:[%s1 + $0x10] sm:$0xf]
      %v1296 = vsel %vm281, %v1262, 0
      %v1299 = vsel %vm281, %v1263, 0
      %v1302 = vsel %vm281, %v1264, 0
      %v1305 = vsel %vm281, %v1265, 0
      %v1308 = vsel %vm281, %v1266, 0
      %v1311 = vsel %vm281, %v1267, 0
      %v1314 = vsel %vm281, %v1268, 0
      %v1317 = vsel %vm281, %v1269, 0
      %v1320 = vsel %vm281, %v1270, 0
      %v1323 = vsel %vm281, %v1271, 0
      %v1326 = vsel %vm281, %v1272, 0
      %v1329 = vsel %vm281, %v1273, 0
      %v1332 = vsel %vm281, %v1274, 0
      %v1335 = vsel %vm281, %v1275, 0
      %v1338 = vsel %vm281, %v1276, 0
      %v1341 = vsel %vm281, %v1277, 0
      %v1344 = vsel %vm281, %v1278, 0
      %v1347 = vsel %vm281, %v1279, 0
      %v1350 = vsel %vm281, %v1280, 0
      %v1353 = vsel %vm281, %v1281, 0
      %v1356 = vsel %vm281, %v1282, 0
      %v1359 = vsel %vm281, %v1283, 0
      %v1362 = vsel %vm281, %v1284, 0
      %v1365 = vsel %vm281, %v1285, 0
      %v1368 = vsel %vm281, %v1286, 0
      %v1371 = vsel %vm281, %v1287, 0
      %v1374 = vsel %vm281, %v1288, 0
      %v1377 = vsel %vm281, %v1289, 0
      %v1380 = vsel %vm281, %v1290, 0
      %v1383 = vsel %vm281, %v1291, 0
      %v1386 = vsel %vm281, %v1292, 0
      %v1389 = vsel %vm281, %v1293, 0
      %v1392 = vsel %vm378, %v1294, 0
      %1394 = vmatpush.msra.mxu0 0.0
      %1395 = vmatpush.msra.mxu0 0.0
      %1396 = vmatpush.msra.mxu0 0.0
      %1397 = vmatpush.msra.mxu0 0.0
      %1398 = vmatpush.msra.mxu0 0.0
      %1399 = vmatpush.msra.mxu0 0.0
      %1400 = vmatpush.msra.mxu0 0.0
      %1401 = vmatpush.msra.mxu0 0.0
      %1402 = vmatpush.msra.mxu0 0.0
      %1403 = vmatpush.msra.mxu0 0.0
      %1404 = vmatpush.msra.mxu0 0.0
      %1405 = vmatpush.msra.mxu0 0.0
      %1406 = vmatpush.msra.mxu0 0.0
      %1407 = vmatpush.msra.mxu0 0.0
      %1408 = vmatpush.msra.mxu0 0.0
      %1409 = vmatpush.msra.mxu0 %v1392
      %1410 = vmatmul.f32.gmra.mxu0 %v1296
      %v1411 = vpop.f32.mrf.mxu0
      %v1412 = vadd.f32 0.0, %v1411
      %1413 = vmatmul.f32.gmra.mxu0 %v1299
      %v1414 = vpop.f32.mrf.mxu0
      %v1415 = vadd.f32 0.0, %v1414
      %1416 = vmatmul.f32.gmra.mxu0 %v1302
      %v1417 = vpop.f32.mrf.mxu0
      %v1418 = vadd.f32 0.0, %v1417
      %1419 = vmatmul.f32.gmra.mxu0 %v1305
      %v1420 = vpop.f32.mrf.mxu0
      %v1421 = vadd.f32 0.0, %v1420
      %1422 = vmatmul.f32.gmra.mxu0 %v1308
      %v1423 = vpop.f32.mrf.mxu0
      %v1424 = vadd.f32 0.0, %v1423
      %1425 = vmatmul.f32.gmra.mxu0 %v1311
      %v1426 = vpop.f32.mrf.mxu0
      %v1427 = vadd.f32 0.0, %v1426
      %1428 = vmatmul.f32.gmra.mxu0 %v1314
      %v1429 = vpop.f32.mrf.mxu0
      %v1430 = vadd.f32 0.0, %v1429
      %1431 = vmatmul.f32.gmra.mxu0 %v1317
      %v1432 = vpop.f32.mrf.mxu0
      %v1433 = vadd.f32 0.0, %v1432
      %1434 = vmatmul.f32.gmra.mxu0 %v1320
      %v1435 = vpop.f32.mrf.mxu0
      %v1436 = vadd.f32 0.0, %v1435
      %1437 = vmatmul.f32.gmra.mxu0 %v1323
      %v1438 = vpop.f32.mrf.mxu0
      %v1439 = vadd.f32 0.0, %v1438
      %1440 = vmatmul.f32.gmra.mxu0 %v1326
      %v1441 = vpop.f32.mrf.mxu0
      %v1442 = vadd.f32 0.0, %v1441
      %1443 = vmatmul.f32.gmra.mxu0 %v1329
      %v1444 = vpop.f32.mrf.mxu0
      %v1445 = vadd.f32 0.0, %v1444
      %1446 = vmatmul.f32.gmra.mxu0 %v1332
      %v1447 = vpop.f32.mrf.mxu0
      %v1448 = vadd.f32 0.0, %v1447
      %1449 = vmatmul.f32.gmra.mxu0 %v1335
      %v1450 = vpop.f32.mrf.mxu0
      %v1451 = vadd.f32 0.0, %v1450
      %1452 = vmatmul.f32.gmra.mxu0 %v1338
      %v1453 = vpop.f32.mrf.mxu0
      %v1454 = vadd.f32 0.0, %v1453
      %1455 = vmatmul.f32.gmra.mxu0 %v1341
      %v1456 = vpop.f32.mrf.mxu0
      %v1457 = vadd.f32 0.0, %v1456
      %1458 = vmatmul.f32.gmra.mxu0 %v1344
      %v1459 = vpop.f32.mrf.mxu0
      %v1460 = vadd.f32 0.0, %v1459
      %1461 = vmatmul.f32.gmra.mxu0 %v1347
      %v1462 = vpop.f32.mrf.mxu0
      %v1463 = vadd.f32 0.0, %v1462
      %1464 = vmatmul.f32.gmra.mxu0 %v1350
      %v1465 = vpop.f32.mrf.mxu0
      %v1466 = vadd.f32 0.0, %v1465
      %1467 = vmatmul.f32.gmra.mxu0 %v1353
      %v1468 = vpop.f32.mrf.mxu0
      %v1469 = vadd.f32 0.0, %v1468
      %1470 = vmatmul.f32.gmra.mxu0 %v1356
      %v1471 = vpop.f32.mrf.mxu0
      %v1472 = vadd.f32 0.0, %v1471
      %1473 = vmatmul.f32.gmra.mxu0 %v1359
      %v1474 = vpop.f32.mrf.mxu0
      %v1475 = vadd.f32 0.0, %v1474
      %1476 = vmatmul.f32.gmra.mxu0 %v1362
      %v1477 = vpop.f32.mrf.mxu0
      %v1478 = vadd.f32 0.0, %v1477
      %1479 = vmatmul.f32.gmra.mxu0 %v1365
      %v1480 = vpop.f32.mrf.mxu0
      %v1481 = vadd.f32 0.0, %v1480
      %1482 = vmatmul.f32.gmra.mxu0 %v1368
      %v1483 = vpop.f32.mrf.mxu0
      %v1484 = vadd.f32 0.0, %v1483
      %1485 = vmatmul.f32.gmra.mxu0 %v1371
      %v1486 = vpop.f32.mrf.mxu0
      %v1487 = vadd.f32 0.0, %v1486
      %1488 = vmatmul.f32.gmra.mxu0 %v1374
      %v1489 = vpop.f32.mrf.mxu0
      %v1490 = vadd.f32 0.0, %v1489
      %1491 = vmatmul.f32.gmra.mxu0 %v1377
      %v1492 = vpop.f32.mrf.mxu0
      %v1493 = vadd.f32 0.0, %v1492
      %1494 = vmatmul.f32.gmra.mxu0 %v1380
      %v1495 = vpop.f32.mrf.mxu0
      %v1496 = vadd.f32 0.0, %v1495
      %1497 = vmatmul.f32.gmra.mxu0 %v1383
      %v1498 = vpop.f32.mrf.mxu0
      %v1499 = vadd.f32 0.0, %v1498
      %1500 = vmatmul.f32.gmra.mxu0 %v1386
      %v1501 = vpop.f32.mrf.mxu0
      %v1502 = vadd.f32 0.0, %v1501
      %1503 = vmatmul.f32.gmra.mxu0 %v1389
      %v1504 = vpop.f32.mrf.mxu0
      %v1505 = vadd.f32 0.0, %v1504
      %1506 = vdwg.mxu0
      %v1507 = vadd.f32 %v1230, %v1412
      %v1508 = vadd.f32 %v1231, %v1415
      %v1509 = vadd.f32 %v1232, %v1418
      %v1510 = vadd.f32 %v1233, %v1421
      %v1511 = vadd.f32 %v1234, %v1424
      %v1512 = vadd.f32 %v1235, %v1427
      %v1513 = vadd.f32 %v1236, %v1430
      %v1514 = vadd.f32 %v1237, %v1433
      %v1515 = vadd.f32 %v1238, %v1436
      %v1516 = vadd.f32 %v1239, %v1439
      %v1517 = vadd.f32 %v1240, %v1442
      %v1518 = vadd.f32 %v1241, %v1445
      %v1519 = vadd.f32 %v1242, %v1448
      %v1520 = vadd.f32 %v1243, %v1451
      %v1521 = vadd.f32 %v1244, %v1454
      %v1522 = vadd.f32 %v1245, %v1457
      %v1523 = vadd.f32 %v1246, %v1460
      %v1524 = vadd.f32 %v1247, %v1463
      %v1525 = vadd.f32 %v1248, %v1466
      %v1526 = vadd.f32 %v1249, %v1469
      %v1527 = vadd.f32 %v1250, %v1472
      %v1528 = vadd.f32 %v1251, %v1475
      %v1529 = vadd.f32 %v1252, %v1478
      %v1530 = vadd.f32 %v1253, %v1481
      %v1531 = vadd.f32 %v1254, %v1484
      %v1532 = vadd.f32 %v1255, %v1487
      %v1533 = vadd.f32 %v1256, %v1490
      %v1534 = vadd.f32 %v1257, %v1493
      %v1535 = vadd.f32 %v1258, %v1496
      %v1536 = vadd.f32 %v1259, %v1499
      %v1537 = vadd.f32 %v1260, %v1502
      %v1538 = vadd.f32 %v1261, %v1505
      %v1539 = vld [vmem:[%s984 + $0x2] sm:$0xff]
      %v1540 = vld [vmem:[%s984 + $0xa] sm:$0xff]
      %v1541 = vld [vmem:[%s984 + $0x1a] sm:$0xff]
      %v1542 = vld [vmem:[%s984 + $0x22] sm:$0xff]
      %v1543 = vld [vmem:[%s984 + $0x32] sm:$0xff]
      %v1544 = vld [vmem:[%s984 + $0x3a] sm:$0xff]
      %v1545 = vld [vmem:[%s984 + $0x4a] sm:$0xff]
      %v1546 = vld [vmem:[%s984 + $0x52] sm:$0xff]
      %v1547 = vld [vmem:[%s984 + $0x62] sm:$0xff]
      %v1548 = vld [vmem:[%s984 + $0x6a] sm:$0xff]
      %v1549 = vld [vmem:[%s984 + $0x7a] sm:$0xff]
      %v1550 = vld [vmem:[%s984 + $0x82] sm:$0xff]
      %v1551 = vld [vmem:[%s984 + $0x92] sm:$0xff]
      %v1552 = vld [vmem:[%s984 + $0x9a] sm:$0xff]
      %v1553 = vld [vmem:[%s984 + $0xaa] sm:$0xff]
      %v1554 = vld [vmem:[%s984 + $0xb2] sm:$0xff]
      %v1555 = vld [vmem:[%s984 + $0xc2] sm:$0xff]
      %v1556 = vld [vmem:[%s984 + $0xca] sm:$0xff]
      %v1557 = vld [vmem:[%s984 + $0xda] sm:$0xff]
      %v1558 = vld [vmem:[%s984 + $0xe2] sm:$0xff]
      %v1559 = vld [vmem:[%s984 + $0xf2] sm:$0xff]
      %v1560 = vld [vmem:[%s984 + $0xfa] sm:$0xff]
      %v1561 = vld [vmem:[%s984 + $0x10a] sm:$0xff]
      %v1562 = vld [vmem:[%s984 + $0x112] sm:$0xff]
      %v1563 = vld [vmem:[%s984 + $0x122] sm:$0xff]
      %v1564 = vld [vmem:[%s984 + $0x12a] sm:$0xff]
      %v1565 = vld [vmem:[%s984 + $0x13a] sm:$0xff]
      %v1566 = vld [vmem:[%s984 + $0x142] sm:$0xff]
      %v1567 = vld [vmem:[%s984 + $0x152] sm:$0xff]
      %v1568 = vld [vmem:[%s984 + $0x15a] sm:$0xff]
      %v1569 = vld [vmem:[%s984 + $0x16a] sm:$0xff]
      %v1570 = vld [vmem:[%s984 + $0x172] sm:$0xff]
      %v1571 = vld [vmem:[%s1 + $0x14] sm:$0xf]
      %v1573 = vsel %vm281, %v1539, 0
      %v1576 = vsel %vm281, %v1540, 0
      %v1579 = vsel %vm281, %v1541, 0
      %v1582 = vsel %vm281, %v1542, 0
      %v1585 = vsel %vm281, %v1543, 0
      %v1588 = vsel %vm281, %v1544, 0
      %v1591 = vsel %vm281, %v1545, 0
      %v1594 = vsel %vm281, %v1546, 0
      %v1597 = vsel %vm281, %v1547, 0
      %v1600 = vsel %vm281, %v1548, 0
      %v1603 = vsel %vm281, %v1549, 0
      %v1606 = vsel %vm281, %v1550, 0
      %v1609 = vsel %vm281, %v1551, 0
      %v1612 = vsel %vm281, %v1552, 0
      %v1615 = vsel %vm281, %v1553, 0
      %v1618 = vsel %vm281, %v1554, 0
      %v1621 = vsel %vm281, %v1555, 0
      %v1624 = vsel %vm281, %v1556, 0
      %v1627 = vsel %vm281, %v1557, 0
      %v1630 = vsel %vm281, %v1558, 0
      %v1633 = vsel %vm281, %v1559, 0
      %v1636 = vsel %vm281, %v1560, 0
      %v1639 = vsel %vm281, %v1561, 0
      %v1642 = vsel %vm281, %v1562, 0
      %v1645 = vsel %vm281, %v1563, 0
      %v1648 = vsel %vm281, %v1564, 0
      %v1651 = vsel %vm281, %v1565, 0
      %v1654 = vsel %vm281, %v1566, 0
      %v1657 = vsel %vm281, %v1567, 0
      %v1660 = vsel %vm281, %v1568, 0
      %v1663 = vsel %vm281, %v1569, 0
      %v1666 = vsel %vm281, %v1570, 0
      %v1669 = vsel %vm378, %v1571, 0
      %1671 = vmatpush.msra.mxu0 0.0
      %1672 = vmatpush.msra.mxu0 0.0
      %1673 = vmatpush.msra.mxu0 0.0
      %1674 = vmatpush.msra.mxu0 0.0
      %1675 = vmatpush.msra.mxu0 0.0
      %1676 = vmatpush.msra.mxu0 0.0
      %1677 = vmatpush.msra.mxu0 0.0
      %1678 = vmatpush.msra.mxu0 0.0
      %1679 = vmatpush.msra.mxu0 0.0
      %1680 = vmatpush.msra.mxu0 0.0
      %1681 = vmatpush.msra.mxu0 0.0
      %1682 = vmatpush.msra.mxu0 0.0
      %1683 = vmatpush.msra.mxu0 0.0
      %1684 = vmatpush.msra.mxu0 0.0
      %1685 = vmatpush.msra.mxu0 0.0
      %1686 = vmatpush.msra.mxu0 %v1669
      %1687 = vmatmul.f32.gmra.mxu0 %v1573
      %v1688 = vpop.f32.mrf.mxu0
      %v1689 = vadd.f32 0.0, %v1688
      %1690 = vmatmul.f32.gmra.mxu0 %v1576
      %v1691 = vpop.f32.mrf.mxu0
      %v1692 = vadd.f32 0.0, %v1691
      %1693 = vmatmul.f32.gmra.mxu0 %v1579
      %v1694 = vpop.f32.mrf.mxu0
      %v1695 = vadd.f32 0.0, %v1694
      %1696 = vmatmul.f32.gmra.mxu0 %v1582
      %v1697 = vpop.f32.mrf.mxu0
      %v1698 = vadd.f32 0.0, %v1697
      %1699 = vmatmul.f32.gmra.mxu0 %v1585
      %v1700 = vpop.f32.mrf.mxu0
      %v1701 = vadd.f32 0.0, %v1700
      %1702 = vmatmul.f32.gmra.mxu0 %v1588
      %v1703 = vpop.f32.mrf.mxu0
      %v1704 = vadd.f32 0.0, %v1703
      %1705 = vmatmul.f32.gmra.mxu0 %v1591
      %v1706 = vpop.f32.mrf.mxu0
      %v1707 = vadd.f32 0.0, %v1706
      %1708 = vmatmul.f32.gmra.mxu0 %v1594
      %v1709 = vpop.f32.mrf.mxu0
      %v1710 = vadd.f32 0.0, %v1709
      %1711 = vmatmul.f32.gmra.mxu0 %v1597
      %v1712 = vpop.f32.mrf.mxu0
      %v1713 = vadd.f32 0.0, %v1712
      %1714 = vmatmul.f32.gmra.mxu0 %v1600
      %v1715 = vpop.f32.mrf.mxu0
      %v1716 = vadd.f32 0.0, %v1715
      %1717 = vmatmul.f32.gmra.mxu0 %v1603
      %v1718 = vpop.f32.mrf.mxu0
      %v1719 = vadd.f32 0.0, %v1718
      %1720 = vmatmul.f32.gmra.mxu0 %v1606
      %v1721 = vpop.f32.mrf.mxu0
      %v1722 = vadd.f32 0.0, %v1721
      %1723 = vmatmul.f32.gmra.mxu0 %v1609
      %v1724 = vpop.f32.mrf.mxu0
      %v1725 = vadd.f32 0.0, %v1724
      %1726 = vmatmul.f32.gmra.mxu0 %v1612
      %v1727 = vpop.f32.mrf.mxu0
      %v1728 = vadd.f32 0.0, %v1727
      %1729 = vmatmul.f32.gmra.mxu0 %v1615
      %v1730 = vpop.f32.mrf.mxu0
      %v1731 = vadd.f32 0.0, %v1730
      %1732 = vmatmul.f32.gmra.mxu0 %v1618
      %v1733 = vpop.f32.mrf.mxu0
      %v1734 = vadd.f32 0.0, %v1733
      %1735 = vmatmul.f32.gmra.mxu0 %v1621
      %v1736 = vpop.f32.mrf.mxu0
      %v1737 = vadd.f32 0.0, %v1736
      %1738 = vmatmul.f32.gmra.mxu0 %v1624
      %v1739 = vpop.f32.mrf.mxu0
      %v1740 = vadd.f32 0.0, %v1739
      %1741 = vmatmul.f32.gmra.mxu0 %v1627
      %v1742 = vpop.f32.mrf.mxu0
      %v1743 = vadd.f32 0.0, %v1742
      %1744 = vmatmul.f32.gmra.mxu0 %v1630
      %v1745 = vpop.f32.mrf.mxu0
      %v1746 = vadd.f32 0.0, %v1745
      %1747 = vmatmul.f32.gmra.mxu0 %v1633
      %v1748 = vpop.f32.mrf.mxu0
      %v1749 = vadd.f32 0.0, %v1748
      %1750 = vmatmul.f32.gmra.mxu0 %v1636
      %v1751 = vpop.f32.mrf.mxu0
      %v1752 = vadd.f32 0.0, %v1751
      %1753 = vmatmul.f32.gmra.mxu0 %v1639
      %v1754 = vpop.f32.mrf.mxu0
      %v1755 = vadd.f32 0.0, %v1754
      %1756 = vmatmul.f32.gmra.mxu0 %v1642
      %v1757 = vpop.f32.mrf.mxu0
      %v1758 = vadd.f32 0.0, %v1757
      %1759 = vmatmul.f32.gmra.mxu0 %v1645
      %v1760 = vpop.f32.mrf.mxu0
      %v1761 = vadd.f32 0.0, %v1760
      %1762 = vmatmul.f32.gmra.mxu0 %v1648
      %v1763 = vpop.f32.mrf.mxu0
      %v1764 = vadd.f32 0.0, %v1763
      %1765 = vmatmul.f32.gmra.mxu0 %v1651
      %v1766 = vpop.f32.mrf.mxu0
      %v1767 = vadd.f32 0.0, %v1766
      %1768 = vmatmul.f32.gmra.mxu0 %v1654
      %v1769 = vpop.f32.mrf.mxu0
      %v1770 = vadd.f32 0.0, %v1769
      %1771 = vmatmul.f32.gmra.mxu0 %v1657
      %v1772 = vpop.f32.mrf.mxu0
      %v1773 = vadd.f32 0.0, %v1772
      %1774 = vmatmul.f32.gmra.mxu0 %v1660
      %v1775 = vpop.f32.mrf.mxu0
      %v1776 = vadd.f32 0.0, %v1775
      %1777 = vmatmul.f32.gmra.mxu0 %v1663
      %v1778 = vpop.f32.mrf.mxu0
      %v1779 = vadd.f32 0.0, %v1778
      %1780 = vmatmul.f32.gmra.mxu0 %v1666
      %v1781 = vpop.f32.mrf.mxu0
      %v1782 = vadd.f32 0.0, %v1781
      %1783 = vdwg.mxu0
      %v1784 = vadd.f32 %v1507, %v1689
      %v1785 = vadd.f32 %v1508, %v1692
      %v1786 = vadd.f32 %v1509, %v1695
      %v1787 = vadd.f32 %v1510, %v1698
      %v1788 = vadd.f32 %v1511, %v1701
      %v1789 = vadd.f32 %v1512, %v1704
      %v1790 = vadd.f32 %v1513, %v1707
      %v1791 = vadd.f32 %v1514, %v1710
      %v1792 = vadd.f32 %v1515, %v1713
      %v1793 = vadd.f32 %v1516, %v1716
      %v1794 = vadd.f32 %v1517, %v1719
      %v1795 = vadd.f32 %v1518, %v1722
      %v1796 = vadd.f32 %v1519, %v1725
      %v1797 = vadd.f32 %v1520, %v1728
      %v1798 = vadd.f32 %v1521, %v1731
      %v1799 = vadd.f32 %v1522, %v1734
      %v1800 = vadd.f32 %v1523, %v1737
      %v1801 = vadd.f32 %v1524, %v1740
      %v1802 = vadd.f32 %v1525, %v1743
      %v1803 = vadd.f32 %v1526, %v1746
      %v1804 = vadd.f32 %v1527, %v1749
      %v1805 = vadd.f32 %v1528, %v1752
      %v1806 = vadd.f32 %v1529, %v1755
      %v1807 = vadd.f32 %v1530, %v1758
      %v1808 = vadd.f32 %v1531, %v1761
      %v1809 = vadd.f32 %v1532, %v1764
      %v1810 = vadd.f32 %v1533, %v1767
      %v1811 = vadd.f32 %v1534, %v1770
      %v1812 = vadd.f32 %v1535, %v1773
      %v1813 = vadd.f32 %v1536, %v1776
      %v1814 = vadd.f32 %v1537, %v1779
      %v1815 = vadd.f32 %v1538, %v1782
      %s1816 = scalar_lea.vmem %s207, 48
      %v1817 = vld [vmem:[%s1816] sm:$0xff]
      %v1818 = vld [vmem:[%s1816 + $0x8] sm:$0xff]
      %v1819 = vld [vmem:[%s1816 + $0x18] sm:$0xff]
      %v1820 = vld [vmem:[%s1816 + $0x20] sm:$0xff]
      %v1821 = vld [vmem:[%s1816 + $0x30] sm:$0xff]
      %v1822 = vld [vmem:[%s1816 + $0x38] sm:$0xff]
      %v1823 = vld [vmem:[%s1816 + $0x48] sm:$0xff]
      %v1824 = vld [vmem:[%s1816 + $0x50] sm:$0xff]
      %v1825 = vld [vmem:[%s1816 + $0x60] sm:$0xff]
      %v1826 = vld [vmem:[%s1816 + $0x68] sm:$0xff]
      %v1827 = vld [vmem:[%s1816 + $0x78] sm:$0xff]
      %v1828 = vld [vmem:[%s1816 + $0x80] sm:$0xff]
      %v1829 = vld [vmem:[%s1816 + $0x90] sm:$0xff]
      %v1830 = vld [vmem:[%s1816 + $0x98] sm:$0xff]
      %v1831 = vld [vmem:[%s1816 + $0xa8] sm:$0xff]
      %v1832 = vld [vmem:[%s1816 + $0xb0] sm:$0xff]
      %v1833 = vld [vmem:[%s1816 + $0xc0] sm:$0xff]
      %v1834 = vld [vmem:[%s1816 + $0xc8] sm:$0xff]
      %v1835 = vld [vmem:[%s1816 + $0xd8] sm:$0xff]
      %v1836 = vld [vmem:[%s1816 + $0xe0] sm:$0xff]
      %v1837 = vld [vmem:[%s1816 + $0xf0] sm:$0xff]
      %v1838 = vld [vmem:[%s1816 + $0xf8] sm:$0xff]
      %v1839 = vld [vmem:[%s1816 + $0x108] sm:$0xff]
      %v1840 = vld [vmem:[%s1816 + $0x110] sm:$0xff]
      %v1841 = vld [vmem:[%s1816 + $0x120] sm:$0xff]
      %v1842 = vld [vmem:[%s1816 + $0x128] sm:$0xff]
      %v1843 = vld [vmem:[%s1816 + $0x138] sm:$0xff]
      %v1844 = vld [vmem:[%s1816 + $0x140] sm:$0xff]
      %v1845 = vld [vmem:[%s1816 + $0x150] sm:$0xff]
      %v1846 = vld [vmem:[%s1816 + $0x158] sm:$0xff]
      %v1847 = vld [vmem:[%s1816 + $0x168] sm:$0xff]
      %v1848 = vld [vmem:[%s1816 + $0x170] sm:$0xff]
      %v1849 = vld [vmem:[%s1 + $0x18] sm:$0xf]
      %v1851 = vsel %vm281, %v1817, 0
      %v1854 = vsel %vm281, %v1818, 0
      %v1857 = vsel %vm281, %v1819, 0
      %v1860 = vsel %vm281, %v1820, 0
      %v1863 = vsel %vm281, %v1821, 0
      %v1866 = vsel %vm281, %v1822, 0
      %v1869 = vsel %vm281, %v1823, 0
      %v1872 = vsel %vm281, %v1824, 0
      %v1875 = vsel %vm281, %v1825, 0
      %v1878 = vsel %vm281, %v1826, 0
      %v1881 = vsel %vm281, %v1827, 0
      %v1884 = vsel %vm281, %v1828, 0
      %v1887 = vsel %vm281, %v1829, 0
      %v1890 = vsel %vm281, %v1830, 0
      %v1893 = vsel %vm281, %v1831, 0
      %v1896 = vsel %vm281, %v1832, 0
      %v1899 = vsel %vm281, %v1833, 0
      %v1902 = vsel %vm281, %v1834, 0
      %v1905 = vsel %vm281, %v1835, 0
      %v1908 = vsel %vm281, %v1836, 0
      %v1911 = vsel %vm281, %v1837, 0
      %v1914 = vsel %vm281, %v1838, 0
      %v1917 = vsel %vm281, %v1839, 0
      %v1920 = vsel %vm281, %v1840, 0
      %v1923 = vsel %vm281, %v1841, 0
      %v1926 = vsel %vm281, %v1842, 0
      %v1929 = vsel %vm281, %v1843, 0
      %v1932 = vsel %vm281, %v1844, 0
      %v1935 = vsel %vm281, %v1845, 0
      %v1938 = vsel %vm281, %v1846, 0
      %v1941 = vsel %vm281, %v1847, 0
      %v1944 = vsel %vm281, %v1848, 0
      %v1947 = vsel %vm378, %v1849, 0
      %1949 = vmatpush.msra.mxu0 0.0
      %1950 = vmatpush.msra.mxu0 0.0
      %1951 = vmatpush.msra.mxu0 0.0
      %1952 = vmatpush.msra.mxu0 0.0
      %1953 = vmatpush.msra.mxu0 0.0
      %1954 = vmatpush.msra.mxu0 0.0
      %1955 = vmatpush.msra.mxu0 0.0
      %1956 = vmatpush.msra.mxu0 0.0
      %1957 = vmatpush.msra.mxu0 0.0
      %1958 = vmatpush.msra.mxu0 0.0
      %1959 = vmatpush.msra.mxu0 0.0
      %1960 = vmatpush.msra.mxu0 0.0
      %1961 = vmatpush.msra.mxu0 0.0
      %1962 = vmatpush.msra.mxu0 0.0
      %1963 = vmatpush.msra.mxu0 0.0
      %1964 = vmatpush.msra.mxu0 %v1947
      %1965 = vmatmul.f32.gmra.mxu0 %v1851
      %v1966 = vpop.f32.mrf.mxu0
      %v1967 = vadd.f32 0.0, %v1966
      %1968 = vmatmul.f32.gmra.mxu0 %v1854
      %v1969 = vpop.f32.mrf.mxu0
      %v1970 = vadd.f32 0.0, %v1969
      %1971 = vmatmul.f32.gmra.mxu0 %v1857
      %v1972 = vpop.f32.mrf.mxu0
      %v1973 = vadd.f32 0.0, %v1972
      %1974 = vmatmul.f32.gmra.mxu0 %v1860
      %v1975 = vpop.f32.mrf.mxu0
      %v1976 = vadd.f32 0.0, %v1975
      %1977 = vmatmul.f32.gmra.mxu0 %v1863
      %v1978 = vpop.f32.mrf.mxu0
      %v1979 = vadd.f32 0.0, %v1978
      %1980 = vmatmul.f32.gmra.mxu0 %v1866
      %v1981 = vpop.f32.mrf.mxu0
      %v1982 = vadd.f32 0.0, %v1981
      %1983 = vmatmul.f32.gmra.mxu0 %v1869
      %v1984 = vpop.f32.mrf.mxu0
      %v1985 = vadd.f32 0.0, %v1984
      %1986 = vmatmul.f32.gmra.mxu0 %v1872
      %v1987 = vpop.f32.mrf.mxu0
      %v1988 = vadd.f32 0.0, %v1987
      %1989 = vmatmul.f32.gmra.mxu0 %v1875
      %v1990 = vpop.f32.mrf.mxu0
      %v1991 = vadd.f32 0.0, %v1990
      %1992 = vmatmul.f32.gmra.mxu0 %v1878
      %v1993 = vpop.f32.mrf.mxu0
      %v1994 = vadd.f32 0.0, %v1993
      %1995 = vmatmul.f32.gmra.mxu0 %v1881
      %v1996 = vpop.f32.mrf.mxu0
      %v1997 = vadd.f32 0.0, %v1996
      %1998 = vmatmul.f32.gmra.mxu0 %v1884
      %v1999 = vpop.f32.mrf.mxu0
      %v2000 = vadd.f32 0.0, %v1999
      %2001 = vmatmul.f32.gmra.mxu0 %v1887
      %v2002 = vpop.f32.mrf.mxu0
      %v2003 = vadd.f32 0.0, %v2002
      %2004 = vmatmul.f32.gmra.mxu0 %v1890
      %v2005 = vpop.f32.mrf.mxu0
      %v2006 = vadd.f32 0.0, %v2005
      %2007 = vmatmul.f32.gmra.mxu0 %v1893
      %v2008 = vpop.f32.mrf.mxu0
      %v2009 = vadd.f32 0.0, %v2008
      %2010 = vmatmul.f32.gmra.mxu0 %v1896
      %v2011 = vpop.f32.mrf.mxu0
      %v2012 = vadd.f32 0.0, %v2011
      %2013 = vmatmul.f32.gmra.mxu0 %v1899
      %v2014 = vpop.f32.mrf.mxu0
      %v2015 = vadd.f32 0.0, %v2014
      %2016 = vmatmul.f32.gmra.mxu0 %v1902
      %v2017 = vpop.f32.mrf.mxu0
      %v2018 = vadd.f32 0.0, %v2017
      %2019 = vmatmul.f32.gmra.mxu0 %v1905
      %v2020 = vpop.f32.mrf.mxu0
      %v2021 = vadd.f32 0.0, %v2020
      %2022 = vmatmul.f32.gmra.mxu0 %v1908
      %v2023 = vpop.f32.mrf.mxu0
      %v2024 = vadd.f32 0.0, %v2023
      %2025 = vmatmul.f32.gmra.mxu0 %v1911
      %v2026 = vpop.f32.mrf.mxu0
      %v2027 = vadd.f32 0.0, %v2026
      %2028 = vmatmul.f32.gmra.mxu0 %v1914
      %v2029 = vpop.f32.mrf.mxu0
      %v2030 = vadd.f32 0.0, %v2029
      %2031 = vmatmul.f32.gmra.mxu0 %v1917
      %v2032 = vpop.f32.mrf.mxu0
      %v2033 = vadd.f32 0.0, %v2032
      %2034 = vmatmul.f32.gmra.mxu0 %v1920
      %v2035 = vpop.f32.mrf.mxu0
      %v2036 = vadd.f32 0.0, %v2035
      %2037 = vmatmul.f32.gmra.mxu0 %v1923
      %v2038 = vpop.f32.mrf.mxu0
      %v2039 = vadd.f32 0.0, %v2038
      %2040 = vmatmul.f32.gmra.mxu0 %v1926
      %v2041 = vpop.f32.mrf.mxu0
      %v2042 = vadd.f32 0.0, %v2041
      %2043 = vmatmul.f32.gmra.mxu0 %v1929
      %v2044 = vpop.f32.mrf.mxu0
      %v2045 = vadd.f32 0.0, %v2044
      %2046 = vmatmul.f32.gmra.mxu0 %v1932
      %v2047 = vpop.f32.mrf.mxu0
      %v2048 = vadd.f32 0.0, %v2047
      %2049 = vmatmul.f32.gmra.mxu0 %v1935
      %v2050 = vpop.f32.mrf.mxu0
      %v2051 = vadd.f32 0.0, %v2050
      %2052 = vmatmul.f32.gmra.mxu0 %v1938
      %v2053 = vpop.f32.mrf.mxu0
      %v2054 = vadd.f32 0.0, %v2053
      %2055 = vmatmul.f32.gmra.mxu0 %v1941
      %v2056 = vpop.f32.mrf.mxu0
      %v2057 = vadd.f32 0.0, %v2056
      %2058 = vmatmul.f32.gmra.mxu0 %v1944
      %v2059 = vpop.f32.mrf.mxu0
      %v2060 = vadd.f32 0.0, %v2059
      %2061 = vdwg.mxu0
      %v2062 = vadd.f32 %v1784, %v1967
      %v2063 = vadd.f32 %v1785, %v1970
      %v2064 = vadd.f32 %v1786, %v1973
      %v2065 = vadd.f32 %v1787, %v1976
      %v2066 = vadd.f32 %v1788, %v1979
      %v2067 = vadd.f32 %v1789, %v1982
      %v2068 = vadd.f32 %v1790, %v1985
      %v2069 = vadd.f32 %v1791, %v1988
      %v2070 = vadd.f32 %v1792, %v1991
      %v2071 = vadd.f32 %v1793, %v1994
      %v2072 = vadd.f32 %v1794, %v1997
      %v2073 = vadd.f32 %v1795, %v2000
      %v2074 = vadd.f32 %v1796, %v2003
      %v2075 = vadd.f32 %v1797, %v2006
      %v2076 = vadd.f32 %v1798, %v2009
      %v2077 = vadd.f32 %v1799, %v2012
      %v2078 = vadd.f32 %v1800, %v2015
      %v2079 = vadd.f32 %v1801, %v2018
      %v2080 = vadd.f32 %v1802, %v2021
      %v2081 = vadd.f32 %v1803, %v2024
      %v2082 = vadd.f32 %v1804, %v2027
      %v2083 = vadd.f32 %v1805, %v2030
      %v2084 = vadd.f32 %v1806, %v2033
      %v2085 = vadd.f32 %v1807, %v2036
      %v2086 = vadd.f32 %v1808, %v2039
      %v2087 = vadd.f32 %v1809, %v2042
      %v2088 = vadd.f32 %v1810, %v2045
      %v2089 = vadd.f32 %v1811, %v2048
      %v2090 = vadd.f32 %v1812, %v2051
      %v2091 = vadd.f32 %v1813, %v2054
      %v2092 = vadd.f32 %v1814, %v2057
      %v2093 = vadd.f32 %v1815, %v2060
      %v2094 = vld [vmem:[%s1816 + $0x1] sm:$0xff]
      %v2095 = vld [vmem:[%s1816 + $0x9] sm:$0xff]
      %v2096 = vld [vmem:[%s1816 + $0x19] sm:$0xff]
      %v2097 = vld [vmem:[%s1816 + $0x21] sm:$0xff]
      %v2098 = vld [vmem:[%s1816 + $0x31] sm:$0xff]
      %v2099 = vld [vmem:[%s1816 + $0x39] sm:$0xff]
      %v2100 = vld [vmem:[%s1816 + $0x49] sm:$0xff]
      %v2101 = vld [vmem:[%s1816 + $0x51] sm:$0xff]
      %v2102 = vld [vmem:[%s1816 + $0x61] sm:$0xff]
      %v2103 = vld [vmem:[%s1816 + $0x69] sm:$0xff]
      %v2104 = vld [vmem:[%s1816 + $0x79] sm:$0xff]
      %v2105 = vld [vmem:[%s1816 + $0x81] sm:$0xff]
      %v2106 = vld [vmem:[%s1816 + $0x91] sm:$0xff]
      %v2107 = vld [vmem:[%s1816 + $0x99] sm:$0xff]
      %v2108 = vld [vmem:[%s1816 + $0xa9] sm:$0xff]
      %v2109 = vld [vmem:[%s1816 + $0xb1] sm:$0xff]
      %v2110 = vld [vmem:[%s1816 + $0xc1] sm:$0xff]
      %v2111 = vld [vmem:[%s1816 + $0xc9] sm:$0xff]
      %v2112 = vld [vmem:[%s1816 + $0xd9] sm:$0xff]
      %v2113 = vld [vmem:[%s1816 + $0xe1] sm:$0xff]
      %v2114 = vld [vmem:[%s1816 + $0xf1] sm:$0xff]
      %v2115 = vld [vmem:[%s1816 + $0xf9] sm:$0xff]
      %v2116 = vld [vmem:[%s1816 + $0x109] sm:$0xff]
      %v2117 = vld [vmem:[%s1816 + $0x111] sm:$0xff]
      %v2118 = vld [vmem:[%s1816 + $0x121] sm:$0xff]
      %v2119 = vld [vmem:[%s1816 + $0x129] sm:$0xff]
      %v2120 = vld [vmem:[%s1816 + $0x139] sm:$0xff]
      %v2121 = vld [vmem:[%s1816 + $0x141] sm:$0xff]
      %v2122 = vld [vmem:[%s1816 + $0x151] sm:$0xff]
      %v2123 = vld [vmem:[%s1816 + $0x159] sm:$0xff]
      %v2124 = vld [vmem:[%s1816 + $0x169] sm:$0xff]
      %v2125 = vld [vmem:[%s1816 + $0x171] sm:$0xff]
      %v2126 = vld [vmem:[%s1 + $0x1c] sm:$0xf]
      %v2128 = vsel %vm281, %v2094, 0
      %v2131 = vsel %vm281, %v2095, 0
      %v2134 = vsel %vm281, %v2096, 0
      %v2137 = vsel %vm281, %v2097, 0
      %v2140 = vsel %vm281, %v2098, 0
      %v2143 = vsel %vm281, %v2099, 0
      %v2146 = vsel %vm281, %v2100, 0
      %v2149 = vsel %vm281, %v2101, 0
      %v2152 = vsel %vm281, %v2102, 0
      %v2155 = vsel %vm281, %v2103, 0
      %v2158 = vsel %vm281, %v2104, 0
      %v2161 = vsel %vm281, %v2105, 0
      %v2164 = vsel %vm281, %v2106, 0
      %v2167 = vsel %vm281, %v2107, 0
      %v2170 = vsel %vm281, %v2108, 0
      %v2173 = vsel %vm281, %v2109, 0
      %v2176 = vsel %vm281, %v2110, 0
      %v2179 = vsel %vm281, %v2111, 0
      %v2182 = vsel %vm281, %v2112, 0
      %v2185 = vsel %vm281, %v2113, 0
      %v2188 = vsel %vm281, %v2114, 0
      %v2191 = vsel %vm281, %v2115, 0
      %v2194 = vsel %vm281, %v2116, 0
      %v2197 = vsel %vm281, %v2117, 0
      %v2200 = vsel %vm281, %v2118, 0
      %v2203 = vsel %vm281, %v2119, 0
      %v2206 = vsel %vm281, %v2120, 0
      %v2209 = vsel %vm281, %v2121, 0
      %v2212 = vsel %vm281, %v2122, 0
      %v2215 = vsel %vm281, %v2123, 0
      %v2218 = vsel %vm281, %v2124, 0
      %v2221 = vsel %vm281, %v2125, 0
      %v2224 = vsel %vm378, %v2126, 0
      %2226 = vmatpush.msra.mxu0 0.0
      %2227 = vmatpush.msra.mxu0 0.0
      %2228 = vmatpush.msra.mxu0 0.0
      %2229 = vmatpush.msra.mxu0 0.0
      %2230 = vmatpush.msra.mxu0 0.0
      %2231 = vmatpush.msra.mxu0 0.0
      %2232 = vmatpush.msra.mxu0 0.0
      %2233 = vmatpush.msra.mxu0 0.0
      %2234 = vmatpush.msra.mxu0 0.0
      %2235 = vmatpush.msra.mxu0 0.0
      %2236 = vmatpush.msra.mxu0 0.0
      %2237 = vmatpush.msra.mxu0 0.0
      %2238 = vmatpush.msra.mxu0 0.0
      %2239 = vmatpush.msra.mxu0 0.0
      %2240 = vmatpush.msra.mxu0 0.0
      %2241 = vmatpush.msra.mxu0 %v2224
      %2242 = vmatmul.f32.gmra.mxu0 %v2128
      %v2243 = vpop.f32.mrf.mxu0
      %v2244 = vadd.f32 0.0, %v2243
      %2245 = vmatmul.f32.gmra.mxu0 %v2131
      %v2246 = vpop.f32.mrf.mxu0
      %v2247 = vadd.f32 0.0, %v2246
      %2248 = vmatmul.f32.gmra.mxu0 %v2134
      %v2249 = vpop.f32.mrf.mxu0
      %v2250 = vadd.f32 0.0, %v2249
      %2251 = vmatmul.f32.gmra.mxu0 %v2137
      %v2252 = vpop.f32.mrf.mxu0
      %v2253 = vadd.f32 0.0, %v2252
      %2254 = vmatmul.f32.gmra.mxu0 %v2140
      %v2255 = vpop.f32.mrf.mxu0
      %v2256 = vadd.f32 0.0, %v2255
      %2257 = vmatmul.f32.gmra.mxu0 %v2143
      %v2258 = vpop.f32.mrf.mxu0
      %v2259 = vadd.f32 0.0, %v2258
      %2260 = vmatmul.f32.gmra.mxu0 %v2146
      %v2261 = vpop.f32.mrf.mxu0
      %v2262 = vadd.f32 0.0, %v2261
      %2263 = vmatmul.f32.gmra.mxu0 %v2149
      %v2264 = vpop.f32.mrf.mxu0
      %v2265 = vadd.f32 0.0, %v2264
      %2266 = vmatmul.f32.gmra.mxu0 %v2152
      %v2267 = vpop.f32.mrf.mxu0
      %v2268 = vadd.f32 0.0, %v2267
      %2269 = vmatmul.f32.gmra.mxu0 %v2155
      %v2270 = vpop.f32.mrf.mxu0
      %v2271 = vadd.f32 0.0, %v2270
      %2272 = vmatmul.f32.gmra.mxu0 %v2158
      %v2273 = vpop.f32.mrf.mxu0
      %v2274 = vadd.f32 0.0, %v2273
      %2275 = vmatmul.f32.gmra.mxu0 %v2161
      %v2276 = vpop.f32.mrf.mxu0
      %v2277 = vadd.f32 0.0, %v2276
      %2278 = vmatmul.f32.gmra.mxu0 %v2164
      %v2279 = vpop.f32.mrf.mxu0
      %v2280 = vadd.f32 0.0, %v2279
      %2281 = vmatmul.f32.gmra.mxu0 %v2167
      %v2282 = vpop.f32.mrf.mxu0
      %v2283 = vadd.f32 0.0, %v2282
      %2284 = vmatmul.f32.gmra.mxu0 %v2170
      %v2285 = vpop.f32.mrf.mxu0
      %v2286 = vadd.f32 0.0, %v2285
      %2287 = vmatmul.f32.gmra.mxu0 %v2173
      %v2288 = vpop.f32.mrf.mxu0
      %v2289 = vadd.f32 0.0, %v2288
      %2290 = vmatmul.f32.gmra.mxu0 %v2176
      %v2291 = vpop.f32.mrf.mxu0
      %v2292 = vadd.f32 0.0, %v2291
      %2293 = vmatmul.f32.gmra.mxu0 %v2179
      %v2294 = vpop.f32.mrf.mxu0
      %v2295 = vadd.f32 0.0, %v2294
      %2296 = vmatmul.f32.gmra.mxu0 %v2182
      %v2297 = vpop.f32.mrf.mxu0
      %v2298 = vadd.f32 0.0, %v2297
      %2299 = vmatmul.f32.gmra.mxu0 %v2185
      %v2300 = vpop.f32.mrf.mxu0
      %v2301 = vadd.f32 0.0, %v2300
      %2302 = vmatmul.f32.gmra.mxu0 %v2188
      %v2303 = vpop.f32.mrf.mxu0
      %v2304 = vadd.f32 0.0, %v2303
      %2305 = vmatmul.f32.gmra.mxu0 %v2191
      %v2306 = vpop.f32.mrf.mxu0
      %v2307 = vadd.f32 0.0, %v2306
      %2308 = vmatmul.f32.gmra.mxu0 %v2194
      %v2309 = vpop.f32.mrf.mxu0
      %v2310 = vadd.f32 0.0, %v2309
      %2311 = vmatmul.f32.gmra.mxu0 %v2197
      %v2312 = vpop.f32.mrf.mxu0
      %v2313 = vadd.f32 0.0, %v2312
      %2314 = vmatmul.f32.gmra.mxu0 %v2200
      %v2315 = vpop.f32.mrf.mxu0
      %v2316 = vadd.f32 0.0, %v2315
      %2317 = vmatmul.f32.gmra.mxu0 %v2203
      %v2318 = vpop.f32.mrf.mxu0
      %v2319 = vadd.f32 0.0, %v2318
      %2320 = vmatmul.f32.gmra.mxu0 %v2206
      %v2321 = vpop.f32.mrf.mxu0
      %v2322 = vadd.f32 0.0, %v2321
      %2323 = vmatmul.f32.gmra.mxu0 %v2209
      %v2324 = vpop.f32.mrf.mxu0
      %v2325 = vadd.f32 0.0, %v2324
      %2326 = vmatmul.f32.gmra.mxu0 %v2212
      %v2327 = vpop.f32.mrf.mxu0
      %v2328 = vadd.f32 0.0, %v2327
      %2329 = vmatmul.f32.gmra.mxu0 %v2215
      %v2330 = vpop.f32.mrf.mxu0
      %v2331 = vadd.f32 0.0, %v2330
      %2332 = vmatmul.f32.gmra.mxu0 %v2218
      %v2333 = vpop.f32.mrf.mxu0
      %v2334 = vadd.f32 0.0, %v2333
      %2335 = vmatmul.f32.gmra.mxu0 %v2221
      %v2336 = vpop.f32.mrf.mxu0
      %v2337 = vadd.f32 0.0, %v2336
      %2338 = vdwg.mxu0
      %v2339 = vadd.f32 %v2062, %v2244
      %v2340 = vadd.f32 %v2063, %v2247
      %v2341 = vadd.f32 %v2064, %v2250
      %v2342 = vadd.f32 %v2065, %v2253
      %v2343 = vadd.f32 %v2066, %v2256
      %v2344 = vadd.f32 %v2067, %v2259
      %v2345 = vadd.f32 %v2068, %v2262
      %v2346 = vadd.f32 %v2069, %v2265
      %v2347 = vadd.f32 %v2070, %v2268
      %v2348 = vadd.f32 %v2071, %v2271
      %v2349 = vadd.f32 %v2072, %v2274
      %v2350 = vadd.f32 %v2073, %v2277
      %v2351 = vadd.f32 %v2074, %v2280
      %v2352 = vadd.f32 %v2075, %v2283
      %v2353 = vadd.f32 %v2076, %v2286
      %v2354 = vadd.f32 %v2077, %v2289
      %v2355 = vadd.f32 %v2078, %v2292
      %v2356 = vadd.f32 %v2079, %v2295
      %v2357 = vadd.f32 %v2080, %v2298
      %v2358 = vadd.f32 %v2081, %v2301
      %v2359 = vadd.f32 %v2082, %v2304
      %v2360 = vadd.f32 %v2083, %v2307
      %v2361 = vadd.f32 %v2084, %v2310
      %v2362 = vadd.f32 %v2085, %v2313
      %v2363 = vadd.f32 %v2086, %v2316
      %v2364 = vadd.f32 %v2087, %v2319
      %v2365 = vadd.f32 %v2088, %v2322
      %v2366 = vadd.f32 %v2089, %v2325
      %v2367 = vadd.f32 %v2090, %v2328
      %v2368 = vadd.f32 %v2091, %v2331
      %v2369 = vadd.f32 %v2092, %v2334
      %v2370 = vadd.f32 %v2093, %v2337
      %v2371 = vld [vmem:[%s1816 + $0x2] sm:$0xff]
      %v2372 = vld [vmem:[%s1816 + $0xa] sm:$0xff]
      %v2373 = vld [vmem:[%s1816 + $0x1a] sm:$0xff]
      %v2374 = vld [vmem:[%s1816 + $0x22] sm:$0xff]
      %v2375 = vld [vmem:[%s1816 + $0x32] sm:$0xff]
      %v2376 = vld [vmem:[%s1816 + $0x3a] sm:$0xff]
      %v2377 = vld [vmem:[%s1816 + $0x4a] sm:$0xff]
      %v2378 = vld [vmem:[%s1816 + $0x52] sm:$0xff]
      %v2379 = vld [vmem:[%s1816 + $0x62] sm:$0xff]
      %v2380 = vld [vmem:[%s1816 + $0x6a] sm:$0xff]
      %v2381 = vld [vmem:[%s1816 + $0x7a] sm:$0xff]
      %v2382 = vld [vmem:[%s1816 + $0x82] sm:$0xff]
      %v2383 = vld [vmem:[%s1816 + $0x92] sm:$0xff]
      %v2384 = vld [vmem:[%s1816 + $0x9a] sm:$0xff]
      %v2385 = vld [vmem:[%s1816 + $0xaa] sm:$0xff]
      %v2386 = vld [vmem:[%s1816 + $0xb2] sm:$0xff]
      %v2387 = vld [vmem:[%s1816 + $0xc2] sm:$0xff]
      %v2388 = vld [vmem:[%s1816 + $0xca] sm:$0xff]
      %v2389 = vld [vmem:[%s1816 + $0xda] sm:$0xff]
      %v2390 = vld [vmem:[%s1816 + $0xe2] sm:$0xff]
      %v2391 = vld [vmem:[%s1816 + $0xf2] sm:$0xff]
      %v2392 = vld [vmem:[%s1816 + $0xfa] sm:$0xff]
      %v2393 = vld [vmem:[%s1816 + $0x10a] sm:$0xff]
      %v2394 = vld [vmem:[%s1816 + $0x112] sm:$0xff]
      %v2395 = vld [vmem:[%s1816 + $0x122] sm:$0xff]
      %v2396 = vld [vmem:[%s1816 + $0x12a] sm:$0xff]
      %v2397 = vld [vmem:[%s1816 + $0x13a] sm:$0xff]
      %v2398 = vld [vmem:[%s1816 + $0x142] sm:$0xff]
      %v2399 = vld [vmem:[%s1816 + $0x152] sm:$0xff]
      %v2400 = vld [vmem:[%s1816 + $0x15a] sm:$0xff]
      %v2401 = vld [vmem:[%s1816 + $0x16a] sm:$0xff]
      %v2402 = vld [vmem:[%s1816 + $0x172] sm:$0xff]
      %v2403 = vld [vmem:[%s1 + $0x20] sm:$0xf]
      %v2405 = vsel %vm281, %v2371, 0
      %v2408 = vsel %vm281, %v2372, 0
      %v2411 = vsel %vm281, %v2373, 0
      %v2414 = vsel %vm281, %v2374, 0
      %v2417 = vsel %vm281, %v2375, 0
      %v2420 = vsel %vm281, %v2376, 0
      %v2423 = vsel %vm281, %v2377, 0
      %v2426 = vsel %vm281, %v2378, 0
      %v2429 = vsel %vm281, %v2379, 0
      %v2432 = vsel %vm281, %v2380, 0
      %v2435 = vsel %vm281, %v2381, 0
      %v2438 = vsel %vm281, %v2382, 0
      %v2441 = vsel %vm281, %v2383, 0
      %v2444 = vsel %vm281, %v2384, 0
      %v2447 = vsel %vm281, %v2385, 0
      %v2450 = vsel %vm281, %v2386, 0
      %v2453 = vsel %vm281, %v2387, 0
      %v2456 = vsel %vm281, %v2388, 0
      %v2459 = vsel %vm281, %v2389, 0
      %v2462 = vsel %vm281, %v2390, 0
      %v2465 = vsel %vm281, %v2391, 0
      %v2468 = vsel %vm281, %v2392, 0
      %v2471 = vsel %vm281, %v2393, 0
      %v2474 = vsel %vm281, %v2394, 0
      %v2477 = vsel %vm281, %v2395, 0
      %v2480 = vsel %vm281, %v2396, 0
      %v2483 = vsel %vm281, %v2397, 0
      %v2486 = vsel %vm281, %v2398, 0
      %v2489 = vsel %vm281, %v2399, 0
      %v2492 = vsel %vm281, %v2400, 0
      %v2495 = vsel %vm281, %v2401, 0
      %v2498 = vsel %vm281, %v2402, 0
      %v2501 = vsel %vm378, %v2403, 0
      %2503 = vmatpush.msra.mxu0 0.0
      %2504 = vmatpush.msra.mxu0 0.0
      %2505 = vmatpush.msra.mxu0 0.0
      %2506 = vmatpush.msra.mxu0 0.0
      %2507 = vmatpush.msra.mxu0 0.0
      %2508 = vmatpush.msra.mxu0 0.0
      %2509 = vmatpush.msra.mxu0 0.0
      %2510 = vmatpush.msra.mxu0 0.0
      %2511 = vmatpush.msra.mxu0 0.0
      %2512 = vmatpush.msra.mxu0 0.0
      %2513 = vmatpush.msra.mxu0 0.0
      %2514 = vmatpush.msra.mxu0 0.0
      %2515 = vmatpush.msra.mxu0 0.0
      %2516 = vmatpush.msra.mxu0 0.0
      %2517 = vmatpush.msra.mxu0 0.0
      %2518 = vmatpush.msra.mxu0 %v2501
      %2519 = vmatmul.f32.gmra.mxu0 %v2405
      %v2520 = vpop.f32.mrf.mxu0
      %v2521 = vadd.f32 0.0, %v2520
      %2522 = vmatmul.f32.gmra.mxu0 %v2408
      %v2523 = vpop.f32.mrf.mxu0
      %v2524 = vadd.f32 0.0, %v2523
      %2525 = vmatmul.f32.gmra.mxu0 %v2411
      %v2526 = vpop.f32.mrf.mxu0
      %v2527 = vadd.f32 0.0, %v2526
      %2528 = vmatmul.f32.gmra.mxu0 %v2414
      %v2529 = vpop.f32.mrf.mxu0
      %v2530 = vadd.f32 0.0, %v2529
      %2531 = vmatmul.f32.gmra.mxu0 %v2417
      %v2532 = vpop.f32.mrf.mxu0
      %v2533 = vadd.f32 0.0, %v2532
      %2534 = vmatmul.f32.gmra.mxu0 %v2420
      %v2535 = vpop.f32.mrf.mxu0
      %v2536 = vadd.f32 0.0, %v2535
      %2537 = vmatmul.f32.gmra.mxu0 %v2423
      %v2538 = vpop.f32.mrf.mxu0
      %v2539 = vadd.f32 0.0, %v2538
      %2540 = vmatmul.f32.gmra.mxu0 %v2426
      %v2541 = vpop.f32.mrf.mxu0
      %v2542 = vadd.f32 0.0, %v2541
      %2543 = vmatmul.f32.gmra.mxu0 %v2429
      %v2544 = vpop.f32.mrf.mxu0
      %v2545 = vadd.f32 0.0, %v2544
      %2546 = vmatmul.f32.gmra.mxu0 %v2432
      %v2547 = vpop.f32.mrf.mxu0
      %v2548 = vadd.f32 0.0, %v2547
      %2549 = vmatmul.f32.gmra.mxu0 %v2435
      %v2550 = vpop.f32.mrf.mxu0
      %v2551 = vadd.f32 0.0, %v2550
      %2552 = vmatmul.f32.gmra.mxu0 %v2438
      %v2553 = vpop.f32.mrf.mxu0
      %v2554 = vadd.f32 0.0, %v2553
      %2555 = vmatmul.f32.gmra.mxu0 %v2441
      %v2556 = vpop.f32.mrf.mxu0
      %v2557 = vadd.f32 0.0, %v2556
      %2558 = vmatmul.f32.gmra.mxu0 %v2444
      %v2559 = vpop.f32.mrf.mxu0
      %v2560 = vadd.f32 0.0, %v2559
      %2561 = vmatmul.f32.gmra.mxu0 %v2447
      %v2562 = vpop.f32.mrf.mxu0
      %v2563 = vadd.f32 0.0, %v2562
      %2564 = vmatmul.f32.gmra.mxu0 %v2450
      %v2565 = vpop.f32.mrf.mxu0
      %v2566 = vadd.f32 0.0, %v2565
      %2567 = vmatmul.f32.gmra.mxu0 %v2453
      %v2568 = vpop.f32.mrf.mxu0
      %v2569 = vadd.f32 0.0, %v2568
      %2570 = vmatmul.f32.gmra.mxu0 %v2456
      %v2571 = vpop.f32.mrf.mxu0
      %v2572 = vadd.f32 0.0, %v2571
      %2573 = vmatmul.f32.gmra.mxu0 %v2459
      %v2574 = vpop.f32.mrf.mxu0
      %v2575 = vadd.f32 0.0, %v2574
      %2576 = vmatmul.f32.gmra.mxu0 %v2462
      %v2577 = vpop.f32.mrf.mxu0
      %v2578 = vadd.f32 0.0, %v2577
      %2579 = vmatmul.f32.gmra.mxu0 %v2465
      %v2580 = vpop.f32.mrf.mxu0
      %v2581 = vadd.f32 0.0, %v2580
      %2582 = vmatmul.f32.gmra.mxu0 %v2468
      %v2583 = vpop.f32.mrf.mxu0
      %v2584 = vadd.f32 0.0, %v2583
      %2585 = vmatmul.f32.gmra.mxu0 %v2471
      %v2586 = vpop.f32.mrf.mxu0
      %v2587 = vadd.f32 0.0, %v2586
      %2588 = vmatmul.f32.gmra.mxu0 %v2474
      %v2589 = vpop.f32.mrf.mxu0
      %v2590 = vadd.f32 0.0, %v2589
      %2591 = vmatmul.f32.gmra.mxu0 %v2477
      %v2592 = vpop.f32.mrf.mxu0
      %v2593 = vadd.f32 0.0, %v2592
      %2594 = vmatmul.f32.gmra.mxu0 %v2480
      %v2595 = vpop.f32.mrf.mxu0
      %v2596 = vadd.f32 0.0, %v2595
      %2597 = vmatmul.f32.gmra.mxu0 %v2483
      %v2598 = vpop.f32.mrf.mxu0
      %v2599 = vadd.f32 0.0, %v2598
      %2600 = vmatmul.f32.gmra.mxu0 %v2486
      %v2601 = vpop.f32.mrf.mxu0
      %v2602 = vadd.f32 0.0, %v2601
      %2603 = vmatmul.f32.gmra.mxu0 %v2489
      %v2604 = vpop.f32.mrf.mxu0
      %v2605 = vadd.f32 0.0, %v2604
      %2606 = vmatmul.f32.gmra.mxu0 %v2492
      %v2607 = vpop.f32.mrf.mxu0
      %v2608 = vadd.f32 0.0, %v2607
      %2609 = vmatmul.f32.gmra.mxu0 %v2495
      %v2610 = vpop.f32.mrf.mxu0
      %v2611 = vadd.f32 0.0, %v2610
      %2612 = vmatmul.f32.gmra.mxu0 %v2498
      %v2613 = vpop.f32.mrf.mxu0
      %v2614 = vadd.f32 0.0, %v2613
      %2615 = vdwg.mxu0
      %v2616 = vadd.f32 %v2339, %v2521
      %v2617 = vadd.f32 %v2340, %v2524
      %v2618 = vadd.f32 %v2341, %v2527
      %v2619 = vadd.f32 %v2342, %v2530
      %v2620 = vadd.f32 %v2343, %v2533
      %v2621 = vadd.f32 %v2344, %v2536
      %v2622 = vadd.f32 %v2345, %v2539
      %v2623 = vadd.f32 %v2346, %v2542
      %v2624 = vadd.f32 %v2347, %v2545
      %v2625 = vadd.f32 %v2348, %v2548
      %v2626 = vadd.f32 %v2349, %v2551
      %v2627 = vadd.f32 %v2350, %v2554
      %v2628 = vadd.f32 %v2351, %v2557
      %v2629 = vadd.f32 %v2352, %v2560
      %v2630 = vadd.f32 %v2353, %v2563
      %v2631 = vadd.f32 %v2354, %v2566
      %v2632 = vadd.f32 %v2355, %v2569
      %v2633 = vadd.f32 %v2356, %v2572
      %v2634 = vadd.f32 %v2357, %v2575
      %v2635 = vadd.f32 %v2358, %v2578
      %v2636 = vadd.f32 %v2359, %v2581
      %v2637 = vadd.f32 %v2360, %v2584
      %v2638 = vadd.f32 %v2361, %v2587
      %v2639 = vadd.f32 %v2362, %v2590
      %v2640 = vadd.f32 %v2363, %v2593
      %v2641 = vadd.f32 %v2364, %v2596
      %v2642 = vadd.f32 %v2365, %v2599
      %v2643 = vadd.f32 %v2366, %v2602
      %v2644 = vadd.f32 %v2367, %v2605
      %v2645 = vadd.f32 %v2368, %v2608
      %v2646 = vadd.f32 %v2369, %v2611
      %v2647 = vadd.f32 %v2370, %v2614
      %p2648 = scmp.eq.s32.totalorder %s19, 0
      // Predicated region
      $region37: #{recurrent_criss_cross_attention.3} parent=35 // pred_check
        %p2649 = pneg %p2648
      $region38: #{recurrent_criss_cross_attention.3} parent=35 // pred_check_branch
        %2651 = sbr.rel (%p2649) target = $region40
      $region39: #{recurrent_criss_cross_attention.3} parent=35 // pred_region
        %p2652 = scmp.eq.s32.totalorder %s20, 0
        // Predicated region
        $region41: #{recurrent_criss_cross_attention.3} parent=39 // pred_check
          %p2653 = pneg %p2652
        $region42: #{recurrent_criss_cross_attention.3} parent=39 // pred_check_branch
          %2655 = sbr.rel (%p2653) target = $region44
        $region43: #{recurrent_criss_cross_attention.3} parent=39 // pred_region
          %2656 = vst [vmem:[#allocation2] sm:$0x1] 0.0
          %2657 = vst [vmem:[#allocation3] sm:$0x1] 0.0
        $region44: #{recurrent_criss_cross_attention.3} parent=39 // pred_fallthru
          _
        %v2658 = vld [vmem:[#allocation2] sm:$0x1]
        %v2659 = vadd.f32 %v2616, %v2617
        %v2660 = vadd.f32 %v2659, %v2618
        %v2661 = vadd.f32 %v2660, %v2619
        %v2662 = vadd.f32 %v2661, %v2620
        %v2663 = vadd.f32 %v2662, %v2621
        %v2664 = vadd.f32 %v2663, %v2622
        %v2665 = vadd.f32 %v2664, %v2623
        %v2666 = vadd.f32 %v2665, %v2624
        %v2667 = vadd.f32 %v2666, %v2625
        %v2668 = vadd.f32 %v2667, %v2626
        %v2669 = vadd.f32 %v2668, %v2627
        %v2670 = vadd.f32 %v2669, %v2628
        %v2671 = vadd.f32 %v2670, %v2629
        %v2672 = vadd.f32 %v2671, %v2630
        %v2673 = vadd.f32 %v2672, %v2631
        %v2674 = vadd.f32 %v2673, %v2632
        %v2675 = vadd.f32 %v2674, %v2633
        %v2676 = vadd.f32 %v2675, %v2634
        %v2677 = vadd.f32 %v2676, %v2635
        %v2678 = vadd.f32 %v2677, %v2636
        %v2679 = vadd.f32 %v2678, %v2637
        %v2680 = vadd.f32 %v2679, %v2638
        %v2681 = vadd.f32 %v2680, %v2639
        %v2682 = vadd.f32 %v2681, %v2640
        %v2683 = vadd.f32 %v2682, %v2641
        %v2684 = vadd.f32 %v2683, %v2642
        %v2685 = vadd.f32 %v2684, %v2643
        %v2686 = vadd.f32 %v2685, %v2644
        %v2687 = vadd.f32 %v2686, %v2645
        %v2688 = vadd.f32 %v2687, %v2646
        %v2689 = vadd.f32 %v2688, %v2647
        %v2690 = vrot.slane %v2689, 4
        %v2691 = vadd.f32 %v2689, %v2690
        %v2692 = vrot.slane %v2691, 2
        %v2693 = vadd.f32 %v2691, %v2692
        %v2694 = vrot.slane %v2693, 1
        %v2695 = vadd.f32 %v2693, %v2694
        %v2696 = vadd.f32 %v2658, %v2695
        %2697 = vst [vmem:[#allocation2] sm:$0x1] %v2696
        %v2698 = vld [vmem:[#allocation3] sm:$0x1]
        %v2699 = vmul.f32 %v2616, %v2616
        %v2700 = vmul.f32 %v2617, %v2617
        %v2701 = vmul.f32 %v2618, %v2618
        %v2702 = vmul.f32 %v2619, %v2619
        %v2703 = vmul.f32 %v2620, %v2620
        %v2704 = vmul.f32 %v2621, %v2621
        %v2705 = vmul.f32 %v2622, %v2622
        %v2706 = vmul.f32 %v2623, %v2623
        %v2707 = vmul.f32 %v2624, %v2624
        %v2708 = vmul.f32 %v2625, %v2625
        %v2709 = vmul.f32 %v2626, %v2626
        %v2710 = vmul.f32 %v2627, %v2627
        %v2711 = vmul.f32 %v2628, %v2628
        %v2712 = vmul.f32 %v2629, %v2629
        %v2713 = vmul.f32 %v2630, %v2630
        %v2714 = vmul.f32 %v2631, %v2631
        %v2715 = vmul.f32 %v2632, %v2632
        %v2716 = vmul.f32 %v2633, %v2633
        %v2717 = vmul.f32 %v2634, %v2634
        %v2718 = vmul.f32 %v2635, %v2635
        %v2719 = vmul.f32 %v2636, %v2636
        %v2720 = vmul.f32 %v2637, %v2637
        %v2721 = vmul.f32 %v2638, %v2638
        %v2722 = vmul.f32 %v2639, %v2639
        %v2723 = vmul.f32 %v2640, %v2640
        %v2724 = vmul.f32 %v2641, %v2641
        %v2725 = vmul.f32 %v2642, %v2642
        %v2726 = vmul.f32 %v2643, %v2643
        %v2727 = vmul.f32 %v2644, %v2644
        %v2728 = vmul.f32 %v2645, %v2645
        %v2729 = vmul.f32 %v2646, %v2646
        %v2730 = vmul.f32 %v2647, %v2647
        %v2731 = vadd.f32 %v2699, %v2700
        %v2732 = vadd.f32 %v2731, %v2701
        %v2733 = vadd.f32 %v2732, %v2702
        %v2734 = vadd.f32 %v2733, %v2703
        %v2735 = vadd.f32 %v2734, %v2704
        %v2736 = vadd.f32 %v2735, %v2705
        %v2737 = vadd.f32 %v2736, %v2706
        %v2738 = vadd.f32 %v2737, %v2707
        %v2739 = vadd.f32 %v2738, %v2708
        %v2740 = vadd.f32 %v2739, %v2709
        %v2741 = vadd.f32 %v2740, %v2710
        %v2742 = vadd.f32 %v2741, %v2711
        %v2743 = vadd.f32 %v2742, %v2712
        %v2744 = vadd.f32 %v2743, %v2713
        %v2745 = vadd.f32 %v2744, %v2714
        %v2746 = vadd.f32 %v2745, %v2715
        %v2747 = vadd.f32 %v2746, %v2716
        %v2748 = vadd.f32 %v2747, %v2717
        %v2749 = vadd.f32 %v2748, %v2718
        %v2750 = vadd.f32 %v2749, %v2719
        %v2751 = vadd.f32 %v2750, %v2720
        %v2752 = vadd.f32 %v2751, %v2721
        %v2753 = vadd.f32 %v2752, %v2722
        %v2754 = vadd.f32 %v2753, %v2723
        %v2755 = vadd.f32 %v2754, %v2724
        %v2756 = vadd.f32 %v2755, %v2725
        %v2757 = vadd.f32 %v2756, %v2726
        %v2758 = vadd.f32 %v2757, %v2727
        %v2759 = vadd.f32 %v2758, %v2728
        %v2760 = vadd.f32 %v2759, %v2729
        %v2761 = vadd.f32 %v2760, %v2730
        %v2762 = vrot.slane %v2761, 4
        %v2763 = vadd.f32 %v2761, %v2762
        %v2764 = vrot.slane %v2763, 2
        %v2765 = vadd.f32 %v2763, %v2764
        %v2766 = vrot.slane %v2765, 1
        %v2767 = vadd.f32 %v2765, %v2766
        %v2768 = vadd.f32 %v2698, %v2767
        %2769 = vst [vmem:[#allocation3] sm:$0x1] %v2768
        %p2770 = scmp.eq.s32.totalorder %s20, 1
        // Predicated region
        $region45: #{recurrent_criss_cross_attention.3} parent=39 // pred_check
          %p2771 = pneg %p2770
        $region46: #{recurrent_criss_cross_attention.3} parent=39 // pred_check_branch
          %2773 = sbr.rel (%p2771) target = $region48
        $region47: #{recurrent_criss_cross_attention.3} parent=39 // pred_region
          %v2774 = vld [vmem:[#allocation2] sm:$0x1]
          %v2775 = vmul.f32 %v2774, 0.001953125
          %v2776 = vld [vmem:[#allocation3] sm:$0x1]
          %v2777 = vmul.f32 %v2776, 0.001953125
          %v2778 = vmul.f32 %v2775, %v2775
          %v2779 = vsub.f32 %v2777, %v2778
          %2780 = vst [vmem:[#allocation2] sm:$0x1] %v2775
          %v2781 = vadd.f32 %v2779, 1e-05
          %v2782 = vrsqrt.pop %v2781
          %v2783 = vmul.f32 %v2782, %v2781
          %v2784 = vmul.f32 %v2783, %v2782
          %v2785 = vmul.f32 0.5, %v2784
          %v2786 = vsub.f32 1.5, %v2785
          %v2787 = vmul.f32 %v2782, %v2786
          %vm2788 = vweird.f32 %v2781
          %vm2789 = vweird.f32 %v2782
          %vm2790 = vmor %vm2788, %vm2789
          %v2791 = vsel %vm2790, %v2782, %v2787
          %2792 = vst [vmem:[#allocation3] sm:$0x1] %v2791
        $region48: #{recurrent_criss_cross_attention.3} parent=39 // pred_fallthru
          _
      $region40: #{recurrent_criss_cross_attention.3} parent=35 // pred_fallthru
        _
      %p2793 = scmp.eq.s32.totalorder %s19, 1
      // Predicated region
      $region49: #{recurrent_criss_cross_attention.3} parent=35 // pred_check
        %p2794 = pneg %p2793
      $region50: #{recurrent_criss_cross_attention.3} parent=35 // pred_check_branch
        %2796 = sbr.rel (%p2794) target = $region52
      $region51: #{recurrent_criss_cross_attention.3} parent=35 // pred_region
        %v2797 = vld [vmem:[#allocation2] sm:$0x1]
        %v2799 = vperm.slane %v2797, 0
        %v2801 = vsub.f32 %v2616, %v2799
        %v2802 = vsub.f32 %v2617, %v2799
        %v2803 = vsub.f32 %v2618, %v2799
        %v2804 = vsub.f32 %v2619, %v2799
        %v2805 = vsub.f32 %v2620, %v2799
        %v2806 = vsub.f32 %v2621, %v2799
        %v2807 = vsub.f32 %v2622, %v2799
        %v2808 = vsub.f32 %v2623, %v2799
        %v2809 = vsub.f32 %v2624, %v2799
        %v2810 = vsub.f32 %v2625, %v2799
        %v2811 = vsub.f32 %v2626, %v2799
        %v2812 = vsub.f32 %v2627, %v2799
        %v2813 = vsub.f32 %v2628, %v2799
        %v2814 = vsub.f32 %v2629, %v2799
        %v2815 = vsub.f32 %v2630, %v2799
        %v2816 = vsub.f32 %v2631, %v2799
        %v2817 = vsub.f32 %v2632, %v2799
        %v2818 = vsub.f32 %v2633, %v2799
        %v2819 = vsub.f32 %v2634, %v2799
        %v2820 = vsub.f32 %v2635, %v2799
        %v2821 = vsub.f32 %v2636, %v2799
        %v2822 = vsub.f32 %v2637, %v2799
        %v2823 = vsub.f32 %v2638, %v2799
        %v2824 = vsub.f32 %v2639, %v2799
        %v2825 = vsub.f32 %v2640, %v2799
        %v2826 = vsub.f32 %v2641, %v2799
        %v2827 = vsub.f32 %v2642, %v2799
        %v2828 = vsub.f32 %v2643, %v2799
        %v2829 = vsub.f32 %v2644, %v2799
        %v2830 = vsub.f32 %v2645, %v2799
        %v2831 = vsub.f32 %v2646, %v2799
        %v2832 = vsub.f32 %v2647, %v2799
        %v2833 = vld [vmem:[#allocation3] sm:$0x1]
        %v2835 = vperm.slane %v2833, 0
        %v2837 = vmul.f32 %v2801, %v2835
        %v2838 = vmul.f32 %v2802, %v2835
        %v2839 = vmul.f32 %v2803, %v2835
        %v2840 = vmul.f32 %v2804, %v2835
        %v2841 = vmul.f32 %v2805, %v2835
        %v2842 = vmul.f32 %v2806, %v2835
        %v2843 = vmul.f32 %v2807, %v2835
        %v2844 = vmul.f32 %v2808, %v2835
        %v2845 = vmul.f32 %v2809, %v2835
        %v2846 = vmul.f32 %v2810, %v2835
        %v2847 = vmul.f32 %v2811, %v2835
        %v2848 = vmul.f32 %v2812, %v2835
        %v2849 = vmul.f32 %v2813, %v2835
        %v2850 = vmul.f32 %v2814, %v2835
        %v2851 = vmul.f32 %v2815, %v2835
        %v2852 = vmul.f32 %v2816, %v2835
        %v2853 = vmul.f32 %v2817, %v2835
        %v2854 = vmul.f32 %v2818, %v2835
        %v2855 = vmul.f32 %v2819, %v2835
        %v2856 = vmul.f32 %v2820, %v2835
        %v2857 = vmul.f32 %v2821, %v2835
        %v2858 = vmul.f32 %v2822, %v2835
        %v2859 = vmul.f32 %v2823, %v2835
        %v2860 = vmul.f32 %v2824, %v2835
        %v2861 = vmul.f32 %v2825, %v2835
        %v2862 = vmul.f32 %v2826, %v2835
        %v2863 = vmul.f32 %v2827, %v2835
        %v2864 = vmul.f32 %v2828, %v2835
        %v2865 = vmul.f32 %v2829, %v2835
        %v2866 = vmul.f32 %v2830, %v2835
        %v2867 = vmul.f32 %v2831, %v2835
        %v2868 = vmul.f32 %v2832, %v2835
        %v2869 = vld [vmem:[%s2] sm:$0x1]
        %v2871 = vperm.slane %v2869, 0
        %v2873 = vmul.f32 %v2837, %v2871
        %v2874 = vmul.f32 %v2838, %v2871
        %v2875 = vmul.f32 %v2839, %v2871
        %v2876 = vmul.f32 %v2840, %v2871
        %v2877 = vmul.f32 %v2841, %v2871
        %v2878 = vmul.f32 %v2842, %v2871
        %v2879 = vmul.f32 %v2843, %v2871
        %v2880 = vmul.f32 %v2844, %v2871
        %v2881 = vmul.f32 %v2845, %v2871
        %v2882 = vmul.f32 %v2846, %v2871
        %v2883 = vmul.f32 %v2847, %v2871
        %v2884 = vmul.f32 %v2848, %v2871
        %v2885 = vmul.f32 %v2849, %v2871
        %v2886 = vmul.f32 %v2850, %v2871
        %v2887 = vmul.f32 %v2851, %v2871
        %v2888 = vmul.f32 %v2852, %v2871
        %v2889 = vmul.f32 %v2853, %v2871
        %v2890 = vmul.f32 %v2854, %v2871
        %v2891 = vmul.f32 %v2855, %v2871
        %v2892 = vmul.f32 %v2856, %v2871
        %v2893 = vmul.f32 %v2857, %v2871
        %v2894 = vmul.f32 %v2858, %v2871
        %v2895 = vmul.f32 %v2859, %v2871
        %v2896 = vmul.f32 %v2860, %v2871
        %v2897 = vmul.f32 %v2861, %v2871
        %v2898 = vmul.f32 %v2862, %v2871
        %v2899 = vmul.f32 %v2863, %v2871
        %v2900 = vmul.f32 %v2864, %v2871
        %v2901 = vmul.f32 %v2865, %v2871
        %v2902 = vmul.f32 %v2866, %v2871
        %v2903 = vmul.f32 %v2867, %v2871
        %v2904 = vmul.f32 %v2868, %v2871
        %v2905 = vld [vmem:[%s3] sm:$0x1]
        %v2907 = vperm.slane %v2905, 0
        %v2909 = vadd.f32 %v2873, %v2907
        %v2910 = vadd.f32 %v2874, %v2907
        %v2911 = vadd.f32 %v2875, %v2907
        %v2912 = vadd.f32 %v2876, %v2907
        %v2913 = vadd.f32 %v2877, %v2907
        %v2914 = vadd.f32 %v2878, %v2907
        %v2915 = vadd.f32 %v2879, %v2907
        %v2916 = vadd.f32 %v2880, %v2907
        %v2917 = vadd.f32 %v2881, %v2907
        %v2918 = vadd.f32 %v2882, %v2907
        %v2919 = vadd.f32 %v2883, %v2907
        %v2920 = vadd.f32 %v2884, %v2907
        %v2921 = vadd.f32 %v2885, %v2907
        %v2922 = vadd.f32 %v2886, %v2907
        %v2923 = vadd.f32 %v2887, %v2907
        %v2924 = vadd.f32 %v2888, %v2907
        %v2925 = vadd.f32 %v2889, %v2907
        %v2926 = vadd.f32 %v2890, %v2907
        %v2927 = vadd.f32 %v2891, %v2907
        %v2928 = vadd.f32 %v2892, %v2907
        %v2929 = vadd.f32 %v2893, %v2907
        %v2930 = vadd.f32 %v2894, %v2907
        %v2931 = vadd.f32 %v2895, %v2907
        %v2932 = vadd.f32 %v2896, %v2907
        %v2933 = vadd.f32 %v2897, %v2907
        %v2934 = vadd.f32 %v2898, %v2907
        %v2935 = vadd.f32 %v2899, %v2907
        %v2936 = vadd.f32 %v2900, %v2907
        %v2937 = vadd.f32 %v2901, %v2907
        %v2938 = vadd.f32 %v2902, %v2907
        %v2939 = vadd.f32 %v2903, %v2907
        %v2940 = vadd.f32 %v2904, %v2907
        %v2941 = vmax.f32 %v2909, 0.0
        %v2942 = vmax.f32 %v2910, 0.0
        %v2943 = vmax.f32 %v2911, 0.0
        %v2944 = vmax.f32 %v2912, 0.0
        %v2945 = vmax.f32 %v2913, 0.0
        %v2946 = vmax.f32 %v2914, 0.0
        %v2947 = vmax.f32 %v2915, 0.0
        %v2948 = vmax.f32 %v2916, 0.0
        %v2949 = vmax.f32 %v2917, 0.0
        %v2950 = vmax.f32 %v2918, 0.0
        %v2951 = vmax.f32 %v2919, 0.0
        %v2952 = vmax.f32 %v2920, 0.0
        %v2953 = vmax.f32 %v2921, 0.0
        %v2954 = vmax.f32 %v2922, 0.0
        %v2955 = vmax.f32 %v2923, 0.0
        %v2956 = vmax.f32 %v2924, 0.0
        %v2957 = vmax.f32 %v2925, 0.0
        %v2958 = vmax.f32 %v2926, 0.0
        %v2959 = vmax.f32 %v2927, 0.0
        %v2960 = vmax.f32 %v2928, 0.0
        %v2961 = vmax.f32 %v2929, 0.0
        %v2962 = vmax.f32 %v2930, 0.0
        %v2963 = vmax.f32 %v2931, 0.0
        %v2964 = vmax.f32 %v2932, 0.0
        %v2965 = vmax.f32 %v2933, 0.0
        %v2966 = vmax.f32 %v2934, 0.0
        %v2967 = vmax.f32 %v2935, 0.0
        %v2968 = vmax.f32 %v2936, 0.0
        %v2969 = vmax.f32 %v2937, 0.0
        %v2970 = vmax.f32 %v2938, 0.0
        %v2971 = vmax.f32 %v2939, 0.0
        %v2972 = vmax.f32 %v2940, 0.0
        %2973 = vst [vmem:[%s213] sm:$0xff] %v2941
        %2974 = vst [vmem:[%s213 + $0x8] sm:$0xff] %v2942
        %2975 = vst [vmem:[%s213 + $0x10] sm:$0xff] %v2943
        %2976 = vst [vmem:[%s213 + $0x18] sm:$0xff] %v2944
        %2977 = vst [vmem:[%s213 + $0x20] sm:$0xff] %v2945
        %2978 = vst [vmem:[%s213 + $0x28] sm:$0xff] %v2946
        %2979 = vst [vmem:[%s213 + $0x30] sm:$0xff] %v2947
        %2980 = vst [vmem:[%s213 + $0x38] sm:$0xff] %v2948
        %2981 = vst [vmem:[%s213 + $0x40] sm:$0xff] %v2949
        %2982 = vst [vmem:[%s213 + $0x48] sm:$0xff] %v2950
        %2983 = vst [vmem:[%s213 + $0x50] sm:$0xff] %v2951
        %2984 = vst [vmem:[%s213 + $0x58] sm:$0xff] %v2952
        %2985 = vst [vmem:[%s213 + $0x60] sm:$0xff] %v2953
        %2986 = vst [vmem:[%s213 + $0x68] sm:$0xff] %v2954
        %2987 = vst [vmem:[%s213 + $0x70] sm:$0xff] %v2955
        %2988 = vst [vmem:[%s213 + $0x78] sm:$0xff] %v2956
        %2989 = vst [vmem:[%s213 + $0x80] sm:$0xff] %v2957
        %2990 = vst [vmem:[%s213 + $0x88] sm:$0xff] %v2958
        %2991 = vst [vmem:[%s213 + $0x90] sm:$0xff] %v2959
        %2992 = vst [vmem:[%s213 + $0x98] sm:$0xff] %v2960
        %2993 = vst [vmem:[%s213 + $0xa0] sm:$0xff] %v2961
        %2994 = vst [vmem:[%s213 + $0xa8] sm:$0xff] %v2962
        %2995 = vst [vmem:[%s213 + $0xb0] sm:$0xff] %v2963
        %2996 = vst [vmem:[%s213 + $0xb8] sm:$0xff] %v2964
        %2997 = vst [vmem:[%s213 + $0xc0] sm:$0xff] %v2965
        %2998 = vst [vmem:[%s213 + $0xc8] sm:$0xff] %v2966
        %2999 = vst [vmem:[%s213 + $0xd0] sm:$0xff] %v2967
        %3000 = vst [vmem:[%s213 + $0xd8] sm:$0xff] %v2968
        %3001 = vst [vmem:[%s213 + $0xe0] sm:$0xff] %v2969
        %3002 = vst [vmem:[%s213 + $0xe8] sm:$0xff] %v2970
        %3003 = vst [vmem:[%s213 + $0xf0] sm:$0xff] %v2971
        %3004 = vst [vmem:[%s213 + $0xf8] sm:$0xff] %v2972
      $region52: #{recurrent_criss_cross_attention.3} parent=35 // pred_fallthru
        _
      %s3005 = smul.u32 %s19, %s20
      %p3006 = scmp.lt.s32.totalorder %s3005, 1
      %s3007 = scalar_select %p3006, %s3005, 1
      %s3008 = smul.addr %s3007, 32
      %s3009 = smul.addr %s3008, 8
      %s3010 = scalar_lea.vmem %s4, %s3009
      // Predicated region
      $region53: #{recurrent_criss_cross_attention.3} parent=35 // pred_check
        %p3011 = pneg %p136
      $region54: #{recurrent_criss_cross_attention.3} parent=35 // pred_check_branch
        %3013 = sbr.rel (%p3011) target = $region56
      $region55: #{recurrent_criss_cross_attention.3} parent=35 // pred_region
        %s3014 = smul.u32 %s19, %s20
      $region56: #{recurrent_criss_cross_attention.3} parent=35 // pred_fallthru
        _
    $region36: #{recurrent_criss_cross_attention.3} parent=5 // pred_fallthru
      _
    %p3015 = scmp.le.s32.totalorder 2, %s10
    // Predicated region
    $region57: #{recurrent_criss_cross_attention.3} parent=5 // pred_check
      %p3016 = pneg %p3015
    $region58: #{recurrent_criss_cross_attention.3} parent=5 // pred_check_branch
      %3018 = sbr.rel (%p3016) target = $region60
    $region59: #{recurrent_criss_cross_attention.3} parent=5 // pred_region
      %s3019 = ssub.s32 %s10, 2
      // Predicated region
      $region61: #{recurrent_criss_cross_attention.3} parent=59 // pred_check
        %p3020 = pneg %p142
      $region62: #{recurrent_criss_cross_attention.3} parent=59 // pred_check_branch
        %3022 = sbr.rel (%p3020) target = $region64
      $region63: #{recurrent_criss_cross_attention.3} parent=59 // pred_region
        %s3023 = smul.u32 %s21, %s22
        %p3024 = scmp.lt.s32.totalorder %s3023, 1
        %s3025 = scalar_select %p3024, %s3023, 1
        %s3026 = smul.addr %s3025, 32
        %s3027 = smul.addr %s3026, 8
        %s3028 = scalar_lea.vmem %s4, %s3027
      $region64: #{recurrent_criss_cross_attention.3} parent=59 // pred_fallthru
        _
    $region60: #{recurrent_criss_cross_attention.3} parent=5 // pred_fallthru
      _
  $region6: #{recurrent_criss_cross_attention.3} parent=0 // loop_footer
    %s14 = sadd.s32 1, %s10
  $region7: #{recurrent_criss_cross_attention.3} parent=0 // loop_footer_branch
    %9 = sbr.rel target = $region3
  $region8: #{recurrent_criss_cross_attention.3} parent=0 // loop_exit
    _

// kernel: recurrent_criss_cross_attention.5
$region0: #{recurrent_criss_cross_attention.5}
  #allocation0 [shape = 'u32[]', space=smem, size = 0x4, offset = 0x4, fixed_abs, tag = 'smem constant byte address 0x4 - core index']
  #allocation1 [shape = 'u32[72,128]{1,0:T(1,128)}', space=vmem, size = 0x9000, scoped, tag = 'internal scratch']
  #allocation2 [shape = 'f32[1,128]{1,0:T(1,128)}', space=vmem, size = 0x200, scoped, tag = 'scratch operand']
  #allocation3 [shape = 'f32[1,128]{1,0:T(1,128)}', space=vmem, size = 0x200, scoped, tag = 'scratch operand']
  %s0 = inlined_call_operand.vmem [shape: f32[2,18,18,32], index: 0, kind: input, shape index: {}]
  %s1 = inlined_call_operand.vmem [shape: f32[288,128], index: 1, kind: input, shape index: {}]
  %s2 = inlined_call_operand.vmem [shape: f32[1,128], index: 2, kind: input, shape index: {}]
  %s3 = inlined_call_operand.vmem [shape: f32[1,128], index: 3, kind: input, shape index: {}]
  %s4 = inlined_call_operand.vmem [shape: f32[2,256,128], index: 4, kind: output, shape index: {}]
  %s5 = sld [smem:[#allocation0]]
  $region65: #{recurrent_criss_cross_attention.5} parent=0
    _
  %s7 = ssub.s32 1, %s5
  %s8 = scalar_select 0, %s7, %s5
  loop: start=0, step=1, limit=6
  $region2: #{recurrent_criss_cross_attention.5} parent=0 // loop_pre_header
    _
  $region3: #{recurrent_criss_cross_attention.5} parent=0 // loop_header
    %s10 = sphi 0, %s14
    %p11 = scmp.ge.s32.totalorder %s10, 6
    %s17 = sphi 0, %s29
    %s18 = sphi 0, %s25
    %s19 = sphi 0, %s17
    %s20 = sphi 0, %s18
    %s21 = sphi 0, %s19
    %s22 = sphi 0, %s20
    %s32 = sphi 0, %s34
    %s35 = sphi 0, %s32
    %s36 = sphi 0, %s35
    %s52 = sphi 0, %s36
    %s56 = sphi 0, %s56
    %s58 = sphi 0, %s56
    %s59 = sphi 0, %s58
    %s73 = sphi 0, %s59
    %s77 = sphi 0, %s77
    %s79 = sphi 0, %s77
    %s80 = sphi 0, %s79
    %s94 = sphi 0, %s80
    %s98 = sphi 0, %s98
    %s100 = sphi 0, %s98
    %s101 = sphi 0, %s100
    %s115 = sphi 0, %s101
    %s123 = sphi 0, %s125
    %s126 = sphi 0, %s123
    %s127 = sphi 0, %s126
    %s143 = sphi 0, %s127
  $region4: #{recurrent_criss_cross_attention.5} parent=0 // loop_header_branch
    %13 = sbr.rel (%p11) target = $region8
  $region5: #{recurrent_criss_cross_attention.5} parent=0 // loop_body
    %s15 = ssub.s32 %s10, 1
    %s16 = ssub.s32 %s10, 2
    %s23 = sadd.s32 1, %s18
    %p24 = scmp.ge.s32.totalorder %s23, 2
    %s25 = scalar_select %p24, 0, %s23
    %s26 = sadd.s32 1, %s17
    %s27 = scalar_select %p24, %s26, %s17
    %p28 = scmp.ge.s32.totalorder %s27, 2
    %s29 = scalar_select %p28, 0, %s27
    %s30 = ssub.s32 %s18, %s25
    %p31 = scmp.eq.s32.totalorder %s30, 0
    %s33 = sadd.s32 %s32, 1
    %s34 = scalar_select %p31, %s32, %s33
    %p37 = pneg %p31
    %p38 = scmp.eq.s32.totalorder %s10, 3
    %p39 = por %p37, %p38
    %p40 = scmp.ne.s32.totalorder %s32, %s35
    %p41 = scmp.eq.s32.totalorder %s10, 0
    %p42 = por %p40, %p41
    %p43 = scmp.ne.s32.totalorder %s32, %s35
    %p44 = scmp.eq.s32.totalorder %s15, 3
    %p45 = por %p43, %p44
    %p46 = scmp.ne.s32.totalorder %s35, %s36
    %p47 = scmp.eq.s32.totalorder %s15, 0
    %p48 = por %p46, %p47
    %p49 = scmp.ne.s32.totalorder %s35, %s36
    %p50 = scmp.eq.s32.totalorder %s16, 3
    %p51 = por %p49, %p50
    %p53 = scmp.ne.s32.totalorder %s36, %s52
    %p54 = scmp.eq.s32.totalorder %s16, 0
    %p55 = por %p53, %p54
    %s57 = sadd.s32 %s56, 1
    %p60 = scmp.eq.s32.totalorder %s10, 3
    %p61 = scmp.ne.s32.totalorder %s56, %s58
    %p62 = scmp.eq.s32.totalorder %s10, 0
    %p63 = por %p61, %p62
    %p64 = scmp.ne.s32.totalorder %s56, %s58
    %p65 = scmp.eq.s32.totalorder %s15, 3
    %p66 = por %p64, %p65
    %p67 = scmp.ne.s32.totalorder %s58, %s59
    %p68 = scmp.eq.s32.totalorder %s15, 0
    %p69 = por %p67, %p68
    %p70 = scmp.ne.s32.totalorder %s58, %s59
    %p71 = scmp.eq.s32.totalorder %s16, 3
    %p72 = por %p70, %p71
    %p74 = scmp.ne.s32.totalorder %s59, %s73
    %p75 = scmp.eq.s32.totalorder %s16, 0
    %p76 = por %p74, %p75
    %s78 = sadd.s32 %s77, 1
    %p81 = scmp.eq.s32.totalorder %s10, 3
    %p82 = scmp.ne.s32.totalorder %s77, %s79
    %p83 = scmp.eq.s32.totalorder %s10, 0
    %p84 = por %p82, %p83
    %p85 = scmp.ne.s32.totalorder %s77, %s79
    %p86 = scmp.eq.s32.totalorder %s15, 3
    %p87 = por %p85, %p86
    %p88 = scmp.ne.s32.totalorder %s79, %s80
    %p89 = scmp.eq.s32.totalorder %s15, 0
    %p90 = por %p88, %p89
    %p91 = scmp.ne.s32.totalorder %s79, %s80
    %p92 = scmp.eq.s32.totalorder %s16, 3
    %p93 = por %p91, %p92
    %p95 = scmp.ne.s32.totalorder %s80, %s94
    %p96 = scmp.eq.s32.totalorder %s16, 0
    %p97 = por %p95, %p96
    %s99 = sadd.s32 %s98, 1
    %p102 = scmp.eq.s32.totalorder %s10, 3
    %p103 = scmp.ne.s32.totalorder %s98, %s100
    %p104 = scmp.eq.s32.totalorder %s10, 0
    %p105 = por %p103, %p104
    %p106 = scmp.ne.s32.totalorder %s98, %s100
    %p107 = scmp.eq.s32.totalorder %s15, 3
    %p108 = por %p106, %p107
    %p109 = scmp.ne.s32.totalorder %s100, %s101
    %p110 = scmp.eq.s32.totalorder %s15, 0
    %p111 = por %p109, %p110
    %p112 = scmp.ne.s32.totalorder %s100, %s101
    %p113 = scmp.eq.s32.totalorder %s16, 3
    %p114 = por %p112, %p113
    %p116 = scmp.ne.s32.totalorder %s101, %s115
    %p117 = scmp.eq.s32.totalorder %s16, 0
    %p118 = por %p116, %p117
    %s119 = smul.u32 %s17, %s18
    %s120 = smul.u32 %s29, %s25
    %s121 = ssub.s32 %s119, %s120
    %p122 = scmp.eq.s32.totalorder %s121, 0
    %s124 = sadd.s32 %s123, 1
    %s125 = scalar_select %p122, %s123, %s124
    %p128 = pneg %p122
    %p129 = scmp.eq.s32.totalorder %s10, 3
    %p130 = por %p128, %p129
    %p131 = scmp.ne.s32.totalorder %s123, %s126
    %p132 = scmp.eq.s32.totalorder %s10, 0
    %p133 = por %p131, %p132
    %p134 = scmp.ne.s32.totalorder %s123, %s126
    %p135 = scmp.eq.s32.totalorder %s15, 3
    %p136 = por %p134, %p135
    %p137 = scmp.ne.s32.totalorder %s126, %s127
    %p138 = scmp.eq.s32.totalorder %s15, 0
    %p139 = por %p137, %p138
    %p140 = scmp.ne.s32.totalorder %s126, %s127
    %p141 = scmp.eq.s32.totalorder %s16, 3
    %p142 = por %p140, %p141
    %p144 = scmp.ne.s32.totalorder %s127, %s143
    %p145 = scmp.eq.s32.totalorder %s16, 0
    %p146 = por %p144, %p145
    %p147 = scmp.le.s32.totalorder 1, %s10
    %p148 = scmp.lt.s32.totalorder %s10, 5
    %p149 = pnand %p147, %p148
    %p150 = pneg %p149
    // Predicated region
    $region9: #{recurrent_criss_cross_attention.5} parent=5 // pred_check
      _
    $region10: #{recurrent_criss_cross_attention.5} parent=5 // pred_check_branch
      %152 = sbr.rel (%p149) target = $region12
    $region11: #{recurrent_criss_cross_attention.5} parent=5 // pred_region
      %s153 = ssub.s32 %s10, 1
      // Predicated region
      $region13: #{recurrent_criss_cross_attention.5} parent=11 // pred_check
        %p154 = pneg %p69
      $region14: #{recurrent_criss_cross_attention.5} parent=11 // pred_check_branch
        %156 = sbr.rel (%p154) target = $region16
      $region15: #{recurrent_criss_cross_attention.5} parent=11 // pred_region
        _
      $region16: #{recurrent_criss_cross_attention.5} parent=11 // pred_fallthru
        _
      // Predicated region
      $region17: #{recurrent_criss_cross_attention.5} parent=11 // pred_check
        %p157 = pneg %p90
      $region18: #{recurrent_criss_cross_attention.5} parent=11 // pred_check_branch
        %159 = sbr.rel (%p157) target = $region20
      $region19: #{recurrent_criss_cross_attention.5} parent=11 // pred_region
        _
      $region20: #{recurrent_criss_cross_attention.5} parent=11 // pred_fallthru
        _
      // Predicated region
      $region21: #{recurrent_criss_cross_attention.5} parent=11 // pred_check
        %p160 = pneg %p111
      $region22: #{recurrent_criss_cross_attention.5} parent=11 // pred_check_branch
        %162 = sbr.rel (%p160) target = $region24
      $region23: #{recurrent_criss_cross_attention.5} parent=11 // pred_region
        _
      $region24: #{recurrent_criss_cross_attention.5} parent=11 // pred_fallthru
        _
    $region12: #{recurrent_criss_cross_attention.5} parent=5 // pred_fallthru
      _
    %p163 = scmp.lt.s32.totalorder %s10, 4
    // Predicated region
    $region25: #{recurrent_criss_cross_attention.5} parent=5 // pred_check
      %p164 = pneg %p163
    $region26: #{recurrent_criss_cross_attention.5} parent=5 // pred_check_branch
      %166 = sbr.rel (%p164) target = $region28
    $region27: #{recurrent_criss_cross_attention.5} parent=5 // pred_region
      // Predicated region
      $region29: #{recurrent_criss_cross_attention.5} parent=27 // pred_check
        %p167 = pneg %p42
      $region30: #{recurrent_criss_cross_attention.5} parent=27 // pred_check_branch
        %169 = sbr.rel (%p167) target = $region32
      $region31: #{recurrent_criss_cross_attention.5} parent=27 // pred_region
        %p170 = scmp.lt.s32.totalorder %s18, 1
        %s171 = scalar_select %p170, %s18, 1
        %s172 = smul.addr %s171, 54
        %s173 = smul.addr %s172, 8
        %s174 = scalar_lea.vmem %s0, %s173
      $region32: #{recurrent_criss_cross_attention.5} parent=27 // pred_fallthru
        _
    $region28: #{recurrent_criss_cross_attention.5} parent=5 // pred_fallthru
      _
    %p175 = scmp.le.s32.totalorder 1, %s10
    %p176 = scmp.lt.s32.totalorder %s10, 5
    %p177 = pnand %p175, %p176
    %p178 = pneg %p177
    // Predicated region
    $region33: #{recurrent_criss_cross_attention.5} parent=5 // pred_check
      _
    $region34: #{recurrent_criss_cross_attention.5} parent=5 // pred_check_branch
      %180 = sbr.rel (%p177) target = $region36
    $region35: #{recurrent_criss_cross_attention.5} parent=5 // pred_region
      %s181 = ssub.s32 %s10, 1
      %p182 = scmp.lt.s32.totalorder %s20, 1
      %s183 = scalar_select %p182, %s20, 1
      %s184 = smul.addr %s183, 54
      %s185 = smul.addr %s184, 8
      %s186 = scalar_lea.vmem %s0, %s185
      %p187 = pneg %p48
      %p188 = pneg %p45
      %p189 = pneg %p69
      %p190 = pneg %p66
      %p191 = pneg %p90
      %p192 = pneg %p87
      %p193 = pneg %p111
      %p194 = pneg %p108
      %p195 = pneg %p139
      %p196 = pneg %p136
      %s197 = smul.u32 %s19, %s20
      %p198 = scmp.lt.s32.totalorder %s197, 1
      %s199 = scalar_select %p198, %s197, 1
      %s200 = smul.addr %s199, 32
      %s201 = smul.addr %s200, 8
      %s202 = scalar_lea.vmem %s4, %s201
      %p203 = scmp.lt.s32.totalorder %s20, 1
      %s204 = scalar_select %p203, %s20, 1
      %s205 = smul.addr %s204, 54
      %s206 = smul.addr %s205, 8
      %s207 = scalar_lea.vmem %s0, %s206
      %s208 = smul.u32 %s19, %s20
      %p209 = scmp.lt.s32.totalorder %s208, 1
      %s210 = scalar_select %p209, %s208, 1
      %s211 = smul.addr %s210, 32
      %s212 = smul.addr %s211, 8
      %s213 = scalar_lea.vmem %s4, %s212
      %s214 = smul.u32 %s19, %s20
      %v215 = vld [vmem:[%s207] sm:$0xff]
      %v216 = vld [vmem:[%s207 + $0x8] sm:$0xff]
      %v217 = vld [vmem:[%s207 + $0x18] sm:$0xff]
      %v218 = vld [vmem:[%s207 + $0x20] sm:$0xff]
      %v219 = vld [vmem:[%s207 + $0x30] sm:$0xff]
      %v220 = vld [vmem:[%s207 + $0x38] sm:$0xff]
      %v221 = vld [vmem:[%s207 + $0x48] sm:$0xff]
      %v222 = vld [vmem:[%s207 + $0x50] sm:$0xff]
      %v223 = vld [vmem:[%s207 + $0x60] sm:$0xff]
      %v224 = vld [vmem:[%s207 + $0x68] sm:$0xff]
      %v225 = vld [vmem:[%s207 + $0x78] sm:$0xff]
      %v226 = vld [vmem:[%s207 + $0x80] sm:$0xff]
      %v227 = vld [vmem:[%s207 + $0x90] sm:$0xff]
      %v228 = vld [vmem:[%s207 + $0x98] sm:$0xff]
      %v229 = vld [vmem:[%s207 + $0xa8] sm:$0xff]
      %v230 = vld [vmem:[%s207 + $0xb0] sm:$0xff]
      %v231 = vld [vmem:[%s207 + $0xc0] sm:$0xff]
      %v232 = vld [vmem:[%s207 + $0xc8] sm:$0xff]
      %v233 = vld [vmem:[%s207 + $0xd8] sm:$0xff]
      %v234 = vld [vmem:[%s207 + $0xe0] sm:$0xff]
      %v235 = vld [vmem:[%s207 + $0xf0] sm:$0xff]
      %v236 = vld [vmem:[%s207 + $0xf8] sm:$0xff]
      %v237 = vld [vmem:[%s207 + $0x108] sm:$0xff]
      %v238 = vld [vmem:[%s207 + $0x110] sm:$0xff]
      %v239 = vld [vmem:[%s207 + $0x120] sm:$0xff]
      %v240 = vld [vmem:[%s207 + $0x128] sm:$0xff]
      %v241 = vld [vmem:[%s207 + $0x138] sm:$0xff]
      %v242 = vld [vmem:[%s207 + $0x140] sm:$0xff]
      %v243 = vld [vmem:[%s207 + $0x150] sm:$0xff]
      %v244 = vld [vmem:[%s207 + $0x158] sm:$0xff]
      %v245 = vld [vmem:[%s207 + $0x168] sm:$0xff]
      %v246 = vld [vmem:[%s207 + $0x170] sm:$0xff]
      %v247 = vld [vmem:[%s1] sm:$0xff]
      %v248 = vld [vmem:[%s1 + $0x8] sm:$0xff]
      %v249 = vld [vmem:[%s1 + $0x10] sm:$0xff]
      %v250 = vld [vmem:[%s1 + $0x18] sm:$0xff]
      %v251 = vld [vmem:[%s207 + $0x1] sm:$0xff]
      %v252 = vld [vmem:[%s207 + $0x9] sm:$0xff]
      %v253 = vld [vmem:[%s207 + $0x19] sm:$0xff]
      %v254 = vld [vmem:[%s207 + $0x21] sm:$0xff]
      %v255 = vld [vmem:[%s207 + $0x31] sm:$0xff]
      %v256 = vld [vmem:[%s207 + $0x39] sm:$0xff]
      %v257 = vld [vmem:[%s207 + $0x49] sm:$0xff]
      %v258 = vld [vmem:[%s207 + $0x51] sm:$0xff]
      %v259 = vld [vmem:[%s207 + $0x61] sm:$0xff]
      %v260 = vld [vmem:[%s207 + $0x69] sm:$0xff]
      %v261 = vld [vmem:[%s207 + $0x79] sm:$0xff]
      %v262 = vld [vmem:[%s207 + $0x81] sm:$0xff]
      %v263 = vld [vmem:[%s207 + $0x91] sm:$0xff]
      %v264 = vld [vmem:[%s207 + $0x99] sm:$0xff]
      %v265 = vld [vmem:[%s207 + $0xa9] sm:$0xff]
      %v266 = vld [vmem:[%s207 + $0xb1] sm:$0xff]
      %v267 = vld [vmem:[%s207 + $0xc1] sm:$0xff]
      %v268 = vld [vmem:[%s207 + $0xc9] sm:$0xff]
      %v269 = vld [vmem:[%s207 + $0xd9] sm:$0xff]
      %v270 = vld [vmem:[%s207 + $0xe1] sm:$0xff]
      %v271 = vld [vmem:[%s207 + $0xf1] sm:$0xff]
      %v272 = vld [vmem:[%s207 + $0xf9] sm:$0xff]
      %v273 = vld [vmem:[%s207 + $0x109] sm:$0xff]
      %v274 = vld [vmem:[%s207 + $0x111] sm:$0xff]
      %v275 = vld [vmem:[%s207 + $0x121] sm:$0xff]
      %v276 = vld [vmem:[%s207 + $0x129] sm:$0xff]
      %v277 = vld [vmem:[%s207 + $0x139] sm:$0xff]
      %v278 = vld [vmem:[%s207 + $0x141] sm:$0xff]
      %v279 = vld [vmem:[%s207 + $0x151] sm:$0xff]
      %v280 = vld [vmem:[%s207 + $0x159] sm:$0xff]
      %v281 = vld [vmem:[%s207 + $0x169] sm:$0xff]
      %v282 = vld [vmem:[%s207 + $0x171] sm:$0xff]
      %v283 = vld [vmem:[%s1 + $0x20] sm:$0xff]
      %v284 = vld [vmem:[%s1 + $0x28] sm:$0xff]
      %v285 = vld [vmem:[%s1 + $0x30] sm:$0xff]
      %v286 = vld [vmem:[%s1 + $0x38] sm:$0xff]
      %vm287 = vcmask 261120
      %v289 = vsel %vm287, %v251, 0
      %v292 = vsel %vm287, %v252, 0
      %v295 = vsel %vm287, %v253, 0
      %v298 = vsel %vm287, %v254, 0
      %v301 = vsel %vm287, %v255, 0
      %v304 = vsel %vm287, %v256, 0
      %v307 = vsel %vm287, %v257, 0
      %v310 = vsel %vm287, %v258, 0
      %v313 = vsel %vm287, %v259, 0
      %v316 = vsel %vm287, %v260, 0
      %v319 = vsel %vm287, %v261, 0
      %v322 = vsel %vm287, %v262, 0
      %v325 = vsel %vm287, %v263, 0
      %v328 = vsel %vm287, %v264, 0
      %v331 = vsel %vm287, %v265, 0
      %v334 = vsel %vm287, %v266, 0
      %v337 = vsel %vm287, %v267, 0
      %v340 = vsel %vm287, %v268, 0
      %v343 = vsel %vm287, %v269, 0
      %v346 = vsel %vm287, %v270, 0
      %v349 = vsel %vm287, %v271, 0
      %v352 = vsel %vm287, %v272, 0
      %v355 = vsel %vm287, %v273, 0
      %v358 = vsel %vm287, %v274, 0
      %v361 = vsel %vm287, %v275, 0
      %v364 = vsel %vm287, %v276, 0
      %v367 = vsel %vm287, %v277, 0
      %v370 = vsel %vm287, %v278, 0
      %v373 = vsel %vm287, %v279, 0
      %v376 = vsel %vm287, %v280, 0
      %v379 = vsel %vm287, %v281, 0
      %v382 = vsel %vm287, %v282, 0
      %384 = vmatpush.msra.mxu0 0.0
      %385 = vmatpush.msra.mxu0 0.0
      %386 = vmatpush.msra.mxu0 0.0
      %387 = vmatpush.msra.mxu0 0.0
      %388 = vmatpush.msra.mxu0 0.0
      %389 = vmatpush.msra.mxu0 0.0
      %390 = vmatpush.msra.mxu0 0.0
      %391 = vmatpush.msra.mxu0 0.0
      %392 = vmatpush.msra.mxu0 0.0
      %393 = vmatpush.msra.mxu0 0.0
      %394 = vmatpush.msra.mxu0 0.0
      %395 = vmatpush.msra.mxu0 0.0
      %396 = vmatpush.msra.mxu0 %v286
      %397 = vmatpush.msra.mxu0 %v285
      %398 = vmatpush.msra.mxu0 %v284
      %399 = vmatpush.msra.mxu0 %v283
      %400 = vmatmul.f32.gmra.mxu0 %v289
      %v401 = vpop.f32.mrf.mxu0
      %v402 = vadd.f32 0.0, %v401
      %403 = vmatmul.f32.gmra.mxu0 %v292
      %v404 = vpop.f32.mrf.mxu0
      %v405 = vadd.f32 0.0, %v404
      %406 = vmatmul.f32.gmra.mxu0 %v295
      %v407 = vpop.f32.mrf.mxu0
      %v408 = vadd.f32 0.0, %v407
      %409 = vmatmul.f32.gmra.mxu0 %v298
      %v410 = vpop.f32.mrf.mxu0
      %v411 = vadd.f32 0.0, %v410
      %412 = vmatmul.f32.gmra.mxu0 %v301
      %v413 = vpop.f32.mrf.mxu0
      %v414 = vadd.f32 0.0, %v413
      %415 = vmatmul.f32.gmra.mxu0 %v304
      %v416 = vpop.f32.mrf.mxu0
      %v417 = vadd.f32 0.0, %v416
      %418 = vmatmul.f32.gmra.mxu0 %v307
      %v419 = vpop.f32.mrf.mxu0
      %v420 = vadd.f32 0.0, %v419
      %421 = vmatmul.f32.gmra.mxu0 %v310
      %v422 = vpop.f32.mrf.mxu0
      %v423 = vadd.f32 0.0, %v422
      %424 = vmatmul.f32.gmra.mxu0 %v313
      %v425 = vpop.f32.mrf.mxu0
      %v426 = vadd.f32 0.0, %v425
      %427 = vmatmul.f32.gmra.mxu0 %v316
      %v428 = vpop.f32.mrf.mxu0
      %v429 = vadd.f32 0.0, %v428
      %430 = vmatmul.f32.gmra.mxu0 %v319
      %v431 = vpop.f32.mrf.mxu0
      %v432 = vadd.f32 0.0, %v431
      %433 = vmatmul.f32.gmra.mxu0 %v322
      %v434 = vpop.f32.mrf.mxu0
      %v435 = vadd.f32 0.0, %v434
      %436 = vmatmul.f32.gmra.mxu0 %v325
      %v437 = vpop.f32.mrf.mxu0
      %v438 = vadd.f32 0.0, %v437
      %439 = vmatmul.f32.gmra.mxu0 %v328
      %v440 = vpop.f32.mrf.mxu0
      %v441 = vadd.f32 0.0, %v440
      %442 = vmatmul.f32.gmra.mxu0 %v331
      %v443 = vpop.f32.mrf.mxu0
      %v444 = vadd.f32 0.0, %v443
      %445 = vmatmul.f32.gmra.mxu0 %v334
      %v446 = vpop.f32.mrf.mxu0
      %v447 = vadd.f32 0.0, %v446
      %448 = vmatmul.f32.gmra.mxu0 %v337
      %v449 = vpop.f32.mrf.mxu0
      %v450 = vadd.f32 0.0, %v449
      %451 = vmatmul.f32.gmra.mxu0 %v340
      %v452 = vpop.f32.mrf.mxu0
      %v453 = vadd.f32 0.0, %v452
      %454 = vmatmul.f32.gmra.mxu0 %v343
      %v455 = vpop.f32.mrf.mxu0
      %v456 = vadd.f32 0.0, %v455
      %457 = vmatmul.f32.gmra.mxu0 %v346
      %v458 = vpop.f32.mrf.mxu0
      %v459 = vadd.f32 0.0, %v458
      %460 = vmatmul.f32.gmra.mxu0 %v349
      %v461 = vpop.f32.mrf.mxu0
      %v462 = vadd.f32 0.0, %v461
      %463 = vmatmul.f32.gmra.mxu0 %v352
      %v464 = vpop.f32.mrf.mxu0
      %v465 = vadd.f32 0.0, %v464
      %466 = vmatmul.f32.gmra.mxu0 %v355
      %v467 = vpop.f32.mrf.mxu0
      %v468 = vadd.f32 0.0, %v467
      %469 = vmatmul.f32.gmra.mxu0 %v358
      %v470 = vpop.f32.mrf.mxu0
      %v471 = vadd.f32 0.0, %v470
      %472 = vmatmul.f32.gmra.mxu0 %v361
      %v473 = vpop.f32.mrf.mxu0
      %v474 = vadd.f32 0.0, %v473
      %475 = vmatmul.f32.gmra.mxu0 %v364
      %v476 = vpop.f32.mrf.mxu0
      %v477 = vadd.f32 0.0, %v476
      %478 = vmatmul.f32.gmra.mxu0 %v367
      %v479 = vpop.f32.mrf.mxu0
      %v480 = vadd.f32 0.0, %v479
      %481 = vmatmul.f32.gmra.mxu0 %v370
      %v482 = vpop.f32.mrf.mxu0
      %v483 = vadd.f32 0.0, %v482
      %484 = vmatmul.f32.gmra.mxu0 %v373
      %v485 = vpop.f32.mrf.mxu0
      %v486 = vadd.f32 0.0, %v485
      %487 = vmatmul.f32.gmra.mxu0 %v376
      %v488 = vpop.f32.mrf.mxu0
      %v489 = vadd.f32 0.0, %v488
      %490 = vmatmul.f32.gmra.mxu0 %v379
      %v491 = vpop.f32.mrf.mxu0
      %v492 = vadd.f32 0.0, %v491
      %493 = vmatmul.f32.gmra.mxu0 %v382
      %v494 = vpop.f32.mrf.mxu0
      %v495 = vadd.f32 0.0, %v494
      %496 = vdwg.mxu0
      %v498 = vsel %vm287, %v215, 0
      %v501 = vsel %vm287, %v216, 0
      %v504 = vsel %vm287, %v217, 0
      %v507 = vsel %vm287, %v218, 0
      %v510 = vsel %vm287, %v219, 0
      %v513 = vsel %vm287, %v220, 0
      %v516 = vsel %vm287, %v221, 0
      %v519 = vsel %vm287, %v222, 0
      %v522 = vsel %vm287, %v223, 0
      %v525 = vsel %vm287, %v224, 0
      %v528 = vsel %vm287, %v225, 0
      %v531 = vsel %vm287, %v226, 0
      %v534 = vsel %vm287, %v227, 0
      %v537 = vsel %vm287, %v228, 0
      %v540 = vsel %vm287, %v229, 0
      %v543 = vsel %vm287, %v230, 0
      %v546 = vsel %vm287, %v231, 0
      %v549 = vsel %vm287, %v232, 0
      %v552 = vsel %vm287, %v233, 0
      %v555 = vsel %vm287, %v234, 0
      %v558 = vsel %vm287, %v235, 0
      %v561 = vsel %vm287, %v236, 0
      %v564 = vsel %vm287, %v237, 0
      %v567 = vsel %vm287, %v238, 0
      %v570 = vsel %vm287, %v239, 0
      %v573 = vsel %vm287, %v240, 0
      %v576 = vsel %vm287, %v241, 0
      %v579 = vsel %vm287, %v242, 0
      %v582 = vsel %vm287, %v243, 0
      %v585 = vsel %vm287, %v244, 0
      %v588 = vsel %vm287, %v245, 0
      %v591 = vsel %vm287, %v246, 0
      %593 = vmatpush.msra.mxu0 0.0
      %594 = vmatpush.msra.mxu0 0.0
      %595 = vmatpush.msra.mxu0 0.0
      %596 = vmatpush.msra.mxu0 0.0
      %597 = vmatpush.msra.mxu0 0.0
      %598 = vmatpush.msra.mxu0 0.0
      %599 = vmatpush.msra.mxu0 0.0
      %600 = vmatpush.msra.mxu0 0.0
      %601 = vmatpush.msra.mxu0 0.0
      %602 = vmatpush.msra.mxu0 0.0
      %603 = vmatpush.msra.mxu0 0.0
      %604 = vmatpush.msra.mxu0 0.0
      %605 = vmatpush.msra.mxu0 %v250
      %606 = vmatpush.msra.mxu0 %v249
      %607 = vmatpush.msra.mxu0 %v248
      %608 = vmatpush.msra.mxu0 %v247
      %609 = vmatmul.f32.gmra.mxu0 %v498
      %v610 = vpop.f32.mrf.mxu0
      %v611 = vadd.f32 %v402, %v610
      %612 = vmatmul.f32.gmra.mxu0 %v501
      %v613 = vpop.f32.mrf.mxu0
      %v614 = vadd.f32 %v405, %v613
      %615 = vmatmul.f32.gmra.mxu0 %v504
      %v616 = vpop.f32.mrf.mxu0
      %v617 = vadd.f32 %v408, %v616
      %618 = vmatmul.f32.gmra.mxu0 %v507
      %v619 = vpop.f32.mrf.mxu0
      %v620 = vadd.f32 %v411, %v619
      %621 = vmatmul.f32.gmra.mxu0 %v510
      %v622 = vpop.f32.mrf.mxu0
      %v623 = vadd.f32 %v414, %v622
      %624 = vmatmul.f32.gmra.mxu0 %v513
      %v625 = vpop.f32.mrf.mxu0
      %v626 = vadd.f32 %v417, %v625
      %627 = vmatmul.f32.gmra.mxu0 %v516
      %v628 = vpop.f32.mrf.mxu0
      %v629 = vadd.f32 %v420, %v628
      %630 = vmatmul.f32.gmra.mxu0 %v519
      %v631 = vpop.f32.mrf.mxu0
      %v632 = vadd.f32 %v423, %v631
      %633 = vmatmul.f32.gmra.mxu0 %v522
      %v634 = vpop.f32.mrf.mxu0
      %v635 = vadd.f32 %v426, %v634
      %636 = vmatmul.f32.gmra.mxu0 %v525
      %v637 = vpop.f32.mrf.mxu0
      %v638 = vadd.f32 %v429, %v637
      %639 = vmatmul.f32.gmra.mxu0 %v528
      %v640 = vpop.f32.mrf.mxu0
      %v641 = vadd.f32 %v432, %v640
      %642 = vmatmul.f32.gmra.mxu0 %v531
      %v643 = vpop.f32.mrf.mxu0
      %v644 = vadd.f32 %v435, %v643
      %645 = vmatmul.f32.gmra.mxu0 %v534
      %v646 = vpop.f32.mrf.mxu0
      %v647 = vadd.f32 %v438, %v646
      %648 = vmatmul.f32.gmra.mxu0 %v537
      %v649 = vpop.f32.mrf.mxu0
      %v650 = vadd.f32 %v441, %v649
      %651 = vmatmul.f32.gmra.mxu0 %v540
      %v652 = vpop.f32.mrf.mxu0
      %v653 = vadd.f32 %v444, %v652
      %654 = vmatmul.f32.gmra.mxu0 %v543
      %v655 = vpop.f32.mrf.mxu0
      %v656 = vadd.f32 %v447, %v655
      %657 = vmatmul.f32.gmra.mxu0 %v546
      %v658 = vpop.f32.mrf.mxu0
      %v659 = vadd.f32 %v450, %v658
      %660 = vmatmul.f32.gmra.mxu0 %v549
      %v661 = vpop.f32.mrf.mxu0
      %v662 = vadd.f32 %v453, %v661
      %663 = vmatmul.f32.gmra.mxu0 %v552
      %v664 = vpop.f32.mrf.mxu0
      %v665 = vadd.f32 %v456, %v664
      %666 = vmatmul.f32.gmra.mxu0 %v555
      %v667 = vpop.f32.mrf.mxu0
      %v668 = vadd.f32 %v459, %v667
      %669 = vmatmul.f32.gmra.mxu0 %v558
      %v670 = vpop.f32.mrf.mxu0
      %v671 = vadd.f32 %v462, %v670
      %672 = vmatmul.f32.gmra.mxu0 %v561
      %v673 = vpop.f32.mrf.mxu0
      %v674 = vadd.f32 %v465, %v673
      %675 = vmatmul.f32.gmra.mxu0 %v564
      %v676 = vpop.f32.mrf.mxu0
      %v677 = vadd.f32 %v468, %v676
      %678 = vmatmul.f32.gmra.mxu0 %v567
      %v679 = vpop.f32.mrf.mxu0
      %v680 = vadd.f32 %v471, %v679
      %681 = vmatmul.f32.gmra.mxu0 %v570
      %v682 = vpop.f32.mrf.mxu0
      %v683 = vadd.f32 %v474, %v682
      %684 = vmatmul.f32.gmra.mxu0 %v573
      %v685 = vpop.f32.mrf.mxu0
      %v686 = vadd.f32 %v477, %v685
      %687 = vmatmul.f32.gmra.mxu0 %v576
      %v688 = vpop.f32.mrf.mxu0
      %v689 = vadd.f32 %v480, %v688
      %690 = vmatmul.f32.gmra.mxu0 %v579
      %v691 = vpop.f32.mrf.mxu0
      %v692 = vadd.f32 %v483, %v691
      %693 = vmatmul.f32.gmra.mxu0 %v582
      %v694 = vpop.f32.mrf.mxu0
      %v695 = vadd.f32 %v486, %v694
      %696 = vmatmul.f32.gmra.mxu0 %v585
      %v697 = vpop.f32.mrf.mxu0
      %v698 = vadd.f32 %v489, %v697
      %699 = vmatmul.f32.gmra.mxu0 %v588
      %v700 = vpop.f32.mrf.mxu0
      %v701 = vadd.f32 %v492, %v700
      %702 = vmatmul.f32.gmra.mxu0 %v591
      %v703 = vpop.f32.mrf.mxu0
      %v704 = vadd.f32 %v495, %v703
      %705 = vdwg.mxu0
      %v706 = vld [vmem:[%s207 + $0x2] sm:$0xff]
      %v707 = vld [vmem:[%s207 + $0xa] sm:$0xff]
      %v708 = vld [vmem:[%s207 + $0x1a] sm:$0xff]
      %v709 = vld [vmem:[%s207 + $0x22] sm:$0xff]
      %v710 = vld [vmem:[%s207 + $0x32] sm:$0xff]
      %v711 = vld [vmem:[%s207 + $0x3a] sm:$0xff]
      %v712 = vld [vmem:[%s207 + $0x4a] sm:$0xff]
      %v713 = vld [vmem:[%s207 + $0x52] sm:$0xff]
      %v714 = vld [vmem:[%s207 + $0x62] sm:$0xff]
      %v715 = vld [vmem:[%s207 + $0x6a] sm:$0xff]
      %v716 = vld [vmem:[%s207 + $0x7a] sm:$0xff]
      %v717 = vld [vmem:[%s207 + $0x82] sm:$0xff]
      %v718 = vld [vmem:[%s207 + $0x92] sm:$0xff]
      %v719 = vld [vmem:[%s207 + $0x9a] sm:$0xff]
      %v720 = vld [vmem:[%s207 + $0xaa] sm:$0xff]
      %v721 = vld [vmem:[%s207 + $0xb2] sm:$0xff]
      %v722 = vld [vmem:[%s207 + $0xc2] sm:$0xff]
      %v723 = vld [vmem:[%s207 + $0xca] sm:$0xff]
      %v724 = vld [vmem:[%s207 + $0xda] sm:$0xff]
      %v725 = vld [vmem:[%s207 + $0xe2] sm:$0xff]
      %v726 = vld [vmem:[%s207 + $0xf2] sm:$0xff]
      %v727 = vld [vmem:[%s207 + $0xfa] sm:$0xff]
      %v728 = vld [vmem:[%s207 + $0x10a] sm:$0xff]
      %v729 = vld [vmem:[%s207 + $0x112] sm:$0xff]
      %v730 = vld [vmem:[%s207 + $0x122] sm:$0xff]
      %v731 = vld [vmem:[%s207 + $0x12a] sm:$0xff]
      %v732 = vld [vmem:[%s207 + $0x13a] sm:$0xff]
      %v733 = vld [vmem:[%s207 + $0x142] sm:$0xff]
      %v734 = vld [vmem:[%s207 + $0x152] sm:$0xff]
      %v735 = vld [vmem:[%s207 + $0x15a] sm:$0xff]
      %v736 = vld [vmem:[%s207 + $0x16a] sm:$0xff]
      %v737 = vld [vmem:[%s207 + $0x172] sm:$0xff]
      %v738 = vld [vmem:[%s1 + $0x40] sm:$0xff]
      %v739 = vld [vmem:[%s1 + $0x48] sm:$0xff]
      %v740 = vld [vmem:[%s1 + $0x50] sm:$0xff]
      %v741 = vld [vmem:[%s1 + $0x58] sm:$0xff]
      %v743 = vsel %vm287, %v706, 0
      %v746 = vsel %vm287, %v707, 0
      %v749 = vsel %vm287, %v708, 0
      %v752 = vsel %vm287, %v709, 0
      %v755 = vsel %vm287, %v710, 0
      %v758 = vsel %vm287, %v711, 0
      %v761 = vsel %vm287, %v712, 0
      %v764 = vsel %vm287, %v713, 0
      %v767 = vsel %vm287, %v714, 0
      %v770 = vsel %vm287, %v715, 0
      %v773 = vsel %vm287, %v716, 0
      %v776 = vsel %vm287, %v717, 0
      %v779 = vsel %vm287, %v718, 0
      %v782 = vsel %vm287, %v719, 0
      %v785 = vsel %vm287, %v720, 0
      %v788 = vsel %vm287, %v721, 0
      %v791 = vsel %vm287, %v722, 0
      %v794 = vsel %vm287, %v723, 0
      %v797 = vsel %vm287, %v724, 0
      %v800 = vsel %vm287, %v725, 0
      %v803 = vsel %vm287, %v726, 0
      %v806 = vsel %vm287, %v727, 0
      %v809 = vsel %vm287, %v728, 0
      %v812 = vsel %vm287, %v729, 0
      %v815 = vsel %vm287, %v730, 0
      %v818 = vsel %vm287, %v731, 0
      %v821 = vsel %vm287, %v732, 0
      %v824 = vsel %vm287, %v733, 0
      %v827 = vsel %vm287, %v734, 0
      %v830 = vsel %vm287, %v735, 0
      %v833 = vsel %vm287, %v736, 0
      %v836 = vsel %vm287, %v737, 0
      %838 = vmatpush.msra.mxu0 0.0
      %839 = vmatpush.msra.mxu0 0.0
      %840 = vmatpush.msra.mxu0 0.0
      %841 = vmatpush.msra.mxu0 0.0
      %842 = vmatpush.msra.mxu0 0.0
      %843 = vmatpush.msra.mxu0 0.0
      %844 = vmatpush.msra.mxu0 0.0
      %845 = vmatpush.msra.mxu0 0.0
      %846 = vmatpush.msra.mxu0 0.0
      %847 = vmatpush.msra.mxu0 0.0
      %848 = vmatpush.msra.mxu0 0.0
      %849 = vmatpush.msra.mxu0 0.0
      %850 = vmatpush.msra.mxu0 %v741
      %851 = vmatpush.msra.mxu0 %v740
      %852 = vmatpush.msra.mxu0 %v739
      %853 = vmatpush.msra.mxu0 %v738
      %854 = vmatmul.f32.gmra.mxu0 %v743
      %v855 = vpop.f32.mrf.mxu0
      %v856 = vadd.f32 0.0, %v855
      %857 = vmatmul.f32.gmra.mxu0 %v746
      %v858 = vpop.f32.mrf.mxu0
      %v859 = vadd.f32 0.0, %v858
      %860 = vmatmul.f32.gmra.mxu0 %v749
      %v861 = vpop.f32.mrf.mxu0
      %v862 = vadd.f32 0.0, %v861
      %863 = vmatmul.f32.gmra.mxu0 %v752
      %v864 = vpop.f32.mrf.mxu0
      %v865 = vadd.f32 0.0, %v864
      %866 = vmatmul.f32.gmra.mxu0 %v755
      %v867 = vpop.f32.mrf.mxu0
      %v868 = vadd.f32 0.0, %v867
      %869 = vmatmul.f32.gmra.mxu0 %v758
      %v870 = vpop.f32.mrf.mxu0
      %v871 = vadd.f32 0.0, %v870
      %872 = vmatmul.f32.gmra.mxu0 %v761
      %v873 = vpop.f32.mrf.mxu0
      %v874 = vadd.f32 0.0, %v873
      %875 = vmatmul.f32.gmra.mxu0 %v764
      %v876 = vpop.f32.mrf.mxu0
      %v877 = vadd.f32 0.0, %v876
      %878 = vmatmul.f32.gmra.mxu0 %v767
      %v879 = vpop.f32.mrf.mxu0
      %v880 = vadd.f32 0.0, %v879
      %881 = vmatmul.f32.gmra.mxu0 %v770
      %v882 = vpop.f32.mrf.mxu0
      %v883 = vadd.f32 0.0, %v882
      %884 = vmatmul.f32.gmra.mxu0 %v773
      %v885 = vpop.f32.mrf.mxu0
      %v886 = vadd.f32 0.0, %v885
      %887 = vmatmul.f32.gmra.mxu0 %v776
      %v888 = vpop.f32.mrf.mxu0
      %v889 = vadd.f32 0.0, %v888
      %890 = vmatmul.f32.gmra.mxu0 %v779
      %v891 = vpop.f32.mrf.mxu0
      %v892 = vadd.f32 0.0, %v891
      %893 = vmatmul.f32.gmra.mxu0 %v782
      %v894 = vpop.f32.mrf.mxu0
      %v895 = vadd.f32 0.0, %v894
      %896 = vmatmul.f32.gmra.mxu0 %v785
      %v897 = vpop.f32.mrf.mxu0
      %v898 = vadd.f32 0.0, %v897
      %899 = vmatmul.f32.gmra.mxu0 %v788
      %v900 = vpop.f32.mrf.mxu0
      %v901 = vadd.f32 0.0, %v900
      %902 = vmatmul.f32.gmra.mxu0 %v791
      %v903 = vpop.f32.mrf.mxu0
      %v904 = vadd.f32 0.0, %v903
      %905 = vmatmul.f32.gmra.mxu0 %v794
      %v906 = vpop.f32.mrf.mxu0
      %v907 = vadd.f32 0.0, %v906
      %908 = vmatmul.f32.gmra.mxu0 %v797
      %v909 = vpop.f32.mrf.mxu0
      %v910 = vadd.f32 0.0, %v909
      %911 = vmatmul.f32.gmra.mxu0 %v800
      %v912 = vpop.f32.mrf.mxu0
      %v913 = vadd.f32 0.0, %v912
      %914 = vmatmul.f32.gmra.mxu0 %v803
      %v915 = vpop.f32.mrf.mxu0
      %v916 = vadd.f32 0.0, %v915
      %917 = vmatmul.f32.gmra.mxu0 %v806
      %v918 = vpop.f32.mrf.mxu0
      %v919 = vadd.f32 0.0, %v918
      %920 = vmatmul.f32.gmra.mxu0 %v809
      %v921 = vpop.f32.mrf.mxu0
      %v922 = vadd.f32 0.0, %v921
      %923 = vmatmul.f32.gmra.mxu0 %v812
      %v924 = vpop.f32.mrf.mxu0
      %v925 = vadd.f32 0.0, %v924
      %926 = vmatmul.f32.gmra.mxu0 %v815
      %v927 = vpop.f32.mrf.mxu0
      %v928 = vadd.f32 0.0, %v927
      %929 = vmatmul.f32.gmra.mxu0 %v818
      %v930 = vpop.f32.mrf.mxu0
      %v931 = vadd.f32 0.0, %v930
      %932 = vmatmul.f32.gmra.mxu0 %v821
      %v933 = vpop.f32.mrf.mxu0
      %v934 = vadd.f32 0.0, %v933
      %935 = vmatmul.f32.gmra.mxu0 %v824
      %v936 = vpop.f32.mrf.mxu0
      %v937 = vadd.f32 0.0, %v936
      %938 = vmatmul.f32.gmra.mxu0 %v827
      %v939 = vpop.f32.mrf.mxu0
      %v940 = vadd.f32 0.0, %v939
      %941 = vmatmul.f32.gmra.mxu0 %v830
      %v942 = vpop.f32.mrf.mxu0
      %v943 = vadd.f32 0.0, %v942
      %944 = vmatmul.f32.gmra.mxu0 %v833
      %v945 = vpop.f32.mrf.mxu0
      %v946 = vadd.f32 0.0, %v945
      %947 = vmatmul.f32.gmra.mxu0 %v836
      %v948 = vpop.f32.mrf.mxu0
      %v949 = vadd.f32 0.0, %v948
      %950 = vdwg.mxu0
      %v951 = vadd.f32 %v611, %v856
      %v952 = vadd.f32 %v614, %v859
      %v953 = vadd.f32 %v617, %v862
      %v954 = vadd.f32 %v620, %v865
      %v955 = vadd.f32 %v623, %v868
      %v956 = vadd.f32 %v626, %v871
      %v957 = vadd.f32 %v629, %v874
      %v958 = vadd.f32 %v632, %v877
      %v959 = vadd.f32 %v635, %v880
      %v960 = vadd.f32 %v638, %v883
      %v961 = vadd.f32 %v641, %v886
      %v962 = vadd.f32 %v644, %v889
      %v963 = vadd.f32 %v647, %v892
      %v964 = vadd.f32 %v650, %v895
      %v965 = vadd.f32 %v653, %v898
      %v966 = vadd.f32 %v656, %v901
      %v967 = vadd.f32 %v659, %v904
      %v968 = vadd.f32 %v662, %v907
      %v969 = vadd.f32 %v665, %v910
      %v970 = vadd.f32 %v668, %v913
      %v971 = vadd.f32 %v671, %v916
      %v972 = vadd.f32 %v674, %v919
      %v973 = vadd.f32 %v677, %v922
      %v974 = vadd.f32 %v680, %v925
      %v975 = vadd.f32 %v683, %v928
      %v976 = vadd.f32 %v686, %v931
      %v977 = vadd.f32 %v689, %v934
      %v978 = vadd.f32 %v692, %v937
      %v979 = vadd.f32 %v695, %v940
      %v980 = vadd.f32 %v698, %v943
      %v981 = vadd.f32 %v701, %v946
      %v982 = vadd.f32 %v704, %v949
      %s983 = scalar_lea.vmem %s207, 24
      %v984 = vld [vmem:[%s983] sm:$0xff]
      %v985 = vld [vmem:[%s983 + $0x8] sm:$0xff]
      %v986 = vld [vmem:[%s983 + $0x18] sm:$0xff]
      %v987 = vld [vmem:[%s983 + $0x20] sm:$0xff]
      %v988 = vld [vmem:[%s983 + $0x30] sm:$0xff]
      %v989 = vld [vmem:[%s983 + $0x38] sm:$0xff]
      %v990 = vld [vmem:[%s983 + $0x48] sm:$0xff]
      %v991 = vld [vmem:[%s983 + $0x50] sm:$0xff]
      %v992 = vld [vmem:[%s983 + $0x60] sm:$0xff]
      %v993 = vld [vmem:[%s983 + $0x68] sm:$0xff]
      %v994 = vld [vmem:[%s983 + $0x78] sm:$0xff]
      %v995 = vld [vmem:[%s983 + $0x80] sm:$0xff]
      %v996 = vld [vmem:[%s983 + $0x90] sm:$0xff]
      %v997 = vld [vmem:[%s983 + $0x98] sm:$0xff]
      %v998 = vld [vmem:[%s983 + $0xa8] sm:$0xff]
      %v999 = vld [vmem:[%s983 + $0xb0] sm:$0xff]
      %v1000 = vld [vmem:[%s983 + $0xc0] sm:$0xff]
      %v1001 = vld [vmem:[%s983 + $0xc8] sm:$0xff]
      %v1002 = vld [vmem:[%s983 + $0xd8] sm:$0xff]
      %v1003 = vld [vmem:[%s983 + $0xe0] sm:$0xff]
      %v1004 = vld [vmem:[%s983 + $0xf0] sm:$0xff]
      %v1005 = vld [vmem:[%s983 + $0xf8] sm:$0xff]
      %v1006 = vld [vmem:[%s983 + $0x108] sm:$0xff]
      %v1007 = vld [vmem:[%s983 + $0x110] sm:$0xff]
      %v1008 = vld [vmem:[%s983 + $0x120] sm:$0xff]
      %v1009 = vld [vmem:[%s983 + $0x128] sm:$0xff]
      %v1010 = vld [vmem:[%s983 + $0x138] sm:$0xff]
      %v1011 = vld [vmem:[%s983 + $0x140] sm:$0xff]
      %v1012 = vld [vmem:[%s983 + $0x150] sm:$0xff]
      %v1013 = vld [vmem:[%s983 + $0x158] sm:$0xff]
      %v1014 = vld [vmem:[%s983 + $0x168] sm:$0xff]
      %v1015 = vld [vmem:[%s983 + $0x170] sm:$0xff]
      %v1016 = vld [vmem:[%s1 + $0x60] sm:$0xff]
      %v1017 = vld [vmem:[%s1 + $0x68] sm:$0xff]
      %v1018 = vld [vmem:[%s1 + $0x70] sm:$0xff]
      %v1019 = vld [vmem:[%s1 + $0x78] sm:$0xff]
      %v1021 = vsel %vm287, %v984, 0
      %v1024 = vsel %vm287, %v985, 0
      %v1027 = vsel %vm287, %v986, 0
      %v1030 = vsel %vm287, %v987, 0
      %v1033 = vsel %vm287, %v988, 0
      %v1036 = vsel %vm287, %v989, 0
      %v1039 = vsel %vm287, %v990, 0
      %v1042 = vsel %vm287, %v991, 0
      %v1045 = vsel %vm287, %v992, 0
      %v1048 = vsel %vm287, %v993, 0
      %v1051 = vsel %vm287, %v994, 0
      %v1054 = vsel %vm287, %v995, 0
      %v1057 = vsel %vm287, %v996, 0
      %v1060 = vsel %vm287, %v997, 0
      %v1063 = vsel %vm287, %v998, 0
      %v1066 = vsel %vm287, %v999, 0
      %v1069 = vsel %vm287, %v1000, 0
      %v1072 = vsel %vm287, %v1001, 0
      %v1075 = vsel %vm287, %v1002, 0
      %v1078 = vsel %vm287, %v1003, 0
      %v1081 = vsel %vm287, %v1004, 0
      %v1084 = vsel %vm287, %v1005, 0
      %v1087 = vsel %vm287, %v1006, 0
      %v1090 = vsel %vm287, %v1007, 0
      %v1093 = vsel %vm287, %v1008, 0
      %v1096 = vsel %vm287, %v1009, 0
      %v1099 = vsel %vm287, %v1010, 0
      %v1102 = vsel %vm287, %v1011, 0
      %v1105 = vsel %vm287, %v1012, 0
      %v1108 = vsel %vm287, %v1013, 0
      %v1111 = vsel %vm287, %v1014, 0
      %v1114 = vsel %vm287, %v1015, 0
      %1116 = vmatpush.msra.mxu0 0.0
      %1117 = vmatpush.msra.mxu0 0.0
      %1118 = vmatpush.msra.mxu0 0.0
      %1119 = vmatpush.msra.mxu0 0.0
      %1120 = vmatpush.msra.mxu0 0.0
      %1121 = vmatpush.msra.mxu0 0.0
      %1122 = vmatpush.msra.mxu0 0.0
      %1123 = vmatpush.msra.mxu0 0.0
      %1124 = vmatpush.msra.mxu0 0.0
      %1125 = vmatpush.msra.mxu0 0.0
      %1126 = vmatpush.msra.mxu0 0.0
      %1127 = vmatpush.msra.mxu0 0.0
      %1128 = vmatpush.msra.mxu0 %v1019
      %1129 = vmatpush.msra.mxu0 %v1018
      %1130 = vmatpush.msra.mxu0 %v1017
      %1131 = vmatpush.msra.mxu0 %v1016
      %1132 = vmatmul.f32.gmra.mxu0 %v1021
      %v1133 = vpop.f32.mrf.mxu0
      %v1134 = vadd.f32 0.0, %v1133
      %1135 = vmatmul.f32.gmra.mxu0 %v1024
      %v1136 = vpop.f32.mrf.mxu0
      %v1137 = vadd.f32 0.0, %v1136
      %1138 = vmatmul.f32.gmra.mxu0 %v1027
      %v1139 = vpop.f32.mrf.mxu0
      %v1140 = vadd.f32 0.0, %v1139
      %1141 = vmatmul.f32.gmra.mxu0 %v1030
      %v1142 = vpop.f32.mrf.mxu0
      %v1143 = vadd.f32 0.0, %v1142
      %1144 = vmatmul.f32.gmra.mxu0 %v1033
      %v1145 = vpop.f32.mrf.mxu0
      %v1146 = vadd.f32 0.0, %v1145
      %1147 = vmatmul.f32.gmra.mxu0 %v1036
      %v1148 = vpop.f32.mrf.mxu0
      %v1149 = vadd.f32 0.0, %v1148
      %1150 = vmatmul.f32.gmra.mxu0 %v1039
      %v1151 = vpop.f32.mrf.mxu0
      %v1152 = vadd.f32 0.0, %v1151
      %1153 = vmatmul.f32.gmra.mxu0 %v1042
      %v1154 = vpop.f32.mrf.mxu0
      %v1155 = vadd.f32 0.0, %v1154
      %1156 = vmatmul.f32.gmra.mxu0 %v1045
      %v1157 = vpop.f32.mrf.mxu0
      %v1158 = vadd.f32 0.0, %v1157
      %1159 = vmatmul.f32.gmra.mxu0 %v1048
      %v1160 = vpop.f32.mrf.mxu0
      %v1161 = vadd.f32 0.0, %v1160
      %1162 = vmatmul.f32.gmra.mxu0 %v1051
      %v1163 = vpop.f32.mrf.mxu0
      %v1164 = vadd.f32 0.0, %v1163
      %1165 = vmatmul.f32.gmra.mxu0 %v1054
      %v1166 = vpop.f32.mrf.mxu0
      %v1167 = vadd.f32 0.0, %v1166
      %1168 = vmatmul.f32.gmra.mxu0 %v1057
      %v1169 = vpop.f32.mrf.mxu0
      %v1170 = vadd.f32 0.0, %v1169
      %1171 = vmatmul.f32.gmra.mxu0 %v1060
      %v1172 = vpop.f32.mrf.mxu0
      %v1173 = vadd.f32 0.0, %v1172
      %1174 = vmatmul.f32.gmra.mxu0 %v1063
      %v1175 = vpop.f32.mrf.mxu0
      %v1176 = vadd.f32 0.0, %v1175
      %1177 = vmatmul.f32.gmra.mxu0 %v1066
      %v1178 = vpop.f32.mrf.mxu0
      %v1179 = vadd.f32 0.0, %v1178
      %1180 = vmatmul.f32.gmra.mxu0 %v1069
      %v1181 = vpop.f32.mrf.mxu0
      %v1182 = vadd.f32 0.0, %v1181
      %1183 = vmatmul.f32.gmra.mxu0 %v1072
      %v1184 = vpop.f32.mrf.mxu0
      %v1185 = vadd.f32 0.0, %v1184
      %1186 = vmatmul.f32.gmra.mxu0 %v1075
      %v1187 = vpop.f32.mrf.mxu0
      %v1188 = vadd.f32 0.0, %v1187
      %1189 = vmatmul.f32.gmra.mxu0 %v1078
      %v1190 = vpop.f32.mrf.mxu0
      %v1191 = vadd.f32 0.0, %v1190
      %1192 = vmatmul.f32.gmra.mxu0 %v1081
      %v1193 = vpop.f32.mrf.mxu0
      %v1194 = vadd.f32 0.0, %v1193
      %1195 = vmatmul.f32.gmra.mxu0 %v1084
      %v1196 = vpop.f32.mrf.mxu0
      %v1197 = vadd.f32 0.0, %v1196
      %1198 = vmatmul.f32.gmra.mxu0 %v1087
      %v1199 = vpop.f32.mrf.mxu0
      %v1200 = vadd.f32 0.0, %v1199
      %1201 = vmatmul.f32.gmra.mxu0 %v1090
      %v1202 = vpop.f32.mrf.mxu0
      %v1203 = vadd.f32 0.0, %v1202
      %1204 = vmatmul.f32.gmra.mxu0 %v1093
      %v1205 = vpop.f32.mrf.mxu0
      %v1206 = vadd.f32 0.0, %v1205
      %1207 = vmatmul.f32.gmra.mxu0 %v1096
      %v1208 = vpop.f32.mrf.mxu0
      %v1209 = vadd.f32 0.0, %v1208
      %1210 = vmatmul.f32.gmra.mxu0 %v1099
      %v1211 = vpop.f32.mrf.mxu0
      %v1212 = vadd.f32 0.0, %v1211
      %1213 = vmatmul.f32.gmra.mxu0 %v1102
      %v1214 = vpop.f32.mrf.mxu0
      %v1215 = vadd.f32 0.0, %v1214
      %1216 = vmatmul.f32.gmra.mxu0 %v1105
      %v1217 = vpop.f32.mrf.mxu0
      %v1218 = vadd.f32 0.0, %v1217
      %1219 = vmatmul.f32.gmra.mxu0 %v1108
      %v1220 = vpop.f32.mrf.mxu0
      %v1221 = vadd.f32 0.0, %v1220
      %1222 = vmatmul.f32.gmra.mxu0 %v1111
      %v1223 = vpop.f32.mrf.mxu0
      %v1224 = vadd.f32 0.0, %v1223
      %1225 = vmatmul.f32.gmra.mxu0 %v1114
      %v1226 = vpop.f32.mrf.mxu0
      %v1227 = vadd.f32 0.0, %v1226
      %1228 = vdwg.mxu0
      %v1229 = vadd.f32 %v951, %v1134
      %v1230 = vadd.f32 %v952, %v1137
      %v1231 = vadd.f32 %v953, %v1140
      %v1232 = vadd.f32 %v954, %v1143
      %v1233 = vadd.f32 %v955, %v1146
      %v1234 = vadd.f32 %v956, %v1149
      %v1235 = vadd.f32 %v957, %v1152
      %v1236 = vadd.f32 %v958, %v1155
      %v1237 = vadd.f32 %v959, %v1158
      %v1238 = vadd.f32 %v960, %v1161
      %v1239 = vadd.f32 %v961, %v1164
      %v1240 = vadd.f32 %v962, %v1167
      %v1241 = vadd.f32 %v963, %v1170
      %v1242 = vadd.f32 %v964, %v1173
      %v1243 = vadd.f32 %v965, %v1176
      %v1244 = vadd.f32 %v966, %v1179
      %v1245 = vadd.f32 %v967, %v1182
      %v1246 = vadd.f32 %v968, %v1185
      %v1247 = vadd.f32 %v969, %v1188
      %v1248 = vadd.f32 %v970, %v1191
      %v1249 = vadd.f32 %v971, %v1194
      %v1250 = vadd.f32 %v972, %v1197
      %v1251 = vadd.f32 %v973, %v1200
      %v1252 = vadd.f32 %v974, %v1203
      %v1253 = vadd.f32 %v975, %v1206
      %v1254 = vadd.f32 %v976, %v1209
      %v1255 = vadd.f32 %v977, %v1212
      %v1256 = vadd.f32 %v978, %v1215
      %v1257 = vadd.f32 %v979, %v1218
      %v1258 = vadd.f32 %v980, %v1221
      %v1259 = vadd.f32 %v981, %v1224
      %v1260 = vadd.f32 %v982, %v1227
      %v1261 = vld [vmem:[%s983 + $0x1] sm:$0xff]
      %v1262 = vld [vmem:[%s983 + $0x9] sm:$0xff]
      %v1263 = vld [vmem:[%s983 + $0x19] sm:$0xff]
      %v1264 = vld [vmem:[%s983 + $0x21] sm:$0xff]
      %v1265 = vld [vmem:[%s983 + $0x31] sm:$0xff]
      %v1266 = vld [vmem:[%s983 + $0x39] sm:$0xff]
      %v1267 = vld [vmem:[%s983 + $0x49] sm:$0xff]
      %v1268 = vld [vmem:[%s983 + $0x51] sm:$0xff]
      %v1269 = vld [vmem:[%s983 + $0x61] sm:$0xff]
      %v1270 = vld [vmem:[%s983 + $0x69] sm:$0xff]
      %v1271 = vld [vmem:[%s983 + $0x79] sm:$0xff]
      %v1272 = vld [vmem:[%s983 + $0x81] sm:$0xff]
      %v1273 = vld [vmem:[%s983 + $0x91] sm:$0xff]
      %v1274 = vld [vmem:[%s983 + $0x99] sm:$0xff]
      %v1275 = vld [vmem:[%s983 + $0xa9] sm:$0xff]
      %v1276 = vld [vmem:[%s983 + $0xb1] sm:$0xff]
      %v1277 = vld [vmem:[%s983 + $0xc1] sm:$0xff]
      %v1278 = vld [vmem:[%s983 + $0xc9] sm:$0xff]
      %v1279 = vld [vmem:[%s983 + $0xd9] sm:$0xff]
      %v1280 = vld [vmem:[%s983 + $0xe1] sm:$0xff]
      %v1281 = vld [vmem:[%s983 + $0xf1] sm:$0xff]
      %v1282 = vld [vmem:[%s983 + $0xf9] sm:$0xff]
      %v1283 = vld [vmem:[%s983 + $0x109] sm:$0xff]
      %v1284 = vld [vmem:[%s983 + $0x111] sm:$0xff]
      %v1285 = vld [vmem:[%s983 + $0x121] sm:$0xff]
      %v1286 = vld [vmem:[%s983 + $0x129] sm:$0xff]
      %v1287 = vld [vmem:[%s983 + $0x139] sm:$0xff]
      %v1288 = vld [vmem:[%s983 + $0x141] sm:$0xff]
      %v1289 = vld [vmem:[%s983 + $0x151] sm:$0xff]
      %v1290 = vld [vmem:[%s983 + $0x159] sm:$0xff]
      %v1291 = vld [vmem:[%s983 + $0x169] sm:$0xff]
      %v1292 = vld [vmem:[%s983 + $0x171] sm:$0xff]
      %v1293 = vld [vmem:[%s1 + $0x80] sm:$0xff]
      %v1294 = vld [vmem:[%s1 + $0x88] sm:$0xff]
      %v1295 = vld [vmem:[%s1 + $0x90] sm:$0xff]
      %v1296 = vld [vmem:[%s1 + $0x98] sm:$0xff]
      %v1298 = vsel %vm287, %v1261, 0
      %v1301 = vsel %vm287, %v1262, 0
      %v1304 = vsel %vm287, %v1263, 0
      %v1307 = vsel %vm287, %v1264, 0
      %v1310 = vsel %vm287, %v1265, 0
      %v1313 = vsel %vm287, %v1266, 0
      %v1316 = vsel %vm287, %v1267, 0
      %v1319 = vsel %vm287, %v1268, 0
      %v1322 = vsel %vm287, %v1269, 0
      %v1325 = vsel %vm287, %v1270, 0
      %v1328 = vsel %vm287, %v1271, 0
      %v1331 = vsel %vm287, %v1272, 0
      %v1334 = vsel %vm287, %v1273, 0
      %v1337 = vsel %vm287, %v1274, 0
      %v1340 = vsel %vm287, %v1275, 0
      %v1343 = vsel %vm287, %v1276, 0
      %v1346 = vsel %vm287, %v1277, 0
      %v1349 = vsel %vm287, %v1278, 0
      %v1352 = vsel %vm287, %v1279, 0
      %v1355 = vsel %vm287, %v1280, 0
      %v1358 = vsel %vm287, %v1281, 0
      %v1361 = vsel %vm287, %v1282, 0
      %v1364 = vsel %vm287, %v1283, 0
      %v1367 = vsel %vm287, %v1284, 0
      %v1370 = vsel %vm287, %v1285, 0
      %v1373 = vsel %vm287, %v1286, 0
      %v1376 = vsel %vm287, %v1287, 0
      %v1379 = vsel %vm287, %v1288, 0
      %v1382 = vsel %vm287, %v1289, 0
      %v1385 = vsel %vm287, %v1290, 0
      %v1388 = vsel %vm287, %v1291, 0
      %v1391 = vsel %vm287, %v1292, 0
      %1393 = vmatpush.msra.mxu0 0.0
      %1394 = vmatpush.msra.mxu0 0.0
      %1395 = vmatpush.msra.mxu0 0.0
      %1396 = vmatpush.msra.mxu0 0.0
      %1397 = vmatpush.msra.mxu0 0.0
      %1398 = vmatpush.msra.mxu0 0.0
      %1399 = vmatpush.msra.mxu0 0.0
      %1400 = vmatpush.msra.mxu0 0.0
      %1401 = vmatpush.msra.mxu0 0.0
      %1402 = vmatpush.msra.mxu0 0.0
      %1403 = vmatpush.msra.mxu0 0.0
      %1404 = vmatpush.msra.mxu0 0.0
      %1405 = vmatpush.msra.mxu0 %v1296
      %1406 = vmatpush.msra.mxu0 %v1295
      %1407 = vmatpush.msra.mxu0 %v1294
      %1408 = vmatpush.msra.mxu0 %v1293
      %1409 = vmatmul.f32.gmra.mxu0 %v1298
      %v1410 = vpop.f32.mrf.mxu0
      %v1411 = vadd.f32 0.0, %v1410
      %1412 = vmatmul.f32.gmra.mxu0 %v1301
      %v1413 = vpop.f32.mrf.mxu0
      %v1414 = vadd.f32 0.0, %v1413
      %1415 = vmatmul.f32.gmra.mxu0 %v1304
      %v1416 = vpop.f32.mrf.mxu0
      %v1417 = vadd.f32 0.0, %v1416
      %1418 = vmatmul.f32.gmra.mxu0 %v1307
      %v1419 = vpop.f32.mrf.mxu0
      %v1420 = vadd.f32 0.0, %v1419
      %1421 = vmatmul.f32.gmra.mxu0 %v1310
      %v1422 = vpop.f32.mrf.mxu0
      %v1423 = vadd.f32 0.0, %v1422
      %1424 = vmatmul.f32.gmra.mxu0 %v1313
      %v1425 = vpop.f32.mrf.mxu0
      %v1426 = vadd.f32 0.0, %v1425
      %1427 = vmatmul.f32.gmra.mxu0 %v1316
      %v1428 = vpop.f32.mrf.mxu0
      %v1429 = vadd.f32 0.0, %v1428
      %1430 = vmatmul.f32.gmra.mxu0 %v1319
      %v1431 = vpop.f32.mrf.mxu0
      %v1432 = vadd.f32 0.0, %v1431
      %1433 = vmatmul.f32.gmra.mxu0 %v1322
      %v1434 = vpop.f32.mrf.mxu0
      %v1435 = vadd.f32 0.0, %v1434
      %1436 = vmatmul.f32.gmra.mxu0 %v1325
      %v1437 = vpop.f32.mrf.mxu0
      %v1438 = vadd.f32 0.0, %v1437
      %1439 = vmatmul.f32.gmra.mxu0 %v1328
      %v1440 = vpop.f32.mrf.mxu0
      %v1441 = vadd.f32 0.0, %v1440
      %1442 = vmatmul.f32.gmra.mxu0 %v1331
      %v1443 = vpop.f32.mrf.mxu0
      %v1444 = vadd.f32 0.0, %v1443
      %1445 = vmatmul.f32.gmra.mxu0 %v1334
      %v1446 = vpop.f32.mrf.mxu0
      %v1447 = vadd.f32 0.0, %v1446
      %1448 = vmatmul.f32.gmra.mxu0 %v1337
      %v1449 = vpop.f32.mrf.mxu0
      %v1450 = vadd.f32 0.0, %v1449
      %1451 = vmatmul.f32.gmra.mxu0 %v1340
      %v1452 = vpop.f32.mrf.mxu0
      %v1453 = vadd.f32 0.0, %v1452
      %1454 = vmatmul.f32.gmra.mxu0 %v1343
      %v1455 = vpop.f32.mrf.mxu0
      %v1456 = vadd.f32 0.0, %v1455
      %1457 = vmatmul.f32.gmra.mxu0 %v1346
      %v1458 = vpop.f32.mrf.mxu0
      %v1459 = vadd.f32 0.0, %v1458
      %1460 = vmatmul.f32.gmra.mxu0 %v1349
      %v1461 = vpop.f32.mrf.mxu0
      %v1462 = vadd.f32 0.0, %v1461
      %1463 = vmatmul.f32.gmra.mxu0 %v1352
      %v1464 = vpop.f32.mrf.mxu0
      %v1465 = vadd.f32 0.0, %v1464
      %1466 = vmatmul.f32.gmra.mxu0 %v1355
      %v1467 = vpop.f32.mrf.mxu0
      %v1468 = vadd.f32 0.0, %v1467
      %1469 = vmatmul.f32.gmra.mxu0 %v1358
      %v1470 = vpop.f32.mrf.mxu0
      %v1471 = vadd.f32 0.0, %v1470
      %1472 = vmatmul.f32.gmra.mxu0 %v1361
      %v1473 = vpop.f32.mrf.mxu0
      %v1474 = vadd.f32 0.0, %v1473
      %1475 = vmatmul.f32.gmra.mxu0 %v1364
      %v1476 = vpop.f32.mrf.mxu0
      %v1477 = vadd.f32 0.0, %v1476
      %1478 = vmatmul.f32.gmra.mxu0 %v1367
      %v1479 = vpop.f32.mrf.mxu0
      %v1480 = vadd.f32 0.0, %v1479
      %1481 = vmatmul.f32.gmra.mxu0 %v1370
      %v1482 = vpop.f32.mrf.mxu0
      %v1483 = vadd.f32 0.0, %v1482
      %1484 = vmatmul.f32.gmra.mxu0 %v1373
      %v1485 = vpop.f32.mrf.mxu0
      %v1486 = vadd.f32 0.0, %v1485
      %1487 = vmatmul.f32.gmra.mxu0 %v1376
      %v1488 = vpop.f32.mrf.mxu0
      %v1489 = vadd.f32 0.0, %v1488
      %1490 = vmatmul.f32.gmra.mxu0 %v1379
      %v1491 = vpop.f32.mrf.mxu0
      %v1492 = vadd.f32 0.0, %v1491
      %1493 = vmatmul.f32.gmra.mxu0 %v1382
      %v1494 = vpop.f32.mrf.mxu0
      %v1495 = vadd.f32 0.0, %v1494
      %1496 = vmatmul.f32.gmra.mxu0 %v1385
      %v1497 = vpop.f32.mrf.mxu0
      %v1498 = vadd.f32 0.0, %v1497
      %1499 = vmatmul.f32.gmra.mxu0 %v1388
      %v1500 = vpop.f32.mrf.mxu0
      %v1501 = vadd.f32 0.0, %v1500
      %1502 = vmatmul.f32.gmra.mxu0 %v1391
      %v1503 = vpop.f32.mrf.mxu0
      %v1504 = vadd.f32 0.0, %v1503
      %1505 = vdwg.mxu0
      %v1506 = vadd.f32 %v1229, %v1411
      %v1507 = vadd.f32 %v1230, %v1414
      %v1508 = vadd.f32 %v1231, %v1417
      %v1509 = vadd.f32 %v1232, %v1420
      %v1510 = vadd.f32 %v1233, %v1423
      %v1511 = vadd.f32 %v1234, %v1426
      %v1512 = vadd.f32 %v1235, %v1429
      %v1513 = vadd.f32 %v1236, %v1432
      %v1514 = vadd.f32 %v1237, %v1435
      %v1515 = vadd.f32 %v1238, %v1438
      %v1516 = vadd.f32 %v1239, %v1441
      %v1517 = vadd.f32 %v1240, %v1444
      %v1518 = vadd.f32 %v1241, %v1447
      %v1519 = vadd.f32 %v1242, %v1450
      %v1520 = vadd.f32 %v1243, %v1453
      %v1521 = vadd.f32 %v1244, %v1456
      %v1522 = vadd.f32 %v1245, %v1459
      %v1523 = vadd.f32 %v1246, %v1462
      %v1524 = vadd.f32 %v1247, %v1465
      %v1525 = vadd.f32 %v1248, %v1468
      %v1526 = vadd.f32 %v1249, %v1471
      %v1527 = vadd.f32 %v1250, %v1474
      %v1528 = vadd.f32 %v1251, %v1477
      %v1529 = vadd.f32 %v1252, %v1480
      %v1530 = vadd.f32 %v1253, %v1483
      %v1531 = vadd.f32 %v1254, %v1486
      %v1532 = vadd.f32 %v1255, %v1489
      %v1533 = vadd.f32 %v1256, %v1492
      %v1534 = vadd.f32 %v1257, %v1495
      %v1535 = vadd.f32 %v1258, %v1498
      %v1536 = vadd.f32 %v1259, %v1501
      %v1537 = vadd.f32 %v1260, %v1504
      %v1538 = vld [vmem:[%s983 + $0x2] sm:$0xff]
      %v1539 = vld [vmem:[%s983 + $0xa] sm:$0xff]
      %v1540 = vld [vmem:[%s983 + $0x1a] sm:$0xff]
      %v1541 = vld [vmem:[%s983 + $0x22] sm:$0xff]
      %v1542 = vld [vmem:[%s983 + $0x32] sm:$0xff]
      %v1543 = vld [vmem:[%s983 + $0x3a] sm:$0xff]
      %v1544 = vld [vmem:[%s983 + $0x4a] sm:$0xff]
      %v1545 = vld [vmem:[%s983 + $0x52] sm:$0xff]
      %v1546 = vld [vmem:[%s983 + $0x62] sm:$0xff]
      %v1547 = vld [vmem:[%s983 + $0x6a] sm:$0xff]
      %v1548 = vld [vmem:[%s983 + $0x7a] sm:$0xff]
      %v1549 = vld [vmem:[%s983 + $0x82] sm:$0xff]
      %v1550 = vld [vmem:[%s983 + $0x92] sm:$0xff]
      %v1551 = vld [vmem:[%s983 + $0x9a] sm:$0xff]
      %v1552 = vld [vmem:[%s983 + $0xaa] sm:$0xff]
      %v1553 = vld [vmem:[%s983 + $0xb2] sm:$0xff]
      %v1554 = vld [vmem:[%s983 + $0xc2] sm:$0xff]
      %v1555 = vld [vmem:[%s983 + $0xca] sm:$0xff]
      %v1556 = vld [vmem:[%s983 + $0xda] sm:$0xff]
      %v1557 = vld [vmem:[%s983 + $0xe2] sm:$0xff]
      %v1558 = vld [vmem:[%s983 + $0xf2] sm:$0xff]
      %v1559 = vld [vmem:[%s983 + $0xfa] sm:$0xff]
      %v1560 = vld [vmem:[%s983 + $0x10a] sm:$0xff]
      %v1561 = vld [vmem:[%s983 + $0x112] sm:$0xff]
      %v1562 = vld [vmem:[%s983 + $0x122] sm:$0xff]
      %v1563 = vld [vmem:[%s983 + $0x12a] sm:$0xff]
      %v1564 = vld [vmem:[%s983 + $0x13a] sm:$0xff]
      %v1565 = vld [vmem:[%s983 + $0x142] sm:$0xff]
      %v1566 = vld [vmem:[%s983 + $0x152] sm:$0xff]
      %v1567 = vld [vmem:[%s983 + $0x15a] sm:$0xff]
      %v1568 = vld [vmem:[%s983 + $0x16a] sm:$0xff]
      %v1569 = vld [vmem:[%s983 + $0x172] sm:$0xff]
      %v1570 = vld [vmem:[%s1 + $0xa0] sm:$0xff]
      %v1571 = vld [vmem:[%s1 + $0xa8] sm:$0xff]
      %v1572 = vld [vmem:[%s1 + $0xb0] sm:$0xff]
      %v1573 = vld [vmem:[%s1 + $0xb8] sm:$0xff]
      %v1575 = vsel %vm287, %v1538, 0
      %v1578 = vsel %vm287, %v1539, 0
      %v1581 = vsel %vm287, %v1540, 0
      %v1584 = vsel %vm287, %v1541, 0
      %v1587 = vsel %vm287, %v1542, 0
      %v1590 = vsel %vm287, %v1543, 0
      %v1593 = vsel %vm287, %v1544, 0
      %v1596 = vsel %vm287, %v1545, 0
      %v1599 = vsel %vm287, %v1546, 0
      %v1602 = vsel %vm287, %v1547, 0
      %v1605 = vsel %vm287, %v1548, 0
      %v1608 = vsel %vm287, %v1549, 0
      %v1611 = vsel %vm287, %v1550, 0
      %v1614 = vsel %vm287, %v1551, 0
      %v1617 = vsel %vm287, %v1552, 0
      %v1620 = vsel %vm287, %v1553, 0
      %v1623 = vsel %vm287, %v1554, 0
      %v1626 = vsel %vm287, %v1555, 0
      %v1629 = vsel %vm287, %v1556, 0
      %v1632 = vsel %vm287, %v1557, 0
      %v1635 = vsel %vm287, %v1558, 0
      %v1638 = vsel %vm287, %v1559, 0
      %v1641 = vsel %vm287, %v1560, 0
      %v1644 = vsel %vm287, %v1561, 0
      %v1647 = vsel %vm287, %v1562, 0
      %v1650 = vsel %vm287, %v1563, 0
      %v1653 = vsel %vm287, %v1564, 0
      %v1656 = vsel %vm287, %v1565, 0
      %v1659 = vsel %vm287, %v1566, 0
      %v1662 = vsel %vm287, %v1567, 0
      %v1665 = vsel %vm287, %v1568, 0
      %v1668 = vsel %vm287, %v1569, 0
      %1670 = vmatpush.msra.mxu0 0.0
      %1671 = vmatpush.msra.mxu0 0.0
      %1672 = vmatpush.msra.mxu0 0.0
      %1673 = vmatpush.msra.mxu0 0.0
      %1674 = vmatpush.msra.mxu0 0.0
      %1675 = vmatpush.msra.mxu0 0.0
      %1676 = vmatpush.msra.mxu0 0.0
      %1677 = vmatpush.msra.mxu0 0.0
      %1678 = vmatpush.msra.mxu0 0.0
      %1679 = vmatpush.msra.mxu0 0.0
      %1680 = vmatpush.msra.mxu0 0.0
      %1681 = vmatpush.msra.mxu0 0.0
      %1682 = vmatpush.msra.mxu0 %v1573
      %1683 = vmatpush.msra.mxu0 %v1572
      %1684 = vmatpush.msra.mxu0 %v1571
      %1685 = vmatpush.msra.mxu0 %v1570
      %1686 = vmatmul.f32.gmra.mxu0 %v1575
      %v1687 = vpop.f32.mrf.mxu0
      %v1688 = vadd.f32 0.0, %v1687
      %1689 = vmatmul.f32.gmra.mxu0 %v1578
      %v1690 = vpop.f32.mrf.mxu0
      %v1691 = vadd.f32 0.0, %v1690
      %1692 = vmatmul.f32.gmra.mxu0 %v1581
      %v1693 = vpop.f32.mrf.mxu0
      %v1694 = vadd.f32 0.0, %v1693
      %1695 = vmatmul.f32.gmra.mxu0 %v1584
      %v1696 = vpop.f32.mrf.mxu0
      %v1697 = vadd.f32 0.0, %v1696
      %1698 = vmatmul.f32.gmra.mxu0 %v1587
      %v1699 = vpop.f32.mrf.mxu0
      %v1700 = vadd.f32 0.0, %v1699
      %1701 = vmatmul.f32.gmra.mxu0 %v1590
      %v1702 = vpop.f32.mrf.mxu0
      %v1703 = vadd.f32 0.0, %v1702
      %1704 = vmatmul.f32.gmra.mxu0 %v1593
      %v1705 = vpop.f32.mrf.mxu0
      %v1706 = vadd.f32 0.0, %v1705
      %1707 = vmatmul.f32.gmra.mxu0 %v1596
      %v1708 = vpop.f32.mrf.mxu0
      %v1709 = vadd.f32 0.0, %v1708
      %1710 = vmatmul.f32.gmra.mxu0 %v1599
      %v1711 = vpop.f32.mrf.mxu0
      %v1712 = vadd.f32 0.0, %v1711
      %1713 = vmatmul.f32.gmra.mxu0 %v1602
      %v1714 = vpop.f32.mrf.mxu0
      %v1715 = vadd.f32 0.0, %v1714
      %1716 = vmatmul.f32.gmra.mxu0 %v1605
      %v1717 = vpop.f32.mrf.mxu0
      %v1718 = vadd.f32 0.0, %v1717
      %1719 = vmatmul.f32.gmra.mxu0 %v1608
      %v1720 = vpop.f32.mrf.mxu0
      %v1721 = vadd.f32 0.0, %v1720
      %1722 = vmatmul.f32.gmra.mxu0 %v1611
      %v1723 = vpop.f32.mrf.mxu0
      %v1724 = vadd.f32 0.0, %v1723
      %1725 = vmatmul.f32.gmra.mxu0 %v1614
      %v1726 = vpop.f32.mrf.mxu0
      %v1727 = vadd.f32 0.0, %v1726
      %1728 = vmatmul.f32.gmra.mxu0 %v1617
      %v1729 = vpop.f32.mrf.mxu0
      %v1730 = vadd.f32 0.0, %v1729
      %1731 = vmatmul.f32.gmra.mxu0 %v1620
      %v1732 = vpop.f32.mrf.mxu0
      %v1733 = vadd.f32 0.0, %v1732
      %1734 = vmatmul.f32.gmra.mxu0 %v1623
      %v1735 = vpop.f32.mrf.mxu0
      %v1736 = vadd.f32 0.0, %v1735
      %1737 = vmatmul.f32.gmra.mxu0 %v1626
      %v1738 = vpop.f32.mrf.mxu0
      %v1739 = vadd.f32 0.0, %v1738
      %1740 = vmatmul.f32.gmra.mxu0 %v1629
      %v1741 = vpop.f32.mrf.mxu0
      %v1742 = vadd.f32 0.0, %v1741
      %1743 = vmatmul.f32.gmra.mxu0 %v1632
      %v1744 = vpop.f32.mrf.mxu0
      %v1745 = vadd.f32 0.0, %v1744
      %1746 = vmatmul.f32.gmra.mxu0 %v1635
      %v1747 = vpop.f32.mrf.mxu0
      %v1748 = vadd.f32 0.0, %v1747
      %1749 = vmatmul.f32.gmra.mxu0 %v1638
      %v1750 = vpop.f32.mrf.mxu0
      %v1751 = vadd.f32 0.0, %v1750
      %1752 = vmatmul.f32.gmra.mxu0 %v1641
      %v1753 = vpop.f32.mrf.mxu0
      %v1754 = vadd.f32 0.0, %v1753
      %1755 = vmatmul.f32.gmra.mxu0 %v1644
      %v1756 = vpop.f32.mrf.mxu0
      %v1757 = vadd.f32 0.0, %v1756
      %1758 = vmatmul.f32.gmra.mxu0 %v1647
      %v1759 = vpop.f32.mrf.mxu0
      %v1760 = vadd.f32 0.0, %v1759
      %1761 = vmatmul.f32.gmra.mxu0 %v1650
      %v1762 = vpop.f32.mrf.mxu0
      %v1763 = vadd.f32 0.0, %v1762
      %1764 = vmatmul.f32.gmra.mxu0 %v1653
      %v1765 = vpop.f32.mrf.mxu0
      %v1766 = vadd.f32 0.0, %v1765
      %1767 = vmatmul.f32.gmra.mxu0 %v1656
      %v1768 = vpop.f32.mrf.mxu0
      %v1769 = vadd.f32 0.0, %v1768
      %1770 = vmatmul.f32.gmra.mxu0 %v1659
      %v1771 = vpop.f32.mrf.mxu0
      %v1772 = vadd.f32 0.0, %v1771
      %1773 = vmatmul.f32.gmra.mxu0 %v1662
      %v1774 = vpop.f32.mrf.mxu0
      %v1775 = vadd.f32 0.0, %v1774
      %1776 = vmatmul.f32.gmra.mxu0 %v1665
      %v1777 = vpop.f32.mrf.mxu0
      %v1778 = vadd.f32 0.0, %v1777
      %1779 = vmatmul.f32.gmra.mxu0 %v1668
      %v1780 = vpop.f32.mrf.mxu0
      %v1781 = vadd.f32 0.0, %v1780
      %1782 = vdwg.mxu0
      %v1783 = vadd.f32 %v1506, %v1688
      %v1784 = vadd.f32 %v1507, %v1691
      %v1785 = vadd.f32 %v1508, %v1694
      %v1786 = vadd.f32 %v1509, %v1697
      %v1787 = vadd.f32 %v1510, %v1700
      %v1788 = vadd.f32 %v1511, %v1703
      %v1789 = vadd.f32 %v1512, %v1706
      %v1790 = vadd.f32 %v1513, %v1709
      %v1791 = vadd.f32 %v1514, %v1712
      %v1792 = vadd.f32 %v1515, %v1715
      %v1793 = vadd.f32 %v1516, %v1718
      %v1794 = vadd.f32 %v1517, %v1721
      %v1795 = vadd.f32 %v1518, %v1724
      %v1796 = vadd.f32 %v1519, %v1727
      %v1797 = vadd.f32 %v1520, %v1730
      %v1798 = vadd.f32 %v1521, %v1733
      %v1799 = vadd.f32 %v1522, %v1736
      %v1800 = vadd.f32 %v1523, %v1739
      %v1801 = vadd.f32 %v1524, %v1742
      %v1802 = vadd.f32 %v1525, %v1745
      %v1803 = vadd.f32 %v1526, %v1748
      %v1804 = vadd.f32 %v1527, %v1751
      %v1805 = vadd.f32 %v1528, %v1754
      %v1806 = vadd.f32 %v1529, %v1757
      %v1807 = vadd.f32 %v1530, %v1760
      %v1808 = vadd.f32 %v1531, %v1763
      %v1809 = vadd.f32 %v1532, %v1766
      %v1810 = vadd.f32 %v1533, %v1769
      %v1811 = vadd.f32 %v1534, %v1772
      %v1812 = vadd.f32 %v1535, %v1775
      %v1813 = vadd.f32 %v1536, %v1778
      %v1814 = vadd.f32 %v1537, %v1781
      %s1815 = scalar_lea.vmem %s207, 48
      %v1816 = vld [vmem:[%s1815] sm:$0xff]
      %v1817 = vld [vmem:[%s1815 + $0x8] sm:$0xff]
      %v1818 = vld [vmem:[%s1815 + $0x18] sm:$0xff]
      %v1819 = vld [vmem:[%s1815 + $0x20] sm:$0xff]
      %v1820 = vld [vmem:[%s1815 + $0x30] sm:$0xff]
      %v1821 = vld [vmem:[%s1815 + $0x38] sm:$0xff]
      %v1822 = vld [vmem:[%s1815 + $0x48] sm:$0xff]
      %v1823 = vld [vmem:[%s1815 + $0x50] sm:$0xff]
      %v1824 = vld [vmem:[%s1815 + $0x60] sm:$0xff]
      %v1825 = vld [vmem:[%s1815 + $0x68] sm:$0xff]
      %v1826 = vld [vmem:[%s1815 + $0x78] sm:$0xff]
      %v1827 = vld [vmem:[%s1815 + $0x80] sm:$0xff]
      %v1828 = vld [vmem:[%s1815 + $0x90] sm:$0xff]
      %v1829 = vld [vmem:[%s1815 + $0x98] sm:$0xff]
      %v1830 = vld [vmem:[%s1815 + $0xa8] sm:$0xff]
      %v1831 = vld [vmem:[%s1815 + $0xb0] sm:$0xff]
      %v1832 = vld [vmem:[%s1815 + $0xc0] sm:$0xff]
      %v1833 = vld [vmem:[%s1815 + $0xc8] sm:$0xff]
      %v1834 = vld [vmem:[%s1815 + $0xd8] sm:$0xff]
      %v1835 = vld [vmem:[%s1815 + $0xe0] sm:$0xff]
      %v1836 = vld [vmem:[%s1815 + $0xf0] sm:$0xff]
      %v1837 = vld [vmem:[%s1815 + $0xf8] sm:$0xff]
      %v1838 = vld [vmem:[%s1815 + $0x108] sm:$0xff]
      %v1839 = vld [vmem:[%s1815 + $0x110] sm:$0xff]
      %v1840 = vld [vmem:[%s1815 + $0x120] sm:$0xff]
      %v1841 = vld [vmem:[%s1815 + $0x128] sm:$0xff]
      %v1842 = vld [vmem:[%s1815 + $0x138] sm:$0xff]
      %v1843 = vld [vmem:[%s1815 + $0x140] sm:$0xff]
      %v1844 = vld [vmem:[%s1815 + $0x150] sm:$0xff]
      %v1845 = vld [vmem:[%s1815 + $0x158] sm:$0xff]
      %v1846 = vld [vmem:[%s1815 + $0x168] sm:$0xff]
      %v1847 = vld [vmem:[%s1815 + $0x170] sm:$0xff]
      %v1848 = vld [vmem:[%s1 + $0xc0] sm:$0xff]
      %v1849 = vld [vmem:[%s1 + $0xc8] sm:$0xff]
      %v1850 = vld [vmem:[%s1 + $0xd0] sm:$0xff]
      %v1851 = vld [vmem:[%s1 + $0xd8] sm:$0xff]
      %v1853 = vsel %vm287, %v1816, 0
      %v1856 = vsel %vm287, %v1817, 0
      %v1859 = vsel %vm287, %v1818, 0
      %v1862 = vsel %vm287, %v1819, 0
      %v1865 = vsel %vm287, %v1820, 0
      %v1868 = vsel %vm287, %v1821, 0
      %v1871 = vsel %vm287, %v1822, 0
      %v1874 = vsel %vm287, %v1823, 0
      %v1877 = vsel %vm287, %v1824, 0
      %v1880 = vsel %vm287, %v1825, 0
      %v1883 = vsel %vm287, %v1826, 0
      %v1886 = vsel %vm287, %v1827, 0
      %v1889 = vsel %vm287, %v1828, 0
      %v1892 = vsel %vm287, %v1829, 0
      %v1895 = vsel %vm287, %v1830, 0
      %v1898 = vsel %vm287, %v1831, 0
      %v1901 = vsel %vm287, %v1832, 0
      %v1904 = vsel %vm287, %v1833, 0
      %v1907 = vsel %vm287, %v1834, 0
      %v1910 = vsel %vm287, %v1835, 0
      %v1913 = vsel %vm287, %v1836, 0
      %v1916 = vsel %vm287, %v1837, 0
      %v1919 = vsel %vm287, %v1838, 0
      %v1922 = vsel %vm287, %v1839, 0
      %v1925 = vsel %vm287, %v1840, 0
      %v1928 = vsel %vm287, %v1841, 0
      %v1931 = vsel %vm287, %v1842, 0
      %v1934 = vsel %vm287, %v1843, 0
      %v1937 = vsel %vm287, %v1844, 0
      %v1940 = vsel %vm287, %v1845, 0
      %v1943 = vsel %vm287, %v1846, 0
      %v1946 = vsel %vm287, %v1847, 0
      %1948 = vmatpush.msra.mxu0 0.0
      %1949 = vmatpush.msra.mxu0 0.0
      %1950 = vmatpush.msra.mxu0 0.0
      %1951 = vmatpush.msra.mxu0 0.0
      %1952 = vmatpush.msra.mxu0 0.0
      %1953 = vmatpush.msra.mxu0 0.0
      %1954 = vmatpush.msra.mxu0 0.0
      %1955 = vmatpush.msra.mxu0 0.0
      %1956 = vmatpush.msra.mxu0 0.0
      %1957 = vmatpush.msra.mxu0 0.0
      %1958 = vmatpush.msra.mxu0 0.0
      %1959 = vmatpush.msra.mxu0 0.0
      %1960 = vmatpush.msra.mxu0 %v1851
      %1961 = vmatpush.msra.mxu0 %v1850
      %1962 = vmatpush.msra.mxu0 %v1849
      %1963 = vmatpush.msra.mxu0 %v1848
      %1964 = vmatmul.f32.gmra.mxu0 %v1853
      %v1965 = vpop.f32.mrf.mxu0
      %v1966 = vadd.f32 0.0, %v1965
      %1967 = vmatmul.f32.gmra.mxu0 %v1856
      %v1968 = vpop.f32.mrf.mxu0
      %v1969 = vadd.f32 0.0, %v1968
      %1970 = vmatmul.f32.gmra.mxu0 %v1859
      %v1971 = vpop.f32.mrf.mxu0
      %v1972 = vadd.f32 0.0, %v1971
      %1973 = vmatmul.f32.gmra.mxu0 %v1862
      %v1974 = vpop.f32.mrf.mxu0
      %v1975 = vadd.f32 0.0, %v1974
      %1976 = vmatmul.f32.gmra.mxu0 %v1865
      %v1977 = vpop.f32.mrf.mxu0
      %v1978 = vadd.f32 0.0, %v1977
      %1979 = vmatmul.f32.gmra.mxu0 %v1868
      %v1980 = vpop.f32.mrf.mxu0
      %v1981 = vadd.f32 0.0, %v1980
      %1982 = vmatmul.f32.gmra.mxu0 %v1871
      %v1983 = vpop.f32.mrf.mxu0
      %v1984 = vadd.f32 0.0, %v1983
      %1985 = vmatmul.f32.gmra.mxu0 %v1874
      %v1986 = vpop.f32.mrf.mxu0
      %v1987 = vadd.f32 0.0, %v1986
      %1988 = vmatmul.f32.gmra.mxu0 %v1877
      %v1989 = vpop.f32.mrf.mxu0
      %v1990 = vadd.f32 0.0, %v1989
      %1991 = vmatmul.f32.gmra.mxu0 %v1880
      %v1992 = vpop.f32.mrf.mxu0
      %v1993 = vadd.f32 0.0, %v1992
      %1994 = vmatmul.f32.gmra.mxu0 %v1883
      %v1995 = vpop.f32.mrf.mxu0
      %v1996 = vadd.f32 0.0, %v1995
      %1997 = vmatmul.f32.gmra.mxu0 %v1886
      %v1998 = vpop.f32.mrf.mxu0
      %v1999 = vadd.f32 0.0, %v1998
      %2000 = vmatmul.f32.gmra.mxu0 %v1889
      %v2001 = vpop.f32.mrf.mxu0
      %v2002 = vadd.f32 0.0, %v2001
      %2003 = vmatmul.f32.gmra.mxu0 %v1892
      %v2004 = vpop.f32.mrf.mxu0
      %v2005 = vadd.f32 0.0, %v2004
      %2006 = vmatmul.f32.gmra.mxu0 %v1895
      %v2007 = vpop.f32.mrf.mxu0
      %v2008 = vadd.f32 0.0, %v2007
      %2009 = vmatmul.f32.gmra.mxu0 %v1898
      %v2010 = vpop.f32.mrf.mxu0
      %v2011 = vadd.f32 0.0, %v2010
      %2012 = vmatmul.f32.gmra.mxu0 %v1901
      %v2013 = vpop.f32.mrf.mxu0
      %v2014 = vadd.f32 0.0, %v2013
      %2015 = vmatmul.f32.gmra.mxu0 %v1904
      %v2016 = vpop.f32.mrf.mxu0
      %v2017 = vadd.f32 0.0, %v2016
      %2018 = vmatmul.f32.gmra.mxu0 %v1907
      %v2019 = vpop.f32.mrf.mxu0
      %v2020 = vadd.f32 0.0, %v2019
      %2021 = vmatmul.f32.gmra.mxu0 %v1910
      %v2022 = vpop.f32.mrf.mxu0
      %v2023 = vadd.f32 0.0, %v2022
      %2024 = vmatmul.f32.gmra.mxu0 %v1913
      %v2025 = vpop.f32.mrf.mxu0
      %v2026 = vadd.f32 0.0, %v2025
      %2027 = vmatmul.f32.gmra.mxu0 %v1916
      %v2028 = vpop.f32.mrf.mxu0
      %v2029 = vadd.f32 0.0, %v2028
      %2030 = vmatmul.f32.gmra.mxu0 %v1919
      %v2031 = vpop.f32.mrf.mxu0
      %v2032 = vadd.f32 0.0, %v2031
      %2033 = vmatmul.f32.gmra.mxu0 %v1922
      %v2034 = vpop.f32.mrf.mxu0
      %v2035 = vadd.f32 0.0, %v2034
      %2036 = vmatmul.f32.gmra.mxu0 %v1925
      %v2037 = vpop.f32.mrf.mxu0
      %v2038 = vadd.f32 0.0, %v2037
      %2039 = vmatmul.f32.gmra.mxu0 %v1928
      %v2040 = vpop.f32.mrf.mxu0
      %v2041 = vadd.f32 0.0, %v2040
      %2042 = vmatmul.f32.gmra.mxu0 %v1931
      %v2043 = vpop.f32.mrf.mxu0
      %v2044 = vadd.f32 0.0, %v2043
      %2045 = vmatmul.f32.gmra.mxu0 %v1934
      %v2046 = vpop.f32.mrf.mxu0
      %v2047 = vadd.f32 0.0, %v2046
      %2048 = vmatmul.f32.gmra.mxu0 %v1937
      %v2049 = vpop.f32.mrf.mxu0
      %v2050 = vadd.f32 0.0, %v2049
      %2051 = vmatmul.f32.gmra.mxu0 %v1940
      %v2052 = vpop.f32.mrf.mxu0
      %v2053 = vadd.f32 0.0, %v2052
      %2054 = vmatmul.f32.gmra.mxu0 %v1943
      %v2055 = vpop.f32.mrf.mxu0
      %v2056 = vadd.f32 0.0, %v2055
      %2057 = vmatmul.f32.gmra.mxu0 %v1946
      %v2058 = vpop.f32.mrf.mxu0
      %v2059 = vadd.f32 0.0, %v2058
      %2060 = vdwg.mxu0
      %v2061 = vadd.f32 %v1783, %v1966
      %v2062 = vadd.f32 %v1784, %v1969
      %v2063 = vadd.f32 %v1785, %v1972
      %v2064 = vadd.f32 %v1786, %v1975
      %v2065 = vadd.f32 %v1787, %v1978
      %v2066 = vadd.f32 %v1788, %v1981
      %v2067 = vadd.f32 %v1789, %v1984
      %v2068 = vadd.f32 %v1790, %v1987
      %v2069 = vadd.f32 %v1791, %v1990
      %v2070 = vadd.f32 %v1792, %v1993
      %v2071 = vadd.f32 %v1793, %v1996
      %v2072 = vadd.f32 %v1794, %v1999
      %v2073 = vadd.f32 %v1795, %v2002
      %v2074 = vadd.f32 %v1796, %v2005
      %v2075 = vadd.f32 %v1797, %v2008
      %v2076 = vadd.f32 %v1798, %v2011
      %v2077 = vadd.f32 %v1799, %v2014
      %v2078 = vadd.f32 %v1800, %v2017
      %v2079 = vadd.f32 %v1801, %v2020
      %v2080 = vadd.f32 %v1802, %v2023
      %v2081 = vadd.f32 %v1803, %v2026
      %v2082 = vadd.f32 %v1804, %v2029
      %v2083 = vadd.f32 %v1805, %v2032
      %v2084 = vadd.f32 %v1806, %v2035
      %v2085 = vadd.f32 %v1807, %v2038
      %v2086 = vadd.f32 %v1808, %v2041
      %v2087 = vadd.f32 %v1809, %v2044
      %v2088 = vadd.f32 %v1810, %v2047
      %v2089 = vadd.f32 %v1811, %v2050
      %v2090 = vadd.f32 %v1812, %v2053
      %v2091 = vadd.f32 %v1813, %v2056
      %v2092 = vadd.f32 %v1814, %v2059
      %v2093 = vld [vmem:[%s1815 + $0x1] sm:$0xff]
      %v2094 = vld [vmem:[%s1815 + $0x9] sm:$0xff]
      %v2095 = vld [vmem:[%s1815 + $0x19] sm:$0xff]
      %v2096 = vld [vmem:[%s1815 + $0x21] sm:$0xff]
      %v2097 = vld [vmem:[%s1815 + $0x31] sm:$0xff]
      %v2098 = vld [vmem:[%s1815 + $0x39] sm:$0xff]
      %v2099 = vld [vmem:[%s1815 + $0x49] sm:$0xff]
      %v2100 = vld [vmem:[%s1815 + $0x51] sm:$0xff]
      %v2101 = vld [vmem:[%s1815 + $0x61] sm:$0xff]
      %v2102 = vld [vmem:[%s1815 + $0x69] sm:$0xff]
      %v2103 = vld [vmem:[%s1815 + $0x79] sm:$0xff]
      %v2104 = vld [vmem:[%s1815 + $0x81] sm:$0xff]
      %v2105 = vld [vmem:[%s1815 + $0x91] sm:$0xff]
      %v2106 = vld [vmem:[%s1815 + $0x99] sm:$0xff]
      %v2107 = vld [vmem:[%s1815 + $0xa9] sm:$0xff]
      %v2108 = vld [vmem:[%s1815 + $0xb1] sm:$0xff]
      %v2109 = vld [vmem:[%s1815 + $0xc1] sm:$0xff]
      %v2110 = vld [vmem:[%s1815 + $0xc9] sm:$0xff]
      %v2111 = vld [vmem:[%s1815 + $0xd9] sm:$0xff]
      %v2112 = vld [vmem:[%s1815 + $0xe1] sm:$0xff]
      %v2113 = vld [vmem:[%s1815 + $0xf1] sm:$0xff]
      %v2114 = vld [vmem:[%s1815 + $0xf9] sm:$0xff]
      %v2115 = vld [vmem:[%s1815 + $0x109] sm:$0xff]
      %v2116 = vld [vmem:[%s1815 + $0x111] sm:$0xff]
      %v2117 = vld [vmem:[%s1815 + $0x121] sm:$0xff]
      %v2118 = vld [vmem:[%s1815 + $0x129] sm:$0xff]
      %v2119 = vld [vmem:[%s1815 + $0x139] sm:$0xff]
      %v2120 = vld [vmem:[%s1815 + $0x141] sm:$0xff]
      %v2121 = vld [vmem:[%s1815 + $0x151] sm:$0xff]
      %v2122 = vld [vmem:[%s1815 + $0x159] sm:$0xff]
      %v2123 = vld [vmem:[%s1815 + $0x169] sm:$0xff]
      %v2124 = vld [vmem:[%s1815 + $0x171] sm:$0xff]
      %v2125 = vld [vmem:[%s1 + $0xe0] sm:$0xff]
      %v2126 = vld [vmem:[%s1 + $0xe8] sm:$0xff]
      %v2127 = vld [vmem:[%s1 + $0xf0] sm:$0xff]
      %v2128 = vld [vmem:[%s1 + $0xf8] sm:$0xff]
      %v2130 = vsel %vm287, %v2093, 0
      %v2133 = vsel %vm287, %v2094, 0
      %v2136 = vsel %vm287, %v2095, 0
      %v2139 = vsel %vm287, %v2096, 0
      %v2142 = vsel %vm287, %v2097, 0
      %v2145 = vsel %vm287, %v2098, 0
      %v2148 = vsel %vm287, %v2099, 0
      %v2151 = vsel %vm287, %v2100, 0
      %v2154 = vsel %vm287, %v2101, 0
      %v2157 = vsel %vm287, %v2102, 0
      %v2160 = vsel %vm287, %v2103, 0
      %v2163 = vsel %vm287, %v2104, 0
      %v2166 = vsel %vm287, %v2105, 0
      %v2169 = vsel %vm287, %v2106, 0
      %v2172 = vsel %vm287, %v2107, 0
      %v2175 = vsel %vm287, %v2108, 0
      %v2178 = vsel %vm287, %v2109, 0
      %v2181 = vsel %vm287, %v2110, 0
      %v2184 = vsel %vm287, %v2111, 0
      %v2187 = vsel %vm287, %v2112, 0
      %v2190 = vsel %vm287, %v2113, 0
      %v2193 = vsel %vm287, %v2114, 0
      %v2196 = vsel %vm287, %v2115, 0
      %v2199 = vsel %vm287, %v2116, 0
      %v2202 = vsel %vm287, %v2117, 0
      %v2205 = vsel %vm287, %v2118, 0
      %v2208 = vsel %vm287, %v2119, 0
      %v2211 = vsel %vm287, %v2120, 0
      %v2214 = vsel %vm287, %v2121, 0
      %v2217 = vsel %vm287, %v2122, 0
      %v2220 = vsel %vm287, %v2123, 0
      %v2223 = vsel %vm287, %v2124, 0
      %2225 = vmatpush.msra.mxu0 0.0
      %2226 = vmatpush.msra.mxu0 0.0
      %2227 = vmatpush.msra.mxu0 0.0
      %2228 = vmatpush.msra.mxu0 0.0
      %2229 = vmatpush.msra.mxu0 0.0
      %2230 = vmatpush.msra.mxu0 0.0
      %2231 = vmatpush.msra.mxu0 0.0
      %2232 = vmatpush.msra.mxu0 0.0
      %2233 = vmatpush.msra.mxu0 0.0
      %2234 = vmatpush.msra.mxu0 0.0
      %2235 = vmatpush.msra.mxu0 0.0
      %2236 = vmatpush.msra.mxu0 0.0
      %2237 = vmatpush.msra.mxu0 %v2128
      %2238 = vmatpush.msra.mxu0 %v2127
      %2239 = vmatpush.msra.mxu0 %v2126
      %2240 = vmatpush.msra.mxu0 %v2125
      %2241 = vmatmul.f32.gmra.mxu0 %v2130
      %v2242 = vpop.f32.mrf.mxu0
      %v2243 = vadd.f32 0.0, %v2242
      %2244 = vmatmul.f32.gmra.mxu0 %v2133
      %v2245 = vpop.f32.mrf.mxu0
      %v2246 = vadd.f32 0.0, %v2245
      %2247 = vmatmul.f32.gmra.mxu0 %v2136
      %v2248 = vpop.f32.mrf.mxu0
      %v2249 = vadd.f32 0.0, %v2248
      %2250 = vmatmul.f32.gmra.mxu0 %v2139
      %v2251 = vpop.f32.mrf.mxu0
      %v2252 = vadd.f32 0.0, %v2251
      %2253 = vmatmul.f32.gmra.mxu0 %v2142
      %v2254 = vpop.f32.mrf.mxu0
      %v2255 = vadd.f32 0.0, %v2254
      %2256 = vmatmul.f32.gmra.mxu0 %v2145
      %v2257 = vpop.f32.mrf.mxu0
      %v2258 = vadd.f32 0.0, %v2257
      %2259 = vmatmul.f32.gmra.mxu0 %v2148
      %v2260 = vpop.f32.mrf.mxu0
      %v2261 = vadd.f32 0.0, %v2260
      %2262 = vmatmul.f32.gmra.mxu0 %v2151
      %v2263 = vpop.f32.mrf.mxu0
      %v2264 = vadd.f32 0.0, %v2263
      %2265 = vmatmul.f32.gmra.mxu0 %v2154
      %v2266 = vpop.f32.mrf.mxu0
      %v2267 = vadd.f32 0.0, %v2266
      %2268 = vmatmul.f32.gmra.mxu0 %v2157
      %v2269 = vpop.f32.mrf.mxu0
      %v2270 = vadd.f32 0.0, %v2269
      %2271 = vmatmul.f32.gmra.mxu0 %v2160
      %v2272 = vpop.f32.mrf.mxu0
      %v2273 = vadd.f32 0.0, %v2272
      %2274 = vmatmul.f32.gmra.mxu0 %v2163
      %v2275 = vpop.f32.mrf.mxu0
      %v2276 = vadd.f32 0.0, %v2275
      %2277 = vmatmul.f32.gmra.mxu0 %v2166
      %v2278 = vpop.f32.mrf.mxu0
      %v2279 = vadd.f32 0.0, %v2278
      %2280 = vmatmul.f32.gmra.mxu0 %v2169
      %v2281 = vpop.f32.mrf.mxu0
      %v2282 = vadd.f32 0.0, %v2281
      %2283 = vmatmul.f32.gmra.mxu0 %v2172
      %v2284 = vpop.f32.mrf.mxu0
      %v2285 = vadd.f32 0.0, %v2284
      %2286 = vmatmul.f32.gmra.mxu0 %v2175
      %v2287 = vpop.f32.mrf.mxu0
      %v2288 = vadd.f32 0.0, %v2287
      %2289 = vmatmul.f32.gmra.mxu0 %v2178
      %v2290 = vpop.f32.mrf.mxu0
      %v2291 = vadd.f32 0.0, %v2290
      %2292 = vmatmul.f32.gmra.mxu0 %v2181
      %v2293 = vpop.f32.mrf.mxu0
      %v2294 = vadd.f32 0.0, %v2293
      %2295 = vmatmul.f32.gmra.mxu0 %v2184
      %v2296 = vpop.f32.mrf.mxu0
      %v2297 = vadd.f32 0.0, %v2296
      %2298 = vmatmul.f32.gmra.mxu0 %v2187
      %v2299 = vpop.f32.mrf.mxu0
      %v2300 = vadd.f32 0.0, %v2299
      %2301 = vmatmul.f32.gmra.mxu0 %v2190
      %v2302 = vpop.f32.mrf.mxu0
      %v2303 = vadd.f32 0.0, %v2302
      %2304 = vmatmul.f32.gmra.mxu0 %v2193
      %v2305 = vpop.f32.mrf.mxu0
      %v2306 = vadd.f32 0.0, %v2305
      %2307 = vmatmul.f32.gmra.mxu0 %v2196
      %v2308 = vpop.f32.mrf.mxu0
      %v2309 = vadd.f32 0.0, %v2308
      %2310 = vmatmul.f32.gmra.mxu0 %v2199
      %v2311 = vpop.f32.mrf.mxu0
      %v2312 = vadd.f32 0.0, %v2311
      %2313 = vmatmul.f32.gmra.mxu0 %v2202
      %v2314 = vpop.f32.mrf.mxu0
      %v2315 = vadd.f32 0.0, %v2314
      %2316 = vmatmul.f32.gmra.mxu0 %v2205
      %v2317 = vpop.f32.mrf.mxu0
      %v2318 = vadd.f32 0.0, %v2317
      %2319 = vmatmul.f32.gmra.mxu0 %v2208
      %v2320 = vpop.f32.mrf.mxu0
      %v2321 = vadd.f32 0.0, %v2320
      %2322 = vmatmul.f32.gmra.mxu0 %v2211
      %v2323 = vpop.f32.mrf.mxu0
      %v2324 = vadd.f32 0.0, %v2323
      %2325 = vmatmul.f32.gmra.mxu0 %v2214
      %v2326 = vpop.f32.mrf.mxu0
      %v2327 = vadd.f32 0.0, %v2326
      %2328 = vmatmul.f32.gmra.mxu0 %v2217
      %v2329 = vpop.f32.mrf.mxu0
      %v2330 = vadd.f32 0.0, %v2329
      %2331 = vmatmul.f32.gmra.mxu0 %v2220
      %v2332 = vpop.f32.mrf.mxu0
      %v2333 = vadd.f32 0.0, %v2332
      %2334 = vmatmul.f32.gmra.mxu0 %v2223
      %v2335 = vpop.f32.mrf.mxu0
      %v2336 = vadd.f32 0.0, %v2335
      %2337 = vdwg.mxu0
      %v2338 = vadd.f32 %v2061, %v2243
      %v2339 = vadd.f32 %v2062, %v2246
      %v2340 = vadd.f32 %v2063, %v2249
      %v2341 = vadd.f32 %v2064, %v2252
      %v2342 = vadd.f32 %v2065, %v2255
      %v2343 = vadd.f32 %v2066, %v2258
      %v2344 = vadd.f32 %v2067, %v2261
      %v2345 = vadd.f32 %v2068, %v2264
      %v2346 = vadd.f32 %v2069, %v2267
      %v2347 = vadd.f32 %v2070, %v2270
      %v2348 = vadd.f32 %v2071, %v2273
      %v2349 = vadd.f32 %v2072, %v2276
      %v2350 = vadd.f32 %v2073, %v2279
      %v2351 = vadd.f32 %v2074, %v2282
      %v2352 = vadd.f32 %v2075, %v2285
      %v2353 = vadd.f32 %v2076, %v2288
      %v2354 = vadd.f32 %v2077, %v2291
      %v2355 = vadd.f32 %v2078, %v2294
      %v2356 = vadd.f32 %v2079, %v2297
      %v2357 = vadd.f32 %v2080, %v2300
      %v2358 = vadd.f32 %v2081, %v2303
      %v2359 = vadd.f32 %v2082, %v2306
      %v2360 = vadd.f32 %v2083, %v2309
      %v2361 = vadd.f32 %v2084, %v2312
      %v2362 = vadd.f32 %v2085, %v2315
      %v2363 = vadd.f32 %v2086, %v2318
      %v2364 = vadd.f32 %v2087, %v2321
      %v2365 = vadd.f32 %v2088, %v2324
      %v2366 = vadd.f32 %v2089, %v2327
      %v2367 = vadd.f32 %v2090, %v2330
      %v2368 = vadd.f32 %v2091, %v2333
      %v2369 = vadd.f32 %v2092, %v2336
      %v2370 = vld [vmem:[%s1815 + $0x2] sm:$0xff]
      %v2371 = vld [vmem:[%s1815 + $0xa] sm:$0xff]
      %v2372 = vld [vmem:[%s1815 + $0x1a] sm:$0xff]
      %v2373 = vld [vmem:[%s1815 + $0x22] sm:$0xff]
      %v2374 = vld [vmem:[%s1815 + $0x32] sm:$0xff]
      %v2375 = vld [vmem:[%s1815 + $0x3a] sm:$0xff]
      %v2376 = vld [vmem:[%s1815 + $0x4a] sm:$0xff]
      %v2377 = vld [vmem:[%s1815 + $0x52] sm:$0xff]
      %v2378 = vld [vmem:[%s1815 + $0x62] sm:$0xff]
      %v2379 = vld [vmem:[%s1815 + $0x6a] sm:$0xff]
      %v2380 = vld [vmem:[%s1815 + $0x7a] sm:$0xff]
      %v2381 = vld [vmem:[%s1815 + $0x82] sm:$0xff]
      %v2382 = vld [vmem:[%s1815 + $0x92] sm:$0xff]
      %v2383 = vld [vmem:[%s1815 + $0x9a] sm:$0xff]
      %v2384 = vld [vmem:[%s1815 + $0xaa] sm:$0xff]
      %v2385 = vld [vmem:[%s1815 + $0xb2] sm:$0xff]
      %v2386 = vld [vmem:[%s1815 + $0xc2] sm:$0xff]
      %v2387 = vld [vmem:[%s1815 + $0xca] sm:$0xff]
      %v2388 = vld [vmem:[%s1815 + $0xda] sm:$0xff]
      %v2389 = vld [vmem:[%s1815 + $0xe2] sm:$0xff]
      %v2390 = vld [vmem:[%s1815 + $0xf2] sm:$0xff]
      %v2391 = vld [vmem:[%s1815 + $0xfa] sm:$0xff]
      %v2392 = vld [vmem:[%s1815 + $0x10a] sm:$0xff]
      %v2393 = vld [vmem:[%s1815 + $0x112] sm:$0xff]
      %v2394 = vld [vmem:[%s1815 + $0x122] sm:$0xff]
      %v2395 = vld [vmem:[%s1815 + $0x12a] sm:$0xff]
      %v2396 = vld [vmem:[%s1815 + $0x13a] sm:$0xff]
      %v2397 = vld [vmem:[%s1815 + $0x142] sm:$0xff]
      %v2398 = vld [vmem:[%s1815 + $0x152] sm:$0xff]
      %v2399 = vld [vmem:[%s1815 + $0x15a] sm:$0xff]
      %v2400 = vld [vmem:[%s1815 + $0x16a] sm:$0xff]
      %v2401 = vld [vmem:[%s1815 + $0x172] sm:$0xff]
      %v2402 = vld [vmem:[%s1 + $0x100] sm:$0xff]
      %v2403 = vld [vmem:[%s1 + $0x108] sm:$0xff]
      %v2404 = vld [vmem:[%s1 + $0x110] sm:$0xff]
      %v2405 = vld [vmem:[%s1 + $0x118] sm:$0xff]
      %v2407 = vsel %vm287, %v2370, 0
      %v2410 = vsel %vm287, %v2371, 0
      %v2413 = vsel %vm287, %v2372, 0
      %v2416 = vsel %vm287, %v2373, 0
      %v2419 = vsel %vm287, %v2374, 0
      %v2422 = vsel %vm287, %v2375, 0
      %v2425 = vsel %vm287, %v2376, 0
      %v2428 = vsel %vm287, %v2377, 0
      %v2431 = vsel %vm287, %v2378, 0
      %v2434 = vsel %vm287, %v2379, 0
      %v2437 = vsel %vm287, %v2380, 0
      %v2440 = vsel %vm287, %v2381, 0
      %v2443 = vsel %vm287, %v2382, 0
      %v2446 = vsel %vm287, %v2383, 0
      %v2449 = vsel %vm287, %v2384, 0
      %v2452 = vsel %vm287, %v2385, 0
      %v2455 = vsel %vm287, %v2386, 0
      %v2458 = vsel %vm287, %v2387, 0
      %v2461 = vsel %vm287, %v2388, 0
      %v2464 = vsel %vm287, %v2389, 0
      %v2467 = vsel %vm287, %v2390, 0
      %v2470 = vsel %vm287, %v2391, 0
      %v2473 = vsel %vm287, %v2392, 0
      %v2476 = vsel %vm287, %v2393, 0
      %v2479 = vsel %vm287, %v2394, 0
      %v2482 = vsel %vm287, %v2395, 0
      %v2485 = vsel %vm287, %v2396, 0
      %v2488 = vsel %vm287, %v2397, 0
      %v2491 = vsel %vm287, %v2398, 0
      %v2494 = vsel %vm287, %v2399, 0
      %v2497 = vsel %vm287, %v2400, 0
      %v2500 = vsel %vm287, %v2401, 0
      %2502 = vmatpush.msra.mxu0 0.0
      %2503 = vmatpush.msra.mxu0 0.0
      %2504 = vmatpush.msra.mxu0 0.0
      %2505 = vmatpush.msra.mxu0 0.0
      %2506 = vmatpush.msra.mxu0 0.0
      %2507 = vmatpush.msra.mxu0 0.0
      %2508 = vmatpush.msra.mxu0 0.0
      %2509 = vmatpush.msra.mxu0 0.0
      %2510 = vmatpush.msra.mxu0 0.0
      %2511 = vmatpush.msra.mxu0 0.0
      %2512 = vmatpush.msra.mxu0 0.0
      %2513 = vmatpush.msra.mxu0 0.0
      %2514 = vmatpush.msra.mxu0 %v2405
      %2515 = vmatpush.msra.mxu0 %v2404
      %2516 = vmatpush.msra.mxu0 %v2403
      %2517 = vmatpush.msra.mxu0 %v2402
      %2518 = vmatmul.f32.gmra.mxu0 %v2407
      %v2519 = vpop.f32.mrf.mxu0
      %v2520 = vadd.f32 0.0, %v2519
      %2521 = vmatmul.f32.gmra.mxu0 %v2410
      %v2522 = vpop.f32.mrf.mxu0
      %v2523 = vadd.f32 0.0, %v2522
      %2524 = vmatmul.f32.gmra.mxu0 %v2413
      %v2525 = vpop.f32.mrf.mxu0
      %v2526 = vadd.f32 0.0, %v2525
      %2527 = vmatmul.f32.gmra.mxu0 %v2416
      %v2528 = vpop.f32.mrf.mxu0
      %v2529 = vadd.f32 0.0, %v2528
      %2530 = vmatmul.f32.gmra.mxu0 %v2419
      %v2531 = vpop.f32.mrf.mxu0
      %v2532 = vadd.f32 0.0, %v2531
      %2533 = vmatmul.f32.gmra.mxu0 %v2422
      %v2534 = vpop.f32.mrf.mxu0
      %v2535 = vadd.f32 0.0, %v2534
      %2536 = vmatmul.f32.gmra.mxu0 %v2425
      %v2537 = vpop.f32.mrf.mxu0
      %v2538 = vadd.f32 0.0, %v2537
      %2539 = vmatmul.f32.gmra.mxu0 %v2428
      %v2540 = vpop.f32.mrf.mxu0
      %v2541 = vadd.f32 0.0, %v2540
      %2542 = vmatmul.f32.gmra.mxu0 %v2431
      %v2543 = vpop.f32.mrf.mxu0
      %v2544 = vadd.f32 0.0, %v2543
      %2545 = vmatmul.f32.gmra.mxu0 %v2434
      %v2546 = vpop.f32.mrf.mxu0
      %v2547 = vadd.f32 0.0, %v2546
      %2548 = vmatmul.f32.gmra.mxu0 %v2437
      %v2549 = vpop.f32.mrf.mxu0
      %v2550 = vadd.f32 0.0, %v2549
      %2551 = vmatmul.f32.gmra.mxu0 %v2440
      %v2552 = vpop.f32.mrf.mxu0
      %v2553 = vadd.f32 0.0, %v2552
      %2554 = vmatmul.f32.gmra.mxu0 %v2443
      %v2555 = vpop.f32.mrf.mxu0
      %v2556 = vadd.f32 0.0, %v2555
      %2557 = vmatmul.f32.gmra.mxu0 %v2446
      %v2558 = vpop.f32.mrf.mxu0
      %v2559 = vadd.f32 0.0, %v2558
      %2560 = vmatmul.f32.gmra.mxu0 %v2449
      %v2561 = vpop.f32.mrf.mxu0
      %v2562 = vadd.f32 0.0, %v2561
      %2563 = vmatmul.f32.gmra.mxu0 %v2452
      %v2564 = vpop.f32.mrf.mxu0
      %v2565 = vadd.f32 0.0, %v2564
      %2566 = vmatmul.f32.gmra.mxu0 %v2455
      %v2567 = vpop.f32.mrf.mxu0
      %v2568 = vadd.f32 0.0, %v2567
      %2569 = vmatmul.f32.gmra.mxu0 %v2458
      %v2570 = vpop.f32.mrf.mxu0
      %v2571 = vadd.f32 0.0, %v2570
      %2572 = vmatmul.f32.gmra.mxu0 %v2461
      %v2573 = vpop.f32.mrf.mxu0
      %v2574 = vadd.f32 0.0, %v2573
      %2575 = vmatmul.f32.gmra.mxu0 %v2464
      %v2576 = vpop.f32.mrf.mxu0
      %v2577 = vadd.f32 0.0, %v2576
      %2578 = vmatmul.f32.gmra.mxu0 %v2467
      %v2579 = vpop.f32.mrf.mxu0
      %v2580 = vadd.f32 0.0, %v2579
      %2581 = vmatmul.f32.gmra.mxu0 %v2470
      %v2582 = vpop.f32.mrf.mxu0
      %v2583 = vadd.f32 0.0, %v2582
      %2584 = vmatmul.f32.gmra.mxu0 %v2473
      %v2585 = vpop.f32.mrf.mxu0
      %v2586 = vadd.f32 0.0, %v2585
      %2587 = vmatmul.f32.gmra.mxu0 %v2476
      %v2588 = vpop.f32.mrf.mxu0
      %v2589 = vadd.f32 0.0, %v2588
      %2590 = vmatmul.f32.gmra.mxu0 %v2479
      %v2591 = vpop.f32.mrf.mxu0
      %v2592 = vadd.f32 0.0, %v2591
      %2593 = vmatmul.f32.gmra.mxu0 %v2482
      %v2594 = vpop.f32.mrf.mxu0
      %v2595 = vadd.f32 0.0, %v2594
      %2596 = vmatmul.f32.gmra.mxu0 %v2485
      %v2597 = vpop.f32.mrf.mxu0
      %v2598 = vadd.f32 0.0, %v2597
      %2599 = vmatmul.f32.gmra.mxu0 %v2488
      %v2600 = vpop.f32.mrf.mxu0
      %v2601 = vadd.f32 0.0, %v2600
      %2602 = vmatmul.f32.gmra.mxu0 %v2491
      %v2603 = vpop.f32.mrf.mxu0
      %v2604 = vadd.f32 0.0, %v2603
      %2605 = vmatmul.f32.gmra.mxu0 %v2494
      %v2606 = vpop.f32.mrf.mxu0
      %v2607 = vadd.f32 0.0, %v2606
      %2608 = vmatmul.f32.gmra.mxu0 %v2497
      %v2609 = vpop.f32.mrf.mxu0
      %v2610 = vadd.f32 0.0, %v2609
      %2611 = vmatmul.f32.gmra.mxu0 %v2500
      %v2612 = vpop.f32.mrf.mxu0
      %v2613 = vadd.f32 0.0, %v2612
      %2614 = vdwg.mxu0
      %v2615 = vadd.f32 %v2338, %v2520
      %v2616 = vadd.f32 %v2339, %v2523
      %v2617 = vadd.f32 %v2340, %v2526
      %v2618 = vadd.f32 %v2341, %v2529
      %v2619 = vadd.f32 %v2342, %v2532
      %v2620 = vadd.f32 %v2343, %v2535
      %v2621 = vadd.f32 %v2344, %v2538
      %v2622 = vadd.f32 %v2345, %v2541
      %v2623 = vadd.f32 %v2346, %v2544
      %v2624 = vadd.f32 %v2347, %v2547
      %v2625 = vadd.f32 %v2348, %v2550
      %v2626 = vadd.f32 %v2349, %v2553
      %v2627 = vadd.f32 %v2350, %v2556
      %v2628 = vadd.f32 %v2351, %v2559
      %v2629 = vadd.f32 %v2352, %v2562
      %v2630 = vadd.f32 %v2353, %v2565
      %v2631 = vadd.f32 %v2354, %v2568
      %v2632 = vadd.f32 %v2355, %v2571
      %v2633 = vadd.f32 %v2356, %v2574
      %v2634 = vadd.f32 %v2357, %v2577
      %v2635 = vadd.f32 %v2358, %v2580
      %v2636 = vadd.f32 %v2359, %v2583
      %v2637 = vadd.f32 %v2360, %v2586
      %v2638 = vadd.f32 %v2361, %v2589
      %v2639 = vadd.f32 %v2362, %v2592
      %v2640 = vadd.f32 %v2363, %v2595
      %v2641 = vadd.f32 %v2364, %v2598
      %v2642 = vadd.f32 %v2365, %v2601
      %v2643 = vadd.f32 %v2366, %v2604
      %v2644 = vadd.f32 %v2367, %v2607
      %v2645 = vadd.f32 %v2368, %v2610
      %v2646 = vadd.f32 %v2369, %v2613
      %p2647 = scmp.eq.s32.totalorder %s19, 0
      // Predicated region
      $region37: #{recurrent_criss_cross_attention.5} parent=35 // pred_check
        %p2648 = pneg %p2647
      $region38: #{recurrent_criss_cross_attention.5} parent=35 // pred_check_branch
        %2650 = sbr.rel (%p2648) target = $region40
      $region39: #{recurrent_criss_cross_attention.5} parent=35 // pred_region
        %p2651 = scmp.eq.s32.totalorder %s20, 0
        // Predicated region
        $region41: #{recurrent_criss_cross_attention.5} parent=39 // pred_check
          %p2652 = pneg %p2651
        $region42: #{recurrent_criss_cross_attention.5} parent=39 // pred_check_branch
          %2654 = sbr.rel (%p2652) target = $region44
        $region43: #{recurrent_criss_cross_attention.5} parent=39 // pred_region
          %2655 = vst [vmem:[#allocation2] sm:$0x1] 0.0
          %2656 = vst [vmem:[#allocation3] sm:$0x1] 0.0
        $region44: #{recurrent_criss_cross_attention.5} parent=39 // pred_fallthru
          _
        %v2657 = vld [vmem:[#allocation2] sm:$0x1]
        %v2658 = vadd.f32 %v2615, %v2616
        %v2659 = vadd.f32 %v2658, %v2617
        %v2660 = vadd.f32 %v2659, %v2618
        %v2661 = vadd.f32 %v2660, %v2619
        %v2662 = vadd.f32 %v2661, %v2620
        %v2663 = vadd.f32 %v2662, %v2621
        %v2664 = vadd.f32 %v2663, %v2622
        %v2665 = vadd.f32 %v2664, %v2623
        %v2666 = vadd.f32 %v2665, %v2624
        %v2667 = vadd.f32 %v2666, %v2625
        %v2668 = vadd.f32 %v2667, %v2626
        %v2669 = vadd.f32 %v2668, %v2627
        %v2670 = vadd.f32 %v2669, %v2628
        %v2671 = vadd.f32 %v2670, %v2629
        %v2672 = vadd.f32 %v2671, %v2630
        %v2673 = vadd.f32 %v2672, %v2631
        %v2674 = vadd.f32 %v2673, %v2632
        %v2675 = vadd.f32 %v2674, %v2633
        %v2676 = vadd.f32 %v2675, %v2634
        %v2677 = vadd.f32 %v2676, %v2635
        %v2678 = vadd.f32 %v2677, %v2636
        %v2679 = vadd.f32 %v2678, %v2637
        %v2680 = vadd.f32 %v2679, %v2638
        %v2681 = vadd.f32 %v2680, %v2639
        %v2682 = vadd.f32 %v2681, %v2640
        %v2683 = vadd.f32 %v2682, %v2641
        %v2684 = vadd.f32 %v2683, %v2642
        %v2685 = vadd.f32 %v2684, %v2643
        %v2686 = vadd.f32 %v2685, %v2644
        %v2687 = vadd.f32 %v2686, %v2645
        %v2688 = vadd.f32 %v2687, %v2646
        %v2689 = vrot.slane %v2688, 4
        %v2690 = vadd.f32 %v2688, %v2689
        %v2691 = vrot.slane %v2690, 2
        %v2692 = vadd.f32 %v2690, %v2691
        %v2693 = vrot.slane %v2692, 1
        %v2694 = vadd.f32 %v2692, %v2693
        %v2695 = vadd.f32 %v2657, %v2694
        %2696 = vst [vmem:[#allocation2] sm:$0x1] %v2695
        %v2697 = vld [vmem:[#allocation3] sm:$0x1]
        %v2698 = vmul.f32 %v2615, %v2615
        %v2699 = vmul.f32 %v2616, %v2616
        %v2700 = vmul.f32 %v2617, %v2617
        %v2701 = vmul.f32 %v2618, %v2618
        %v2702 = vmul.f32 %v2619, %v2619
        %v2703 = vmul.f32 %v2620, %v2620
        %v2704 = vmul.f32 %v2621, %v2621
        %v2705 = vmul.f32 %v2622, %v2622
        %v2706 = vmul.f32 %v2623, %v2623
        %v2707 = vmul.f32 %v2624, %v2624
        %v2708 = vmul.f32 %v2625, %v2625
        %v2709 = vmul.f32 %v2626, %v2626
        %v2710 = vmul.f32 %v2627, %v2627
        %v2711 = vmul.f32 %v2628, %v2628
        %v2712 = vmul.f32 %v2629, %v2629
        %v2713 = vmul.f32 %v2630, %v2630
        %v2714 = vmul.f32 %v2631, %v2631
        %v2715 = vmul.f32 %v2632, %v2632
        %v2716 = vmul.f32 %v2633, %v2633
        %v2717 = vmul.f32 %v2634, %v2634
        %v2718 = vmul.f32 %v2635, %v2635
        %v2719 = vmul.f32 %v2636, %v2636
        %v2720 = vmul.f32 %v2637, %v2637
        %v2721 = vmul.f32 %v2638, %v2638
        %v2722 = vmul.f32 %v2639, %v2639
        %v2723 = vmul.f32 %v2640, %v2640
        %v2724 = vmul.f32 %v2641, %v2641
        %v2725 = vmul.f32 %v2642, %v2642
        %v2726 = vmul.f32 %v2643, %v2643
        %v2727 = vmul.f32 %v2644, %v2644
        %v2728 = vmul.f32 %v2645, %v2645
        %v2729 = vmul.f32 %v2646, %v2646
        %v2730 = vadd.f32 %v2698, %v2699
        %v2731 = vadd.f32 %v2730, %v2700
        %v2732 = vadd.f32 %v2731, %v2701
        %v2733 = vadd.f32 %v2732, %v2702
        %v2734 = vadd.f32 %v2733, %v2703
        %v2735 = vadd.f32 %v2734, %v2704
        %v2736 = vadd.f32 %v2735, %v2705
        %v2737 = vadd.f32 %v2736, %v2706
        %v2738 = vadd.f32 %v2737, %v2707
        %v2739 = vadd.f32 %v2738, %v2708
        %v2740 = vadd.f32 %v2739, %v2709
        %v2741 = vadd.f32 %v2740, %v2710
        %v2742 = vadd.f32 %v2741, %v2711
        %v2743 = vadd.f32 %v2742, %v2712
        %v2744 = vadd.f32 %v2743, %v2713
        %v2745 = vadd.f32 %v2744, %v2714
        %v2746 = vadd.f32 %v2745, %v2715
        %v2747 = vadd.f32 %v2746, %v2716
        %v2748 = vadd.f32 %v2747, %v2717
        %v2749 = vadd.f32 %v2748, %v2718
        %v2750 = vadd.f32 %v2749, %v2719
        %v2751 = vadd.f32 %v2750, %v2720
        %v2752 = vadd.f32 %v2751, %v2721
        %v2753 = vadd.f32 %v2752, %v2722
        %v2754 = vadd.f32 %v2753, %v2723
        %v2755 = vadd.f32 %v2754, %v2724
        %v2756 = vadd.f32 %v2755, %v2725
        %v2757 = vadd.f32 %v2756, %v2726
        %v2758 = vadd.f32 %v2757, %v2727
        %v2759 = vadd.f32 %v2758, %v2728
        %v2760 = vadd.f32 %v2759, %v2729
        %v2761 = vrot.slane %v2760, 4
        %v2762 = vadd.f32 %v2760, %v2761
        %v2763 = vrot.slane %v2762, 2
        %v2764 = vadd.f32 %v2762, %v2763
        %v2765 = vrot.slane %v2764, 1
        %v2766 = vadd.f32 %v2764, %v2765
        %v2767 = vadd.f32 %v2697, %v2766
        %2768 = vst [vmem:[#allocation3] sm:$0x1] %v2767
        %p2769 = scmp.eq.s32.totalorder %s20, 1
        // Predicated region
        $region45: #{recurrent_criss_cross_attention.5} parent=39 // pred_check
          %p2770 = pneg %p2769
        $region46: #{recurrent_criss_cross_attention.5} parent=39 // pred_check_branch
          %2772 = sbr.rel (%p2770) target = $region48
        $region47: #{recurrent_criss_cross_attention.5} parent=39 // pred_region
          %v2773 = vld [vmem:[#allocation2] sm:$0x1]
          %v2774 = vmul.f32 %v2773, 0.001953125
          %v2775 = vld [vmem:[#allocation3] sm:$0x1]
          %v2776 = vmul.f32 %v2775, 0.001953125
          %v2777 = vmul.f32 %v2774, %v2774
          %v2778 = vsub.f32 %v2776, %v2777
          %2779 = vst [vmem:[#allocation2] sm:$0x1] %v2774
          %v2780 = vadd.f32 %v2778, 1e-05
          %v2781 = vrsqrt.pop %v2780
          %v2782 = vmul.f32 %v2781, %v2780
          %v2783 = vmul.f32 %v2782, %v2781
          %v2784 = vmul.f32 0.5, %v2783
          %v2785 = vsub.f32 1.5, %v2784
          %v2786 = vmul.f32 %v2781, %v2785
          %vm2787 = vweird.f32 %v2780
          %vm2788 = vweird.f32 %v2781
          %vm2789 = vmor %vm2787, %vm2788
          %v2790 = vsel %vm2789, %v2781, %v2786
          %2791 = vst [vmem:[#allocation3] sm:$0x1] %v2790
        $region48: #{recurrent_criss_cross_attention.5} parent=39 // pred_fallthru
          _
      $region40: #{recurrent_criss_cross_attention.5} parent=35 // pred_fallthru
        _
      %p2792 = scmp.eq.s32.totalorder %s19, 1
      // Predicated region
      $region49: #{recurrent_criss_cross_attention.5} parent=35 // pred_check
        %p2793 = pneg %p2792
      $region50: #{recurrent_criss_cross_attention.5} parent=35 // pred_check_branch
        %2795 = sbr.rel (%p2793) target = $region52
      $region51: #{recurrent_criss_cross_attention.5} parent=35 // pred_region
        %v2796 = vld [vmem:[#allocation2] sm:$0x1]
        %v2798 = vperm.slane %v2796, 0
        %v2800 = vsub.f32 %v2615, %v2798
        %v2801 = vsub.f32 %v2616, %v2798
        %v2802 = vsub.f32 %v2617, %v2798
        %v2803 = vsub.f32 %v2618, %v2798
        %v2804 = vsub.f32 %v2619, %v2798
        %v2805 = vsub.f32 %v2620, %v2798
        %v2806 = vsub.f32 %v2621, %v2798
        %v2807 = vsub.f32 %v2622, %v2798
        %v2808 = vsub.f32 %v2623, %v2798
        %v2809 = vsub.f32 %v2624, %v2798
        %v2810 = vsub.f32 %v2625, %v2798
        %v2811 = vsub.f32 %v2626, %v2798
        %v2812 = vsub.f32 %v2627, %v2798
        %v2813 = vsub.f32 %v2628, %v2798
        %v2814 = vsub.f32 %v2629, %v2798
        %v2815 = vsub.f32 %v2630, %v2798
        %v2816 = vsub.f32 %v2631, %v2798
        %v2817 = vsub.f32 %v2632, %v2798
        %v2818 = vsub.f32 %v2633, %v2798
        %v2819 = vsub.f32 %v2634, %v2798
        %v2820 = vsub.f32 %v2635, %v2798
        %v2821 = vsub.f32 %v2636, %v2798
        %v2822 = vsub.f32 %v2637, %v2798
        %v2823 = vsub.f32 %v2638, %v2798
        %v2824 = vsub.f32 %v2639, %v2798
        %v2825 = vsub.f32 %v2640, %v2798
        %v2826 = vsub.f32 %v2641, %v2798
        %v2827 = vsub.f32 %v2642, %v2798
        %v2828 = vsub.f32 %v2643, %v2798
        %v2829 = vsub.f32 %v2644, %v2798
        %v2830 = vsub.f32 %v2645, %v2798
        %v2831 = vsub.f32 %v2646, %v2798
        %v2832 = vld [vmem:[#allocation3] sm:$0x1]
        %v2834 = vperm.slane %v2832, 0
        %v2836 = vmul.f32 %v2800, %v2834
        %v2837 = vmul.f32 %v2801, %v2834
        %v2838 = vmul.f32 %v2802, %v2834
        %v2839 = vmul.f32 %v2803, %v2834
        %v2840 = vmul.f32 %v2804, %v2834
        %v2841 = vmul.f32 %v2805, %v2834
        %v2842 = vmul.f32 %v2806, %v2834
        %v2843 = vmul.f32 %v2807, %v2834
        %v2844 = vmul.f32 %v2808, %v2834
        %v2845 = vmul.f32 %v2809, %v2834
        %v2846 = vmul.f32 %v2810, %v2834
        %v2847 = vmul.f32 %v2811, %v2834
        %v2848 = vmul.f32 %v2812, %v2834
        %v2849 = vmul.f32 %v2813, %v2834
        %v2850 = vmul.f32 %v2814, %v2834
        %v2851 = vmul.f32 %v2815, %v2834
        %v2852 = vmul.f32 %v2816, %v2834
        %v2853 = vmul.f32 %v2817, %v2834
        %v2854 = vmul.f32 %v2818, %v2834
        %v2855 = vmul.f32 %v2819, %v2834
        %v2856 = vmul.f32 %v2820, %v2834
        %v2857 = vmul.f32 %v2821, %v2834
        %v2858 = vmul.f32 %v2822, %v2834
        %v2859 = vmul.f32 %v2823, %v2834
        %v2860 = vmul.f32 %v2824, %v2834
        %v2861 = vmul.f32 %v2825, %v2834
        %v2862 = vmul.f32 %v2826, %v2834
        %v2863 = vmul.f32 %v2827, %v2834
        %v2864 = vmul.f32 %v2828, %v2834
        %v2865 = vmul.f32 %v2829, %v2834
        %v2866 = vmul.f32 %v2830, %v2834
        %v2867 = vmul.f32 %v2831, %v2834
        %v2868 = vld [vmem:[%s2] sm:$0x1]
        %v2870 = vperm.slane %v2868, 0
        %v2872 = vmul.f32 %v2836, %v2870
        %v2873 = vmul.f32 %v2837, %v2870
        %v2874 = vmul.f32 %v2838, %v2870
        %v2875 = vmul.f32 %v2839, %v2870
        %v2876 = vmul.f32 %v2840, %v2870
        %v2877 = vmul.f32 %v2841, %v2870
        %v2878 = vmul.f32 %v2842, %v2870
        %v2879 = vmul.f32 %v2843, %v2870
        %v2880 = vmul.f32 %v2844, %v2870
        %v2881 = vmul.f32 %v2845, %v2870
        %v2882 = vmul.f32 %v2846, %v2870
        %v2883 = vmul.f32 %v2847, %v2870
        %v2884 = vmul.f32 %v2848, %v2870
        %v2885 = vmul.f32 %v2849, %v2870
        %v2886 = vmul.f32 %v2850, %v2870
        %v2887 = vmul.f32 %v2851, %v2870
        %v2888 = vmul.f32 %v2852, %v2870
        %v2889 = vmul.f32 %v2853, %v2870
        %v2890 = vmul.f32 %v2854, %v2870
        %v2891 = vmul.f32 %v2855, %v2870
        %v2892 = vmul.f32 %v2856, %v2870
        %v2893 = vmul.f32 %v2857, %v2870
        %v2894 = vmul.f32 %v2858, %v2870
        %v2895 = vmul.f32 %v2859, %v2870
        %v2896 = vmul.f32 %v2860, %v2870
        %v2897 = vmul.f32 %v2861, %v2870
        %v2898 = vmul.f32 %v2862, %v2870
        %v2899 = vmul.f32 %v2863, %v2870
        %v2900 = vmul.f32 %v2864, %v2870
        %v2901 = vmul.f32 %v2865, %v2870
        %v2902 = vmul.f32 %v2866, %v2870
        %v2903 = vmul.f32 %v2867, %v2870
        %v2904 = vld [vmem:[%s3] sm:$0x1]
        %v2906 = vperm.slane %v2904, 0
        %v2908 = vadd.f32 %v2872, %v2906
        %v2909 = vadd.f32 %v2873, %v2906
        %v2910 = vadd.f32 %v2874, %v2906
        %v2911 = vadd.f32 %v2875, %v2906
        %v2912 = vadd.f32 %v2876, %v2906
        %v2913 = vadd.f32 %v2877, %v2906
        %v2914 = vadd.f32 %v2878, %v2906
        %v2915 = vadd.f32 %v2879, %v2906
        %v2916 = vadd.f32 %v2880, %v2906
        %v2917 = vadd.f32 %v2881, %v2906
        %v2918 = vadd.f32 %v2882, %v2906
        %v2919 = vadd.f32 %v2883, %v2906
        %v2920 = vadd.f32 %v2884, %v2906
        %v2921 = vadd.f32 %v2885, %v2906
        %v2922 = vadd.f32 %v2886, %v2906
        %v2923 = vadd.f32 %v2887, %v2906
        %v2924 = vadd.f32 %v2888, %v2906
        %v2925 = vadd.f32 %v2889, %v2906
        %v2926 = vadd.f32 %v2890, %v2906
        %v2927 = vadd.f32 %v2891, %v2906
        %v2928 = vadd.f32 %v2892, %v2906
        %v2929 = vadd.f32 %v2893, %v2906
        %v2930 = vadd.f32 %v2894, %v2906
        %v2931 = vadd.f32 %v2895, %v2906
        %v2932 = vadd.f32 %v2896, %v2906
        %v2933 = vadd.f32 %v2897, %v2906
        %v2934 = vadd.f32 %v2898, %v2906
        %v2935 = vadd.f32 %v2899, %v2906
        %v2936 = vadd.f32 %v2900, %v2906
        %v2937 = vadd.f32 %v2901, %v2906
        %v2938 = vadd.f32 %v2902, %v2906
        %v2939 = vadd.f32 %v2903, %v2906
        %v2940 = vmax.f32 %v2908, 0.0
        %v2941 = vmax.f32 %v2909, 0.0
        %v2942 = vmax.f32 %v2910, 0.0
        %v2943 = vmax.f32 %v2911, 0.0
        %v2944 = vmax.f32 %v2912, 0.0
        %v2945 = vmax.f32 %v2913, 0.0
        %v2946 = vmax.f32 %v2914, 0.0
        %v2947 = vmax.f32 %v2915, 0.0
        %v2948 = vmax.f32 %v2916, 0.0
        %v2949 = vmax.f32 %v2917, 0.0
        %v2950 = vmax.f32 %v2918, 0.0
        %v2951 = vmax.f32 %v2919, 0.0
        %v2952 = vmax.f32 %v2920, 0.0
        %v2953 = vmax.f32 %v2921, 0.0
        %v2954 = vmax.f32 %v2922, 0.0
        %v2955 = vmax.f32 %v2923, 0.0
        %v2956 = vmax.f32 %v2924, 0.0
        %v2957 = vmax.f32 %v2925, 0.0
        %v2958 = vmax.f32 %v2926, 0.0
        %v2959 = vmax.f32 %v2927, 0.0
        %v2960 = vmax.f32 %v2928, 0.0
        %v2961 = vmax.f32 %v2929, 0.0
        %v2962 = vmax.f32 %v2930, 0.0
        %v2963 = vmax.f32 %v2931, 0.0
        %v2964 = vmax.f32 %v2932, 0.0
        %v2965 = vmax.f32 %v2933, 0.0
        %v2966 = vmax.f32 %v2934, 0.0
        %v2967 = vmax.f32 %v2935, 0.0
        %v2968 = vmax.f32 %v2936, 0.0
        %v2969 = vmax.f32 %v2937, 0.0
        %v2970 = vmax.f32 %v2938, 0.0
        %v2971 = vmax.f32 %v2939, 0.0
        %2972 = vst [vmem:[%s213] sm:$0xff] %v2940
        %2973 = vst [vmem:[%s213 + $0x8] sm:$0xff] %v2941
        %2974 = vst [vmem:[%s213 + $0x10] sm:$0xff] %v2942
        %2975 = vst [vmem:[%s213 + $0x18] sm:$0xff] %v2943
        %2976 = vst [vmem:[%s213 + $0x20] sm:$0xff] %v2944
        %2977 = vst [vmem:[%s213 + $0x28] sm:$0xff] %v2945
        %2978 = vst [vmem:[%s213 + $0x30] sm:$0xff] %v2946
        %2979 = vst [vmem:[%s213 + $0x38] sm:$0xff] %v2947
        %2980 = vst [vmem:[%s213 + $0x40] sm:$0xff] %v2948
        %2981 = vst [vmem:[%s213 + $0x48] sm:$0xff] %v2949
        %2982 = vst [vmem:[%s213 + $0x50] sm:$0xff] %v2950
        %2983 = vst [vmem:[%s213 + $0x58] sm:$0xff] %v2951
        %2984 = vst [vmem:[%s213 + $0x60] sm:$0xff] %v2952
        %2985 = vst [vmem:[%s213 + $0x68] sm:$0xff] %v2953
        %2986 = vst [vmem:[%s213 + $0x70] sm:$0xff] %v2954
        %2987 = vst [vmem:[%s213 + $0x78] sm:$0xff] %v2955
        %2988 = vst [vmem:[%s213 + $0x80] sm:$0xff] %v2956
        %2989 = vst [vmem:[%s213 + $0x88] sm:$0xff] %v2957
        %2990 = vst [vmem:[%s213 + $0x90] sm:$0xff] %v2958
        %2991 = vst [vmem:[%s213 + $0x98] sm:$0xff] %v2959
        %2992 = vst [vmem:[%s213 + $0xa0] sm:$0xff] %v2960
        %2993 = vst [vmem:[%s213 + $0xa8] sm:$0xff] %v2961
        %2994 = vst [vmem:[%s213 + $0xb0] sm:$0xff] %v2962
        %2995 = vst [vmem:[%s213 + $0xb8] sm:$0xff] %v2963
        %2996 = vst [vmem:[%s213 + $0xc0] sm:$0xff] %v2964
        %2997 = vst [vmem:[%s213 + $0xc8] sm:$0xff] %v2965
        %2998 = vst [vmem:[%s213 + $0xd0] sm:$0xff] %v2966
        %2999 = vst [vmem:[%s213 + $0xd8] sm:$0xff] %v2967
        %3000 = vst [vmem:[%s213 + $0xe0] sm:$0xff] %v2968
        %3001 = vst [vmem:[%s213 + $0xe8] sm:$0xff] %v2969
        %3002 = vst [vmem:[%s213 + $0xf0] sm:$0xff] %v2970
        %3003 = vst [vmem:[%s213 + $0xf8] sm:$0xff] %v2971
      $region52: #{recurrent_criss_cross_attention.5} parent=35 // pred_fallthru
        _
      %s3004 = smul.u32 %s19, %s20
      %p3005 = scmp.lt.s32.totalorder %s3004, 1
      %s3006 = scalar_select %p3005, %s3004, 1
      %s3007 = smul.addr %s3006, 32
      %s3008 = smul.addr %s3007, 8
      %s3009 = scalar_lea.vmem %s4, %s3008
      // Predicated region
      $region53: #{recurrent_criss_cross_attention.5} parent=35 // pred_check
        %p3010 = pneg %p136
      $region54: #{recurrent_criss_cross_attention.5} parent=35 // pred_check_branch
        %3012 = sbr.rel (%p3010) target = $region56
      $region55: #{recurrent_criss_cross_attention.5} parent=35 // pred_region
        %s3013 = smul.u32 %s19, %s20
      $region56: #{recurrent_criss_cross_attention.5} parent=35 // pred_fallthru
        _
    $region36: #{recurrent_criss_cross_attention.5} parent=5 // pred_fallthru
      _
    %p3014 = scmp.le.s32.totalorder 2, %s10
    // Predicated region
    $region57: #{recurrent_criss_cross_attention.5} parent=5 // pred_check
      %p3015 = pneg %p3014
    $region58: #{recurrent_criss_cross_attention.5} parent=5 // pred_check_branch
      %3017 = sbr.rel (%p3015) target = $region60
    $region59: #{recurrent_criss_cross_attention.5} parent=5 // pred_region
      %s3018 = ssub.s32 %s10, 2
      // Predicated region
      $region61: #{recurrent_criss_cross_attention.5} parent=59 // pred_check
        %p3019 = pneg %p142
      $region62: #{recurrent_criss_cross_attention.5} parent=59 // pred_check_branch
        %3021 = sbr.rel (%p3019) target = $region64
      $region63: #{recurrent_criss_cross_attention.5} parent=59 // pred_region
        %s3022 = smul.u32 %s21, %s22
        %p3023 = scmp.lt.s32.totalorder %s3022, 1
        %s3024 = scalar_select %p3023, %s3022, 1
        %s3025 = smul.addr %s3024, 32
        %s3026 = smul.addr %s3025, 8
        %s3027 = scalar_lea.vmem %s4, %s3026
      $region64: #{recurrent_criss_cross_attention.5} parent=59 // pred_fallthru
        _
    $region60: #{recurrent_criss_cross_attention.5} parent=5 // pred_fallthru
      _
  $region6: #{recurrent_criss_cross_attention.5} parent=0 // loop_footer
    %s14 = sadd.s32 1, %s10
  $region7: #{recurrent_criss_cross_attention.5} parent=0 // loop_footer_branch
    %9 = sbr.rel target = $region3
  $region8: #{recurrent_criss_cross_attention.5} parent=0 // loop_exit
    _

// kernel: recurrent_criss_cross_attention.4
$region0: #{recurrent_criss_cross_attention.4}
  #allocation0 [shape = 'u32[]', space=smem, size = 0x4, offset = 0x4, fixed_abs, tag = 'smem constant byte address 0x4 - core index']
  #allocation1 [shape = 'u32[72,128]{1,0:T(1,128)}', space=vmem, size = 0x9000, scoped, tag = 'internal scratch']
  #allocation2 [shape = 'f32[1]{0:T(128)S(6)}', space=smem, size = 0x200, scoped, tag = 'scoped memory for recurrent_criss_cross_attention.4']
  %s0 = inlined_call_operand.vmem [shape: f32[2,256,128], index: 0, kind: input, shape index: {}]
  %s1 = inlined_call_operand.vmem [shape: f32[128,128], index: 1, kind: input, shape index: {}]
  %s2 = inlined_call_operand.vmem [shape: f32[1,128], index: 2, kind: input, shape index: {}]
  %s3 = inlined_call_operand.vmem [shape: f32[128,128], index: 3, kind: input, shape index: {}]
  %s4 = inlined_call_operand.vmem [shape: f32[1,128], index: 4, kind: input, shape index: {}]
  %s5 = inlined_call_operand.vmem [shape: f32[128,128], index: 5, kind: input, shape index: {}]
  %s6 = inlined_call_operand.vmem [shape: f32[1,128], index: 6, kind: input, shape index: {}]
  %s7 = inlined_call_operand.vmem [shape: f32[256,256], index: 7, kind: input, shape index: {}]
  %s8 = inlined_call_operand.vmem [shape: f32[256,256], index: 8, kind: input, shape index: {}]
  %s9 = inlined_call_operand.<no memory space> [shape: f32[1], index: 9, kind: input, shape index: {}]
  %s10 = inlined_call_operand.vmem [shape: f32[2,256,128], index: 10, kind: output, shape index: {}]
  %s11 = sld [smem:[#allocation0]]
  $region73: #{recurrent_criss_cross_attention.4} parent=0
    _
  %s13 = ssub.s32 1, %s11
  %s14 = scalar_select 0, %s13, %s11
  %15 = sst [smem:[#allocation2]] %s9
  loop: start=0, step=1, limit=4
  $region2: #{recurrent_criss_cross_attention.4} parent=0 // loop_pre_header
    _
  $region3: #{recurrent_criss_cross_attention.4} parent=0 // loop_header
    %s17 = sphi 0, %s21
    %p18 = scmp.ge.s32.totalorder %s17, 4
    %s27 = sphi 0, %s29
    %s30 = sphi 0, %s27
    %s31 = sphi 0, %s30
    %s47 = sphi 0, %s31
    %s51 = sphi 0, %s51
    %s53 = sphi 0, %s51
    %s54 = sphi 0, %s53
    %s68 = sphi 0, %s54
    %s72 = sphi 0, %s72
    %s74 = sphi 0, %s72
    %s75 = sphi 0, %s74
    %s89 = sphi 0, %s75
    %s93 = sphi 0, %s93
    %s95 = sphi 0, %s93
    %s96 = sphi 0, %s95
    %s110 = sphi 0, %s96
    %s114 = sphi 0, %s114
    %s116 = sphi 0, %s114
    %s117 = sphi 0, %s116
    %s131 = sphi 0, %s117
    %s135 = sphi 0, %s135
    %s137 = sphi 0, %s135
    %s138 = sphi 0, %s137
    %s152 = sphi 0, %s138
    %s156 = sphi 0, %s156
    %s158 = sphi 0, %s156
    %s159 = sphi 0, %s158
    %s173 = sphi 0, %s159
    %s177 = sphi 0, %s177
    %s179 = sphi 0, %s177
    %s180 = sphi 0, %s179
    %s194 = sphi 0, %s180
    %s198 = sphi 0, %s198
    %s200 = sphi 0, %s198
    %s201 = sphi 0, %s200
    %s215 = sphi 0, %s201
    %s219 = sphi 0, %s219
    %s221 = sphi 0, %s219
    %s222 = sphi 0, %s221
    %s236 = sphi 0, %s222
    %s242 = sphi 0, %s244
    %s245 = sphi 0, %s242
    %s246 = sphi 0, %s245
    %s262 = sphi 0, %s246
  $region4: #{recurrent_criss_cross_attention.4} parent=0 // loop_header_branch
    %20 = sbr.rel (%p18) target = $region8
  $region5: #{recurrent_criss_cross_attention.4} parent=0 // loop_body
    %s22 = ssub.s32 %s17, 1
    %s23 = ssub.s32 %s17, 2
    %s24 = sadd.s32 %s17, 1
    %s25 = ssub.s32 %s17, %s24
    %p26 = scmp.eq.s32.totalorder %s25, 0
    %s28 = sadd.s32 %s27, 1
    %s29 = scalar_select %p26, %s27, %s28
    %p32 = pneg %p26
    %p33 = scmp.eq.s32.totalorder %s17, 1
    %p34 = por %p32, %p33
    %p35 = scmp.ne.s32.totalorder %s27, %s30
    %p36 = scmp.eq.s32.totalorder %s17, 0
    %p37 = por %p35, %p36
    %p38 = scmp.ne.s32.totalorder %s27, %s30
    %p39 = scmp.eq.s32.totalorder %s22, 1
    %p40 = por %p38, %p39
    %p41 = scmp.ne.s32.totalorder %s30, %s31
    %p42 = scmp.eq.s32.totalorder %s22, 0
    %p43 = por %p41, %p42
    %p44 = scmp.ne.s32.totalorder %s30, %s31
    %p45 = scmp.eq.s32.totalorder %s23, 1
    %p46 = por %p44, %p45
    %p48 = scmp.ne.s32.totalorder %s31, %s47
    %p49 = scmp.eq.s32.totalorder %s23, 0
    %p50 = por %p48, %p49
    %s52 = sadd.s32 %s51, 1
    %p55 = scmp.eq.s32.totalorder %s17, 1
    %p56 = scmp.ne.s32.totalorder %s51, %s53
    %p57 = scmp.eq.s32.totalorder %s17, 0
    %p58 = por %p56, %p57
    %p59 = scmp.ne.s32.totalorder %s51, %s53
    %p60 = scmp.eq.s32.totalorder %s22, 1
    %p61 = por %p59, %p60
    %p62 = scmp.ne.s32.totalorder %s53, %s54
    %p63 = scmp.eq.s32.totalorder %s22, 0
    %p64 = por %p62, %p63
    %p65 = scmp.ne.s32.totalorder %s53, %s54
    %p66 = scmp.eq.s32.totalorder %s23, 1
    %p67 = por %p65, %p66
    %p69 = scmp.ne.s32.totalorder %s54, %s68
    %p70 = scmp.eq.s32.totalorder %s23, 0
    %p71 = por %p69, %p70
    %s73 = sadd.s32 %s72, 1
    %p76 = scmp.eq.s32.totalorder %s17, 1
    %p77 = scmp.ne.s32.totalorder %s72, %s74
    %p78 = scmp.eq.s32.totalorder %s17, 0
    %p79 = por %p77, %p78
    %p80 = scmp.ne.s32.totalorder %s72, %s74
    %p81 = scmp.eq.s32.totalorder %s22, 1
    %p82 = por %p80, %p81
    %p83 = scmp.ne.s32.totalorder %s74, %s75
    %p84 = scmp.eq.s32.totalorder %s22, 0
    %p85 = por %p83, %p84
    %p86 = scmp.ne.s32.totalorder %s74, %s75
    %p87 = scmp.eq.s32.totalorder %s23, 1
    %p88 = por %p86, %p87
    %p90 = scmp.ne.s32.totalorder %s75, %s89
    %p91 = scmp.eq.s32.totalorder %s23, 0
    %p92 = por %p90, %p91
    %s94 = sadd.s32 %s93, 1
    %p97 = scmp.eq.s32.totalorder %s17, 1
    %p98 = scmp.ne.s32.totalorder %s93, %s95
    %p99 = scmp.eq.s32.totalorder %s17, 0
    %p100 = por %p98, %p99
    %p101 = scmp.ne.s32.totalorder %s93, %s95
    %p102 = scmp.eq.s32.totalorder %s22, 1
    %p103 = por %p101, %p102
    %p104 = scmp.ne.s32.totalorder %s95, %s96
    %p105 = scmp.eq.s32.totalorder %s22, 0
    %p106 = por %p104, %p105
    %p107 = scmp.ne.s32.totalorder %s95, %s96
    %p108 = scmp.eq.s32.totalorder %s23, 1
    %p109 = por %p107, %p108
    %p111 = scmp.ne.s32.totalorder %s96, %s110
    %p112 = scmp.eq.s32.totalorder %s23, 0
    %p113 = por %p111, %p112
    %s115 = sadd.s32 %s114, 1
    %p118 = scmp.eq.s32.totalorder %s17, 1
    %p119 = scmp.ne.s32.totalorder %s114, %s116
    %p120 = scmp.eq.s32.totalorder %s17, 0
    %p121 = por %p119, %p120
    %p122 = scmp.ne.s32.totalorder %s114, %s116
    %p123 = scmp.eq.s32.totalorder %s22, 1
    %p124 = por %p122, %p123
    %p125 = scmp.ne.s32.totalorder %s116, %s117
    %p126 = scmp.eq.s32.totalorder %s22, 0
    %p127 = por %p125, %p126
    %p128 = scmp.ne.s32.totalorder %s116, %s117
    %p129 = scmp.eq.s32.totalorder %s23, 1
    %p130 = por %p128, %p129
    %p132 = scmp.ne.s32.totalorder %s117, %s131
    %p133 = scmp.eq.s32.totalorder %s23, 0
    %p134 = por %p132, %p133
    %s136 = sadd.s32 %s135, 1
    %p139 = scmp.eq.s32.totalorder %s17, 1
    %p140 = scmp.ne.s32.totalorder %s135, %s137
    %p141 = scmp.eq.s32.totalorder %s17, 0
    %p142 = por %p140, %p141
    %p143 = scmp.ne.s32.totalorder %s135, %s137
    %p144 = scmp.eq.s32.totalorder %s22, 1
    %p145 = por %p143, %p144
    %p146 = scmp.ne.s32.totalorder %s137, %s138
    %p147 = scmp.eq.s32.totalorder %s22, 0
    %p148 = por %p146, %p147
    %p149 = scmp.ne.s32.totalorder %s137, %s138
    %p150 = scmp.eq.s32.totalorder %s23, 1
    %p151 = por %p149, %p150
    %p153 = scmp.ne.s32.totalorder %s138, %s152
    %p154 = scmp.eq.s32.totalorder %s23, 0
    %p155 = por %p153, %p154
    %s157 = sadd.s32 %s156, 1
    %p160 = scmp.eq.s32.totalorder %s17, 1
    %p161 = scmp.ne.s32.totalorder %s156, %s158
    %p162 = scmp.eq.s32.totalorder %s17, 0
    %p163 = por %p161, %p162
    %p164 = scmp.ne.s32.totalorder %s156, %s158
    %p165 = scmp.eq.s32.totalorder %s22, 1
    %p166 = por %p164, %p165
    %p167 = scmp.ne.s32.totalorder %s158, %s159
    %p168 = scmp.eq.s32.totalorder %s22, 0
    %p169 = por %p167, %p168
    %p170 = scmp.ne.s32.totalorder %s158, %s159
    %p171 = scmp.eq.s32.totalorder %s23, 1
    %p172 = por %p170, %p171
    %p174 = scmp.ne.s32.totalorder %s159, %s173
    %p175 = scmp.eq.s32.totalorder %s23, 0
    %p176 = por %p174, %p175
    %s178 = sadd.s32 %s177, 1
    %p181 = scmp.eq.s32.totalorder %s17, 1
    %p182 = scmp.ne.s32.totalorder %s177, %s179
    %p183 = scmp.eq.s32.totalorder %s17, 0
    %p184 = por %p182, %p183
    %p185 = scmp.ne.s32.totalorder %s177, %s179
    %p186 = scmp.eq.s32.totalorder %s22, 1
    %p187 = por %p185, %p186
    %p188 = scmp.ne.s32.totalorder %s179, %s180
    %p189 = scmp.eq.s32.totalorder %s22, 0
    %p190 = por %p188, %p189
    %p191 = scmp.ne.s32.totalorder %s179, %s180
    %p192 = scmp.eq.s32.totalorder %s23, 1
    %p193 = por %p191, %p192
    %p195 = scmp.ne.s32.totalorder %s180, %s194
    %p196 = scmp.eq.s32.totalorder %s23, 0
    %p197 = por %p195, %p196
    %s199 = sadd.s32 %s198, 1
    %p202 = scmp.eq.s32.totalorder %s17, 1
    %p203 = scmp.ne.s32.totalorder %s198, %s200
    %p204 = scmp.eq.s32.totalorder %s17, 0
    %p205 = por %p203, %p204
    %p206 = scmp.ne.s32.totalorder %s198, %s200
    %p207 = scmp.eq.s32.totalorder %s22, 1
    %p208 = por %p206, %p207
    %p209 = scmp.ne.s32.totalorder %s200, %s201
    %p210 = scmp.eq.s32.totalorder %s22, 0
    %p211 = por %p209, %p210
    %p212 = scmp.ne.s32.totalorder %s200, %s201
    %p213 = scmp.eq.s32.totalorder %s23, 1
    %p214 = por %p212, %p213
    %p216 = scmp.ne.s32.totalorder %s201, %s215
    %p217 = scmp.eq.s32.totalorder %s23, 0
    %p218 = por %p216, %p217
    %s220 = sadd.s32 %s219, 1
    %p223 = scmp.eq.s32.totalorder %s17, 1
    %p224 = scmp.ne.s32.totalorder %s219, %s221
    %p225 = scmp.eq.s32.totalorder %s17, 0
    %p226 = por %p224, %p225
    %p227 = scmp.ne.s32.totalorder %s219, %s221
    %p228 = scmp.eq.s32.totalorder %s22, 1
    %p229 = por %p227, %p228
    %p230 = scmp.ne.s32.totalorder %s221, %s222
    %p231 = scmp.eq.s32.totalorder %s22, 0
    %p232 = por %p230, %p231
    %p233 = scmp.ne.s32.totalorder %s221, %s222
    %p234 = scmp.eq.s32.totalorder %s23, 1
    %p235 = por %p233, %p234
    %p237 = scmp.ne.s32.totalorder %s222, %s236
    %p238 = scmp.eq.s32.totalorder %s23, 0
    %p239 = por %p237, %p238
    %s240 = ssub.s32 %s17, %s24
    %p241 = scmp.eq.s32.totalorder %s240, 0
    %s243 = sadd.s32 %s242, 1
    %s244 = scalar_select %p241, %s242, %s243
    %p247 = pneg %p241
    %p248 = scmp.eq.s32.totalorder %s17, 1
    %p249 = por %p247, %p248
    %p250 = scmp.ne.s32.totalorder %s242, %s245
    %p251 = scmp.eq.s32.totalorder %s17, 0
    %p252 = por %p250, %p251
    %p253 = scmp.ne.s32.totalorder %s242, %s245
    %p254 = scmp.eq.s32.totalorder %s22, 1
    %p255 = por %p253, %p254
    %p256 = scmp.ne.s32.totalorder %s245, %s246
    %p257 = scmp.eq.s32.totalorder %s22, 0
    %p258 = por %p256, %p257
    %p259 = scmp.ne.s32.totalorder %s245, %s246
    %p260 = scmp.eq.s32.totalorder %s23, 1
    %p261 = por %p259, %p260
    %p263 = scmp.ne.s32.totalorder %s246, %s262
    %p264 = scmp.eq.s32.totalorder %s23, 0
    %p265 = por %p263, %p264
    %p266 = scmp.le.s32.totalorder 1, %s17
    %p267 = scmp.lt.s32.totalorder %s17, 3
    %p268 = pnand %p266, %p267
    %p269 = pneg %p268
    // Predicated region
    $region9: #{recurrent_criss_cross_attention.4} parent=5 // pred_check
      _
    $region10: #{recurrent_criss_cross_attention.4} parent=5 // pred_check_branch
      %271 = sbr.rel (%p268) target = $region12
    $region11: #{recurrent_criss_cross_attention.4} parent=5 // pred_region
      %s272 = ssub.s32 %s17, 1
      // Predicated region
      $region13: #{recurrent_criss_cross_attention.4} parent=11 // pred_check
        %p273 = pneg %p64
      $region14: #{recurrent_criss_cross_attention.4} parent=11 // pred_check_branch
        %275 = sbr.rel (%p273) target = $region16
      $region15: #{recurrent_criss_cross_attention.4} parent=11 // pred_region
        _
      $region16: #{recurrent_criss_cross_attention.4} parent=11 // pred_fallthru
        _
      // Predicated region
      $region17: #{recurrent_criss_cross_attention.4} parent=11 // pred_check
        %p276 = pneg %p85
      $region18: #{recurrent_criss_cross_attention.4} parent=11 // pred_check_branch
        %278 = sbr.rel (%p276) target = $region20
      $region19: #{recurrent_criss_cross_attention.4} parent=11 // pred_region
        _
      $region20: #{recurrent_criss_cross_attention.4} parent=11 // pred_fallthru
        _
      // Predicated region
      $region21: #{recurrent_criss_cross_attention.4} parent=11 // pred_check
        %p279 = pneg %p106
      $region22: #{recurrent_criss_cross_attention.4} parent=11 // pred_check_branch
        %281 = sbr.rel (%p279) target = $region24
      $region23: #{recurrent_criss_cross_attention.4} parent=11 // pred_region
        _
      $region24: #{recurrent_criss_cross_attention.4} parent=11 // pred_fallthru
        _
      // Predicated region
      $region25: #{recurrent_criss_cross_attention.4} parent=11 // pred_check
        %p282 = pneg %p127
      $region26: #{recurrent_criss_cross_attention.4} parent=11 // pred_check_branch
        %284 = sbr.rel (%p282) target = $region28
      $region27: #{recurrent_criss_cross_attention.4} parent=11 // pred_region
        _
      $region28: #{recurrent_criss_cross_attention.4} parent=11 // pred_fallthru
        _
      // Predicated region
      $region29: #{recurrent_criss_cross_attention.4} parent=11 // pred_check
        %p285 = pneg %p148
      $region30: #{recurrent_criss_cross_attention.4} parent=11 // pred_check_branch
        %287 = sbr.rel (%p285) target = $region32
      $region31: #{recurrent_criss_cross_attention.4} parent=11 // pred_region
        _
      $region32: #{recurrent_criss_cross_attention.4} parent=11 // pred_fallthru
        _
      // Predicated region
      $region33: #{recurrent_criss_cross_attention.4} parent=11 // pred_check
        %p288 = pneg %p169
      $region34: #{recurrent_criss_cross_attention.4} parent=11 // pred_check_branch
        %290 = sbr.rel (%p288) target = $region36
      $region35: #{recurrent_criss_cross_attention.4} parent=11 // pred_region
        _
      $region36: #{recurrent_criss_cross_attention.4} parent=11 // pred_fallthru
        _
      // Predicated region
      $region37: #{recurrent_criss_cross_attention.4} parent=11 // pred_check
        %p291 = pneg %p190
      $region38: #{recurrent_criss_cross_attention.4} parent=11 // pred_check_branch
        %293 = sbr.rel (%p291) target = $region40
      $region39: #{recurrent_criss_cross_attention.4} parent=11 // pred_region
        _
      $region40: #{recurrent_criss_cross_attention.4} parent=11 // pred_fallthru
        _
      // Predicated region
      $region41: #{recurrent_criss_cross_attention.4} parent=11 // pred_check
        %p294 = pneg %p211
      $region42: #{recurrent_criss_cross_attention.4} parent=11 // pred_check_branch
        %296 = sbr.rel (%p294) target = $region44
      $region43: #{recurrent_criss_cross_attention.4} parent=11 // pred_region
        _
      $region44: #{recurrent_criss_cross_attention.4} parent=11 // pred_fallthru
        _
      // Predicated region
      $region45: #{recurrent_criss_cross_attention.4} parent=11 // pred_check
        %p297 = pneg %p232
      $region46: #{recurrent_criss_cross_attention.4} parent=11 // pred_check_branch
        %299 = sbr.rel (%p297) target = $region48
      $region47: #{recurrent_criss_cross_attention.4} parent=11 // pred_region
        _
      $region48: #{recurrent_criss_cross_attention.4} parent=11 // pred_fallthru
        _
    $region12: #{recurrent_criss_cross_attention.4} parent=5 // pred_fallthru
      _
    %p300 = scmp.lt.s32.totalorder %s17, 2
    // Predicated region
    $region49: #{recurrent_criss_cross_attention.4} parent=5 // pred_check
      %p301 = pneg %p300
    $region50: #{recurrent_criss_cross_attention.4} parent=5 // pred_check_branch
      %303 = sbr.rel (%p301) target = $region52
    $region51: #{recurrent_criss_cross_attention.4} parent=5 // pred_region
      // Predicated region
      $region53: #{recurrent_criss_cross_attention.4} parent=51 // pred_check
        %p304 = pneg %p37
      $region54: #{recurrent_criss_cross_attention.4} parent=51 // pred_check_branch
        %306 = sbr.rel (%p304) target = $region56
      $region55: #{recurrent_criss_cross_attention.4} parent=51 // pred_region
        %p307 = scmp.lt.s32.totalorder %s17, 1
        %s308 = scalar_select %p307, %s17, 1
        %s309 = smul.addr %s308, 32
        %s310 = smul.addr %s309, 8
        %s311 = scalar_lea.vmem %s0, %s310
      $region56: #{recurrent_criss_cross_attention.4} parent=51 // pred_fallthru
        _
    $region52: #{recurrent_criss_cross_attention.4} parent=5 // pred_fallthru
      _
    %p312 = scmp.le.s32.totalorder 1, %s17
    %p313 = scmp.lt.s32.totalorder %s17, 3
    %p314 = pnand %p312, %p313
    %p315 = pneg %p314
    // Predicated region
    $region57: #{recurrent_criss_cross_attention.4} parent=5 // pred_check
      _
    $region58: #{recurrent_criss_cross_attention.4} parent=5 // pred_check_branch
      %317 = sbr.rel (%p314) target = $region60
    $region59: #{recurrent_criss_cross_attention.4} parent=5 // pred_region
      %s318 = ssub.s32 %s17, 1
      %p319 = scmp.lt.s32.totalorder %s22, 1
      %s320 = scalar_select %p319, %s22, 1
      %s321 = smul.addr %s320, 32
      %s322 = smul.addr %s321, 8
      %s323 = scalar_lea.vmem %s0, %s322
      %p324 = pneg %p43
      %p325 = pneg %p40
      %p326 = pneg %p64
      %p327 = pneg %p61
      %p328 = pneg %p85
      %p329 = pneg %p82
      %p330 = pneg %p106
      %p331 = pneg %p103
      %p332 = pneg %p127
      %p333 = pneg %p124
      %p334 = pneg %p148
      %p335 = pneg %p145
      %p336 = pneg %p169
      %p337 = pneg %p166
      %p338 = pneg %p190
      %p339 = pneg %p187
      %p340 = pneg %p211
      %p341 = pneg %p208
      %p342 = pneg %p232
      %p343 = pneg %p229
      %p344 = pneg %p258
      %p345 = pneg %p255
      %p346 = scmp.lt.s32.totalorder %s22, 1
      %s347 = scalar_select %p346, %s22, 1
      %s348 = smul.addr %s347, 32
      %s349 = smul.addr %s348, 8
      %s350 = scalar_lea.vmem %s10, %s349
      %p351 = scmp.lt.s32.totalorder %s22, 1
      %s352 = scalar_select %p351, %s22, 1
      %s353 = smul.addr %s352, 32
      %s354 = smul.addr %s353, 8
      %s355 = scalar_lea.vmem %s0, %s354
      %p356 = scmp.lt.s32.totalorder %s22, 1
      %s357 = scalar_select %p356, %s22, 1
      %s358 = smul.addr %s357, 32
      %s359 = smul.addr %s358, 8
      %s360 = scalar_lea.vmem %s10, %s359
      %v361 = vld [vmem:[%s355] sm:$0xff]
      %v362 = vld [vmem:[%s355 + $0x8] sm:$0xff]
      %v363 = vld [vmem:[%s355 + $0x10] sm:$0xff]
      %v364 = vld [vmem:[%s355 + $0x18] sm:$0xff]
      %v365 = vld [vmem:[%s355 + $0x20] sm:$0xff]
      %v366 = vld [vmem:[%s355 + $0x28] sm:$0xff]
      %v367 = vld [vmem:[%s355 + $0x30] sm:$0xff]
      %v368 = vld [vmem:[%s355 + $0x38] sm:$0xff]
      %v369 = vld [vmem:[%s355 + $0x40] sm:$0xff]
      %v370 = vld [vmem:[%s355 + $0x48] sm:$0xff]
      %v371 = vld [vmem:[%s355 + $0x50] sm:$0xff]
      %v372 = vld [vmem:[%s355 + $0x58] sm:$0xff]
      %v373 = vld [vmem:[%s355 + $0x60] sm:$0xff]
      %v374 = vld [vmem:[%s355 + $0x68] sm:$0xff]
      %v375 = vld [vmem:[%s355 + $0x70] sm:$0xff]
      %v376 = vld [vmem:[%s355 + $0x78] sm:$0xff]
      %v377 = vld [vmem:[%s355 + $0x80] sm:$0xff]
      %v378 = vld [vmem:[%s355 + $0x88] sm:$0xff]
      %v379 = vld [vmem:[%s355 + $0x90] sm:$0xff]
      %v380 = vld [vmem:[%s355 + $0x98] sm:$0xff]
      %v381 = vld [vmem:[%s355 + $0xa0] sm:$0xff]
      %v382 = vld [vmem:[%s355 + $0xa8] sm:$0xff]
      %v383 = vld [vmem:[%s355 + $0xb0] sm:$0xff]
      %v384 = vld [vmem:[%s355 + $0xb8] sm:$0xff]
      %v385 = vld [vmem:[%s355 + $0xc0] sm:$0xff]
      %v386 = vld [vmem:[%s355 + $0xc8] sm:$0xff]
      %v387 = vld [vmem:[%s355 + $0xd0] sm:$0xff]
      %v388 = vld [vmem:[%s355 + $0xd8] sm:$0xff]
      %v389 = vld [vmem:[%s355 + $0xe0] sm:$0xff]
      %v390 = vld [vmem:[%s355 + $0xe8] sm:$0xff]
      %v391 = vld [vmem:[%s355 + $0xf0] sm:$0xff]
      %v392 = vld [vmem:[%s355 + $0xf8] sm:$0xff]
      %s393 = sld [smem:[#allocation2]]
      %v394 = vld [vmem:[%s1] sm:$0xff]
      %v395 = vld [vmem:[%s1 + $0x8] sm:$0xff]
      %v396 = vld [vmem:[%s1 + $0x10] sm:$0xff]
      %v397 = vld [vmem:[%s1 + $0x18] sm:$0xff]
      %v398 = vld [vmem:[%s1 + $0x20] sm:$0xff]
      %v399 = vld [vmem:[%s1 + $0x28] sm:$0xff]
      %v400 = vld [vmem:[%s1 + $0x30] sm:$0xff]
      %v401 = vld [vmem:[%s1 + $0x38] sm:$0xff]
      %v402 = vld [vmem:[%s1 + $0x40] sm:$0xff]
      %v403 = vld [vmem:[%s1 + $0x48] sm:$0xff]
      %v404 = vld [vmem:[%s1 + $0x50] sm:$0xff]
      %v405 = vld [vmem:[%s1 + $0x58] sm:$0xff]
      %v406 = vld [vmem:[%s1 + $0x60] sm:$0xff]
      %v407 = vld [vmem:[%s1 + $0x68] sm:$0xff]
      %v408 = vld [vmem:[%s1 + $0x70] sm:$0xff]
      %v409 = vld [vmem:[%s1 + $0x78] sm:$0xff]
      %v410 = vld [vmem:[%s2] sm:$0x1]
      %v411 = vld [vmem:[%s3] sm:$0xff]
      %v412 = vld [vmem:[%s3 + $0x8] sm:$0xff]
      %v413 = vld [vmem:[%s3 + $0x10] sm:$0xff]
      %v414 = vld [vmem:[%s3 + $0x18] sm:$0xff]
      %v415 = vld [vmem:[%s3 + $0x20] sm:$0xff]
      %v416 = vld [vmem:[%s3 + $0x28] sm:$0xff]
      %v417 = vld [vmem:[%s3 + $0x30] sm:$0xff]
      %v418 = vld [vmem:[%s3 + $0x38] sm:$0xff]
      %v419 = vld [vmem:[%s3 + $0x40] sm:$0xff]
      %v420 = vld [vmem:[%s3 + $0x48] sm:$0xff]
      %v421 = vld [vmem:[%s3 + $0x50] sm:$0xff]
      %v422 = vld [vmem:[%s3 + $0x58] sm:$0xff]
      %v423 = vld [vmem:[%s3 + $0x60] sm:$0xff]
      %v424 = vld [vmem:[%s3 + $0x68] sm:$0xff]
      %v425 = vld [vmem:[%s3 + $0x70] sm:$0xff]
      %v426 = vld [vmem:[%s3 + $0x78] sm:$0xff]
      %v427 = vld [vmem:[%s4] sm:$0x1]
      %v428 = vld [vmem:[%s5] sm:$0xff]
      %v429 = vld [vmem:[%s5 + $0x8] sm:$0xff]
      %v430 = vld [vmem:[%s5 + $0x10] sm:$0xff]
      %v431 = vld [vmem:[%s5 + $0x18] sm:$0xff]
      %v432 = vld [vmem:[%s5 + $0x20] sm:$0xff]
      %v433 = vld [vmem:[%s5 + $0x28] sm:$0xff]
      %v434 = vld [vmem:[%s5 + $0x30] sm:$0xff]
      %v435 = vld [vmem:[%s5 + $0x38] sm:$0xff]
      %v436 = vld [vmem:[%s5 + $0x40] sm:$0xff]
      %v437 = vld [vmem:[%s5 + $0x48] sm:$0xff]
      %v438 = vld [vmem:[%s5 + $0x50] sm:$0xff]
      %v439 = vld [vmem:[%s5 + $0x58] sm:$0xff]
      %v440 = vld [vmem:[%s5 + $0x60] sm:$0xff]
      %v441 = vld [vmem:[%s5 + $0x68] sm:$0xff]
      %v442 = vld [vmem:[%s5 + $0x70] sm:$0xff]
      %v443 = vld [vmem:[%s5 + $0x78] sm:$0xff]
      %v444 = vld [vmem:[%s6] sm:$0x1]
      %v445 = vld [vmem:[%s7] sm:$0xff]
      %v446 = vld [vmem:[%s7 + $0x8] sm:$0xff]
      %v447 = vld [vmem:[%s7 + $0x10] sm:$0xff]
      %v448 = vld [vmem:[%s7 + $0x18] sm:$0xff]
      %v449 = vld [vmem:[%s7 + $0x20] sm:$0xff]
      %v450 = vld [vmem:[%s7 + $0x28] sm:$0xff]
      %v451 = vld [vmem:[%s7 + $0x30] sm:$0xff]
      %v452 = vld [vmem:[%s7 + $0x38] sm:$0xff]
      %v453 = vld [vmem:[%s7 + $0x40] sm:$0xff]
      %v454 = vld [vmem:[%s7 + $0x48] sm:$0xff]
      %v455 = vld [vmem:[%s7 + $0x50] sm:$0xff]
      %v456 = vld [vmem:[%s7 + $0x58] sm:$0xff]
      %v457 = vld [vmem:[%s7 + $0x60] sm:$0xff]
      %v458 = vld [vmem:[%s7 + $0x68] sm:$0xff]
      %v459 = vld [vmem:[%s7 + $0x70] sm:$0xff]
      %v460 = vld [vmem:[%s7 + $0x78] sm:$0xff]
      %v461 = vld [vmem:[%s7 + $0x80] sm:$0xff]
      %v462 = vld [vmem:[%s7 + $0x88] sm:$0xff]
      %v463 = vld [vmem:[%s7 + $0x90] sm:$0xff]
      %v464 = vld [vmem:[%s7 + $0x98] sm:$0xff]
      %v465 = vld [vmem:[%s7 + $0xa0] sm:$0xff]
      %v466 = vld [vmem:[%s7 + $0xa8] sm:$0xff]
      %v467 = vld [vmem:[%s7 + $0xb0] sm:$0xff]
      %v468 = vld [vmem:[%s7 + $0xb8] sm:$0xff]
      %v469 = vld [vmem:[%s7 + $0xc0] sm:$0xff]
      %v470 = vld [vmem:[%s7 + $0xc8] sm:$0xff]
      %v471 = vld [vmem:[%s7 + $0xd0] sm:$0xff]
      %v472 = vld [vmem:[%s7 + $0xd8] sm:$0xff]
      %v473 = vld [vmem:[%s7 + $0xe0] sm:$0xff]
      %v474 = vld [vmem:[%s7 + $0xe8] sm:$0xff]
      %v475 = vld [vmem:[%s7 + $0xf0] sm:$0xff]
      %v476 = vld [vmem:[%s7 + $0xf8] sm:$0xff]
      %v477 = vld [vmem:[%s7 + $0x100] sm:$0xff]
      %v478 = vld [vmem:[%s7 + $0x108] sm:$0xff]
      %v479 = vld [vmem:[%s7 + $0x110] sm:$0xff]
      %v480 = vld [vmem:[%s7 + $0x118] sm:$0xff]
      %v481 = vld [vmem:[%s7 + $0x120] sm:$0xff]
      %v482 = vld [vmem:[%s7 + $0x128] sm:$0xff]
      %v483 = vld [vmem:[%s7 + $0x130] sm:$0xff]
      %v484 = vld [vmem:[%s7 + $0x138] sm:$0xff]
      %v485 = vld [vmem:[%s7 + $0x140] sm:$0xff]
      %v486 = vld [vmem:[%s7 + $0x148] sm:$0xff]
      %v487 = vld [vmem:[%s7 + $0x150] sm:$0xff]
      %v488 = vld [vmem:[%s7 + $0x158] sm:$0xff]
      %v489 = vld [vmem:[%s7 + $0x160] sm:$0xff]
      %v490 = vld [vmem:[%s7 + $0x168] sm:$0xff]
      %v491 = vld [vmem:[%s7 + $0x170] sm:$0xff]
      %v492 = vld [vmem:[%s7 + $0x178] sm:$0xff]
      %v493 = vld [vmem:[%s7 + $0x180] sm:$0xff]
      %v494 = vld [vmem:[%s7 + $0x188] sm:$0xff]
      %v495 = vld [vmem:[%s7 + $0x190] sm:$0xff]
      %v496 = vld [vmem:[%s7 + $0x198] sm:$0xff]
      %v497 = vld [vmem:[%s7 + $0x1a0] sm:$0xff]
      %v498 = vld [vmem:[%s7 + $0x1a8] sm:$0xff]
      %v499 = vld [vmem:[%s7 + $0x1b0] sm:$0xff]
      %v500 = vld [vmem:[%s7 + $0x1b8] sm:$0xff]
      %v501 = vld [vmem:[%s7 + $0x1c0] sm:$0xff]
      %v502 = vld [vmem:[%s7 + $0x1c8] sm:$0xff]
      %v503 = vld [vmem:[%s7 + $0x1d0] sm:$0xff]
      %v504 = vld [vmem:[%s7 + $0x1d8] sm:$0xff]
      %v505 = vld [vmem:[%s7 + $0x1e0] sm:$0xff]
      %v506 = vld [vmem:[%s7 + $0x1e8] sm:$0xff]
      %v507 = vld [vmem:[%s7 + $0x1f0] sm:$0xff]
      %v508 = vld [vmem:[%s7 + $0x1f8] sm:$0xff]
      %v509 = vld [vmem:[%s8] sm:$0xff]
      %v510 = vld [vmem:[%s8 + $0x8] sm:$0xff]
      %v511 = vld [vmem:[%s8 + $0x10] sm:$0xff]
      %v512 = vld [vmem:[%s8 + $0x18] sm:$0xff]
      %v513 = vld [vmem:[%s8 + $0x20] sm:$0xff]
      %v514 = vld [vmem:[%s8 + $0x28] sm:$0xff]
      %v515 = vld [vmem:[%s8 + $0x30] sm:$0xff]
      %v516 = vld [vmem:[%s8 + $0x38] sm:$0xff]
      %v517 = vld [vmem:[%s8 + $0x40] sm:$0xff]
      %v518 = vld [vmem:[%s8 + $0x48] sm:$0xff]
      %v519 = vld [vmem:[%s8 + $0x50] sm:$0xff]
      %v520 = vld [vmem:[%s8 + $0x58] sm:$0xff]
      %v521 = vld [vmem:[%s8 + $0x60] sm:$0xff]
      %v522 = vld [vmem:[%s8 + $0x68] sm:$0xff]
      %v523 = vld [vmem:[%s8 + $0x70] sm:$0xff]
      %v524 = vld [vmem:[%s8 + $0x78] sm:$0xff]
      %v525 = vld [vmem:[%s8 + $0x80] sm:$0xff]
      %v526 = vld [vmem:[%s8 + $0x88] sm:$0xff]
      %v527 = vld [vmem:[%s8 + $0x90] sm:$0xff]
      %v528 = vld [vmem:[%s8 + $0x98] sm:$0xff]
      %v529 = vld [vmem:[%s8 + $0xa0] sm:$0xff]
      %v530 = vld [vmem:[%s8 + $0xa8] sm:$0xff]
      %v531 = vld [vmem:[%s8 + $0xb0] sm:$0xff]
      %v532 = vld [vmem:[%s8 + $0xb8] sm:$0xff]
      %v533 = vld [vmem:[%s8 + $0xc0] sm:$0xff]
      %v534 = vld [vmem:[%s8 + $0xc8] sm:$0xff]
      %v535 = vld [vmem:[%s8 + $0xd0] sm:$0xff]
      %v536 = vld [vmem:[%s8 + $0xd8] sm:$0xff]
      %v537 = vld [vmem:[%s8 + $0xe0] sm:$0xff]
      %v538 = vld [vmem:[%s8 + $0xe8] sm:$0xff]
      %v539 = vld [vmem:[%s8 + $0xf0] sm:$0xff]
      %v540 = vld [vmem:[%s8 + $0xf8] sm:$0xff]
      %v541 = vld [vmem:[%s8 + $0x100] sm:$0xff]
      %v542 = vld [vmem:[%s8 + $0x108] sm:$0xff]
      %v543 = vld [vmem:[%s8 + $0x110] sm:$0xff]
      %v544 = vld [vmem:[%s8 + $0x118] sm:$0xff]
      %v545 = vld [vmem:[%s8 + $0x120] sm:$0xff]
      %v546 = vld [vmem:[%s8 + $0x128] sm:$0xff]
      %v547 = vld [vmem:[%s8 + $0x130] sm:$0xff]
      %v548 = vld [vmem:[%s8 + $0x138] sm:$0xff]
      %v549 = vld [vmem:[%s8 + $0x140] sm:$0xff]
      %v550 = vld [vmem:[%s8 + $0x148] sm:$0xff]
      %v551 = vld [vmem:[%s8 + $0x150] sm:$0xff]
      %v552 = vld [vmem:[%s8 + $0x158] sm:$0xff]
      %v553 = vld [vmem:[%s8 + $0x160] sm:$0xff]
      %v554 = vld [vmem:[%s8 + $0x168] sm:$0xff]
      %v555 = vld [vmem:[%s8 + $0x170] sm:$0xff]
      %v556 = vld [vmem:[%s8 + $0x178] sm:$0xff]
      %v557 = vld [vmem:[%s8 + $0x180] sm:$0xff]
      %v558 = vld [vmem:[%s8 + $0x188] sm:$0xff]
      %v559 = vld [vmem:[%s8 + $0x190] sm:$0xff]
      %v560 = vld [vmem:[%s8 + $0x198] sm:$0xff]
      %v561 = vld [vmem:[%s8 + $0x1a0] sm:$0xff]
      %v562 = vld [vmem:[%s8 + $0x1a8] sm:$0xff]
      %v563 = vld [vmem:[%s8 + $0x1b0] sm:$0xff]
      %v564 = vld [vmem:[%s8 + $0x1b8] sm:$0xff]
      %v565 = vld [vmem:[%s8 + $0x1c0] sm:$0xff]
      %v566 = vld [vmem:[%s8 + $0x1c8] sm:$0xff]
      %v567 = vld [vmem:[%s8 + $0x1d0] sm:$0xff]
      %v568 = vld [vmem:[%s8 + $0x1d8] sm:$0xff]
      %v569 = vld [vmem:[%s8 + $0x1e0] sm:$0xff]
      %v570 = vld [vmem:[%s8 + $0x1e8] sm:$0xff]
      %v571 = vld [vmem:[%s8 + $0x1f0] sm:$0xff]
      %v572 = vld [vmem:[%s8 + $0x1f8] sm:$0xff]
      %v574 = vperm.slane %v410, 0
      %576 = vmatpush.msra.mxu0 %v409
      %577 = vmatpush.msra.mxu0 %v408
      %578 = vmatpush.msra.mxu0 %v407
      %579 = vmatpush.msra.mxu0 %v406
      %580 = vmatpush.msra.mxu0 %v405
      %581 = vmatpush.msra.mxu0 %v404
      %582 = vmatpush.msra.mxu0 %v403
      %583 = vmatpush.msra.mxu0 %v402
      %584 = vmatpush.msra.mxu0 %v401
      %585 = vmatpush.msra.mxu0 %v400
      %586 = vmatpush.msra.mxu0 %v399
      %587 = vmatpush.msra.mxu0 %v398
      %588 = vmatpush.msra.mxu0 %v397
      %589 = vmatpush.msra.mxu0 %v396
      %590 = vmatpush.msra.mxu0 %v395
      %591 = vmatpush.msra.mxu0 %v394
      %592 = vmatmul.f32.gmra.mxu0 %v361
      %v593 = vpop.f32.mrf.mxu0
      %v594 = vadd.f32 %v574, %v593
      %595 = vmatmul.f32.gmra.mxu0 %v362
      %v596 = vpop.f32.mrf.mxu0
      %v597 = vadd.f32 %v574, %v596
      %598 = vmatmul.f32.gmra.mxu0 %v363
      %v599 = vpop.f32.mrf.mxu0
      %v600 = vadd.f32 %v574, %v599
      %601 = vmatmul.f32.gmra.mxu0 %v364
      %v602 = vpop.f32.mrf.mxu0
      %v603 = vadd.f32 %v574, %v602
      %604 = vmatmul.f32.gmra.mxu0 %v365
      %v605 = vpop.f32.mrf.mxu0
      %v606 = vadd.f32 %v574, %v605
      %607 = vmatmul.f32.gmra.mxu0 %v366
      %v608 = vpop.f32.mrf.mxu0
      %v609 = vadd.f32 %v574, %v608
      %610 = vmatmul.f32.gmra.mxu0 %v367
      %v611 = vpop.f32.mrf.mxu0
      %v612 = vadd.f32 %v574, %v611
      %613 = vmatmul.f32.gmra.mxu0 %v368
      %v614 = vpop.f32.mrf.mxu0
      %v615 = vadd.f32 %v574, %v614
      %616 = vmatmul.f32.gmra.mxu0 %v369
      %v617 = vpop.f32.mrf.mxu0
      %v618 = vadd.f32 %v574, %v617
      %619 = vmatmul.f32.gmra.mxu0 %v370
      %v620 = vpop.f32.mrf.mxu0
      %v621 = vadd.f32 %v574, %v620
      %622 = vmatmul.f32.gmra.mxu0 %v371
      %v623 = vpop.f32.mrf.mxu0
      %v624 = vadd.f32 %v574, %v623
      %625 = vmatmul.f32.gmra.mxu0 %v372
      %v626 = vpop.f32.mrf.mxu0
      %v627 = vadd.f32 %v574, %v626
      %628 = vmatmul.f32.gmra.mxu0 %v373
      %v629 = vpop.f32.mrf.mxu0
      %v630 = vadd.f32 %v574, %v629
      %631 = vmatmul.f32.gmra.mxu0 %v374
      %v632 = vpop.f32.mrf.mxu0
      %v633 = vadd.f32 %v574, %v632
      %634 = vmatmul.f32.gmra.mxu0 %v375
      %v635 = vpop.f32.mrf.mxu0
      %v636 = vadd.f32 %v574, %v635
      %637 = vmatmul.f32.gmra.mxu0 %v376
      %v638 = vpop.f32.mrf.mxu0
      %v639 = vadd.f32 %v574, %v638
      %640 = vmatmul.f32.gmra.mxu0 %v377
      %v641 = vpop.f32.mrf.mxu0
      %v642 = vadd.f32 %v574, %v641
      %643 = vmatmul.f32.gmra.mxu0 %v378
      %v644 = vpop.f32.mrf.mxu0
      %v645 = vadd.f32 %v574, %v644
      %646 = vmatmul.f32.gmra.mxu0 %v379
      %v647 = vpop.f32.mrf.mxu0
      %v648 = vadd.f32 %v574, %v647
      %649 = vmatmul.f32.gmra.mxu0 %v380
      %v650 = vpop.f32.mrf.mxu0
      %v651 = vadd.f32 %v574, %v650
      %652 = vmatmul.f32.gmra.mxu0 %v381
      %v653 = vpop.f32.mrf.mxu0
      %v654 = vadd.f32 %v574, %v653
      %655 = vmatmul.f32.gmra.mxu0 %v382
      %v656 = vpop.f32.mrf.mxu0
      %v657 = vadd.f32 %v574, %v656
      %658 = vmatmul.f32.gmra.mxu0 %v383
      %v659 = vpop.f32.mrf.mxu0
      %v660 = vadd.f32 %v574, %v659
      %661 = vmatmul.f32.gmra.mxu0 %v384
      %v662 = vpop.f32.mrf.mxu0
      %v663 = vadd.f32 %v574, %v662
      %664 = vmatmul.f32.gmra.mxu0 %v385
      %v665 = vpop.f32.mrf.mxu0
      %v666 = vadd.f32 %v574, %v665
      %667 = vmatmul.f32.gmra.mxu0 %v386
      %v668 = vpop.f32.mrf.mxu0
      %v669 = vadd.f32 %v574, %v668
      %670 = vmatmul.f32.gmra.mxu0 %v387
      %v671 = vpop.f32.mrf.mxu0
      %v672 = vadd.f32 %v574, %v671
      %673 = vmatmul.f32.gmra.mxu0 %v388
      %v674 = vpop.f32.mrf.mxu0
      %v675 = vadd.f32 %v574, %v674
      %676 = vmatmul.f32.gmra.mxu0 %v389
      %v677 = vpop.f32.mrf.mxu0
      %v678 = vadd.f32 %v574, %v677
      %679 = vmatmul.f32.gmra.mxu0 %v390
      %v680 = vpop.f32.mrf.mxu0
      %v681 = vadd.f32 %v574, %v680
      %682 = vmatmul.f32.gmra.mxu0 %v391
      %v683 = vpop.f32.mrf.mxu0
      %v684 = vadd.f32 %v574, %v683
      %685 = vmatmul.f32.gmra.mxu0 %v392
      %v686 = vpop.f32.mrf.mxu0
      %v687 = vadd.f32 %v574, %v686
      %688 = vdwg.mxu0
      %v690 = vperm.slane %v427, 0
      %692 = vmatpush.msra.mxu0 %v426
      %693 = vmatpush.msra.mxu0 %v425
      %694 = vmatpush.msra.mxu0 %v424
      %695 = vmatpush.msra.mxu0 %v423
      %696 = vmatpush.msra.mxu0 %v422
      %697 = vmatpush.msra.mxu0 %v421
      %698 = vmatpush.msra.mxu0 %v420
      %699 = vmatpush.msra.mxu0 %v419
      %700 = vmatpush.msra.mxu0 %v418
      %701 = vmatpush.msra.mxu0 %v417
      %702 = vmatpush.msra.mxu0 %v416
      %703 = vmatpush.msra.mxu0 %v415
      %704 = vmatpush.msra.mxu0 %v414
      %705 = vmatpush.msra.mxu0 %v413
      %706 = vmatpush.msra.mxu0 %v412
      %707 = vmatpush.msra.mxu0 %v411
      %708 = vmatmul.f32.gmra.mxu0 %v361
      %v709 = vpop.f32.mrf.mxu0
      %v710 = vadd.f32 %v690, %v709
      %711 = vmatmul.f32.gmra.mxu0 %v362
      %v712 = vpop.f32.mrf.mxu0
      %v713 = vadd.f32 %v690, %v712
      %714 = vmatmul.f32.gmra.mxu0 %v363
      %v715 = vpop.f32.mrf.mxu0
      %v716 = vadd.f32 %v690, %v715
      %717 = vmatmul.f32.gmra.mxu0 %v364
      %v718 = vpop.f32.mrf.mxu0
      %v719 = vadd.f32 %v690, %v718
      %720 = vmatmul.f32.gmra.mxu0 %v365
      %v721 = vpop.f32.mrf.mxu0
      %v722 = vadd.f32 %v690, %v721
      %723 = vmatmul.f32.gmra.mxu0 %v366
      %v724 = vpop.f32.mrf.mxu0
      %v725 = vadd.f32 %v690, %v724
      %726 = vmatmul.f32.gmra.mxu0 %v367
      %v727 = vpop.f32.mrf.mxu0
      %v728 = vadd.f32 %v690, %v727
      %729 = vmatmul.f32.gmra.mxu0 %v368
      %v730 = vpop.f32.mrf.mxu0
      %v731 = vadd.f32 %v690, %v730
      %732 = vmatmul.f32.gmra.mxu0 %v369
      %v733 = vpop.f32.mrf.mxu0
      %v734 = vadd.f32 %v690, %v733
      %735 = vmatmul.f32.gmra.mxu0 %v370
      %v736 = vpop.f32.mrf.mxu0
      %v737 = vadd.f32 %v690, %v736
      %738 = vmatmul.f32.gmra.mxu0 %v371
      %v739 = vpop.f32.mrf.mxu0
      %v740 = vadd.f32 %v690, %v739
      %741 = vmatmul.f32.gmra.mxu0 %v372
      %v742 = vpop.f32.mrf.mxu0
      %v743 = vadd.f32 %v690, %v742
      %744 = vmatmul.f32.gmra.mxu0 %v373
      %v745 = vpop.f32.mrf.mxu0
      %v746 = vadd.f32 %v690, %v745
      %747 = vmatmul.f32.gmra.mxu0 %v374
      %v748 = vpop.f32.mrf.mxu0
      %v749 = vadd.f32 %v690, %v748
      %750 = vmatmul.f32.gmra.mxu0 %v375
      %v751 = vpop.f32.mrf.mxu0
      %v752 = vadd.f32 %v690, %v751
      %753 = vmatmul.f32.gmra.mxu0 %v376
      %v754 = vpop.f32.mrf.mxu0
      %v755 = vadd.f32 %v690, %v754
      %756 = vmatmul.f32.gmra.mxu0 %v377
      %v757 = vpop.f32.mrf.mxu0
      %v758 = vadd.f32 %v690, %v757
      %759 = vmatmul.f32.gmra.mxu0 %v378
      %v760 = vpop.f32.mrf.mxu0
      %v761 = vadd.f32 %v690, %v760
      %762 = vmatmul.f32.gmra.mxu0 %v379
      %v763 = vpop.f32.mrf.mxu0
      %v764 = vadd.f32 %v690, %v763
      %765 = vmatmul.f32.gmra.mxu0 %v380
      %v766 = vpop.f32.mrf.mxu0
      %v767 = vadd.f32 %v690, %v766
      %768 = vmatmul.f32.gmra.mxu0 %v381
      %v769 = vpop.f32.mrf.mxu0
      %v770 = vadd.f32 %v690, %v769
      %771 = vmatmul.f32.gmra.mxu0 %v382
      %v772 = vpop.f32.mrf.mxu0
      %v773 = vadd.f32 %v690, %v772
      %774 = vmatmul.f32.gmra.mxu0 %v383
      %v775 = vpop.f32.mrf.mxu0
      %v776 = vadd.f32 %v690, %v775
      %777 = vmatmul.f32.gmra.mxu0 %v384
      %v778 = vpop.f32.mrf.mxu0
      %v779 = vadd.f32 %v690, %v778
      %780 = vmatmul.f32.gmra.mxu0 %v385
      %v781 = vpop.f32.mrf.mxu0
      %v782 = vadd.f32 %v690, %v781
      %783 = vmatmul.f32.gmra.mxu0 %v386
      %v784 = vpop.f32.mrf.mxu0
      %v785 = vadd.f32 %v690, %v784
      %786 = vmatmul.f32.gmra.mxu0 %v387
      %v787 = vpop.f32.mrf.mxu0
      %v788 = vadd.f32 %v690, %v787
      %789 = vmatmul.f32.gmra.mxu0 %v388
      %v790 = vpop.f32.mrf.mxu0
      %v791 = vadd.f32 %v690, %v790
      %792 = vmatmul.f32.gmra.mxu0 %v389
      %v793 = vpop.f32.mrf.mxu0
      %v794 = vadd.f32 %v690, %v793
      %795 = vmatmul.f32.gmra.mxu0 %v390
      %v796 = vpop.f32.mrf.mxu0
      %v797 = vadd.f32 %v690, %v796
      %798 = vmatmul.f32.gmra.mxu0 %v391
      %v799 = vpop.f32.mrf.mxu0
      %v800 = vadd.f32 %v690, %v799
      %801 = vmatmul.f32.gmra.mxu0 %v392
      %v802 = vpop.f32.mrf.mxu0
      %v803 = vadd.f32 %v690, %v802
      %804 = vdwg.mxu0
      %v806 = vperm.slane %v444, 0
      %808 = vmatpush.msra.mxu0 %v443
      %809 = vmatpush.msra.mxu0 %v442
      %810 = vmatpush.msra.mxu0 %v441
      %811 = vmatpush.msra.mxu0 %v440
      %812 = vmatpush.msra.mxu0 %v439
      %813 = vmatpush.msra.mxu0 %v438
      %814 = vmatpush.msra.mxu0 %v437
      %815 = vmatpush.msra.mxu0 %v436
      %816 = vmatpush.msra.mxu0 %v435
      %817 = vmatpush.msra.mxu0 %v434
      %818 = vmatpush.msra.mxu0 %v433
      %819 = vmatpush.msra.mxu0 %v432
      %820 = vmatpush.msra.mxu0 %v431
      %821 = vmatpush.msra.mxu0 %v430
      %822 = vmatpush.msra.mxu0 %v429
      %823 = vmatpush.msra.mxu0 %v428
      %824 = vmatmul.f32.gmra.mxu0 %v361
      %v825 = vpop.f32.mrf.mxu0
      %v826 = vadd.f32 %v806, %v825
      %827 = vmatmul.f32.gmra.mxu0 %v362
      %v828 = vpop.f32.mrf.mxu0
      %v829 = vadd.f32 %v806, %v828
      %830 = vmatmul.f32.gmra.mxu0 %v363
      %v831 = vpop.f32.mrf.mxu0
      %v832 = vadd.f32 %v806, %v831
      %833 = vmatmul.f32.gmra.mxu0 %v364
      %v834 = vpop.f32.mrf.mxu0
      %v835 = vadd.f32 %v806, %v834
      %836 = vmatmul.f32.gmra.mxu0 %v365
      %v837 = vpop.f32.mrf.mxu0
      %v838 = vadd.f32 %v806, %v837
      %839 = vmatmul.f32.gmra.mxu0 %v366
      %v840 = vpop.f32.mrf.mxu0
      %v841 = vadd.f32 %v806, %v840
      %842 = vmatmul.f32.gmra.mxu0 %v367
      %v843 = vpop.f32.mrf.mxu0
      %v844 = vadd.f32 %v806, %v843
      %845 = vmatmul.f32.gmra.mxu0 %v368
      %v846 = vpop.f32.mrf.mxu0
      %v847 = vadd.f32 %v806, %v846
      %848 = vmatmul.f32.gmra.mxu0 %v369
      %v849 = vpop.f32.mrf.mxu0
      %v850 = vadd.f32 %v806, %v849
      %851 = vmatmul.f32.gmra.mxu0 %v370
      %v852 = vpop.f32.mrf.mxu0
      %v853 = vadd.f32 %v806, %v852
      %854 = vmatmul.f32.gmra.mxu0 %v371
      %v855 = vpop.f32.mrf.mxu0
      %v856 = vadd.f32 %v806, %v855
      %857 = vmatmul.f32.gmra.mxu0 %v372
      %v858 = vpop.f32.mrf.mxu0
      %v859 = vadd.f32 %v806, %v858
      %860 = vmatmul.f32.gmra.mxu0 %v373
      %v861 = vpop.f32.mrf.mxu0
      %v862 = vadd.f32 %v806, %v861
      %863 = vmatmul.f32.gmra.mxu0 %v374
      %v864 = vpop.f32.mrf.mxu0
      %v865 = vadd.f32 %v806, %v864
      %866 = vmatmul.f32.gmra.mxu0 %v375
      %v867 = vpop.f32.mrf.mxu0
      %v868 = vadd.f32 %v806, %v867
      %869 = vmatmul.f32.gmra.mxu0 %v376
      %v870 = vpop.f32.mrf.mxu0
      %v871 = vadd.f32 %v806, %v870
      %872 = vmatmul.f32.gmra.mxu0 %v377
      %v873 = vpop.f32.mrf.mxu0
      %v874 = vadd.f32 %v806, %v873
      %875 = vmatmul.f32.gmra.mxu0 %v378
      %v876 = vpop.f32.mrf.mxu0
      %v877 = vadd.f32 %v806, %v876
      %878 = vmatmul.f32.gmra.mxu0 %v379
      %v879 = vpop.f32.mrf.mxu0
      %v880 = vadd.f32 %v806, %v879
      %881 = vmatmul.f32.gmra.mxu0 %v380
      %v882 = vpop.f32.mrf.mxu0
      %v883 = vadd.f32 %v806, %v882
      %884 = vmatmul.f32.gmra.mxu0 %v381
      %v885 = vpop.f32.mrf.mxu0
      %v886 = vadd.f32 %v806, %v885
      %887 = vmatmul.f32.gmra.mxu0 %v382
      %v888 = vpop.f32.mrf.mxu0
      %v889 = vadd.f32 %v806, %v888
      %890 = vmatmul.f32.gmra.mxu0 %v383
      %v891 = vpop.f32.mrf.mxu0
      %v892 = vadd.f32 %v806, %v891
      %893 = vmatmul.f32.gmra.mxu0 %v384
      %v894 = vpop.f32.mrf.mxu0
      %v895 = vadd.f32 %v806, %v894
      %896 = vmatmul.f32.gmra.mxu0 %v385
      %v897 = vpop.f32.mrf.mxu0
      %v898 = vadd.f32 %v806, %v897
      %899 = vmatmul.f32.gmra.mxu0 %v386
      %v900 = vpop.f32.mrf.mxu0
      %v901 = vadd.f32 %v806, %v900
      %902 = vmatmul.f32.gmra.mxu0 %v387
      %v903 = vpop.f32.mrf.mxu0
      %v904 = vadd.f32 %v806, %v903
      %905 = vmatmul.f32.gmra.mxu0 %v388
      %v906 = vpop.f32.mrf.mxu0
      %v907 = vadd.f32 %v806, %v906
      %908 = vmatmul.f32.gmra.mxu0 %v389
      %v909 = vpop.f32.mrf.mxu0
      %v910 = vadd.f32 %v806, %v909
      %911 = vmatmul.f32.gmra.mxu0 %v390
      %v912 = vpop.f32.mrf.mxu0
      %v913 = vadd.f32 %v806, %v912
      %914 = vmatmul.f32.gmra.mxu0 %v391
      %v915 = vpop.f32.mrf.mxu0
      %v916 = vadd.f32 %v806, %v915
      %917 = vmatmul.f32.gmra.mxu0 %v392
      %v918 = vpop.f32.mrf.mxu0
      %v919 = vadd.f32 %v806, %v918
      %920 = vdwg.mxu0
      %921 = vmatpush.xpose.msra.mxu0 %v755
      %922 = vmatpush.xpose.msra.mxu0 %v752
      %923 = vmatpush.xpose.msra.mxu0 %v749
      %924 = vmatpush.xpose.msra.mxu0 %v746
      %925 = vmatpush.xpose.msra.mxu0 %v743
      %926 = vmatpush.xpose.msra.mxu0 %v740
      %927 = vmatpush.xpose.msra.mxu0 %v737
      %928 = vmatpush.xpose.msra.mxu0 %v734
      %929 = vmatpush.xpose.msra.mxu0 %v731
      %930 = vmatpush.xpose.msra.mxu0 %v728
      %931 = vmatpush.xpose.msra.mxu0 %v725
      %932 = vmatpush.xpose.msra.mxu0 %v722
      %933 = vmatpush.xpose.msra.mxu0 %v719
      %934 = vmatpush.xpose.msra.mxu0 %v716
      %935 = vmatpush.xpose.msra.mxu0 %v713
      %936 = vmatpush.xpose.msra.mxu0 %v710
      %937 = vmatmul.f32.gmra.mxu0 %v594
      %v938 = vpop.f32.mrf.mxu0
      %v939 = vadd.f32 0.0, %v938
      %940 = vmatmul.f32.gmra.mxu0 %v597
      %v941 = vpop.f32.mrf.mxu0
      %v942 = vadd.f32 0.0, %v941
      %943 = vmatmul.f32.gmra.mxu0 %v600
      %v944 = vpop.f32.mrf.mxu0
      %v945 = vadd.f32 0.0, %v944
      %946 = vmatmul.f32.gmra.mxu0 %v603
      %v947 = vpop.f32.mrf.mxu0
      %v948 = vadd.f32 0.0, %v947
      %949 = vmatmul.f32.gmra.mxu0 %v606
      %v950 = vpop.f32.mrf.mxu0
      %v951 = vadd.f32 0.0, %v950
      %952 = vmatmul.f32.gmra.mxu0 %v609
      %v953 = vpop.f32.mrf.mxu0
      %v954 = vadd.f32 0.0, %v953
      %955 = vmatmul.f32.gmra.mxu0 %v612
      %v956 = vpop.f32.mrf.mxu0
      %v957 = vadd.f32 0.0, %v956
      %958 = vmatmul.f32.gmra.mxu0 %v615
      %v959 = vpop.f32.mrf.mxu0
      %v960 = vadd.f32 0.0, %v959
      %961 = vmatmul.f32.gmra.mxu0 %v618
      %v962 = vpop.f32.mrf.mxu0
      %v963 = vadd.f32 0.0, %v962
      %964 = vmatmul.f32.gmra.mxu0 %v621
      %v965 = vpop.f32.mrf.mxu0
      %v966 = vadd.f32 0.0, %v965
      %967 = vmatmul.f32.gmra.mxu0 %v624
      %v968 = vpop.f32.mrf.mxu0
      %v969 = vadd.f32 0.0, %v968
      %970 = vmatmul.f32.gmra.mxu0 %v627
      %v971 = vpop.f32.mrf.mxu0
      %v972 = vadd.f32 0.0, %v971
      %973 = vmatmul.f32.gmra.mxu0 %v630
      %v974 = vpop.f32.mrf.mxu0
      %v975 = vadd.f32 0.0, %v974
      %976 = vmatmul.f32.gmra.mxu0 %v633
      %v977 = vpop.f32.mrf.mxu0
      %v978 = vadd.f32 0.0, %v977
      %979 = vmatmul.f32.gmra.mxu0 %v636
      %v980 = vpop.f32.mrf.mxu0
      %v981 = vadd.f32 0.0, %v980
      %982 = vmatmul.f32.gmra.mxu0 %v639
      %v983 = vpop.f32.mrf.mxu0
      %v984 = vadd.f32 0.0, %v983
      %985 = vmatmul.f32.gmra.mxu0 %v642
      %v986 = vpop.f32.mrf.mxu0
      %v987 = vadd.f32 0.0, %v986
      %988 = vmatmul.f32.gmra.mxu0 %v645
      %v989 = vpop.f32.mrf.mxu0
      %v990 = vadd.f32 0.0, %v989
      %991 = vmatmul.f32.gmra.mxu0 %v648
      %v992 = vpop.f32.mrf.mxu0
      %v993 = vadd.f32 0.0, %v992
      %994 = vmatmul.f32.gmra.mxu0 %v651
      %v995 = vpop.f32.mrf.mxu0
      %v996 = vadd.f32 0.0, %v995
      %997 = vmatmul.f32.gmra.mxu0 %v654
      %v998 = vpop.f32.mrf.mxu0
      %v999 = vadd.f32 0.0, %v998
      %1000 = vmatmul.f32.gmra.mxu0 %v657
      %v1001 = vpop.f32.mrf.mxu0
      %v1002 = vadd.f32 0.0, %v1001
      %1003 = vmatmul.f32.gmra.mxu0 %v660
      %v1004 = vpop.f32.mrf.mxu0
      %v1005 = vadd.f32 0.0, %v1004
      %1006 = vmatmul.f32.gmra.mxu0 %v663
      %v1007 = vpop.f32.mrf.mxu0
      %v1008 = vadd.f32 0.0, %v1007
      %1009 = vmatmul.f32.gmra.mxu0 %v666
      %v1010 = vpop.f32.mrf.mxu0
      %v1011 = vadd.f32 0.0, %v1010
      %1012 = vmatmul.f32.gmra.mxu0 %v669
      %v1013 = vpop.f32.mrf.mxu0
      %v1014 = vadd.f32 0.0, %v1013
      %1015 = vmatmul.f32.gmra.mxu0 %v672
      %v1016 = vpop.f32.mrf.mxu0
      %v1017 = vadd.f32 0.0, %v1016
      %1018 = vmatmul.f32.gmra.mxu0 %v675
      %v1019 = vpop.f32.mrf.mxu0
      %v1020 = vadd.f32 0.0, %v1019
      %1021 = vmatmul.f32.gmra.mxu0 %v678
      %v1022 = vpop.f32.mrf.mxu0
      %v1023 = vadd.f32 0.0, %v1022
      %1024 = vmatmul.f32.gmra.mxu0 %v681
      %v1025 = vpop.f32.mrf.mxu0
      %v1026 = vadd.f32 0.0, %v1025
      %1027 = vmatmul.f32.gmra.mxu0 %v684
      %v1028 = vpop.f32.mrf.mxu0
      %v1029 = vadd.f32 0.0, %v1028
      %1030 = vmatmul.f32.gmra.mxu0 %v687
      %v1031 = vpop.f32.mrf.mxu0
      %v1032 = vadd.f32 0.0, %v1031
      %1033 = vdwg.mxu0
      %1034 = vmatpush.xpose.msra.mxu0 %v803
      %1035 = vmatpush.xpose.msra.mxu0 %v800
      %1036 = vmatpush.xpose.msra.mxu0 %v797
      %1037 = vmatpush.xpose.msra.mxu0 %v794
      %1038 = vmatpush.xpose.msra.mxu0 %v791
      %1039 = vmatpush.xpose.msra.mxu0 %v788
      %1040 = vmatpush.xpose.msra.mxu0 %v785
      %1041 = vmatpush.xpose.msra.mxu0 %v782
      %1042 = vmatpush.xpose.msra.mxu0 %v779
      %1043 = vmatpush.xpose.msra.mxu0 %v776
      %1044 = vmatpush.xpose.msra.mxu0 %v773
      %1045 = vmatpush.xpose.msra.mxu0 %v770
      %1046 = vmatpush.xpose.msra.mxu0 %v767
      %1047 = vmatpush.xpose.msra.mxu0 %v764
      %1048 = vmatpush.xpose.msra.mxu0 %v761
      %1049 = vmatpush.xpose.msra.mxu0 %v758
      %1050 = vmatmul.f32.gmra.mxu0 %v594
      %v1051 = vpop.f32.mrf.mxu0
      %v1052 = vadd.f32 0.0, %v1051
      %1053 = vmatmul.f32.gmra.mxu0 %v597
      %v1054 = vpop.f32.mrf.mxu0
      %v1055 = vadd.f32 0.0, %v1054
      %1056 = vmatmul.f32.gmra.mxu0 %v600
      %v1057 = vpop.f32.mrf.mxu0
      %v1058 = vadd.f32 0.0, %v1057
      %1059 = vmatmul.f32.gmra.mxu0 %v603
      %v1060 = vpop.f32.mrf.mxu0
      %v1061 = vadd.f32 0.0, %v1060
      %1062 = vmatmul.f32.gmra.mxu0 %v606
      %v1063 = vpop.f32.mrf.mxu0
      %v1064 = vadd.f32 0.0, %v1063
      %1065 = vmatmul.f32.gmra.mxu0 %v609
      %v1066 = vpop.f32.mrf.mxu0
      %v1067 = vadd.f32 0.0, %v1066
      %1068 = vmatmul.f32.gmra.mxu0 %v612
      %v1069 = vpop.f32.mrf.mxu0
      %v1070 = vadd.f32 0.0, %v1069
      %1071 = vmatmul.f32.gmra.mxu0 %v615
      %v1072 = vpop.f32.mrf.mxu0
      %v1073 = vadd.f32 0.0, %v1072
      %1074 = vmatmul.f32.gmra.mxu0 %v618
      %v1075 = vpop.f32.mrf.mxu0
      %v1076 = vadd.f32 0.0, %v1075
      %1077 = vmatmul.f32.gmra.mxu0 %v621
      %v1078 = vpop.f32.mrf.mxu0
      %v1079 = vadd.f32 0.0, %v1078
      %1080 = vmatmul.f32.gmra.mxu0 %v624
      %v1081 = vpop.f32.mrf.mxu0
      %v1082 = vadd.f32 0.0, %v1081
      %1083 = vmatmul.f32.gmra.mxu0 %v627
      %v1084 = vpop.f32.mrf.mxu0
      %v1085 = vadd.f32 0.0, %v1084
      %1086 = vmatmul.f32.gmra.mxu0 %v630
      %v1087 = vpop.f32.mrf.mxu0
      %v1088 = vadd.f32 0.0, %v1087
      %1089 = vmatmul.f32.gmra.mxu0 %v633
      %v1090 = vpop.f32.mrf.mxu0
      %v1091 = vadd.f32 0.0, %v1090
      %1092 = vmatmul.f32.gmra.mxu0 %v636
      %v1093 = vpop.f32.mrf.mxu0
      %v1094 = vadd.f32 0.0, %v1093
      %1095 = vmatmul.f32.gmra.mxu0 %v639
      %v1096 = vpop.f32.mrf.mxu0
      %v1097 = vadd.f32 0.0, %v1096
      %1098 = vmatmul.f32.gmra.mxu0 %v642
      %v1099 = vpop.f32.mrf.mxu0
      %v1100 = vadd.f32 0.0, %v1099
      %1101 = vmatmul.f32.gmra.mxu0 %v645
      %v1102 = vpop.f32.mrf.mxu0
      %v1103 = vadd.f32 0.0, %v1102
      %1104 = vmatmul.f32.gmra.mxu0 %v648
      %v1105 = vpop.f32.mrf.mxu0
      %v1106 = vadd.f32 0.0, %v1105
      %1107 = vmatmul.f32.gmra.mxu0 %v651
      %v1108 = vpop.f32.mrf.mxu0
      %v1109 = vadd.f32 0.0, %v1108
      %1110 = vmatmul.f32.gmra.mxu0 %v654
      %v1111 = vpop.f32.mrf.mxu0
      %v1112 = vadd.f32 0.0, %v1111
      %1113 = vmatmul.f32.gmra.mxu0 %v657
      %v1114 = vpop.f32.mrf.mxu0
      %v1115 = vadd.f32 0.0, %v1114
      %1116 = vmatmul.f32.gmra.mxu0 %v660
      %v1117 = vpop.f32.mrf.mxu0
      %v1118 = vadd.f32 0.0, %v1117
      %1119 = vmatmul.f32.gmra.mxu0 %v663
      %v1120 = vpop.f32.mrf.mxu0
      %v1121 = vadd.f32 0.0, %v1120
      %1122 = vmatmul.f32.gmra.mxu0 %v666
      %v1123 = vpop.f32.mrf.mxu0
      %v1124 = vadd.f32 0.0, %v1123
      %1125 = vmatmul.f32.gmra.mxu0 %v669
      %v1126 = vpop.f32.mrf.mxu0
      %v1127 = vadd.f32 0.0, %v1126
      %1128 = vmatmul.f32.gmra.mxu0 %v672
      %v1129 = vpop.f32.mrf.mxu0
      %v1130 = vadd.f32 0.0, %v1129
      %1131 = vmatmul.f32.gmra.mxu0 %v675
      %v1132 = vpop.f32.mrf.mxu0
      %v1133 = vadd.f32 0.0, %v1132
      %1134 = vmatmul.f32.gmra.mxu0 %v678
      %v1135 = vpop.f32.mrf.mxu0
      %v1136 = vadd.f32 0.0, %v1135
      %1137 = vmatmul.f32.gmra.mxu0 %v681
      %v1138 = vpop.f32.mrf.mxu0
      %v1139 = vadd.f32 0.0, %v1138
      %1140 = vmatmul.f32.gmra.mxu0 %v684
      %v1141 = vpop.f32.mrf.mxu0
      %v1142 = vadd.f32 0.0, %v1141
      %1143 = vmatmul.f32.gmra.mxu0 %v687
      %v1144 = vpop.f32.mrf.mxu0
      %v1145 = vadd.f32 0.0, %v1144
      %1146 = vdwg.mxu0
      %v1147 = vadd.f32 %v939, %v445
      %v1148 = vadd.f32 %v1052, %v446
      %v1149 = vadd.f32 %v942, %v447
      %v1150 = vadd.f32 %v1055, %v448
      %v1151 = vadd.f32 %v945, %v449
      %v1152 = vadd.f32 %v1058, %v450
      %v1153 = vadd.f32 %v948, %v451
      %v1154 = vadd.f32 %v1061, %v452
      %v1155 = vadd.f32 %v951, %v453
      %v1156 = vadd.f32 %v1064, %v454
      %v1157 = vadd.f32 %v954, %v455
      %v1158 = vadd.f32 %v1067, %v456
      %v1159 = vadd.f32 %v957, %v457
      %v1160 = vadd.f32 %v1070, %v458
      %v1161 = vadd.f32 %v960, %v459
      %v1162 = vadd.f32 %v1073, %v460
      %v1163 = vadd.f32 %v963, %v461
      %v1164 = vadd.f32 %v1076, %v462
      %v1165 = vadd.f32 %v966, %v463
      %v1166 = vadd.f32 %v1079, %v464
      %v1167 = vadd.f32 %v969, %v465
      %v1168 = vadd.f32 %v1082, %v466
      %v1169 = vadd.f32 %v972, %v467
      %v1170 = vadd.f32 %v1085, %v468
      %v1171 = vadd.f32 %v975, %v469
      %v1172 = vadd.f32 %v1088, %v470
      %v1173 = vadd.f32 %v978, %v471
      %v1174 = vadd.f32 %v1091, %v472
      %v1175 = vadd.f32 %v981, %v473
      %v1176 = vadd.f32 %v1094, %v474
      %v1177 = vadd.f32 %v984, %v475
      %v1178 = vadd.f32 %v1097, %v476
      %v1179 = vadd.f32 %v987, %v477
      %v1180 = vadd.f32 %v1100, %v478
      %v1181 = vadd.f32 %v990, %v479
      %v1182 = vadd.f32 %v1103, %v480
      %v1183 = vadd.f32 %v993, %v481
      %v1184 = vadd.f32 %v1106, %v482
      %v1185 = vadd.f32 %v996, %v483
      %v1186 = vadd.f32 %v1109, %v484
      %v1187 = vadd.f32 %v999, %v485
      %v1188 = vadd.f32 %v1112, %v486
      %v1189 = vadd.f32 %v1002, %v487
      %v1190 = vadd.f32 %v1115, %v488
      %v1191 = vadd.f32 %v1005, %v489
      %v1192 = vadd.f32 %v1118, %v490
      %v1193 = vadd.f32 %v1008, %v491
      %v1194 = vadd.f32 %v1121, %v492
      %v1195 = vadd.f32 %v1011, %v493
      %v1196 = vadd.f32 %v1124, %v494
      %v1197 = vadd.f32 %v1014, %v495
      %v1198 = vadd.f32 %v1127, %v496
      %v1199 = vadd.f32 %v1017, %v497
      %v1200 = vadd.f32 %v1130, %v498
      %v1201 = vadd.f32 %v1020, %v499
      %v1202 = vadd.f32 %v1133, %v500
      %v1203 = vadd.f32 %v1023, %v501
      %v1204 = vadd.f32 %v1136, %v502
      %v1205 = vadd.f32 %v1026, %v503
      %v1206 = vadd.f32 %v1139, %v504
      %v1207 = vadd.f32 %v1029, %v505
      %v1208 = vadd.f32 %v1142, %v506
      %v1209 = vadd.f32 %v1032, %v507
      %v1210 = vadd.f32 %v1145, %v508
      %v1211 = vmax.f32 %v1147, %v1148
      %1212 = vmax.xlane.f32.xlu0 %v1211
      %v1213 = vpop.xlane.xlu0 %1212
      %v1214 = vmax.f32 %v1149, %v1150
      %1215 = vmax.xlane.f32.xlu0 %v1214
      %v1216 = vpop.xlane.xlu0 %1215
      %v1217 = vmax.f32 %v1151, %v1152
      %1218 = vmax.xlane.f32.xlu0 %v1217
      %v1219 = vpop.xlane.xlu0 %1218
      %v1220 = vmax.f32 %v1153, %v1154
      %1221 = vmax.xlane.f32.xlu0 %v1220
      %v1222 = vpop.xlane.xlu0 %1221
      %v1223 = vmax.f32 %v1155, %v1156
      %1224 = vmax.xlane.f32.xlu0 %v1223
      %v1225 = vpop.xlane.xlu0 %1224
      %v1226 = vmax.f32 %v1157, %v1158
      %1227 = vmax.xlane.f32.xlu0 %v1226
      %v1228 = vpop.xlane.xlu0 %1227
      %v1229 = vmax.f32 %v1159, %v1160
      %1230 = vmax.xlane.f32.xlu0 %v1229
      %v1231 = vpop.xlane.xlu0 %1230
      %v1232 = vmax.f32 %v1161, %v1162
      %1233 = vmax.xlane.f32.xlu0 %v1232
      %v1234 = vpop.xlane.xlu0 %1233
      %v1235 = vmax.f32 %v1163, %v1164
      %1236 = vmax.xlane.f32.xlu0 %v1235
      %v1237 = vpop.xlane.xlu0 %1236
      %v1238 = vmax.f32 %v1165, %v1166
      %1239 = vmax.xlane.f32.xlu0 %v1238
      %v1240 = vpop.xlane.xlu0 %1239
      %v1241 = vmax.f32 %v1167, %v1168
      %1242 = vmax.xlane.f32.xlu0 %v1241
      %v1243 = vpop.xlane.xlu0 %1242
      %v1244 = vmax.f32 %v1169, %v1170
      %1245 = vmax.xlane.f32.xlu0 %v1244
      %v1246 = vpop.xlane.xlu0 %1245
      %v1247 = vmax.f32 %v1171, %v1172
      %1248 = vmax.xlane.f32.xlu0 %v1247
      %v1249 = vpop.xlane.xlu0 %1248
      %v1250 = vmax.f32 %v1173, %v1174
      %1251 = vmax.xlane.f32.xlu0 %v1250
      %v1252 = vpop.xlane.xlu0 %1251
      %v1253 = vmax.f32 %v1175, %v1176
      %1254 = vmax.xlane.f32.xlu0 %v1253
      %v1255 = vpop.xlane.xlu0 %1254
      %v1256 = vmax.f32 %v1177, %v1178
      %1257 = vmax.xlane.f32.xlu0 %v1256
      %v1258 = vpop.xlane.xlu0 %1257
      %v1259 = vmax.f32 %v1179, %v1180
      %1260 = vmax.xlane.f32.xlu0 %v1259
      %v1261 = vpop.xlane.xlu0 %1260
      %v1262 = vmax.f32 %v1181, %v1182
      %1263 = vmax.xlane.f32.xlu0 %v1262
      %v1264 = vpop.xlane.xlu0 %1263
      %v1265 = vmax.f32 %v1183, %v1184
      %1266 = vmax.xlane.f32.xlu0 %v1265
      %v1267 = vpop.xlane.xlu0 %1266
      %v1268 = vmax.f32 %v1185, %v1186
      %1269 = vmax.xlane.f32.xlu0 %v1268
      %v1270 = vpop.xlane.xlu0 %1269
      %v1271 = vmax.f32 %v1187, %v1188
      %1272 = vmax.xlane.f32.xlu0 %v1271
      %v1273 = vpop.xlane.xlu0 %1272
      %v1274 = vmax.f32 %v1189, %v1190
      %1275 = vmax.xlane.f32.xlu0 %v1274
      %v1276 = vpop.xlane.xlu0 %1275
      %v1277 = vmax.f32 %v1191, %v1192
      %1278 = vmax.xlane.f32.xlu0 %v1277
      %v1279 = vpop.xlane.xlu0 %1278
      %v1280 = vmax.f32 %v1193, %v1194
      %1281 = vmax.xlane.f32.xlu0 %v1280
      %v1282 = vpop.xlane.xlu0 %1281
      %v1283 = vmax.f32 %v1195, %v1196
      %1284 = vmax.xlane.f32.xlu0 %v1283
      %v1285 = vpop.xlane.xlu0 %1284
      %v1286 = vmax.f32 %v1197, %v1198
      %1287 = vmax.xlane.f32.xlu0 %v1286
      %v1288 = vpop.xlane.xlu0 %1287
      %v1289 = vmax.f32 %v1199, %v1200
      %1290 = vmax.xlane.f32.xlu0 %v1289
      %v1291 = vpop.xlane.xlu0 %1290
      %v1292 = vmax.f32 %v1201, %v1202
      %1293 = vmax.xlane.f32.xlu0 %v1292
      %v1294 = vpop.xlane.xlu0 %1293
      %v1295 = vmax.f32 %v1203, %v1204
      %1296 = vmax.xlane.f32.xlu0 %v1295
      %v1297 = vpop.xlane.xlu0 %1296
      %v1298 = vmax.f32 %v1205, %v1206
      %1299 = vmax.xlane.f32.xlu0 %v1298
      %v1300 = vpop.xlane.xlu0 %1299
      %v1301 = vmax.f32 %v1207, %v1208
      %1302 = vmax.xlane.f32.xlu0 %v1301
      %v1303 = vpop.xlane.xlu0 %1302
      %v1304 = vmax.f32 %v1209, %v1210
      %1305 = vmax.xlane.f32.xlu0 %v1304
      %v1306 = vpop.xlane.xlu0 %1305
      %v1307 = vsub.f32 %v1147, %v1213
      %v1308 = vsub.f32 %v1148, %v1213
      %v1309 = vsub.f32 %v1149, %v1216
      %v1310 = vsub.f32 %v1150, %v1216
      %v1311 = vsub.f32 %v1151, %v1219
      %v1312 = vsub.f32 %v1152, %v1219
      %v1313 = vsub.f32 %v1153, %v1222
      %v1314 = vsub.f32 %v1154, %v1222
      %v1315 = vsub.f32 %v1155, %v1225
      %v1316 = vsub.f32 %v1156, %v1225
      %v1317 = vsub.f32 %v1157, %v1228
      %v1318 = vsub.f32 %v1158, %v1228
      %v1319 = vsub.f32 %v1159, %v1231
      %v1320 = vsub.f32 %v1160, %v1231
      %v1321 = vsub.f32 %v1161, %v1234
      %v1322 = vsub.f32 %v1162, %v1234
      %v1323 = vsub.f32 %v1163, %v1237
      %v1324 = vsub.f32 %v1164, %v1237
      %v1325 = vsub.f32 %v1165, %v1240
      %v1326 = vsub.f32 %v1166, %v1240
      %v1327 = vsub.f32 %v1167, %v1243
      %v1328 = vsub.f32 %v1168, %v1243
      %v1329 = vsub.f32 %v1169, %v1246
      %v1330 = vsub.f32 %v1170, %v1246
      %v1331 = vsub.f32 %v1171, %v1249
      %v1332 = vsub.f32 %v1172, %v1249
      %v1333 = vsub.f32 %v1173, %v1252
      %v1334 = vsub.f32 %v1174, %v1252
      %v1335 = vsub.f32 %v1175, %v1255
      %v1336 = vsub.f32 %v1176, %v1255
      %v1337 = vsub.f32 %v1177, %v1258
      %v1338 = vsub.f32 %v1178, %v1258
      %v1339 = vsub.f32 %v1179, %v1261
      %v1340 = vsub.f32 %v1180, %v1261
      %v1341 = vsub.f32 %v1181, %v1264
      %v1342 = vsub.f32 %v1182, %v1264
      %v1343 = vsub.f32 %v1183, %v1267
      %v1344 = vsub.f32 %v1184, %v1267
      %v1345 = vsub.f32 %v1185, %v1270
      %v1346 = vsub.f32 %v1186, %v1270
      %v1347 = vsub.f32 %v1187, %v1273
      %v1348 = vsub.f32 %v1188, %v1273
      %v1349 = vsub.f32 %v1189, %v1276
      %v1350 = vsub.f32 %v1190, %v1276
      %v1351 = vsub.f32 %v1191, %v1279
      %v1352 = vsub.f32 %v1192, %v1279
      %v1353 = vsub.f32 %v1193, %v1282
      %v1354 = vsub.f32 %v1194, %v1282
      %v1355 = vsub.f32 %v1195, %v1285
      %v1356 = vsub.f32 %v1196, %v1285
      %v1357 = vsub.f32 %v1197, %v1288
      %v1358 = vsub.f32 %v1198, %v1288
      %v1359 = vsub.f32 %v1199, %v1291
      %v1360 = vsub.f32 %v1200, %v1291
      %v1361 = vsub.f32 %v1201, %v1294
      %v1362 = vsub.f32 %v1202, %v1294
      %v1363 = vsub.f32 %v1203, %v1297
      %v1364 = vsub.f32 %v1204, %v1297
      %v1365 = vsub.f32 %v1205, %v1300
      %v1366 = vsub.f32 %v1206, %v1300
      %v1367 = vsub.f32 %v1207, %v1303
      %v1368 = vsub.f32 %v1208, %v1303
      %v1369 = vsub.f32 %v1209, %v1306
      %v1370 = vsub.f32 %v1210, %v1306
      %v1371 = vmul.f32 %v1307, 1.442695
      %v1372 = vpow.pop %v1371
      %v1373 = vmul.f32 %v1308, 1.442695
      %v1374 = vpow.pop %v1373
      %v1375 = vmul.f32 %v1309, 1.442695
      %v1376 = vpow.pop %v1375
      %v1377 = vmul.f32 %v1310, 1.442695
      %v1378 = vpow.pop %v1377
      %v1379 = vmul.f32 %v1311, 1.442695
      %v1380 = vpow.pop %v1379
      %v1381 = vmul.f32 %v1312, 1.442695
      %v1382 = vpow.pop %v1381
      %v1383 = vmul.f32 %v1313, 1.442695
      %v1384 = vpow.pop %v1383
      %v1385 = vmul.f32 %v1314, 1.442695
      %v1386 = vpow.pop %v1385
      %v1387 = vmul.f32 %v1315, 1.442695
      %v1388 = vpow.pop %v1387
      %v1389 = vmul.f32 %v1316, 1.442695
      %v1390 = vpow.pop %v1389
      %v1391 = vmul.f32 %v1317, 1.442695
      %v1392 = vpow.pop %v1391
      %v1393 = vmul.f32 %v1318, 1.442695
      %v1394 = vpow.pop %v1393
      %v1395 = vmul.f32 %v1319, 1.442695
      %v1396 = vpow.pop %v1395
      %v1397 = vmul.f32 %v1320, 1.442695
      %v1398 = vpow.pop %v1397
      %v1399 = vmul.f32 %v1321, 1.442695
      %v1400 = vpow.pop %v1399
      %v1401 = vmul.f32 %v1322, 1.442695
      %v1402 = vpow.pop %v1401
      %v1403 = vmul.f32 %v1323, 1.442695
      %v1404 = vpow.pop %v1403
      %v1405 = vmul.f32 %v1324, 1.442695
      %v1406 = vpow.pop %v1405
      %v1407 = vmul.f32 %v1325, 1.442695
      %v1408 = vpow.pop %v1407
      %v1409 = vmul.f32 %v1326, 1.442695
      %v1410 = vpow.pop %v1409
      %v1411 = vmul.f32 %v1327, 1.442695
      %v1412 = vpow.pop %v1411
      %v1413 = vmul.f32 %v1328, 1.442695
      %v1414 = vpow.pop %v1413
      %v1415 = vmul.f32 %v1329, 1.442695
      %v1416 = vpow.pop %v1415
      %v1417 = vmul.f32 %v1330, 1.442695
      %v1418 = vpow.pop %v1417
      %v1419 = vmul.f32 %v1331, 1.442695
      %v1420 = vpow.pop %v1419
      %v1421 = vmul.f32 %v1332, 1.442695
      %v1422 = vpow.pop %v1421
      %v1423 = vmul.f32 %v1333, 1.442695
      %v1424 = vpow.pop %v1423
      %v1425 = vmul.f32 %v1334, 1.442695
      %v1426 = vpow.pop %v1425
      %v1427 = vmul.f32 %v1335, 1.442695
      %v1428 = vpow.pop %v1427
      %v1429 = vmul.f32 %v1336, 1.442695
      %v1430 = vpow.pop %v1429
      %v1431 = vmul.f32 %v1337, 1.442695
      %v1432 = vpow.pop %v1431
      %v1433 = vmul.f32 %v1338, 1.442695
      %v1434 = vpow.pop %v1433
      %v1435 = vmul.f32 %v1339, 1.442695
      %v1436 = vpow.pop %v1435
      %v1437 = vmul.f32 %v1340, 1.442695
      %v1438 = vpow.pop %v1437
      %v1439 = vmul.f32 %v1341, 1.442695
      %v1440 = vpow.pop %v1439
      %v1441 = vmul.f32 %v1342, 1.442695
      %v1442 = vpow.pop %v1441
      %v1443 = vmul.f32 %v1343, 1.442695
      %v1444 = vpow.pop %v1443
      %v1445 = vmul.f32 %v1344, 1.442695
      %v1446 = vpow.pop %v1445
      %v1447 = vmul.f32 %v1345, 1.442695
      %v1448 = vpow.pop %v1447
      %v1449 = vmul.f32 %v1346, 1.442695
      %v1450 = vpow.pop %v1449
      %v1451 = vmul.f32 %v1347, 1.442695
      %v1452 = vpow.pop %v1451
      %v1453 = vmul.f32 %v1348, 1.442695
      %v1454 = vpow.pop %v1453
      %v1455 = vmul.f32 %v1349, 1.442695
      %v1456 = vpow.pop %v1455
      %v1457 = vmul.f32 %v1350, 1.442695
      %v1458 = vpow.pop %v1457
      %v1459 = vmul.f32 %v1351, 1.442695
      %v1460 = vpow.pop %v1459
      %v1461 = vmul.f32 %v1352, 1.442695
      %v1462 = vpow.pop %v1461
      %v1463 = vmul.f32 %v1353, 1.442695
      %v1464 = vpow.pop %v1463
      %v1465 = vmul.f32 %v1354, 1.442695
      %v1466 = vpow.pop %v1465
      %v1467 = vmul.f32 %v1355, 1.442695
      %v1468 = vpow.pop %v1467
      %v1469 = vmul.f32 %v1356, 1.442695
      %v1470 = vpow.pop %v1469
      %v1471 = vmul.f32 %v1357, 1.442695
      %v1472 = vpow.pop %v1471
      %v1473 = vmul.f32 %v1358, 1.442695
      %v1474 = vpow.pop %v1473
      %v1475 = vmul.f32 %v1359, 1.442695
      %v1476 = vpow.pop %v1475
      %v1477 = vmul.f32 %v1360, 1.442695
      %v1478 = vpow.pop %v1477
      %v1479 = vmul.f32 %v1361, 1.442695
      %v1480 = vpow.pop %v1479
      %v1481 = vmul.f32 %v1362, 1.442695
      %v1482 = vpow.pop %v1481
      %v1483 = vmul.f32 %v1363, 1.442695
      %v1484 = vpow.pop %v1483
      %v1485 = vmul.f32 %v1364, 1.442695
      %v1486 = vpow.pop %v1485
      %v1487 = vmul.f32 %v1365, 1.442695
      %v1488 = vpow.pop %v1487
      %v1489 = vmul.f32 %v1366, 1.442695
      %v1490 = vpow.pop %v1489
      %v1491 = vmul.f32 %v1367, 1.442695
      %v1492 = vpow.pop %v1491
      %v1493 = vmul.f32 %v1368, 1.442695
      %v1494 = vpow.pop %v1493
      %v1495 = vmul.f32 %v1369, 1.442695
      %v1496 = vpow.pop %v1495
      %v1497 = vmul.f32 %v1370, 1.442695
      %v1498 = vpow.pop %v1497
      %v1499 = vadd.f32 %v1372, %v1374
      %1500 = vadd.xlane.f32.xlu0 %v1499
      %v1501 = vpop.xlane.xlu0 %1500
      %v1502 = vadd.f32 %v1376, %v1378
      %1503 = vadd.xlane.f32.xlu0 %v1502
      %v1504 = vpop.xlane.xlu0 %1503
      %v1505 = vadd.f32 %v1380, %v1382
      %1506 = vadd.xlane.f32.xlu0 %v1505
      %v1507 = vpop.xlane.xlu0 %1506
      %v1508 = vadd.f32 %v1384, %v1386
      %1509 = vadd.xlane.f32.xlu0 %v1508
      %v1510 = vpop.xlane.xlu0 %1509
      %v1511 = vadd.f32 %v1388, %v1390
      %1512 = vadd.xlane.f32.xlu0 %v1511
      %v1513 = vpop.xlane.xlu0 %1512
      %v1514 = vadd.f32 %v1392, %v1394
      %1515 = vadd.xlane.f32.xlu0 %v1514
      %v1516 = vpop.xlane.xlu0 %1515
      %v1517 = vadd.f32 %v1396, %v1398
      %1518 = vadd.xlane.f32.xlu0 %v1517
      %v1519 = vpop.xlane.xlu0 %1518
      %v1520 = vadd.f32 %v1400, %v1402
      %1521 = vadd.xlane.f32.xlu0 %v1520
      %v1522 = vpop.xlane.xlu0 %1521
      %v1523 = vadd.f32 %v1404, %v1406
      %1524 = vadd.xlane.f32.xlu0 %v1523
      %v1525 = vpop.xlane.xlu0 %1524
      %v1526 = vadd.f32 %v1408, %v1410
      %1527 = vadd.xlane.f32.xlu0 %v1526
      %v1528 = vpop.xlane.xlu0 %1527
      %v1529 = vadd.f32 %v1412, %v1414
      %1530 = vadd.xlane.f32.xlu0 %v1529
      %v1531 = vpop.xlane.xlu0 %1530
      %v1532 = vadd.f32 %v1416, %v1418
      %1533 = vadd.xlane.f32.xlu0 %v1532
      %v1534 = vpop.xlane.xlu0 %1533
      %v1535 = vadd.f32 %v1420, %v1422
      %1536 = vadd.xlane.f32.xlu0 %v1535
      %v1537 = vpop.xlane.xlu0 %1536
      %v1538 = vadd.f32 %v1424, %v1426
      %1539 = vadd.xlane.f32.xlu0 %v1538
      %v1540 = vpop.xlane.xlu0 %1539
      %v1541 = vadd.f32 %v1428, %v1430
      %1542 = vadd.xlane.f32.xlu0 %v1541
      %v1543 = vpop.xlane.xlu0 %1542
      %v1544 = vadd.f32 %v1432, %v1434
      %1545 = vadd.xlane.f32.xlu0 %v1544
      %v1546 = vpop.xlane.xlu0 %1545
      %v1547 = vadd.f32 %v1436, %v1438
      %1548 = vadd.xlane.f32.xlu0 %v1547
      %v1549 = vpop.xlane.xlu0 %1548
      %v1550 = vadd.f32 %v1440, %v1442
      %1551 = vadd.xlane.f32.xlu0 %v1550
      %v1552 = vpop.xlane.xlu0 %1551
      %v1553 = vadd.f32 %v1444, %v1446
      %1554 = vadd.xlane.f32.xlu0 %v1553
      %v1555 = vpop.xlane.xlu0 %1554
      %v1556 = vadd.f32 %v1448, %v1450
      %1557 = vadd.xlane.f32.xlu0 %v1556
      %v1558 = vpop.xlane.xlu0 %1557
      %v1559 = vadd.f32 %v1452, %v1454
      %1560 = vadd.xlane.f32.xlu0 %v1559
      %v1561 = vpop.xlane.xlu0 %1560
      %v1562 = vadd.f32 %v1456, %v1458
      %1563 = vadd.xlane.f32.xlu0 %v1562
      %v1564 = vpop.xlane.xlu0 %1563
      %v1565 = vadd.f32 %v1460, %v1462
      %1566 = vadd.xlane.f32.xlu0 %v1565
      %v1567 = vpop.xlane.xlu0 %1566
      %v1568 = vadd.f32 %v1464, %v1466
      %1569 = vadd.xlane.f32.xlu0 %v1568
      %v1570 = vpop.xlane.xlu0 %1569
      %v1571 = vadd.f32 %v1468, %v1470
      %1572 = vadd.xlane.f32.xlu0 %v1571
      %v1573 = vpop.xlane.xlu0 %1572
      %v1574 = vadd.f32 %v1472, %v1474
      %1575 = vadd.xlane.f32.xlu0 %v1574
      %v1576 = vpop.xlane.xlu0 %1575
      %v1577 = vadd.f32 %v1476, %v1478
      %1578 = vadd.xlane.f32.xlu0 %v1577
      %v1579 = vpop.xlane.xlu0 %1578
      %v1580 = vadd.f32 %v1480, %v1482
      %1581 = vadd.xlane.f32.xlu0 %v1580
      %v1582 = vpop.xlane.xlu0 %1581
      %v1583 = vadd.f32 %v1484, %v1486
      %1584 = vadd.xlane.f32.xlu0 %v1583
      %v1585 = vpop.xlane.xlu0 %1584
      %v1586 = vadd.f32 %v1488, %v1490
      %1587 = vadd.xlane.f32.xlu0 %v1586
      %v1588 = vpop.xlane.xlu0 %1587
      %v1589 = vadd.f32 %v1492, %v1494
      %1590 = vadd.xlane.f32.xlu0 %v1589
      %v1591 = vpop.xlane.xlu0 %1590
      %v1592 = vadd.f32 %v1496, %v1498
      %1593 = vadd.xlane.f32.xlu0 %v1592
      %v1594 = vpop.xlane.xlu0 %1593
      %v1595 = vrcp.pop %v1501
      %v1596 = vrcp.pop %v1504
      %v1597 = vrcp.pop %v1507
      %v1598 = vrcp.pop %v1510
      %v1599 = vrcp.pop %v1513
      %v1600 = vrcp.pop %v1516
      %v1601 = vrcp.pop %v1519
      %v1602 = vrcp.pop %v1522
      %v1603 = vrcp.pop %v1525
      %v1604 = vrcp.pop %v1528
      %v1605 = vrcp.pop %v1531
      %v1606 = vrcp.pop %v1534
      %v1607 = vrcp.pop %v1537
      %v1608 = vrcp.pop %v1540
      %v1609 = vrcp.pop %v1543
      %v1610 = vrcp.pop %v1546
      %v1611 = vrcp.pop %v1549
      %v1612 = vrcp.pop %v1552
      %v1613 = vrcp.pop %v1555
      %v1614 = vrcp.pop %v1558
      %v1615 = vrcp.pop %v1561
      %v1616 = vrcp.pop %v1564
      %v1617 = vrcp.pop %v1567
      %v1618 = vrcp.pop %v1570
      %v1619 = vrcp.pop %v1573
      %v1620 = vrcp.pop %v1576
      %v1621 = vrcp.pop %v1579
      %v1622 = vrcp.pop %v1582
      %v1623 = vrcp.pop %v1585
      %v1624 = vrcp.pop %v1588
      %v1625 = vrcp.pop %v1591
      %v1626 = vrcp.pop %v1594
      %v1627 = vmul.f32 %v1372, %v1595
      %v1628 = vmul.f32 %v1374, %v1595
      %v1629 = vmul.f32 %v1376, %v1596
      %v1630 = vmul.f32 %v1378, %v1596
      %v1631 = vmul.f32 %v1380, %v1597
      %v1632 = vmul.f32 %v1382, %v1597
      %v1633 = vmul.f32 %v1384, %v1598
      %v1634 = vmul.f32 %v1386, %v1598
      %v1635 = vmul.f32 %v1388, %v1599
      %v1636 = vmul.f32 %v1390, %v1599
      %v1637 = vmul.f32 %v1392, %v1600
      %v1638 = vmul.f32 %v1394, %v1600
      %v1639 = vmul.f32 %v1396, %v1601
      %v1640 = vmul.f32 %v1398, %v1601
      %v1641 = vmul.f32 %v1400, %v1602
      %v1642 = vmul.f32 %v1402, %v1602
      %v1643 = vmul.f32 %v1404, %v1603
      %v1644 = vmul.f32 %v1406, %v1603
      %v1645 = vmul.f32 %v1408, %v1604
      %v1646 = vmul.f32 %v1410, %v1604
      %v1647 = vmul.f32 %v1412, %v1605
      %v1648 = vmul.f32 %v1414, %v1605
      %v1649 = vmul.f32 %v1416, %v1606
      %v1650 = vmul.f32 %v1418, %v1606
      %v1651 = vmul.f32 %v1420, %v1607
      %v1652 = vmul.f32 %v1422, %v1607
      %v1653 = vmul.f32 %v1424, %v1608
      %v1654 = vmul.f32 %v1426, %v1608
      %v1655 = vmul.f32 %v1428, %v1609
      %v1656 = vmul.f32 %v1430, %v1609
      %v1657 = vmul.f32 %v1432, %v1610
      %v1658 = vmul.f32 %v1434, %v1610
      %v1659 = vmul.f32 %v1436, %v1611
      %v1660 = vmul.f32 %v1438, %v1611
      %v1661 = vmul.f32 %v1440, %v1612
      %v1662 = vmul.f32 %v1442, %v1612
      %v1663 = vmul.f32 %v1444, %v1613
      %v1664 = vmul.f32 %v1446, %v1613
      %v1665 = vmul.f32 %v1448, %v1614
      %v1666 = vmul.f32 %v1450, %v1614
      %v1667 = vmul.f32 %v1452, %v1615
      %v1668 = vmul.f32 %v1454, %v1615
      %v1669 = vmul.f32 %v1456, %v1616
      %v1670 = vmul.f32 %v1458, %v1616
      %v1671 = vmul.f32 %v1460, %v1617
      %v1672 = vmul.f32 %v1462, %v1617
      %v1673 = vmul.f32 %v1464, %v1618
      %v1674 = vmul.f32 %v1466, %v1618
      %v1675 = vmul.f32 %v1468, %v1619
      %v1676 = vmul.f32 %v1470, %v1619
      %v1677 = vmul.f32 %v1472, %v1620
      %v1678 = vmul.f32 %v1474, %v1620
      %v1679 = vmul.f32 %v1476, %v1621
      %v1680 = vmul.f32 %v1478, %v1621
      %v1681 = vmul.f32 %v1480, %v1622
      %v1682 = vmul.f32 %v1482, %v1622
      %v1683 = vmul.f32 %v1484, %v1623
      %v1684 = vmul.f32 %v1486, %v1623
      %v1685 = vmul.f32 %v1488, %v1624
      %v1686 = vmul.f32 %v1490, %v1624
      %v1687 = vmul.f32 %v1492, %v1625
      %v1688 = vmul.f32 %v1494, %v1625
      %v1689 = vmul.f32 %v1496, %v1626
      %v1690 = vmul.f32 %v1498, %v1626
      %v1691 = vadd.f32 %v939, %v509
      %v1692 = vadd.f32 %v1052, %v510
      %v1693 = vadd.f32 %v942, %v511
      %v1694 = vadd.f32 %v1055, %v512
      %v1695 = vadd.f32 %v945, %v513
      %v1696 = vadd.f32 %v1058, %v514
      %v1697 = vadd.f32 %v948, %v515
      %v1698 = vadd.f32 %v1061, %v516
      %v1699 = vadd.f32 %v951, %v517
      %v1700 = vadd.f32 %v1064, %v518
      %v1701 = vadd.f32 %v954, %v519
      %v1702 = vadd.f32 %v1067, %v520
      %v1703 = vadd.f32 %v957, %v521
      %v1704 = vadd.f32 %v1070, %v522
      %v1705 = vadd.f32 %v960, %v523
      %v1706 = vadd.f32 %v1073, %v524
      %v1707 = vadd.f32 %v963, %v525
      %v1708 = vadd.f32 %v1076, %v526
      %v1709 = vadd.f32 %v966, %v527
      %v1710 = vadd.f32 %v1079, %v528
      %v1711 = vadd.f32 %v969, %v529
      %v1712 = vadd.f32 %v1082, %v530
      %v1713 = vadd.f32 %v972, %v531
      %v1714 = vadd.f32 %v1085, %v532
      %v1715 = vadd.f32 %v975, %v533
      %v1716 = vadd.f32 %v1088, %v534
      %v1717 = vadd.f32 %v978, %v535
      %v1718 = vadd.f32 %v1091, %v536
      %v1719 = vadd.f32 %v981, %v537
      %v1720 = vadd.f32 %v1094, %v538
      %v1721 = vadd.f32 %v984, %v539
      %v1722 = vadd.f32 %v1097, %v540
      %v1723 = vadd.f32 %v987, %v541
      %v1724 = vadd.f32 %v1100, %v542
      %v1725 = vadd.f32 %v990, %v543
      %v1726 = vadd.f32 %v1103, %v544
      %v1727 = vadd.f32 %v993, %v545
      %v1728 = vadd.f32 %v1106, %v546
      %v1729 = vadd.f32 %v996, %v547
      %v1730 = vadd.f32 %v1109, %v548
      %v1731 = vadd.f32 %v999, %v549
      %v1732 = vadd.f32 %v1112, %v550
      %v1733 = vadd.f32 %v1002, %v551
      %v1734 = vadd.f32 %v1115, %v552
      %v1735 = vadd.f32 %v1005, %v553
      %v1736 = vadd.f32 %v1118, %v554
      %v1737 = vadd.f32 %v1008, %v555
      %v1738 = vadd.f32 %v1121, %v556
      %v1739 = vadd.f32 %v1011, %v557
      %v1740 = vadd.f32 %v1124, %v558
      %v1741 = vadd.f32 %v1014, %v559
      %v1742 = vadd.f32 %v1127, %v560
      %v1743 = vadd.f32 %v1017, %v561
      %v1744 = vadd.f32 %v1130, %v562
      %v1745 = vadd.f32 %v1020, %v563
      %v1746 = vadd.f32 %v1133, %v564
      %v1747 = vadd.f32 %v1023, %v565
      %v1748 = vadd.f32 %v1136, %v566
      %v1749 = vadd.f32 %v1026, %v567
      %v1750 = vadd.f32 %v1139, %v568
      %v1751 = vadd.f32 %v1029, %v569
      %v1752 = vadd.f32 %v1142, %v570
      %v1753 = vadd.f32 %v1032, %v571
      %v1754 = vadd.f32 %v1145, %v572
      %v1755 = vmax.f32 %v1691, %v1692
      %1756 = vmax.xlane.f32.xlu0 %v1755
      %v1757 = vpop.xlane.xlu0 %1756
      %v1758 = vmax.f32 %v1693, %v1694
      %1759 = vmax.xlane.f32.xlu0 %v1758
      %v1760 = vpop.xlane.xlu0 %1759
      %v1761 = vmax.f32 %v1695, %v1696
      %1762 = vmax.xlane.f32.xlu0 %v1761
      %v1763 = vpop.xlane.xlu0 %1762
      %v1764 = vmax.f32 %v1697, %v1698
      %1765 = vmax.xlane.f32.xlu0 %v1764
      %v1766 = vpop.xlane.xlu0 %1765
      %v1767 = vmax.f32 %v1699, %v1700
      %1768 = vmax.xlane.f32.xlu0 %v1767
      %v1769 = vpop.xlane.xlu0 %1768
      %v1770 = vmax.f32 %v1701, %v1702
      %1771 = vmax.xlane.f32.xlu0 %v1770
      %v1772 = vpop.xlane.xlu0 %1771
      %v1773 = vmax.f32 %v1703, %v1704
      %1774 = vmax.xlane.f32.xlu0 %v1773
      %v1775 = vpop.xlane.xlu0 %1774
      %v1776 = vmax.f32 %v1705, %v1706
      %1777 = vmax.xlane.f32.xlu0 %v1776
      %v1778 = vpop.xlane.xlu0 %1777
      %v1779 = vmax.f32 %v1707, %v1708
      %1780 = vmax.xlane.f32.xlu0 %v1779
      %v1781 = vpop.xlane.xlu0 %1780
      %v1782 = vmax.f32 %v1709, %v1710
      %1783 = vmax.xlane.f32.xlu0 %v1782
      %v1784 = vpop.xlane.xlu0 %1783
      %v1785 = vmax.f32 %v1711, %v1712
      %1786 = vmax.xlane.f32.xlu0 %v1785
      %v1787 = vpop.xlane.xlu0 %1786
      %v1788 = vmax.f32 %v1713, %v1714
      %1789 = vmax.xlane.f32.xlu0 %v1788
      %v1790 = vpop.xlane.xlu0 %1789
      %v1791 = vmax.f32 %v1715, %v1716
      %1792 = vmax.xlane.f32.xlu0 %v1791
      %v1793 = vpop.xlane.xlu0 %1792
      %v1794 = vmax.f32 %v1717, %v1718
      %1795 = vmax.xlane.f32.xlu0 %v1794
      %v1796 = vpop.xlane.xlu0 %1795
      %v1797 = vmax.f32 %v1719, %v1720
      %1798 = vmax.xlane.f32.xlu0 %v1797
      %v1799 = vpop.xlane.xlu0 %1798
      %v1800 = vmax.f32 %v1721, %v1722
      %1801 = vmax.xlane.f32.xlu0 %v1800
      %v1802 = vpop.xlane.xlu0 %1801
      %v1803 = vmax.f32 %v1723, %v1724
      %1804 = vmax.xlane.f32.xlu0 %v1803
      %v1805 = vpop.xlane.xlu0 %1804
      %v1806 = vmax.f32 %v1725, %v1726
      %1807 = vmax.xlane.f32.xlu0 %v1806
      %v1808 = vpop.xlane.xlu0 %1807
      %v1809 = vmax.f32 %v1727, %v1728
      %1810 = vmax.xlane.f32.xlu0 %v1809
      %v1811 = vpop.xlane.xlu0 %1810
      %v1812 = vmax.f32 %v1729, %v1730
      %1813 = vmax.xlane.f32.xlu0 %v1812
      %v1814 = vpop.xlane.xlu0 %1813
      %v1815 = vmax.f32 %v1731, %v1732
      %1816 = vmax.xlane.f32.xlu0 %v1815
      %v1817 = vpop.xlane.xlu0 %1816
      %v1818 = vmax.f32 %v1733, %v1734
      %1819 = vmax.xlane.f32.xlu0 %v1818
      %v1820 = vpop.xlane.xlu0 %1819
      %v1821 = vmax.f32 %v1735, %v1736
      %1822 = vmax.xlane.f32.xlu0 %v1821
      %v1823 = vpop.xlane.xlu0 %1822
      %v1824 = vmax.f32 %v1737, %v1738
      %1825 = vmax.xlane.f32.xlu0 %v1824
      %v1826 = vpop.xlane.xlu0 %1825
      %v1827 = vmax.f32 %v1739, %v1740
      %1828 = vmax.xlane.f32.xlu0 %v1827
      %v1829 = vpop.xlane.xlu0 %1828
      %v1830 = vmax.f32 %v1741, %v1742
      %1831 = vmax.xlane.f32.xlu0 %v1830
      %v1832 = vpop.xlane.xlu0 %1831
      %v1833 = vmax.f32 %v1743, %v1744
      %1834 = vmax.xlane.f32.xlu0 %v1833
      %v1835 = vpop.xlane.xlu0 %1834
      %v1836 = vmax.f32 %v1745, %v1746
      %1837 = vmax.xlane.f32.xlu0 %v1836
      %v1838 = vpop.xlane.xlu0 %1837
      %v1839 = vmax.f32 %v1747, %v1748
      %1840 = vmax.xlane.f32.xlu0 %v1839
      %v1841 = vpop.xlane.xlu0 %1840
      %v1842 = vmax.f32 %v1749, %v1750
      %1843 = vmax.xlane.f32.xlu0 %v1842
      %v1844 = vpop.xlane.xlu0 %1843
      %v1845 = vmax.f32 %v1751, %v1752
      %1846 = vmax.xlane.f32.xlu0 %v1845
      %v1847 = vpop.xlane.xlu0 %1846
      %v1848 = vmax.f32 %v1753, %v1754
      %1849 = vmax.xlane.f32.xlu0 %v1848
      %v1850 = vpop.xlane.xlu0 %1849
      %v1851 = vsub.f32 %v1691, %v1757
      %v1852 = vsub.f32 %v1692, %v1757
      %v1853 = vsub.f32 %v1693, %v1760
      %v1854 = vsub.f32 %v1694, %v1760
      %v1855 = vsub.f32 %v1695, %v1763
      %v1856 = vsub.f32 %v1696, %v1763
      %v1857 = vsub.f32 %v1697, %v1766
      %v1858 = vsub.f32 %v1698, %v1766
      %v1859 = vsub.f32 %v1699, %v1769
      %v1860 = vsub.f32 %v1700, %v1769
      %v1861 = vsub.f32 %v1701, %v1772
      %v1862 = vsub.f32 %v1702, %v1772
      %v1863 = vsub.f32 %v1703, %v1775
      %v1864 = vsub.f32 %v1704, %v1775
      %v1865 = vsub.f32 %v1705, %v1778
      %v1866 = vsub.f32 %v1706, %v1778
      %v1867 = vsub.f32 %v1707, %v1781
      %v1868 = vsub.f32 %v1708, %v1781
      %v1869 = vsub.f32 %v1709, %v1784
      %v1870 = vsub.f32 %v1710, %v1784
      %v1871 = vsub.f32 %v1711, %v1787
      %v1872 = vsub.f32 %v1712, %v1787
      %v1873 = vsub.f32 %v1713, %v1790
      %v1874 = vsub.f32 %v1714, %v1790
      %v1875 = vsub.f32 %v1715, %v1793
      %v1876 = vsub.f32 %v1716, %v1793
      %v1877 = vsub.f32 %v1717, %v1796
      %v1878 = vsub.f32 %v1718, %v1796
      %v1879 = vsub.f32 %v1719, %v1799
      %v1880 = vsub.f32 %v1720, %v1799
      %v1881 = vsub.f32 %v1721, %v1802
      %v1882 = vsub.f32 %v1722, %v1802
      %v1883 = vsub.f32 %v1723, %v1805
      %v1884 = vsub.f32 %v1724, %v1805
      %v1885 = vsub.f32 %v1725, %v1808
      %v1886 = vsub.f32 %v1726, %v1808
      %v1887 = vsub.f32 %v1727, %v1811
      %v1888 = vsub.f32 %v1728, %v1811
      %v1889 = vsub.f32 %v1729, %v1814
      %v1890 = vsub.f32 %v1730, %v1814
      %v1891 = vsub.f32 %v1731, %v1817
      %v1892 = vsub.f32 %v1732, %v1817
      %v1893 = vsub.f32 %v1733, %v1820
      %v1894 = vsub.f32 %v1734, %v1820
      %v1895 = vsub.f32 %v1735, %v1823
      %v1896 = vsub.f32 %v1736, %v1823
      %v1897 = vsub.f32 %v1737, %v1826
      %v1898 = vsub.f32 %v1738, %v1826
      %v1899 = vsub.f32 %v1739, %v1829
      %v1900 = vsub.f32 %v1740, %v1829
      %v1901 = vsub.f32 %v1741, %v1832
      %v1902 = vsub.f32 %v1742, %v1832
      %v1903 = vsub.f32 %v1743, %v1835
      %v1904 = vsub.f32 %v1744, %v1835
      %v1905 = vsub.f32 %v1745, %v1838
      %v1906 = vsub.f32 %v1746, %v1838
      %v1907 = vsub.f32 %v1747, %v1841
      %v1908 = vsub.f32 %v1748, %v1841
      %v1909 = vsub.f32 %v1749, %v1844
      %v1910 = vsub.f32 %v1750, %v1844
      %v1911 = vsub.f32 %v1751, %v1847
      %v1912 = vsub.f32 %v1752, %v1847
      %v1913 = vsub.f32 %v1753, %v1850
      %v1914 = vsub.f32 %v1754, %v1850
      %v1915 = vmul.f32 %v1851, 1.442695
      %v1916 = vpow.pop %v1915
      %v1917 = vmul.f32 %v1852, 1.442695
      %v1918 = vpow.pop %v1917
      %v1919 = vmul.f32 %v1853, 1.442695
      %v1920 = vpow.pop %v1919
      %v1921 = vmul.f32 %v1854, 1.442695
      %v1922 = vpow.pop %v1921
      %v1923 = vmul.f32 %v1855, 1.442695
      %v1924 = vpow.pop %v1923
      %v1925 = vmul.f32 %v1856, 1.442695
      %v1926 = vpow.pop %v1925
      %v1927 = vmul.f32 %v1857, 1.442695
      %v1928 = vpow.pop %v1927
      %v1929 = vmul.f32 %v1858, 1.442695
      %v1930 = vpow.pop %v1929
      %v1931 = vmul.f32 %v1859, 1.442695
      %v1932 = vpow.pop %v1931
      %v1933 = vmul.f32 %v1860, 1.442695
      %v1934 = vpow.pop %v1933
      %v1935 = vmul.f32 %v1861, 1.442695
      %v1936 = vpow.pop %v1935
      %v1937 = vmul.f32 %v1862, 1.442695
      %v1938 = vpow.pop %v1937
      %v1939 = vmul.f32 %v1863, 1.442695
      %v1940 = vpow.pop %v1939
      %v1941 = vmul.f32 %v1864, 1.442695
      %v1942 = vpow.pop %v1941
      %v1943 = vmul.f32 %v1865, 1.442695
      %v1944 = vpow.pop %v1943
      %v1945 = vmul.f32 %v1866, 1.442695
      %v1946 = vpow.pop %v1945
      %v1947 = vmul.f32 %v1867, 1.442695
      %v1948 = vpow.pop %v1947
      %v1949 = vmul.f32 %v1868, 1.442695
      %v1950 = vpow.pop %v1949
      %v1951 = vmul.f32 %v1869, 1.442695
      %v1952 = vpow.pop %v1951
      %v1953 = vmul.f32 %v1870, 1.442695
      %v1954 = vpow.pop %v1953
      %v1955 = vmul.f32 %v1871, 1.442695
      %v1956 = vpow.pop %v1955
      %v1957 = vmul.f32 %v1872, 1.442695
      %v1958 = vpow.pop %v1957
      %v1959 = vmul.f32 %v1873, 1.442695
      %v1960 = vpow.pop %v1959
      %v1961 = vmul.f32 %v1874, 1.442695
      %v1962 = vpow.pop %v1961
      %v1963 = vmul.f32 %v1875, 1.442695
      %v1964 = vpow.pop %v1963
      %v1965 = vmul.f32 %v1876, 1.442695
      %v1966 = vpow.pop %v1965
      %v1967 = vmul.f32 %v1877, 1.442695
      %v1968 = vpow.pop %v1967
      %v1969 = vmul.f32 %v1878, 1.442695
      %v1970 = vpow.pop %v1969
      %v1971 = vmul.f32 %v1879, 1.442695
      %v1972 = vpow.pop %v1971
      %v1973 = vmul.f32 %v1880, 1.442695
      %v1974 = vpow.pop %v1973
      %v1975 = vmul.f32 %v1881, 1.442695
      %v1976 = vpow.pop %v1975
      %v1977 = vmul.f32 %v1882, 1.442695
      %v1978 = vpow.pop %v1977
      %v1979 = vmul.f32 %v1883, 1.442695
      %v1980 = vpow.pop %v1979
      %v1981 = vmul.f32 %v1884, 1.442695
      %v1982 = vpow.pop %v1981
      %v1983 = vmul.f32 %v1885, 1.442695
      %v1984 = vpow.pop %v1983
      %v1985 = vmul.f32 %v1886, 1.442695
      %v1986 = vpow.pop %v1985
      %v1987 = vmul.f32 %v1887, 1.442695
      %v1988 = vpow.pop %v1987
      %v1989 = vmul.f32 %v1888, 1.442695
      %v1990 = vpow.pop %v1989
      %v1991 = vmul.f32 %v1889, 1.442695
      %v1992 = vpow.pop %v1991
      %v1993 = vmul.f32 %v1890, 1.442695
      %v1994 = vpow.pop %v1993
      %v1995 = vmul.f32 %v1891, 1.442695
      %v1996 = vpow.pop %v1995
      %v1997 = vmul.f32 %v1892, 1.442695
      %v1998 = vpow.pop %v1997
      %v1999 = vmul.f32 %v1893, 1.442695
      %v2000 = vpow.pop %v1999
      %v2001 = vmul.f32 %v1894, 1.442695
      %v2002 = vpow.pop %v2001
      %v2003 = vmul.f32 %v1895, 1.442695
      %v2004 = vpow.pop %v2003
      %v2005 = vmul.f32 %v1896, 1.442695
      %v2006 = vpow.pop %v2005
      %v2007 = vmul.f32 %v1897, 1.442695
      %v2008 = vpow.pop %v2007
      %v2009 = vmul.f32 %v1898, 1.442695
      %v2010 = vpow.pop %v2009
      %v2011 = vmul.f32 %v1899, 1.442695
      %v2012 = vpow.pop %v2011
      %v2013 = vmul.f32 %v1900, 1.442695
      %v2014 = vpow.pop %v2013
      %v2015 = vmul.f32 %v1901, 1.442695
      %v2016 = vpow.pop %v2015
      %v2017 = vmul.f32 %v1902, 1.442695
      %v2018 = vpow.pop %v2017
      %v2019 = vmul.f32 %v1903, 1.442695
      %v2020 = vpow.pop %v2019
      %v2021 = vmul.f32 %v1904, 1.442695
      %v2022 = vpow.pop %v2021
      %v2023 = vmul.f32 %v1905, 1.442695
      %v2024 = vpow.pop %v2023
      %v2025 = vmul.f32 %v1906, 1.442695
      %v2026 = vpow.pop %v2025
      %v2027 = vmul.f32 %v1907, 1.442695
      %v2028 = vpow.pop %v2027
      %v2029 = vmul.f32 %v1908, 1.442695
      %v2030 = vpow.pop %v2029
      %v2031 = vmul.f32 %v1909, 1.442695
      %v2032 = vpow.pop %v2031
      %v2033 = vmul.f32 %v1910, 1.442695
      %v2034 = vpow.pop %v2033
      %v2035 = vmul.f32 %v1911, 1.442695
      %v2036 = vpow.pop %v2035
      %v2037 = vmul.f32 %v1912, 1.442695
      %v2038 = vpow.pop %v2037
      %v2039 = vmul.f32 %v1913, 1.442695
      %v2040 = vpow.pop %v2039
      %v2041 = vmul.f32 %v1914, 1.442695
      %v2042 = vpow.pop %v2041
      %v2043 = vadd.f32 %v1916, %v1918
      %2044 = vadd.xlane.f32.xlu0 %v2043
      %v2045 = vpop.xlane.xlu0 %2044
      %v2046 = vadd.f32 %v1920, %v1922
      %2047 = vadd.xlane.f32.xlu0 %v2046
      %v2048 = vpop.xlane.xlu0 %2047
      %v2049 = vadd.f32 %v1924, %v1926
      %2050 = vadd.xlane.f32.xlu0 %v2049
      %v2051 = vpop.xlane.xlu0 %2050
      %v2052 = vadd.f32 %v1928, %v1930
      %2053 = vadd.xlane.f32.xlu0 %v2052
      %v2054 = vpop.xlane.xlu0 %2053
      %v2055 = vadd.f32 %v1932, %v1934
      %2056 = vadd.xlane.f32.xlu0 %v2055
      %v2057 = vpop.xlane.xlu0 %2056
      %v2058 = vadd.f32 %v1936, %v1938
      %2059 = vadd.xlane.f32.xlu0 %v2058
      %v2060 = vpop.xlane.xlu0 %2059
      %v2061 = vadd.f32 %v1940, %v1942
      %2062 = vadd.xlane.f32.xlu0 %v2061
      %v2063 = vpop.xlane.xlu0 %2062
      %v2064 = vadd.f32 %v1944, %v1946
      %2065 = vadd.xlane.f32.xlu0 %v2064
      %v2066 = vpop.xlane.xlu0 %2065
      %v2067 = vadd.f32 %v1948, %v1950
      %2068 = vadd.xlane.f32.xlu0 %v2067
      %v2069 = vpop.xlane.xlu0 %2068
      %v2070 = vadd.f32 %v1952, %v1954
      %2071 = vadd.xlane.f32.xlu0 %v2070
      %v2072 = vpop.xlane.xlu0 %2071
      %v2073 = vadd.f32 %v1956, %v1958
      %2074 = vadd.xlane.f32.xlu0 %v2073
      %v2075 = vpop.xlane.xlu0 %2074
      %v2076 = vadd.f32 %v1960, %v1962
      %2077 = vadd.xlane.f32.xlu0 %v2076
      %v2078 = vpop.xlane.xlu0 %2077
      %v2079 = vadd.f32 %v1964, %v1966
      %2080 = vadd.xlane.f32.xlu0 %v2079
      %v2081 = vpop.xlane.xlu0 %2080
      %v2082 = vadd.f32 %v1968, %v1970
      %2083 = vadd.xlane.f32.xlu0 %v2082
      %v2084 = vpop.xlane.xlu0 %2083
      %v2085 = vadd.f32 %v1972, %v1974
      %2086 = vadd.xlane.f32.xlu0 %v2085
      %v2087 = vpop.xlane.xlu0 %2086
      %v2088 = vadd.f32 %v1976, %v1978
      %2089 = vadd.xlane.f32.xlu0 %v2088
      %v2090 = vpop.xlane.xlu0 %2089
      %v2091 = vadd.f32 %v1980, %v1982
      %2092 = vadd.xlane.f32.xlu0 %v2091
      %v2093 = vpop.xlane.xlu0 %2092
      %v2094 = vadd.f32 %v1984, %v1986
      %2095 = vadd.xlane.f32.xlu0 %v2094
      %v2096 = vpop.xlane.xlu0 %2095
      %v2097 = vadd.f32 %v1988, %v1990
      %2098 = vadd.xlane.f32.xlu0 %v2097
      %v2099 = vpop.xlane.xlu0 %2098
      %v2100 = vadd.f32 %v1992, %v1994
      %2101 = vadd.xlane.f32.xlu0 %v2100
      %v2102 = vpop.xlane.xlu0 %2101
      %v2103 = vadd.f32 %v1996, %v1998
      %2104 = vadd.xlane.f32.xlu0 %v2103
      %v2105 = vpop.xlane.xlu0 %2104
      %v2106 = vadd.f32 %v2000, %v2002
      %2107 = vadd.xlane.f32.xlu0 %v2106
      %v2108 = vpop.xlane.xlu0 %2107
      %v2109 = vadd.f32 %v2004, %v2006
      %2110 = vadd.xlane.f32.xlu0 %v2109
      %v2111 = vpop.xlane.xlu0 %2110
      %v2112 = vadd.f32 %v2008, %v2010
      %2113 = vadd.xlane.f32.xlu0 %v2112
      %v2114 = vpop.xlane.xlu0 %2113
      %v2115 = vadd.f32 %v2012, %v2014
      %2116 = vadd.xlane.f32.xlu0 %v2115
      %v2117 = vpop.xlane.xlu0 %2116
      %v2118 = vadd.f32 %v2016, %v2018
      %2119 = vadd.xlane.f32.xlu0 %v2118
      %v2120 = vpop.xlane.xlu0 %2119
      %v2121 = vadd.f32 %v2020, %v2022
      %2122 = vadd.xlane.f32.xlu0 %v2121
      %v2123 = vpop.xlane.xlu0 %2122
      %v2124 = vadd.f32 %v2024, %v2026
      %2125 = vadd.xlane.f32.xlu0 %v2124
      %v2126 = vpop.xlane.xlu0 %2125
      %v2127 = vadd.f32 %v2028, %v2030
      %2128 = vadd.xlane.f32.xlu0 %v2127
      %v2129 = vpop.xlane.xlu0 %2128
      %v2130 = vadd.f32 %v2032, %v2034
      %2131 = vadd.xlane.f32.xlu0 %v2130
      %v2132 = vpop.xlane.xlu0 %2131
      %v2133 = vadd.f32 %v2036, %v2038
      %2134 = vadd.xlane.f32.xlu0 %v2133
      %v2135 = vpop.xlane.xlu0 %2134
      %v2136 = vadd.f32 %v2040, %v2042
      %2137 = vadd.xlane.f32.xlu0 %v2136
      %v2138 = vpop.xlane.xlu0 %2137
      %v2139 = vrcp.pop %v2045
      %v2140 = vrcp.pop %v2048
      %v2141 = vrcp.pop %v2051
      %v2142 = vrcp.pop %v2054
      %v2143 = vrcp.pop %v2057
      %v2144 = vrcp.pop %v2060
      %v2145 = vrcp.pop %v2063
      %v2146 = vrcp.pop %v2066
      %v2147 = vrcp.pop %v2069
      %v2148 = vrcp.pop %v2072
      %v2149 = vrcp.pop %v2075
      %v2150 = vrcp.pop %v2078
      %v2151 = vrcp.pop %v2081
      %v2152 = vrcp.pop %v2084
      %v2153 = vrcp.pop %v2087
      %v2154 = vrcp.pop %v2090
      %v2155 = vrcp.pop %v2093
      %v2156 = vrcp.pop %v2096
      %v2157 = vrcp.pop %v2099
      %v2158 = vrcp.pop %v2102
      %v2159 = vrcp.pop %v2105
      %v2160 = vrcp.pop %v2108
      %v2161 = vrcp.pop %v2111
      %v2162 = vrcp.pop %v2114
      %v2163 = vrcp.pop %v2117
      %v2164 = vrcp.pop %v2120
      %v2165 = vrcp.pop %v2123
      %v2166 = vrcp.pop %v2126
      %v2167 = vrcp.pop %v2129
      %v2168 = vrcp.pop %v2132
      %v2169 = vrcp.pop %v2135
      %v2170 = vrcp.pop %v2138
      %v2171 = vmul.f32 %v1916, %v2139
      %v2172 = vmul.f32 %v1918, %v2139
      %v2173 = vmul.f32 %v1920, %v2140
      %v2174 = vmul.f32 %v1922, %v2140
      %v2175 = vmul.f32 %v1924, %v2141
      %v2176 = vmul.f32 %v1926, %v2141
      %v2177 = vmul.f32 %v1928, %v2142
      %v2178 = vmul.f32 %v1930, %v2142
      %v2179 = vmul.f32 %v1932, %v2143
      %v2180 = vmul.f32 %v1934, %v2143
      %v2181 = vmul.f32 %v1936, %v2144
      %v2182 = vmul.f32 %v1938, %v2144
      %v2183 = vmul.f32 %v1940, %v2145
      %v2184 = vmul.f32 %v1942, %v2145
      %v2185 = vmul.f32 %v1944, %v2146
      %v2186 = vmul.f32 %v1946, %v2146
      %v2187 = vmul.f32 %v1948, %v2147
      %v2188 = vmul.f32 %v1950, %v2147
      %v2189 = vmul.f32 %v1952, %v2148
      %v2190 = vmul.f32 %v1954, %v2148
      %v2191 = vmul.f32 %v1956, %v2149
      %v2192 = vmul.f32 %v1958, %v2149
      %v2193 = vmul.f32 %v1960, %v2150
      %v2194 = vmul.f32 %v1962, %v2150
      %v2195 = vmul.f32 %v1964, %v2151
      %v2196 = vmul.f32 %v1966, %v2151
      %v2197 = vmul.f32 %v1968, %v2152
      %v2198 = vmul.f32 %v1970, %v2152
      %v2199 = vmul.f32 %v1972, %v2153
      %v2200 = vmul.f32 %v1974, %v2153
      %v2201 = vmul.f32 %v1976, %v2154
      %v2202 = vmul.f32 %v1978, %v2154
      %v2203 = vmul.f32 %v1980, %v2155
      %v2204 = vmul.f32 %v1982, %v2155
      %v2205 = vmul.f32 %v1984, %v2156
      %v2206 = vmul.f32 %v1986, %v2156
      %v2207 = vmul.f32 %v1988, %v2157
      %v2208 = vmul.f32 %v1990, %v2157
      %v2209 = vmul.f32 %v1992, %v2158
      %v2210 = vmul.f32 %v1994, %v2158
      %v2211 = vmul.f32 %v1996, %v2159
      %v2212 = vmul.f32 %v1998, %v2159
      %v2213 = vmul.f32 %v2000, %v2160
      %v2214 = vmul.f32 %v2002, %v2160
      %v2215 = vmul.f32 %v2004, %v2161
      %v2216 = vmul.f32 %v2006, %v2161
      %v2217 = vmul.f32 %v2008, %v2162
      %v2218 = vmul.f32 %v2010, %v2162
      %v2219 = vmul.f32 %v2012, %v2163
      %v2220 = vmul.f32 %v2014, %v2163
      %v2221 = vmul.f32 %v2016, %v2164
      %v2222 = vmul.f32 %v2018, %v2164
      %v2223 = vmul.f32 %v2020, %v2165
      %v2224 = vmul.f32 %v2022, %v2165
      %v2225 = vmul.f32 %v2024, %v2166
      %v2226 = vmul.f32 %v2026, %v2166
      %v2227 = vmul.f32 %v2028, %v2167
      %v2228 = vmul.f32 %v2030, %v2167
      %v2229 = vmul.f32 %v2032, %v2168
      %v2230 = vmul.f32 %v2034, %v2168
      %v2231 = vmul.f32 %v2036, %v2169
      %v2232 = vmul.f32 %v2038, %v2169
      %v2233 = vmul.f32 %v2040, %v2170
      %v2234 = vmul.f32 %v2042, %v2170
      %v2235 = vadd.f32 %v1627, %v2171
      %v2236 = vadd.f32 %v1628, %v2172
      %v2237 = vadd.f32 %v1629, %v2173
      %v2238 = vadd.f32 %v1630, %v2174
      %v2239 = vadd.f32 %v1631, %v2175
      %v2240 = vadd.f32 %v1632, %v2176
      %v2241 = vadd.f32 %v1633, %v2177
      %v2242 = vadd.f32 %v1634, %v2178
      %v2243 = vadd.f32 %v1635, %v2179
      %v2244 = vadd.f32 %v1636, %v2180
      %v2245 = vadd.f32 %v1637, %v2181
      %v2246 = vadd.f32 %v1638, %v2182
      %v2247 = vadd.f32 %v1639, %v2183
      %v2248 = vadd.f32 %v1640, %v2184
      %v2249 = vadd.f32 %v1641, %v2185
      %v2250 = vadd.f32 %v1642, %v2186
      %v2251 = vadd.f32 %v1643, %v2187
      %v2252 = vadd.f32 %v1644, %v2188
      %v2253 = vadd.f32 %v1645, %v2189
      %v2254 = vadd.f32 %v1646, %v2190
      %v2255 = vadd.f32 %v1647, %v2191
      %v2256 = vadd.f32 %v1648, %v2192
      %v2257 = vadd.f32 %v1649, %v2193
      %v2258 = vadd.f32 %v1650, %v2194
      %v2259 = vadd.f32 %v1651, %v2195
      %v2260 = vadd.f32 %v1652, %v2196
      %v2261 = vadd.f32 %v1653, %v2197
      %v2262 = vadd.f32 %v1654, %v2198
      %v2263 = vadd.f32 %v1655, %v2199
      %v2264 = vadd.f32 %v1656, %v2200
      %v2265 = vadd.f32 %v1657, %v2201
      %v2266 = vadd.f32 %v1658, %v2202
      %v2267 = vadd.f32 %v1659, %v2203
      %v2268 = vadd.f32 %v1660, %v2204
      %v2269 = vadd.f32 %v1661, %v2205
      %v2270 = vadd.f32 %v1662, %v2206
      %v2271 = vadd.f32 %v1663, %v2207
      %v2272 = vadd.f32 %v1664, %v2208
      %v2273 = vadd.f32 %v1665, %v2209
      %v2274 = vadd.f32 %v1666, %v2210
      %v2275 = vadd.f32 %v1667, %v2211
      %v2276 = vadd.f32 %v1668, %v2212
      %v2277 = vadd.f32 %v1669, %v2213
      %v2278 = vadd.f32 %v1670, %v2214
      %v2279 = vadd.f32 %v1671, %v2215
      %v2280 = vadd.f32 %v1672, %v2216
      %v2281 = vadd.f32 %v1673, %v2217
      %v2282 = vadd.f32 %v1674, %v2218
      %v2283 = vadd.f32 %v1675, %v2219
      %v2284 = vadd.f32 %v1676, %v2220
      %v2285 = vadd.f32 %v1677, %v2221
      %v2286 = vadd.f32 %v1678, %v2222
      %v2287 = vadd.f32 %v1679, %v2223
      %v2288 = vadd.f32 %v1680, %v2224
      %v2289 = vadd.f32 %v1681, %v2225
      %v2290 = vadd.f32 %v1682, %v2226
      %v2291 = vadd.f32 %v1683, %v2227
      %v2292 = vadd.f32 %v1684, %v2228
      %v2293 = vadd.f32 %v1685, %v2229
      %v2294 = vadd.f32 %v1686, %v2230
      %v2295 = vadd.f32 %v1687, %v2231
      %v2296 = vadd.f32 %v1688, %v2232
      %v2297 = vadd.f32 %v1689, %v2233
      %v2298 = vadd.f32 %v1690, %v2234
      %2299 = vmatpush.msra.mxu0 %v871
      %2300 = vmatpush.msra.mxu0 %v868
      %2301 = vmatpush.msra.mxu0 %v865
      %2302 = vmatpush.msra.mxu0 %v862
      %2303 = vmatpush.msra.mxu0 %v859
      %2304 = vmatpush.msra.mxu0 %v856
      %2305 = vmatpush.msra.mxu0 %v853
      %2306 = vmatpush.msra.mxu0 %v850
      %2307 = vmatpush.msra.mxu0 %v847
      %2308 = vmatpush.msra.mxu0 %v844
      %2309 = vmatpush.msra.mxu0 %v841
      %2310 = vmatpush.msra.mxu0 %v838
      %2311 = vmatpush.msra.mxu0 %v835
      %2312 = vmatpush.msra.mxu0 %v832
      %2313 = vmatpush.msra.mxu0 %v829
      %2314 = vmatpush.msra.mxu0 %v826
      %2315 = vmatmul.f32.gmra.mxu0 %v2235
      %v2316 = vpop.f32.mrf.mxu0
      %v2317 = vadd.f32 0.0, %v2316
      %2318 = vmatmul.f32.gmra.mxu0 %v2237
      %v2319 = vpop.f32.mrf.mxu0
      %v2320 = vadd.f32 0.0, %v2319
      %2321 = vmatmul.f32.gmra.mxu0 %v2239
      %v2322 = vpop.f32.mrf.mxu0
      %v2323 = vadd.f32 0.0, %v2322
      %2324 = vmatmul.f32.gmra.mxu0 %v2241
      %v2325 = vpop.f32.mrf.mxu0
      %v2326 = vadd.f32 0.0, %v2325
      %2327 = vmatmul.f32.gmra.mxu0 %v2243
      %v2328 = vpop.f32.mrf.mxu0
      %v2329 = vadd.f32 0.0, %v2328
      %2330 = vmatmul.f32.gmra.mxu0 %v2245
      %v2331 = vpop.f32.mrf.mxu0
      %v2332 = vadd.f32 0.0, %v2331
      %2333 = vmatmul.f32.gmra.mxu0 %v2247
      %v2334 = vpop.f32.mrf.mxu0
      %v2335 = vadd.f32 0.0, %v2334
      %2336 = vmatmul.f32.gmra.mxu0 %v2249
      %v2337 = vpop.f32.mrf.mxu0
      %v2338 = vadd.f32 0.0, %v2337
      %2339 = vmatmul.f32.gmra.mxu0 %v2251
      %v2340 = vpop.f32.mrf.mxu0
      %v2341 = vadd.f32 0.0, %v2340
      %2342 = vmatmul.f32.gmra.mxu0 %v2253
      %v2343 = vpop.f32.mrf.mxu0
      %v2344 = vadd.f32 0.0, %v2343
      %2345 = vmatmul.f32.gmra.mxu0 %v2255
      %v2346 = vpop.f32.mrf.mxu0
      %v2347 = vadd.f32 0.0, %v2346
      %2348 = vmatmul.f32.gmra.mxu0 %v2257
      %v2349 = vpop.f32.mrf.mxu0
      %v2350 = vadd.f32 0.0, %v2349
      %2351 = vmatmul.f32.gmra.mxu0 %v2259
      %v2352 = vpop.f32.mrf.mxu0
      %v2353 = vadd.f32 0.0, %v2352
      %2354 = vmatmul.f32.gmra.mxu0 %v2261
      %v2355 = vpop.f32.mrf.mxu0
      %v2356 = vadd.f32 0.0, %v2355
      %2357 = vmatmul.f32.gmra.mxu0 %v2263
      %v2358 = vpop.f32.mrf.mxu0
      %v2359 = vadd.f32 0.0, %v2358
      %2360 = vmatmul.f32.gmra.mxu0 %v2265
      %v2361 = vpop.f32.mrf.mxu0
      %v2362 = vadd.f32 0.0, %v2361
      %2363 = vmatmul.f32.gmra.mxu0 %v2267
      %v2364 = vpop.f32.mrf.mxu0
      %v2365 = vadd.f32 0.0, %v2364
      %2366 = vmatmul.f32.gmra.mxu0 %v2269
      %v2367 = vpop.f32.mrf.mxu0
      %v2368 = vadd.f32 0.0, %v2367
      %2369 = vmatmul.f32.gmra.mxu0 %v2271
      %v2370 = vpop.f32.mrf.mxu0
      %v2371 = vadd.f32 0.0, %v2370
      %2372 = vmatmul.f32.gmra.mxu0 %v2273
      %v2373 = vpop.f32.mrf.mxu0
      %v2374 = vadd.f32 0.0, %v2373
      %2375 = vmatmul.f32.gmra.mxu0 %v2275
      %v2376 = vpop.f32.mrf.mxu0
      %v2377 = vadd.f32 0.0, %v2376
      %2378 = vmatmul.f32.gmra.mxu0 %v2277
      %v2379 = vpop.f32.mrf.mxu0
      %v2380 = vadd.f32 0.0, %v2379
      %2381 = vmatmul.f32.gmra.mxu0 %v2279
      %v2382 = vpop.f32.mrf.mxu0
      %v2383 = vadd.f32 0.0, %v2382
      %2384 = vmatmul.f32.gmra.mxu0 %v2281
      %v2385 = vpop.f32.mrf.mxu0
      %v2386 = vadd.f32 0.0, %v2385
      %2387 = vmatmul.f32.gmra.mxu0 %v2283
      %v2388 = vpop.f32.mrf.mxu0
      %v2389 = vadd.f32 0.0, %v2388
      %2390 = vmatmul.f32.gmra.mxu0 %v2285
      %v2391 = vpop.f32.mrf.mxu0
      %v2392 = vadd.f32 0.0, %v2391
      %2393 = vmatmul.f32.gmra.mxu0 %v2287
      %v2394 = vpop.f32.mrf.mxu0
      %v2395 = vadd.f32 0.0, %v2394
      %2396 = vmatmul.f32.gmra.mxu0 %v2289
      %v2397 = vpop.f32.mrf.mxu0
      %v2398 = vadd.f32 0.0, %v2397
      %2399 = vmatmul.f32.gmra.mxu0 %v2291
      %v2400 = vpop.f32.mrf.mxu0
      %v2401 = vadd.f32 0.0, %v2400
      %2402 = vmatmul.f32.gmra.mxu0 %v2293
      %v2403 = vpop.f32.mrf.mxu0
      %v2404 = vadd.f32 0.0, %v2403
      %2405 = vmatmul.f32.gmra.mxu0 %v2295
      %v2406 = vpop.f32.mrf.mxu0
      %v2407 = vadd.f32 0.0, %v2406
      %2408 = vmatmul.f32.gmra.mxu0 %v2297
      %v2409 = vpop.f32.mrf.mxu0
      %v2410 = vadd.f32 0.0, %v2409
      %2411 = vdwg.mxu0
      %2412 = vmatpush.msra.mxu0 %v919
      %2413 = vmatpush.msra.mxu0 %v916
      %2414 = vmatpush.msra.mxu0 %v913
      %2415 = vmatpush.msra.mxu0 %v910
      %2416 = vmatpush.msra.mxu0 %v907
      %2417 = vmatpush.msra.mxu0 %v904
      %2418 = vmatpush.msra.mxu0 %v901
      %2419 = vmatpush.msra.mxu0 %v898
      %2420 = vmatpush.msra.mxu0 %v895
      %2421 = vmatpush.msra.mxu0 %v892
      %2422 = vmatpush.msra.mxu0 %v889
      %2423 = vmatpush.msra.mxu0 %v886
      %2424 = vmatpush.msra.mxu0 %v883
      %2425 = vmatpush.msra.mxu0 %v880
      %2426 = vmatpush.msra.mxu0 %v877
      %2427 = vmatpush.msra.mxu0 %v874
      %2428 = vmatmul.f32.gmra.mxu0 %v2236
      %v2429 = vpop.f32.mrf.mxu0
      %v2430 = vadd.f32 %v2317, %v2429
      %2431 = vmatmul.f32.gmra.mxu0 %v2238
      %v2432 = vpop.f32.mrf.mxu0
      %v2433 = vadd.f32 %v2320, %v2432
      %2434 = vmatmul.f32.gmra.mxu0 %v2240
      %v2435 = vpop.f32.mrf.mxu0
      %v2436 = vadd.f32 %v2323, %v2435
      %2437 = vmatmul.f32.gmra.mxu0 %v2242
      %v2438 = vpop.f32.mrf.mxu0
      %v2439 = vadd.f32 %v2326, %v2438
      %2440 = vmatmul.f32.gmra.mxu0 %v2244
      %v2441 = vpop.f32.mrf.mxu0
      %v2442 = vadd.f32 %v2329, %v2441
      %2443 = vmatmul.f32.gmra.mxu0 %v2246
      %v2444 = vpop.f32.mrf.mxu0
      %v2445 = vadd.f32 %v2332, %v2444
      %2446 = vmatmul.f32.gmra.mxu0 %v2248
      %v2447 = vpop.f32.mrf.mxu0
      %v2448 = vadd.f32 %v2335, %v2447
      %2449 = vmatmul.f32.gmra.mxu0 %v2250
      %v2450 = vpop.f32.mrf.mxu0
      %v2451 = vadd.f32 %v2338, %v2450
      %2452 = vmatmul.f32.gmra.mxu0 %v2252
      %v2453 = vpop.f32.mrf.mxu0
      %v2454 = vadd.f32 %v2341, %v2453
      %2455 = vmatmul.f32.gmra.mxu0 %v2254
      %v2456 = vpop.f32.mrf.mxu0
      %v2457 = vadd.f32 %v2344, %v2456
      %2458 = vmatmul.f32.gmra.mxu0 %v2256
      %v2459 = vpop.f32.mrf.mxu0
      %v2460 = vadd.f32 %v2347, %v2459
      %2461 = vmatmul.f32.gmra.mxu0 %v2258
      %v2462 = vpop.f32.mrf.mxu0
      %v2463 = vadd.f32 %v2350, %v2462
      %2464 = vmatmul.f32.gmra.mxu0 %v2260
      %v2465 = vpop.f32.mrf.mxu0
      %v2466 = vadd.f32 %v2353, %v2465
      %2467 = vmatmul.f32.gmra.mxu0 %v2262
      %v2468 = vpop.f32.mrf.mxu0
      %v2469 = vadd.f32 %v2356, %v2468
      %2470 = vmatmul.f32.gmra.mxu0 %v2264
      %v2471 = vpop.f32.mrf.mxu0
      %v2472 = vadd.f32 %v2359, %v2471
      %2473 = vmatmul.f32.gmra.mxu0 %v2266
      %v2474 = vpop.f32.mrf.mxu0
      %v2475 = vadd.f32 %v2362, %v2474
      %2476 = vmatmul.f32.gmra.mxu0 %v2268
      %v2477 = vpop.f32.mrf.mxu0
      %v2478 = vadd.f32 %v2365, %v2477
      %2479 = vmatmul.f32.gmra.mxu0 %v2270
      %v2480 = vpop.f32.mrf.mxu0
      %v2481 = vadd.f32 %v2368, %v2480
      %2482 = vmatmul.f32.gmra.mxu0 %v2272
      %v2483 = vpop.f32.mrf.mxu0
      %v2484 = vadd.f32 %v2371, %v2483
      %2485 = vmatmul.f32.gmra.mxu0 %v2274
      %v2486 = vpop.f32.mrf.mxu0
      %v2487 = vadd.f32 %v2374, %v2486
      %2488 = vmatmul.f32.gmra.mxu0 %v2276
      %v2489 = vpop.f32.mrf.mxu0
      %v2490 = vadd.f32 %v2377, %v2489
      %2491 = vmatmul.f32.gmra.mxu0 %v2278
      %v2492 = vpop.f32.mrf.mxu0
      %v2493 = vadd.f32 %v2380, %v2492
      %2494 = vmatmul.f32.gmra.mxu0 %v2280
      %v2495 = vpop.f32.mrf.mxu0
      %v2496 = vadd.f32 %v2383, %v2495
      %2497 = vmatmul.f32.gmra.mxu0 %v2282
      %v2498 = vpop.f32.mrf.mxu0
      %v2499 = vadd.f32 %v2386, %v2498
      %2500 = vmatmul.f32.gmra.mxu0 %v2284
      %v2501 = vpop.f32.mrf.mxu0
      %v2502 = vadd.f32 %v2389, %v2501
      %2503 = vmatmul.f32.gmra.mxu0 %v2286
      %v2504 = vpop.f32.mrf.mxu0
      %v2505 = vadd.f32 %v2392, %v2504
      %2506 = vmatmul.f32.gmra.mxu0 %v2288
      %v2507 = vpop.f32.mrf.mxu0
      %v2508 = vadd.f32 %v2395, %v2507
      %2509 = vmatmul.f32.gmra.mxu0 %v2290
      %v2510 = vpop.f32.mrf.mxu0
      %v2511 = vadd.f32 %v2398, %v2510
      %2512 = vmatmul.f32.gmra.mxu0 %v2292
      %v2513 = vpop.f32.mrf.mxu0
      %v2514 = vadd.f32 %v2401, %v2513
      %2515 = vmatmul.f32.gmra.mxu0 %v2294
      %v2516 = vpop.f32.mrf.mxu0
      %v2517 = vadd.f32 %v2404, %v2516
      %2518 = vmatmul.f32.gmra.mxu0 %v2296
      %v2519 = vpop.f32.mrf.mxu0
      %v2520 = vadd.f32 %v2407, %v2519
      %2521 = vmatmul.f32.gmra.mxu0 %v2298
      %v2522 = vpop.f32.mrf.mxu0
      %v2523 = vadd.f32 %v2410, %v2522
      %2524 = vdwg.mxu0
      %v2525 = vstv %s393
      %v2526 = vmul.f32 %v2525, %v2430
      %v2527 = vmul.f32 %v2525, %v2433
      %v2528 = vmul.f32 %v2525, %v2436
      %v2529 = vmul.f32 %v2525, %v2439
      %v2530 = vmul.f32 %v2525, %v2442
      %v2531 = vmul.f32 %v2525, %v2445
      %v2532 = vmul.f32 %v2525, %v2448
      %v2533 = vmul.f32 %v2525, %v2451
      %v2534 = vmul.f32 %v2525, %v2454
      %v2535 = vmul.f32 %v2525, %v2457
      %v2536 = vmul.f32 %v2525, %v2460
      %v2537 = vmul.f32 %v2525, %v2463
      %v2538 = vmul.f32 %v2525, %v2466
      %v2539 = vmul.f32 %v2525, %v2469
      %v2540 = vmul.f32 %v2525, %v2472
      %v2541 = vmul.f32 %v2525, %v2475
      %v2542 = vmul.f32 %v2525, %v2478
      %v2543 = vmul.f32 %v2525, %v2481
      %v2544 = vmul.f32 %v2525, %v2484
      %v2545 = vmul.f32 %v2525, %v2487
      %v2546 = vmul.f32 %v2525, %v2490
      %v2547 = vmul.f32 %v2525, %v2493
      %v2548 = vmul.f32 %v2525, %v2496
      %v2549 = vmul.f32 %v2525, %v2499
      %v2550 = vmul.f32 %v2525, %v2502
      %v2551 = vmul.f32 %v2525, %v2505
      %v2552 = vmul.f32 %v2525, %v2508
      %v2553 = vmul.f32 %v2525, %v2511
      %v2554 = vmul.f32 %v2525, %v2514
      %v2555 = vmul.f32 %v2525, %v2517
      %v2556 = vmul.f32 %v2525, %v2520
      %v2557 = vmul.f32 %v2525, %v2523
      %v2558 = vadd.f32 %v2526, %v361
      %v2559 = vadd.f32 %v2527, %v362
      %v2560 = vadd.f32 %v2528, %v363
      %v2561 = vadd.f32 %v2529, %v364
      %v2562 = vadd.f32 %v2530, %v365
      %v2563 = vadd.f32 %v2531, %v366
      %v2564 = vadd.f32 %v2532, %v367
      %v2565 = vadd.f32 %v2533, %v368
      %v2566 = vadd.f32 %v2534, %v369
      %v2567 = vadd.f32 %v2535, %v370
      %v2568 = vadd.f32 %v2536, %v371
      %v2569 = vadd.f32 %v2537, %v372
      %v2570 = vadd.f32 %v2538, %v373
      %v2571 = vadd.f32 %v2539, %v374
      %v2572 = vadd.f32 %v2540, %v375
      %v2573 = vadd.f32 %v2541, %v376
      %v2574 = vadd.f32 %v2542, %v377
      %v2575 = vadd.f32 %v2543, %v378
      %v2576 = vadd.f32 %v2544, %v379
      %v2577 = vadd.f32 %v2545, %v380
      %v2578 = vadd.f32 %v2546, %v381
      %v2579 = vadd.f32 %v2547, %v382
      %v2580 = vadd.f32 %v2548, %v383
      %v2581 = vadd.f32 %v2549, %v384
      %v2582 = vadd.f32 %v2550, %v385
      %v2583 = vadd.f32 %v2551, %v386
      %v2584 = vadd.f32 %v2552, %v387
      %v2585 = vadd.f32 %v2553, %v388
      %v2586 = vadd.f32 %v2554, %v389
      %v2587 = vadd.f32 %v2555, %v390
      %v2588 = vadd.f32 %v2556, %v391
      %v2589 = vadd.f32 %v2557, %v392
      %2590 = vmatpush.msra.mxu0 %v409
      %2591 = vmatpush.msra.mxu0 %v408
      %2592 = vmatpush.msra.mxu0 %v407
      %2593 = vmatpush.msra.mxu0 %v406
      %2594 = vmatpush.msra.mxu0 %v405
      %2595 = vmatpush.msra.mxu0 %v404
      %2596 = vmatpush.msra.mxu0 %v403
      %2597 = vmatpush.msra.mxu0 %v402
      %2598 = vmatpush.msra.mxu0 %v401
      %2599 = vmatpush.msra.mxu0 %v400
      %2600 = vmatpush.msra.mxu0 %v399
      %2601 = vmatpush.msra.mxu0 %v398
      %2602 = vmatpush.msra.mxu0 %v397
      %2603 = vmatpush.msra.mxu0 %v396
      %2604 = vmatpush.msra.mxu0 %v395
      %2605 = vmatpush.msra.mxu0 %v394
      %2606 = vmatmul.f32.gmra.mxu0 %v2558
      %v2607 = vpop.f32.mrf.mxu0
      %v2608 = vadd.f32 %v574, %v2607
      %2609 = vmatmul.f32.gmra.mxu0 %v2559
      %v2610 = vpop.f32.mrf.mxu0
      %v2611 = vadd.f32 %v574, %v2610
      %2612 = vmatmul.f32.gmra.mxu0 %v2560
      %v2613 = vpop.f32.mrf.mxu0
      %v2614 = vadd.f32 %v574, %v2613
      %2615 = vmatmul.f32.gmra.mxu0 %v2561
      %v2616 = vpop.f32.mrf.mxu0
      %v2617 = vadd.f32 %v574, %v2616
      %2618 = vmatmul.f32.gmra.mxu0 %v2562
      %v2619 = vpop.f32.mrf.mxu0
      %v2620 = vadd.f32 %v574, %v2619
      %2621 = vmatmul.f32.gmra.mxu0 %v2563
      %v2622 = vpop.f32.mrf.mxu0
      %v2623 = vadd.f32 %v574, %v2622
      %2624 = vmatmul.f32.gmra.mxu0 %v2564
      %v2625 = vpop.f32.mrf.mxu0
      %v2626 = vadd.f32 %v574, %v2625
      %2627 = vmatmul.f32.gmra.mxu0 %v2565
      %v2628 = vpop.f32.mrf.mxu0
      %v2629 = vadd.f32 %v574, %v2628
      %2630 = vmatmul.f32.gmra.mxu0 %v2566
      %v2631 = vpop.f32.mrf.mxu0
      %v2632 = vadd.f32 %v574, %v2631
      %2633 = vmatmul.f32.gmra.mxu0 %v2567
      %v2634 = vpop.f32.mrf.mxu0
      %v2635 = vadd.f32 %v574, %v2634
      %2636 = vmatmul.f32.gmra.mxu0 %v2568
      %v2637 = vpop.f32.mrf.mxu0
      %v2638 = vadd.f32 %v574, %v2637
      %2639 = vmatmul.f32.gmra.mxu0 %v2569
      %v2640 = vpop.f32.mrf.mxu0
      %v2641 = vadd.f32 %v574, %v2640
      %2642 = vmatmul.f32.gmra.mxu0 %v2570
      %v2643 = vpop.f32.mrf.mxu0
      %v2644 = vadd.f32 %v574, %v2643
      %2645 = vmatmul.f32.gmra.mxu0 %v2571
      %v2646 = vpop.f32.mrf.mxu0
      %v2647 = vadd.f32 %v574, %v2646
      %2648 = vmatmul.f32.gmra.mxu0 %v2572
      %v2649 = vpop.f32.mrf.mxu0
      %v2650 = vadd.f32 %v574, %v2649
      %2651 = vmatmul.f32.gmra.mxu0 %v2573
      %v2652 = vpop.f32.mrf.mxu0
      %v2653 = vadd.f32 %v574, %v2652
      %2654 = vmatmul.f32.gmra.mxu0 %v2574
      %v2655 = vpop.f32.mrf.mxu0
      %v2656 = vadd.f32 %v574, %v2655
      %2657 = vmatmul.f32.gmra.mxu0 %v2575
      %v2658 = vpop.f32.mrf.mxu0
      %v2659 = vadd.f32 %v574, %v2658
      %2660 = vmatmul.f32.gmra.mxu0 %v2576
      %v2661 = vpop.f32.mrf.mxu0
      %v2662 = vadd.f32 %v574, %v2661
      %2663 = vmatmul.f32.gmra.mxu0 %v2577
      %v2664 = vpop.f32.mrf.mxu0
      %v2665 = vadd.f32 %v574, %v2664
      %2666 = vmatmul.f32.gmra.mxu0 %v2578
      %v2667 = vpop.f32.mrf.mxu0
      %v2668 = vadd.f32 %v574, %v2667
      %2669 = vmatmul.f32.gmra.mxu0 %v2579
      %v2670 = vpop.f32.mrf.mxu0
      %v2671 = vadd.f32 %v574, %v2670
      %2672 = vmatmul.f32.gmra.mxu0 %v2580
      %v2673 = vpop.f32.mrf.mxu0
      %v2674 = vadd.f32 %v574, %v2673
      %2675 = vmatmul.f32.gmra.mxu0 %v2581
      %v2676 = vpop.f32.mrf.mxu0
      %v2677 = vadd.f32 %v574, %v2676
      %2678 = vmatmul.f32.gmra.mxu0 %v2582
      %v2679 = vpop.f32.mrf.mxu0
      %v2680 = vadd.f32 %v574, %v2679
      %2681 = vmatmul.f32.gmra.mxu0 %v2583
      %v2682 = vpop.f32.mrf.mxu0
      %v2683 = vadd.f32 %v574, %v2682
      %2684 = vmatmul.f32.gmra.mxu0 %v2584
      %v2685 = vpop.f32.mrf.mxu0
      %v2686 = vadd.f32 %v574, %v2685
      %2687 = vmatmul.f32.gmra.mxu0 %v2585
      %v2688 = vpop.f32.mrf.mxu0
      %v2689 = vadd.f32 %v574, %v2688
      %2690 = vmatmul.f32.gmra.mxu0 %v2586
      %v2691 = vpop.f32.mrf.mxu0
      %v2692 = vadd.f32 %v574, %v2691
      %2693 = vmatmul.f32.gmra.mxu0 %v2587
      %v2694 = vpop.f32.mrf.mxu0
      %v2695 = vadd.f32 %v574, %v2694
      %2696 = vmatmul.f32.gmra.mxu0 %v2588
      %v2697 = vpop.f32.mrf.mxu0
      %v2698 = vadd.f32 %v574, %v2697
      %2699 = vmatmul.f32.gmra.mxu0 %v2589
      %v2700 = vpop.f32.mrf.mxu0
      %v2701 = vadd.f32 %v574, %v2700
      %2702 = vdwg.mxu0
      %2703 = vmatpush.msra.mxu0 %v426
      %2704 = vmatpush.msra.mxu0 %v425
      %2705 = vmatpush.msra.mxu0 %v424
      %2706 = vmatpush.msra.mxu0 %v423
      %2707 = vmatpush.msra.mxu0 %v422
      %2708 = vmatpush.msra.mxu0 %v421
      %2709 = vmatpush.msra.mxu0 %v420
      %2710 = vmatpush.msra.mxu0 %v419
      %2711 = vmatpush.msra.mxu0 %v418
      %2712 = vmatpush.msra.mxu0 %v417
      %2713 = vmatpush.msra.mxu0 %v416
      %2714 = vmatpush.msra.mxu0 %v415
      %2715 = vmatpush.msra.mxu0 %v414
      %2716 = vmatpush.msra.mxu0 %v413
      %2717 = vmatpush.msra.mxu0 %v412
      %2718 = vmatpush.msra.mxu0 %v411
      %2719 = vmatmul.f32.gmra.mxu0 %v2558
      %v2720 = vpop.f32.mrf.mxu0
      %v2721 = vadd.f32 %v690, %v2720
      %2722 = vmatmul.f32.gmra.mxu0 %v2559
      %v2723 = vpop.f32.mrf.mxu0
      %v2724 = vadd.f32 %v690, %v2723
      %2725 = vmatmul.f32.gmra.mxu0 %v2560
      %v2726 = vpop.f32.mrf.mxu0
      %v2727 = vadd.f32 %v690, %v2726
      %2728 = vmatmul.f32.gmra.mxu0 %v2561
      %v2729 = vpop.f32.mrf.mxu0
      %v2730 = vadd.f32 %v690, %v2729
      %2731 = vmatmul.f32.gmra.mxu0 %v2562
      %v2732 = vpop.f32.mrf.mxu0
      %v2733 = vadd.f32 %v690, %v2732
      %2734 = vmatmul.f32.gmra.mxu0 %v2563
      %v2735 = vpop.f32.mrf.mxu0
      %v2736 = vadd.f32 %v690, %v2735
      %2737 = vmatmul.f32.gmra.mxu0 %v2564
      %v2738 = vpop.f32.mrf.mxu0
      %v2739 = vadd.f32 %v690, %v2738
      %2740 = vmatmul.f32.gmra.mxu0 %v2565
      %v2741 = vpop.f32.mrf.mxu0
      %v2742 = vadd.f32 %v690, %v2741
      %2743 = vmatmul.f32.gmra.mxu0 %v2566
      %v2744 = vpop.f32.mrf.mxu0
      %v2745 = vadd.f32 %v690, %v2744
      %2746 = vmatmul.f32.gmra.mxu0 %v2567
      %v2747 = vpop.f32.mrf.mxu0
      %v2748 = vadd.f32 %v690, %v2747
      %2749 = vmatmul.f32.gmra.mxu0 %v2568
      %v2750 = vpop.f32.mrf.mxu0
      %v2751 = vadd.f32 %v690, %v2750
      %2752 = vmatmul.f32.gmra.mxu0 %v2569
      %v2753 = vpop.f32.mrf.mxu0
      %v2754 = vadd.f32 %v690, %v2753
      %2755 = vmatmul.f32.gmra.mxu0 %v2570
      %v2756 = vpop.f32.mrf.mxu0
      %v2757 = vadd.f32 %v690, %v2756
      %2758 = vmatmul.f32.gmra.mxu0 %v2571
      %v2759 = vpop.f32.mrf.mxu0
      %v2760 = vadd.f32 %v690, %v2759
      %2761 = vmatmul.f32.gmra.mxu0 %v2572
      %v2762 = vpop.f32.mrf.mxu0
      %v2763 = vadd.f32 %v690, %v2762
      %2764 = vmatmul.f32.gmra.mxu0 %v2573
      %v2765 = vpop.f32.mrf.mxu0
      %v2766 = vadd.f32 %v690, %v2765
      %2767 = vmatmul.f32.gmra.mxu0 %v2574
      %v2768 = vpop.f32.mrf.mxu0
      %v2769 = vadd.f32 %v690, %v2768
      %2770 = vmatmul.f32.gmra.mxu0 %v2575
      %v2771 = vpop.f32.mrf.mxu0
      %v2772 = vadd.f32 %v690, %v2771
      %2773 = vmatmul.f32.gmra.mxu0 %v2576
      %v2774 = vpop.f32.mrf.mxu0
      %v2775 = vadd.f32 %v690, %v2774
      %2776 = vmatmul.f32.gmra.mxu0 %v2577
      %v2777 = vpop.f32.mrf.mxu0
      %v2778 = vadd.f32 %v690, %v2777
      %2779 = vmatmul.f32.gmra.mxu0 %v2578
      %v2780 = vpop.f32.mrf.mxu0
      %v2781 = vadd.f32 %v690, %v2780
      %2782 = vmatmul.f32.gmra.mxu0 %v2579
      %v2783 = vpop.f32.mrf.mxu0
      %v2784 = vadd.f32 %v690, %v2783
      %2785 = vmatmul.f32.gmra.mxu0 %v2580
      %v2786 = vpop.f32.mrf.mxu0
      %v2787 = vadd.f32 %v690, %v2786
      %2788 = vmatmul.f32.gmra.mxu0 %v2581
      %v2789 = vpop.f32.mrf.mxu0
      %v2790 = vadd.f32 %v690, %v2789
      %2791 = vmatmul.f32.gmra.mxu0 %v2582
      %v2792 = vpop.f32.mrf.mxu0
      %v2793 = vadd.f32 %v690, %v2792
      %2794 = vmatmul.f32.gmra.mxu0 %v2583
      %v2795 = vpop.f32.mrf.mxu0
      %v2796 = vadd.f32 %v690, %v2795
      %2797 = vmatmul.f32.gmra.mxu0 %v2584
      %v2798 = vpop.f32.mrf.mxu0
      %v2799 = vadd.f32 %v690, %v2798
      %2800 = vmatmul.f32.gmra.mxu0 %v2585
      %v2801 = vpop.f32.mrf.mxu0
      %v2802 = vadd.f32 %v690, %v2801
      %2803 = vmatmul.f32.gmra.mxu0 %v2586
      %v2804 = vpop.f32.mrf.mxu0
      %v2805 = vadd.f32 %v690, %v2804
      %2806 = vmatmul.f32.gmra.mxu0 %v2587
      %v2807 = vpop.f32.mrf.mxu0
      %v2808 = vadd.f32 %v690, %v2807
      %2809 = vmatmul.f32.gmra.mxu0 %v2588
      %v2810 = vpop.f32.mrf.mxu0
      %v2811 = vadd.f32 %v690, %v2810
      %2812 = vmatmul.f32.gmra.mxu0 %v2589
      %v2813 = vpop.f32.mrf.mxu0
      %v2814 = vadd.f32 %v690, %v2813
      %2815 = vdwg.mxu0
      %2816 = vmatpush.msra.mxu0 %v443
      %2817 = vmatpush.msra.mxu0 %v442
      %2818 = vmatpush.msra.mxu0 %v441
      %2819 = vmatpush.msra.mxu0 %v440
      %2820 = vmatpush.msra.mxu0 %v439
      %2821 = vmatpush.msra.mxu0 %v438
      %2822 = vmatpush.msra.mxu0 %v437
      %2823 = vmatpush.msra.mxu0 %v436
      %2824 = vmatpush.msra.mxu0 %v435
      %2825 = vmatpush.msra.mxu0 %v434
      %2826 = vmatpush.msra.mxu0 %v433
      %2827 = vmatpush.msra.mxu0 %v432
      %2828 = vmatpush.msra.mxu0 %v431
      %2829 = vmatpush.msra.mxu0 %v430
      %2830 = vmatpush.msra.mxu0 %v429
      %2831 = vmatpush.msra.mxu0 %v428
      %2832 = vmatmul.f32.gmra.mxu0 %v2558
      %v2833 = vpop.f32.mrf.mxu0
      %v2834 = vadd.f32 %v806, %v2833
      %2835 = vmatmul.f32.gmra.mxu0 %v2559
      %v2836 = vpop.f32.mrf.mxu0
      %v2837 = vadd.f32 %v806, %v2836
      %2838 = vmatmul.f32.gmra.mxu0 %v2560
      %v2839 = vpop.f32.mrf.mxu0
      %v2840 = vadd.f32 %v806, %v2839
      %2841 = vmatmul.f32.gmra.mxu0 %v2561
      %v2842 = vpop.f32.mrf.mxu0
      %v2843 = vadd.f32 %v806, %v2842
      %2844 = vmatmul.f32.gmra.mxu0 %v2562
      %v2845 = vpop.f32.mrf.mxu0
      %v2846 = vadd.f32 %v806, %v2845
      %2847 = vmatmul.f32.gmra.mxu0 %v2563
      %v2848 = vpop.f32.mrf.mxu0
      %v2849 = vadd.f32 %v806, %v2848
      %2850 = vmatmul.f32.gmra.mxu0 %v2564
      %v2851 = vpop.f32.mrf.mxu0
      %v2852 = vadd.f32 %v806, %v2851
      %2853 = vmatmul.f32.gmra.mxu0 %v2565
      %v2854 = vpop.f32.mrf.mxu0
      %v2855 = vadd.f32 %v806, %v2854
      %2856 = vmatmul.f32.gmra.mxu0 %v2566
      %v2857 = vpop.f32.mrf.mxu0
      %v2858 = vadd.f32 %v806, %v2857
      %2859 = vmatmul.f32.gmra.mxu0 %v2567
      %v2860 = vpop.f32.mrf.mxu0
      %v2861 = vadd.f32 %v806, %v2860
      %2862 = vmatmul.f32.gmra.mxu0 %v2568
      %v2863 = vpop.f32.mrf.mxu0
      %v2864 = vadd.f32 %v806, %v2863
      %2865 = vmatmul.f32.gmra.mxu0 %v2569
      %v2866 = vpop.f32.mrf.mxu0
      %v2867 = vadd.f32 %v806, %v2866
      %2868 = vmatmul.f32.gmra.mxu0 %v2570
      %v2869 = vpop.f32.mrf.mxu0
      %v2870 = vadd.f32 %v806, %v2869
      %2871 = vmatmul.f32.gmra.mxu0 %v2571
      %v2872 = vpop.f32.mrf.mxu0
      %v2873 = vadd.f32 %v806, %v2872
      %2874 = vmatmul.f32.gmra.mxu0 %v2572
      %v2875 = vpop.f32.mrf.mxu0
      %v2876 = vadd.f32 %v806, %v2875
      %2877 = vmatmul.f32.gmra.mxu0 %v2573
      %v2878 = vpop.f32.mrf.mxu0
      %v2879 = vadd.f32 %v806, %v2878
      %2880 = vmatmul.f32.gmra.mxu0 %v2574
      %v2881 = vpop.f32.mrf.mxu0
      %v2882 = vadd.f32 %v806, %v2881
      %2883 = vmatmul.f32.gmra.mxu0 %v2575
      %v2884 = vpop.f32.mrf.mxu0
      %v2885 = vadd.f32 %v806, %v2884
      %2886 = vmatmul.f32.gmra.mxu0 %v2576
      %v2887 = vpop.f32.mrf.mxu0
      %v2888 = vadd.f32 %v806, %v2887
      %2889 = vmatmul.f32.gmra.mxu0 %v2577
      %v2890 = vpop.f32.mrf.mxu0
      %v2891 = vadd.f32 %v806, %v2890
      %2892 = vmatmul.f32.gmra.mxu0 %v2578
      %v2893 = vpop.f32.mrf.mxu0
      %v2894 = vadd.f32 %v806, %v2893
      %2895 = vmatmul.f32.gmra.mxu0 %v2579
      %v2896 = vpop.f32.mrf.mxu0
      %v2897 = vadd.f32 %v806, %v2896
      %2898 = vmatmul.f32.gmra.mxu0 %v2580
      %v2899 = vpop.f32.mrf.mxu0
      %v2900 = vadd.f32 %v806, %v2899
      %2901 = vmatmul.f32.gmra.mxu0 %v2581
      %v2902 = vpop.f32.mrf.mxu0
      %v2903 = vadd.f32 %v806, %v2902
      %2904 = vmatmul.f32.gmra.mxu0 %v2582
      %v2905 = vpop.f32.mrf.mxu0
      %v2906 = vadd.f32 %v806, %v2905
      %2907 = vmatmul.f32.gmra.mxu0 %v2583
      %v2908 = vpop.f32.mrf.mxu0
      %v2909 = vadd.f32 %v806, %v2908
      %2910 = vmatmul.f32.gmra.mxu0 %v2584
      %v2911 = vpop.f32.mrf.mxu0
      %v2912 = vadd.f32 %v806, %v2911
      %2913 = vmatmul.f32.gmra.mxu0 %v2585
      %v2914 = vpop.f32.mrf.mxu0
      %v2915 = vadd.f32 %v806, %v2914
      %2916 = vmatmul.f32.gmra.mxu0 %v2586
      %v2917 = vpop.f32.mrf.mxu0
      %v2918 = vadd.f32 %v806, %v2917
      %2919 = vmatmul.f32.gmra.mxu0 %v2587
      %v2920 = vpop.f32.mrf.mxu0
      %v2921 = vadd.f32 %v806, %v2920
      %2922 = vmatmul.f32.gmra.mxu0 %v2588
      %v2923 = vpop.f32.mrf.mxu0
      %v2924 = vadd.f32 %v806, %v2923
      %2925 = vmatmul.f32.gmra.mxu0 %v2589
      %v2926 = vpop.f32.mrf.mxu0
      %v2927 = vadd.f32 %v806, %v2926
      %2928 = vdwg.mxu0
      %2929 = vmatpush.xpose.msra.mxu0 %v2766
      %2930 = vmatpush.xpose.msra.mxu0 %v2763
      %2931 = vmatpush.xpose.msra.mxu0 %v2760
      %2932 = vmatpush.xpose.msra.mxu0 %v2757
      %2933 = vmatpush.xpose.msra.mxu0 %v2754
      %2934 = vmatpush.xpose.msra.mxu0 %v2751
      %2935 = vmatpush.xpose.msra.mxu0 %v2748
      %2936 = vmatpush.xpose.msra.mxu0 %v2745
      %2937 = vmatpush.xpose.msra.mxu0 %v2742
      %2938 = vmatpush.xpose.msra.mxu0 %v2739
      %2939 = vmatpush.xpose.msra.mxu0 %v2736
      %2940 = vmatpush.xpose.msra.mxu0 %v2733
      %2941 = vmatpush.xpose.msra.mxu0 %v2730
      %2942 = vmatpush.xpose.msra.mxu0 %v2727
      %2943 = vmatpush.xpose.msra.mxu0 %v2724
      %2944 = vmatpush.xpose.msra.mxu0 %v2721
      %2945 = vmatmul.f32.gmra.mxu0 %v2608
      %v2946 = vpop.f32.mrf.mxu0
      %v2947 = vadd.f32 0.0, %v2946
      %2948 = vmatmul.f32.gmra.mxu0 %v2611
      %v2949 = vpop.f32.mrf.mxu0
      %v2950 = vadd.f32 0.0, %v2949
      %2951 = vmatmul.f32.gmra.mxu0 %v2614
      %v2952 = vpop.f32.mrf.mxu0
      %v2953 = vadd.f32 0.0, %v2952
      %2954 = vmatmul.f32.gmra.mxu0 %v2617
      %v2955 = vpop.f32.mrf.mxu0
      %v2956 = vadd.f32 0.0, %v2955
      %2957 = vmatmul.f32.gmra.mxu0 %v2620
      %v2958 = vpop.f32.mrf.mxu0
      %v2959 = vadd.f32 0.0, %v2958
      %2960 = vmatmul.f32.gmra.mxu0 %v2623
      %v2961 = vpop.f32.mrf.mxu0
      %v2962 = vadd.f32 0.0, %v2961
      %2963 = vmatmul.f32.gmra.mxu0 %v2626
      %v2964 = vpop.f32.mrf.mxu0
      %v2965 = vadd.f32 0.0, %v2964
      %2966 = vmatmul.f32.gmra.mxu0 %v2629
      %v2967 = vpop.f32.mrf.mxu0
      %v2968 = vadd.f32 0.0, %v2967
      %2969 = vmatmul.f32.gmra.mxu0 %v2632
      %v2970 = vpop.f32.mrf.mxu0
      %v2971 = vadd.f32 0.0, %v2970
      %2972 = vmatmul.f32.gmra.mxu0 %v2635
      %v2973 = vpop.f32.mrf.mxu0
      %v2974 = vadd.f32 0.0, %v2973
      %2975 = vmatmul.f32.gmra.mxu0 %v2638
      %v2976 = vpop.f32.mrf.mxu0
      %v2977 = vadd.f32 0.0, %v2976
      %2978 = vmatmul.f32.gmra.mxu0 %v2641
      %v2979 = vpop.f32.mrf.mxu0
      %v2980 = vadd.f32 0.0, %v2979
      %2981 = vmatmul.f32.gmra.mxu0 %v2644
      %v2982 = vpop.f32.mrf.mxu0
      %v2983 = vadd.f32 0.0, %v2982
      %2984 = vmatmul.f32.gmra.mxu0 %v2647
      %v2985 = vpop.f32.mrf.mxu0
      %v2986 = vadd.f32 0.0, %v2985
      %2987 = vmatmul.f32.gmra.mxu0 %v2650
      %v2988 = vpop.f32.mrf.mxu0
      %v2989 = vadd.f32 0.0, %v2988
      %2990 = vmatmul.f32.gmra.mxu0 %v2653
      %v2991 = vpop.f32.mrf.mxu0
      %v2992 = vadd.f32 0.0, %v2991
      %2993 = vmatmul.f32.gmra.mxu0 %v2656
      %v2994 = vpop.f32.mrf.mxu0
      %v2995 = vadd.f32 0.0, %v2994
      %2996 = vmatmul.f32.gmra.mxu0 %v2659
      %v2997 = vpop.f32.mrf.mxu0
      %v2998 = vadd.f32 0.0, %v2997
      %2999 = vmatmul.f32.gmra.mxu0 %v2662
      %v3000 = vpop.f32.mrf.mxu0
      %v3001 = vadd.f32 0.0, %v3000
      %3002 = vmatmul.f32.gmra.mxu0 %v2665
      %v3003 = vpop.f32.mrf.mxu0
      %v3004 = vadd.f32 0.0, %v3003
      %3005 = vmatmul.f32.gmra.mxu0 %v2668
      %v3006 = vpop.f32.mrf.mxu0
      %v3007 = vadd.f32 0.0, %v3006
      %3008 = vmatmul.f32.gmra.mxu0 %v2671
      %v3009 = vpop.f32.mrf.mxu0
      %v3010 = vadd.f32 0.0, %v3009
      %3011 = vmatmul.f32.gmra.mxu0 %v2674
      %v3012 = vpop.f32.mrf.mxu0
      %v3013 = vadd.f32 0.0, %v3012
      %3014 = vmatmul.f32.gmra.mxu0 %v2677
      %v3015 = vpop.f32.mrf.mxu0
      %v3016 = vadd.f32 0.0, %v3015
      %3017 = vmatmul.f32.gmra.mxu0 %v2680
      %v3018 = vpop.f32.mrf.mxu0
      %v3019 = vadd.f32 0.0, %v3018
      %3020 = vmatmul.f32.gmra.mxu0 %v2683
      %v3021 = vpop.f32.mrf.mxu0
      %v3022 = vadd.f32 0.0, %v3021
      %3023 = vmatmul.f32.gmra.mxu0 %v2686
      %v3024 = vpop.f32.mrf.mxu0
      %v3025 = vadd.f32 0.0, %v3024
      %3026 = vmatmul.f32.gmra.mxu0 %v2689
      %v3027 = vpop.f32.mrf.mxu0
      %v3028 = vadd.f32 0.0, %v3027
      %3029 = vmatmul.f32.gmra.mxu0 %v2692
      %v3030 = vpop.f32.mrf.mxu0
      %v3031 = vadd.f32 0.0, %v3030
      %3032 = vmatmul.f32.gmra.mxu0 %v2695
      %v3033 = vpop.f32.mrf.mxu0
      %v3034 = vadd.f32 0.0, %v3033
      %3035 = vmatmul.f32.gmra.mxu0 %v2698
      %v3036 = vpop.f32.mrf.mxu0
      %v3037 = vadd.f32 0.0, %v3036
      %3038 = vmatmul.f32.gmra.mxu0 %v2701
      %v3039 = vpop.f32.mrf.mxu0
      %v3040 = vadd.f32 0.0, %v3039
      %3041 = vdwg.mxu0
      %3042 = vmatpush.xpose.msra.mxu0 %v2814
      %3043 = vmatpush.xpose.msra.mxu0 %v2811
      %3044 = vmatpush.xpose.msra.mxu0 %v2808
      %3045 = vmatpush.xpose.msra.mxu0 %v2805
      %3046 = vmatpush.xpose.msra.mxu0 %v2802
      %3047 = vmatpush.xpose.msra.mxu0 %v2799
      %3048 = vmatpush.xpose.msra.mxu0 %v2796
      %3049 = vmatpush.xpose.msra.mxu0 %v2793
      %3050 = vmatpush.xpose.msra.mxu0 %v2790
      %3051 = vmatpush.xpose.msra.mxu0 %v2787
      %3052 = vmatpush.xpose.msra.mxu0 %v2784
      %3053 = vmatpush.xpose.msra.mxu0 %v2781
      %3054 = vmatpush.xpose.msra.mxu0 %v2778
      %3055 = vmatpush.xpose.msra.mxu0 %v2775
      %3056 = vmatpush.xpose.msra.mxu0 %v2772
      %3057 = vmatpush.xpose.msra.mxu0 %v2769
      %3058 = vmatmul.f32.gmra.mxu0 %v2608
      %v3059 = vpop.f32.mrf.mxu0
      %v3060 = vadd.f32 0.0, %v3059
      %3061 = vmatmul.f32.gmra.mxu0 %v2611
      %v3062 = vpop.f32.mrf.mxu0
      %v3063 = vadd.f32 0.0, %v3062
      %3064 = vmatmul.f32.gmra.mxu0 %v2614
      %v3065 = vpop.f32.mrf.mxu0
      %v3066 = vadd.f32 0.0, %v3065
      %3067 = vmatmul.f32.gmra.mxu0 %v2617
      %v3068 = vpop.f32.mrf.mxu0
      %v3069 = vadd.f32 0.0, %v3068
      %3070 = vmatmul.f32.gmra.mxu0 %v2620
      %v3071 = vpop.f32.mrf.mxu0
      %v3072 = vadd.f32 0.0, %v3071
      %3073 = vmatmul.f32.gmra.mxu0 %v2623
      %v3074 = vpop.f32.mrf.mxu0
      %v3075 = vadd.f32 0.0, %v3074
      %3076 = vmatmul.f32.gmra.mxu0 %v2626
      %v3077 = vpop.f32.mrf.mxu0
      %v3078 = vadd.f32 0.0, %v3077
      %3079 = vmatmul.f32.gmra.mxu0 %v2629
      %v3080 = vpop.f32.mrf.mxu0
      %v3081 = vadd.f32 0.0, %v3080
      %3082 = vmatmul.f32.gmra.mxu0 %v2632
      %v3083 = vpop.f32.mrf.mxu0
      %v3084 = vadd.f32 0.0, %v3083
      %3085 = vmatmul.f32.gmra.mxu0 %v2635
      %v3086 = vpop.f32.mrf.mxu0
      %v3087 = vadd.f32 0.0, %v3086
      %3088 = vmatmul.f32.gmra.mxu0 %v2638
      %v3089 = vpop.f32.mrf.mxu0
      %v3090 = vadd.f32 0.0, %v3089
      %3091 = vmatmul.f32.gmra.mxu0 %v2641
      %v3092 = vpop.f32.mrf.mxu0
      %v3093 = vadd.f32 0.0, %v3092
      %3094 = vmatmul.f32.gmra.mxu0 %v2644
      %v3095 = vpop.f32.mrf.mxu0
      %v3096 = vadd.f32 0.0, %v3095
      %3097 = vmatmul.f32.gmra.mxu0 %v2647
      %v3098 = vpop.f32.mrf.mxu0
      %v3099 = vadd.f32 0.0, %v3098
      %3100 = vmatmul.f32.gmra.mxu0 %v2650
      %v3101 = vpop.f32.mrf.mxu0
      %v3102 = vadd.f32 0.0, %v3101
      %3103 = vmatmul.f32.gmra.mxu0 %v2653
      %v3104 = vpop.f32.mrf.mxu0
      %v3105 = vadd.f32 0.0, %v3104
      %3106 = vmatmul.f32.gmra.mxu0 %v2656
      %v3107 = vpop.f32.mrf.mxu0
      %v3108 = vadd.f32 0.0, %v3107
      %3109 = vmatmul.f32.gmra.mxu0 %v2659
      %v3110 = vpop.f32.mrf.mxu0
      %v3111 = vadd.f32 0.0, %v3110
      %3112 = vmatmul.f32.gmra.mxu0 %v2662
      %v3113 = vpop.f32.mrf.mxu0
      %v3114 = vadd.f32 0.0, %v3113
      %3115 = vmatmul.f32.gmra.mxu0 %v2665
      %v3116 = vpop.f32.mrf.mxu0
      %v3117 = vadd.f32 0.0, %v3116
      %3118 = vmatmul.f32.gmra.mxu0 %v2668
      %v3119 = vpop.f32.mrf.mxu0
      %v3120 = vadd.f32 0.0, %v3119
      %3121 = vmatmul.f32.gmra.mxu0 %v2671
      %v3122 = vpop.f32.mrf.mxu0
      %v3123 = vadd.f32 0.0, %v3122
      %3124 = vmatmul.f32.gmra.mxu0 %v2674
      %v3125 = vpop.f32.mrf.mxu0
      %v3126 = vadd.f32 0.0, %v3125
      %3127 = vmatmul.f32.gmra.mxu0 %v2677
      %v3128 = vpop.f32.mrf.mxu0
      %v3129 = vadd.f32 0.0, %v3128
      %3130 = vmatmul.f32.gmra.mxu0 %v2680
      %v3131 = vpop.f32.mrf.mxu0
      %v3132 = vadd.f32 0.0, %v3131
      %3133 = vmatmul.f32.gmra.mxu0 %v2683
      %v3134 = vpop.f32.mrf.mxu0
      %v3135 = vadd.f32 0.0, %v3134
      %3136 = vmatmul.f32.gmra.mxu0 %v2686
      %v3137 = vpop.f32.mrf.mxu0
      %v3138 = vadd.f32 0.0, %v3137
      %3139 = vmatmul.f32.gmra.mxu0 %v2689
      %v3140 = vpop.f32.mrf.mxu0
      %v3141 = vadd.f32 0.0, %v3140
      %3142 = vmatmul.f32.gmra.mxu0 %v2692
      %v3143 = vpop.f32.mrf.mxu0
      %v3144 = vadd.f32 0.0, %v3143
      %3145 = vmatmul.f32.gmra.mxu0 %v2695
      %v3146 = vpop.f32.mrf.mxu0
      %v3147 = vadd.f32 0.0, %v3146
      %3148 = vmatmul.f32.gmra.mxu0 %v2698
      %v3149 = vpop.f32.mrf.mxu0
      %v3150 = vadd.f32 0.0, %v3149
      %3151 = vmatmul.f32.gmra.mxu0 %v2701
      %v3152 = vpop.f32.mrf.mxu0
      %v3153 = vadd.f32 0.0, %v3152
      %3154 = vdwg.mxu0
      %v3155 = vadd.f32 %v2947, %v445
      %v3156 = vadd.f32 %v3060, %v446
      %v3157 = vadd.f32 %v2950, %v447
      %v3158 = vadd.f32 %v3063, %v448
      %v3159 = vadd.f32 %v2953, %v449
      %v3160 = vadd.f32 %v3066, %v450
      %v3161 = vadd.f32 %v2956, %v451
      %v3162 = vadd.f32 %v3069, %v452
      %v3163 = vadd.f32 %v2959, %v453
      %v3164 = vadd.f32 %v3072, %v454
      %v3165 = vadd.f32 %v2962, %v455
      %v3166 = vadd.f32 %v3075, %v456
      %v3167 = vadd.f32 %v2965, %v457
      %v3168 = vadd.f32 %v3078, %v458
      %v3169 = vadd.f32 %v2968, %v459
      %v3170 = vadd.f32 %v3081, %v460
      %v3171 = vadd.f32 %v2971, %v461
      %v3172 = vadd.f32 %v3084, %v462
      %v3173 = vadd.f32 %v2974, %v463
      %v3174 = vadd.f32 %v3087, %v464
      %v3175 = vadd.f32 %v2977, %v465
      %v3176 = vadd.f32 %v3090, %v466
      %v3177 = vadd.f32 %v2980, %v467
      %v3178 = vadd.f32 %v3093, %v468
      %v3179 = vadd.f32 %v2983, %v469
      %v3180 = vadd.f32 %v3096, %v470
      %v3181 = vadd.f32 %v2986, %v471
      %v3182 = vadd.f32 %v3099, %v472
      %v3183 = vadd.f32 %v2989, %v473
      %v3184 = vadd.f32 %v3102, %v474
      %v3185 = vadd.f32 %v2992, %v475
      %v3186 = vadd.f32 %v3105, %v476
      %v3187 = vadd.f32 %v2995, %v477
      %v3188 = vadd.f32 %v3108, %v478
      %v3189 = vadd.f32 %v2998, %v479
      %v3190 = vadd.f32 %v3111, %v480
      %v3191 = vadd.f32 %v3001, %v481
      %v3192 = vadd.f32 %v3114, %v482
      %v3193 = vadd.f32 %v3004, %v483
      %v3194 = vadd.f32 %v3117, %v484
      %v3195 = vadd.f32 %v3007, %v485
      %v3196 = vadd.f32 %v3120, %v486
      %v3197 = vadd.f32 %v3010, %v487
      %v3198 = vadd.f32 %v3123, %v488
      %v3199 = vadd.f32 %v3013, %v489
      %v3200 = vadd.f32 %v3126, %v490
      %v3201 = vadd.f32 %v3016, %v491
      %v3202 = vadd.f32 %v3129, %v492
      %v3203 = vadd.f32 %v3019, %v493
      %v3204 = vadd.f32 %v3132, %v494
      %v3205 = vadd.f32 %v3022, %v495
      %v3206 = vadd.f32 %v3135, %v496
      %v3207 = vadd.f32 %v3025, %v497
      %v3208 = vadd.f32 %v3138, %v498
      %v3209 = vadd.f32 %v3028, %v499
      %v3210 = vadd.f32 %v3141, %v500
      %v3211 = vadd.f32 %v3031, %v501
      %v3212 = vadd.f32 %v3144, %v502
      %v3213 = vadd.f32 %v3034, %v503
      %v3214 = vadd.f32 %v3147, %v504
      %v3215 = vadd.f32 %v3037, %v505
      %v3216 = vadd.f32 %v3150, %v506
      %v3217 = vadd.f32 %v3040, %v507
      %v3218 = vadd.f32 %v3153, %v508
      %v3219 = vmax.f32 %v3155, %v3156
      %3220 = vmax.xlane.f32.xlu0 %v3219
      %v3221 = vpop.xlane.xlu0 %3220
      %v3222 = vmax.f32 %v3157, %v3158
      %3223 = vmax.xlane.f32.xlu0 %v3222
      %v3224 = vpop.xlane.xlu0 %3223
      %v3225 = vmax.f32 %v3159, %v3160
      %3226 = vmax.xlane.f32.xlu0 %v3225
      %v3227 = vpop.xlane.xlu0 %3226
      %v3228 = vmax.f32 %v3161, %v3162
      %3229 = vmax.xlane.f32.xlu0 %v3228
      %v3230 = vpop.xlane.xlu0 %3229
      %v3231 = vmax.f32 %v3163, %v3164
      %3232 = vmax.xlane.f32.xlu0 %v3231
      %v3233 = vpop.xlane.xlu0 %3232
      %v3234 = vmax.f32 %v3165, %v3166
      %3235 = vmax.xlane.f32.xlu0 %v3234
      %v3236 = vpop.xlane.xlu0 %3235
      %v3237 = vmax.f32 %v3167, %v3168
      %3238 = vmax.xlane.f32.xlu0 %v3237
      %v3239 = vpop.xlane.xlu0 %3238
      %v3240 = vmax.f32 %v3169, %v3170
      %3241 = vmax.xlane.f32.xlu0 %v3240
      %v3242 = vpop.xlane.xlu0 %3241
      %v3243 = vmax.f32 %v3171, %v3172
      %3244 = vmax.xlane.f32.xlu0 %v3243
      %v3245 = vpop.xlane.xlu0 %3244
      %v3246 = vmax.f32 %v3173, %v3174
      %3247 = vmax.xlane.f32.xlu0 %v3246
      %v3248 = vpop.xlane.xlu0 %3247
      %v3249 = vmax.f32 %v3175, %v3176
      %3250 = vmax.xlane.f32.xlu0 %v3249
      %v3251 = vpop.xlane.xlu0 %3250
      %v3252 = vmax.f32 %v3177, %v3178
      %3253 = vmax.xlane.f32.xlu0 %v3252
      %v3254 = vpop.xlane.xlu0 %3253
      %v3255 = vmax.f32 %v3179, %v3180
      %3256 = vmax.xlane.f32.xlu0 %v3255
      %v3257 = vpop.xlane.xlu0 %3256
      %v3258 = vmax.f32 %v3181, %v3182
      %3259 = vmax.xlane.f32.xlu0 %v3258
      %v3260 = vpop.xlane.xlu0 %3259
      %v3261 = vmax.f32 %v3183, %v3184
      %3262 = vmax.xlane.f32.xlu0 %v3261
      %v3263 = vpop.xlane.xlu0 %3262
      %v3264 = vmax.f32 %v3185, %v3186
      %3265 = vmax.xlane.f32.xlu0 %v3264
      %v3266 = vpop.xlane.xlu0 %3265
      %v3267 = vmax.f32 %v3187, %v3188
      %3268 = vmax.xlane.f32.xlu0 %v3267
      %v3269 = vpop.xlane.xlu0 %3268
      %v3270 = vmax.f32 %v3189, %v3190
      %3271 = vmax.xlane.f32.xlu0 %v3270
      %v3272 = vpop.xlane.xlu0 %3271
      %v3273 = vmax.f32 %v3191, %v3192
      %3274 = vmax.xlane.f32.xlu0 %v3273
      %v3275 = vpop.xlane.xlu0 %3274
      %v3276 = vmax.f32 %v3193, %v3194
      %3277 = vmax.xlane.f32.xlu0 %v3276
      %v3278 = vpop.xlane.xlu0 %3277
      %v3279 = vmax.f32 %v3195, %v3196
      %3280 = vmax.xlane.f32.xlu0 %v3279
      %v3281 = vpop.xlane.xlu0 %3280
      %v3282 = vmax.f32 %v3197, %v3198
      %3283 = vmax.xlane.f32.xlu0 %v3282
      %v3284 = vpop.xlane.xlu0 %3283
      %v3285 = vmax.f32 %v3199, %v3200
      %3286 = vmax.xlane.f32.xlu0 %v3285
      %v3287 = vpop.xlane.xlu0 %3286
      %v3288 = vmax.f32 %v3201, %v3202
      %3289 = vmax.xlane.f32.xlu0 %v3288
      %v3290 = vpop.xlane.xlu0 %3289
      %v3291 = vmax.f32 %v3203, %v3204
      %3292 = vmax.xlane.f32.xlu0 %v3291
      %v3293 = vpop.xlane.xlu0 %3292
      %v3294 = vmax.f32 %v3205, %v3206
      %3295 = vmax.xlane.f32.xlu0 %v3294
      %v3296 = vpop.xlane.xlu0 %3295
      %v3297 = vmax.f32 %v3207, %v3208
      %3298 = vmax.xlane.f32.xlu0 %v3297
      %v3299 = vpop.xlane.xlu0 %3298
      %v3300 = vmax.f32 %v3209, %v3210
      %3301 = vmax.xlane.f32.xlu0 %v3300
      %v3302 = vpop.xlane.xlu0 %3301
      %v3303 = vmax.f32 %v3211, %v3212
      %3304 = vmax.xlane.f32.xlu0 %v3303
      %v3305 = vpop.xlane.xlu0 %3304
      %v3306 = vmax.f32 %v3213, %v3214
      %3307 = vmax.xlane.f32.xlu0 %v3306
      %v3308 = vpop.xlane.xlu0 %3307
      %v3309 = vmax.f32 %v3215, %v3216
      %3310 = vmax.xlane.f32.xlu0 %v3309
      %v3311 = vpop.xlane.xlu0 %3310
      %v3312 = vmax.f32 %v3217, %v3218
      %3313 = vmax.xlane.f32.xlu0 %v3312
      %v3314 = vpop.xlane.xlu0 %3313
      %v3315 = vsub.f32 %v3155, %v3221
      %v3316 = vsub.f32 %v3156, %v3221
      %v3317 = vsub.f32 %v3157, %v3224
      %v3318 = vsub.f32 %v3158, %v3224
      %v3319 = vsub.f32 %v3159, %v3227
      %v3320 = vsub.f32 %v3160, %v3227
      %v3321 = vsub.f32 %v3161, %v3230
      %v3322 = vsub.f32 %v3162, %v3230
      %v3323 = vsub.f32 %v3163, %v3233
      %v3324 = vsub.f32 %v3164, %v3233
      %v3325 = vsub.f32 %v3165, %v3236
      %v3326 = vsub.f32 %v3166, %v3236
      %v3327 = vsub.f32 %v3167, %v3239
      %v3328 = vsub.f32 %v3168, %v3239
      %v3329 = vsub.f32 %v3169, %v3242
      %v3330 = vsub.f32 %v3170, %v3242
      %v3331 = vsub.f32 %v3171, %v3245
      %v3332 = vsub.f32 %v3172, %v3245
      %v3333 = vsub.f32 %v3173, %v3248
      %v3334 = vsub.f32 %v3174, %v3248
      %v3335 = vsub.f32 %v3175, %v3251
      %v3336 = vsub.f32 %v3176, %v3251
      %v3337 = vsub.f32 %v3177, %v3254
      %v3338 = vsub.f32 %v3178, %v3254
      %v3339 = vsub.f32 %v3179, %v3257
      %v3340 = vsub.f32 %v3180, %v3257
      %v3341 = vsub.f32 %v3181, %v3260
      %v3342 = vsub.f32 %v3182, %v3260
      %v3343 = vsub.f32 %v3183, %v3263
      %v3344 = vsub.f32 %v3184, %v3263
      %v3345 = vsub.f32 %v3185, %v3266
      %v3346 = vsub.f32 %v3186, %v3266
      %v3347 = vsub.f32 %v3187, %v3269
      %v3348 = vsub.f32 %v3188, %v3269
      %v3349 = vsub.f32 %v3189, %v3272
      %v3350 = vsub.f32 %v3190, %v3272
      %v3351 = vsub.f32 %v3191, %v3275
      %v3352 = vsub.f32 %v3192, %v3275
      %v3353 = vsub.f32 %v3193, %v3278
      %v3354 = vsub.f32 %v3194, %v3278
      %v3355 = vsub.f32 %v3195, %v3281
      %v3356 = vsub.f32 %v3196, %v3281
      %v3357 = vsub.f32 %v3197, %v3284
      %v3358 = vsub.f32 %v3198, %v3284
      %v3359 = vsub.f32 %v3199, %v3287
      %v3360 = vsub.f32 %v3200, %v3287
      %v3361 = vsub.f32 %v3201, %v3290
      %v3362 = vsub.f32 %v3202, %v3290
      %v3363 = vsub.f32 %v3203, %v3293
      %v3364 = vsub.f32 %v3204, %v3293
      %v3365 = vsub.f32 %v3205, %v3296
      %v3366 = vsub.f32 %v3206, %v3296
      %v3367 = vsub.f32 %v3207, %v3299
      %v3368 = vsub.f32 %v3208, %v3299
      %v3369 = vsub.f32 %v3209, %v3302
      %v3370 = vsub.f32 %v3210, %v3302
      %v3371 = vsub.f32 %v3211, %v3305
      %v3372 = vsub.f32 %v3212, %v3305
      %v3373 = vsub.f32 %v3213, %v3308
      %v3374 = vsub.f32 %v3214, %v3308
      %v3375 = vsub.f32 %v3215, %v3311
      %v3376 = vsub.f32 %v3216, %v3311
      %v3377 = vsub.f32 %v3217, %v3314
      %v3378 = vsub.f32 %v3218, %v3314
      %v3379 = vmul.f32 %v3315, 1.442695
      %v3380 = vpow.pop %v3379
      %v3381 = vmul.f32 %v3316, 1.442695
      %v3382 = vpow.pop %v3381
      %v3383 = vmul.f32 %v3317, 1.442695
      %v3384 = vpow.pop %v3383
      %v3385 = vmul.f32 %v3318, 1.442695
      %v3386 = vpow.pop %v3385
      %v3387 = vmul.f32 %v3319, 1.442695
      %v3388 = vpow.pop %v3387
      %v3389 = vmul.f32 %v3320, 1.442695
      %v3390 = vpow.pop %v3389
      %v3391 = vmul.f32 %v3321, 1.442695
      %v3392 = vpow.pop %v3391
      %v3393 = vmul.f32 %v3322, 1.442695
      %v3394 = vpow.pop %v3393
      %v3395 = vmul.f32 %v3323, 1.442695
      %v3396 = vpow.pop %v3395
      %v3397 = vmul.f32 %v3324, 1.442695
      %v3398 = vpow.pop %v3397
      %v3399 = vmul.f32 %v3325, 1.442695
      %v3400 = vpow.pop %v3399
      %v3401 = vmul.f32 %v3326, 1.442695
      %v3402 = vpow.pop %v3401
      %v3403 = vmul.f32 %v3327, 1.442695
      %v3404 = vpow.pop %v3403
      %v3405 = vmul.f32 %v3328, 1.442695
      %v3406 = vpow.pop %v3405
      %v3407 = vmul.f32 %v3329, 1.442695
      %v3408 = vpow.pop %v3407
      %v3409 = vmul.f32 %v3330, 1.442695
      %v3410 = vpow.pop %v3409
      %v3411 = vmul.f32 %v3331, 1.442695
      %v3412 = vpow.pop %v3411
      %v3413 = vmul.f32 %v3332, 1.442695
      %v3414 = vpow.pop %v3413
      %v3415 = vmul.f32 %v3333, 1.442695
      %v3416 = vpow.pop %v3415
      %v3417 = vmul.f32 %v3334, 1.442695
      %v3418 = vpow.pop %v3417
      %v3419 = vmul.f32 %v3335, 1.442695
      %v3420 = vpow.pop %v3419
      %v3421 = vmul.f32 %v3336, 1.442695
      %v3422 = vpow.pop %v3421
      %v3423 = vmul.f32 %v3337, 1.442695
      %v3424 = vpow.pop %v3423
      %v3425 = vmul.f32 %v3338, 1.442695
      %v3426 = vpow.pop %v3425
      %v3427 = vmul.f32 %v3339, 1.442695
      %v3428 = vpow.pop %v3427
      %v3429 = vmul.f32 %v3340, 1.442695
      %v3430 = vpow.pop %v3429
      %v3431 = vmul.f32 %v3341, 1.442695
      %v3432 = vpow.pop %v3431
      %v3433 = vmul.f32 %v3342, 1.442695
      %v3434 = vpow.pop %v3433
      %v3435 = vmul.f32 %v3343, 1.442695
      %v3436 = vpow.pop %v3435
      %v3437 = vmul.f32 %v3344, 1.442695
      %v3438 = vpow.pop %v3437
      %v3439 = vmul.f32 %v3345, 1.442695
      %v3440 = vpow.pop %v3439
      %v3441 = vmul.f32 %v3346, 1.442695
      %v3442 = vpow.pop %v3441
      %v3443 = vmul.f32 %v3347, 1.442695
      %v3444 = vpow.pop %v3443
      %v3445 = vmul.f32 %v3348, 1.442695
      %v3446 = vpow.pop %v3445
      %v3447 = vmul.f32 %v3349, 1.442695
      %v3448 = vpow.pop %v3447
      %v3449 = vmul.f32 %v3350, 1.442695
      %v3450 = vpow.pop %v3449
      %v3451 = vmul.f32 %v3351, 1.442695
      %v3452 = vpow.pop %v3451
      %v3453 = vmul.f32 %v3352, 1.442695
      %v3454 = vpow.pop %v3453
      %v3455 = vmul.f32 %v3353, 1.442695
      %v3456 = vpow.pop %v3455
      %v3457 = vmul.f32 %v3354, 1.442695
      %v3458 = vpow.pop %v3457
      %v3459 = vmul.f32 %v3355, 1.442695
      %v3460 = vpow.pop %v3459
      %v3461 = vmul.f32 %v3356, 1.442695
      %v3462 = vpow.pop %v3461
      %v3463 = vmul.f32 %v3357, 1.442695
      %v3464 = vpow.pop %v3463
      %v3465 = vmul.f32 %v3358, 1.442695
      %v3466 = vpow.pop %v3465
      %v3467 = vmul.f32 %v3359, 1.442695
      %v3468 = vpow.pop %v3467
      %v3469 = vmul.f32 %v3360, 1.442695
      %v3470 = vpow.pop %v3469
      %v3471 = vmul.f32 %v3361, 1.442695
      %v3472 = vpow.pop %v3471
      %v3473 = vmul.f32 %v3362, 1.442695
      %v3474 = vpow.pop %v3473
      %v3475 = vmul.f32 %v3363, 1.442695
      %v3476 = vpow.pop %v3475
      %v3477 = vmul.f32 %v3364, 1.442695
      %v3478 = vpow.pop %v3477
      %v3479 = vmul.f32 %v3365, 1.442695
      %v3480 = vpow.pop %v3479
      %v3481 = vmul.f32 %v3366, 1.442695
      %v3482 = vpow.pop %v3481
      %v3483 = vmul.f32 %v3367, 1.442695
      %v3484 = vpow.pop %v3483
      %v3485 = vmul.f32 %v3368, 1.442695
      %v3486 = vpow.pop %v3485
      %v3487 = vmul.f32 %v3369, 1.442695
      %v3488 = vpow.pop %v3487
      %v3489 = vmul.f32 %v3370, 1.442695
      %v3490 = vpow.pop %v3489
      %v3491 = vmul.f32 %v3371, 1.442695
      %v3492 = vpow.pop %v3491
      %v3493 = vmul.f32 %v3372, 1.442695
      %v3494 = vpow.pop %v3493
      %v3495 = vmul.f32 %v3373, 1.442695
      %v3496 = vpow.pop %v3495
      %v3497 = vmul.f32 %v3374, 1.442695
      %v3498 = vpow.pop %v3497
      %v3499 = vmul.f32 %v3375, 1.442695
      %v3500 = vpow.pop %v3499
      %v3501 = vmul.f32 %v3376, 1.442695
      %v3502 = vpow.pop %v3501
      %v3503 = vmul.f32 %v3377, 1.442695
      %v3504 = vpow.pop %v3503
      %v3505 = vmul.f32 %v3378, 1.442695
      %v3506 = vpow.pop %v3505
      %v3507 = vadd.f32 %v3380, %v3382
      %3508 = vadd.xlane.f32.xlu0 %v3507
      %v3509 = vpop.xlane.xlu0 %3508
      %v3510 = vadd.f32 %v3384, %v3386
      %3511 = vadd.xlane.f32.xlu0 %v3510
      %v3512 = vpop.xlane.xlu0 %3511
      %v3513 = vadd.f32 %v3388, %v3390
      %3514 = vadd.xlane.f32.xlu0 %v3513
      %v3515 = vpop.xlane.xlu0 %3514
      %v3516 = vadd.f32 %v3392, %v3394
      %3517 = vadd.xlane.f32.xlu0 %v3516
      %v3518 = vpop.xlane.xlu0 %3517
      %v3519 = vadd.f32 %v3396, %v3398
      %3520 = vadd.xlane.f32.xlu0 %v3519
      %v3521 = vpop.xlane.xlu0 %3520
      %v3522 = vadd.f32 %v3400, %v3402
      %3523 = vadd.xlane.f32.xlu0 %v3522
      %v3524 = vpop.xlane.xlu0 %3523
      %v3525 = vadd.f32 %v3404, %v3406
      %3526 = vadd.xlane.f32.xlu0 %v3525
      %v3527 = vpop.xlane.xlu0 %3526
      %v3528 = vadd.f32 %v3408, %v3410
      %3529 = vadd.xlane.f32.xlu0 %v3528
      %v3530 = vpop.xlane.xlu0 %3529
      %v3531 = vadd.f32 %v3412, %v3414
      %3532 = vadd.xlane.f32.xlu0 %v3531
      %v3533 = vpop.xlane.xlu0 %3532
      %v3534 = vadd.f32 %v3416, %v3418
      %3535 = vadd.xlane.f32.xlu0 %v3534
      %v3536 = vpop.xlane.xlu0 %3535
      %v3537 = vadd.f32 %v3420, %v3422
      %3538 = vadd.xlane.f32.xlu0 %v3537
      %v3539 = vpop.xlane.xlu0 %3538
      %v3540 = vadd.f32 %v3424, %v3426
      %3541 = vadd.xlane.f32.xlu0 %v3540
      %v3542 = vpop.xlane.xlu0 %3541
      %v3543 = vadd.f32 %v3428, %v3430
      %3544 = vadd.xlane.f32.xlu0 %v3543
      %v3545 = vpop.xlane.xlu0 %3544
      %v3546 = vadd.f32 %v3432, %v3434
      %3547 = vadd.xlane.f32.xlu0 %v3546
      %v3548 = vpop.xlane.xlu0 %3547
      %v3549 = vadd.f32 %v3436, %v3438
      %3550 = vadd.xlane.f32.xlu0 %v3549
      %v3551 = vpop.xlane.xlu0 %3550
      %v3552 = vadd.f32 %v3440, %v3442
      %3553 = vadd.xlane.f32.xlu0 %v3552
      %v3554 = vpop.xlane.xlu0 %3553
      %v3555 = vadd.f32 %v3444, %v3446
      %3556 = vadd.xlane.f32.xlu0 %v3555
      %v3557 = vpop.xlane.xlu0 %3556
      %v3558 = vadd.f32 %v3448, %v3450
      %3559 = vadd.xlane.f32.xlu0 %v3558
      %v3560 = vpop.xlane.xlu0 %3559
      %v3561 = vadd.f32 %v3452, %v3454
      %3562 = vadd.xlane.f32.xlu0 %v3561
      %v3563 = vpop.xlane.xlu0 %3562
      %v3564 = vadd.f32 %v3456, %v3458
      %3565 = vadd.xlane.f32.xlu0 %v3564
      %v3566 = vpop.xlane.xlu0 %3565
      %v3567 = vadd.f32 %v3460, %v3462
      %3568 = vadd.xlane.f32.xlu0 %v3567
      %v3569 = vpop.xlane.xlu0 %3568
      %v3570 = vadd.f32 %v3464, %v3466
      %3571 = vadd.xlane.f32.xlu0 %v3570
      %v3572 = vpop.xlane.xlu0 %3571
      %v3573 = vadd.f32 %v3468, %v3470
      %3574 = vadd.xlane.f32.xlu0 %v3573
      %v3575 = vpop.xlane.xlu0 %3574
      %v3576 = vadd.f32 %v3472, %v3474
      %3577 = vadd.xlane.f32.xlu0 %v3576
      %v3578 = vpop.xlane.xlu0 %3577
      %v3579 = vadd.f32 %v3476, %v3478
      %3580 = vadd.xlane.f32.xlu0 %v3579
      %v3581 = vpop.xlane.xlu0 %3580
      %v3582 = vadd.f32 %v3480, %v3482
      %3583 = vadd.xlane.f32.xlu0 %v3582
      %v3584 = vpop.xlane.xlu0 %3583
      %v3585 = vadd.f32 %v3484, %v3486
      %3586 = vadd.xlane.f32.xlu0 %v3585
      %v3587 = vpop.xlane.xlu0 %3586
      %v3588 = vadd.f32 %v3488, %v3490
      %3589 = vadd.xlane.f32.xlu0 %v3588
      %v3590 = vpop.xlane.xlu0 %3589
      %v3591 = vadd.f32 %v3492, %v3494
      %3592 = vadd.xlane.f32.xlu0 %v3591
      %v3593 = vpop.xlane.xlu0 %3592
      %v3594 = vadd.f32 %v3496, %v3498
      %3595 = vadd.xlane.f32.xlu0 %v3594
      %v3596 = vpop.xlane.xlu0 %3595
      %v3597 = vadd.f32 %v3500, %v3502
      %3598 = vadd.xlane.f32.xlu0 %v3597
      %v3599 = vpop.xlane.xlu0 %3598
      %v3600 = vadd.f32 %v3504, %v3506
      %3601 = vadd.xlane.f32.xlu0 %v3600
      %v3602 = vpop.xlane.xlu0 %3601
      %v3603 = vrcp.pop %v3509
      %v3604 = vrcp.pop %v3512
      %v3605 = vrcp.pop %v3515
      %v3606 = vrcp.pop %v3518
      %v3607 = vrcp.pop %v3521
      %v3608 = vrcp.pop %v3524
      %v3609 = vrcp.pop %v3527
      %v3610 = vrcp.pop %v3530
      %v3611 = vrcp.pop %v3533
      %v3612 = vrcp.pop %v3536
      %v3613 = vrcp.pop %v3539
      %v3614 = vrcp.pop %v3542
      %v3615 = vrcp.pop %v3545
      %v3616 = vrcp.pop %v3548
      %v3617 = vrcp.pop %v3551
      %v3618 = vrcp.pop %v3554
      %v3619 = vrcp.pop %v3557
      %v3620 = vrcp.pop %v3560
      %v3621 = vrcp.pop %v3563
      %v3622 = vrcp.pop %v3566
      %v3623 = vrcp.pop %v3569
      %v3624 = vrcp.pop %v3572
      %v3625 = vrcp.pop %v3575
      %v3626 = vrcp.pop %v3578
      %v3627 = vrcp.pop %v3581
      %v3628 = vrcp.pop %v3584
      %v3629 = vrcp.pop %v3587
      %v3630 = vrcp.pop %v3590
      %v3631 = vrcp.pop %v3593
      %v3632 = vrcp.pop %v3596
      %v3633 = vrcp.pop %v3599
      %v3634 = vrcp.pop %v3602
      %v3635 = vmul.f32 %v3380, %v3603
      %v3636 = vmul.f32 %v3382, %v3603
      %v3637 = vmul.f32 %v3384, %v3604
      %v3638 = vmul.f32 %v3386, %v3604
      %v3639 = vmul.f32 %v3388, %v3605
      %v3640 = vmul.f32 %v3390, %v3605
      %v3641 = vmul.f32 %v3392, %v3606
      %v3642 = vmul.f32 %v3394, %v3606
      %v3643 = vmul.f32 %v3396, %v3607
      %v3644 = vmul.f32 %v3398, %v3607
      %v3645 = vmul.f32 %v3400, %v3608
      %v3646 = vmul.f32 %v3402, %v3608
      %v3647 = vmul.f32 %v3404, %v3609
      %v3648 = vmul.f32 %v3406, %v3609
      %v3649 = vmul.f32 %v3408, %v3610
      %v3650 = vmul.f32 %v3410, %v3610
      %v3651 = vmul.f32 %v3412, %v3611
      %v3652 = vmul.f32 %v3414, %v3611
      %v3653 = vmul.f32 %v3416, %v3612
      %v3654 = vmul.f32 %v3418, %v3612
      %v3655 = vmul.f32 %v3420, %v3613
      %v3656 = vmul.f32 %v3422, %v3613
      %v3657 = vmul.f32 %v3424, %v3614
      %v3658 = vmul.f32 %v3426, %v3614
      %v3659 = vmul.f32 %v3428, %v3615
      %v3660 = vmul.f32 %v3430, %v3615
      %v3661 = vmul.f32 %v3432, %v3616
      %v3662 = vmul.f32 %v3434, %v3616
      %v3663 = vmul.f32 %v3436, %v3617
      %v3664 = vmul.f32 %v3438, %v3617
      %v3665 = vmul.f32 %v3440, %v3618
      %v3666 = vmul.f32 %v3442, %v3618
      %v3667 = vmul.f32 %v3444, %v3619
      %v3668 = vmul.f32 %v3446, %v3619
      %v3669 = vmul.f32 %v3448, %v3620
      %v3670 = vmul.f32 %v3450, %v3620
      %v3671 = vmul.f32 %v3452, %v3621
      %v3672 = vmul.f32 %v3454, %v3621
      %v3673 = vmul.f32 %v3456, %v3622
      %v3674 = vmul.f32 %v3458, %v3622
      %v3675 = vmul.f32 %v3460, %v3623
      %v3676 = vmul.f32 %v3462, %v3623
      %v3677 = vmul.f32 %v3464, %v3624
      %v3678 = vmul.f32 %v3466, %v3624
      %v3679 = vmul.f32 %v3468, %v3625
      %v3680 = vmul.f32 %v3470, %v3625
      %v3681 = vmul.f32 %v3472, %v3626
      %v3682 = vmul.f32 %v3474, %v3626
      %v3683 = vmul.f32 %v3476, %v3627
      %v3684 = vmul.f32 %v3478, %v3627
      %v3685 = vmul.f32 %v3480, %v3628
      %v3686 = vmul.f32 %v3482, %v3628
      %v3687 = vmul.f32 %v3484, %v3629
      %v3688 = vmul.f32 %v3486, %v3629
      %v3689 = vmul.f32 %v3488, %v3630
      %v3690 = vmul.f32 %v3490, %v3630
      %v3691 = vmul.f32 %v3492, %v3631
      %v3692 = vmul.f32 %v3494, %v3631
      %v3693 = vmul.f32 %v3496, %v3632
      %v3694 = vmul.f32 %v3498, %v3632
      %v3695 = vmul.f32 %v3500, %v3633
      %v3696 = vmul.f32 %v3502, %v3633
      %v3697 = vmul.f32 %v3504, %v3634
      %v3698 = vmul.f32 %v3506, %v3634
      %v3699 = vadd.f32 %v2947, %v509
      %v3700 = vadd.f32 %v3060, %v510
      %v3701 = vadd.f32 %v2950, %v511
      %v3702 = vadd.f32 %v3063, %v512
      %v3703 = vadd.f32 %v2953, %v513
      %v3704 = vadd.f32 %v3066, %v514
      %v3705 = vadd.f32 %v2956, %v515
      %v3706 = vadd.f32 %v3069, %v516
      %v3707 = vadd.f32 %v2959, %v517
      %v3708 = vadd.f32 %v3072, %v518
      %v3709 = vadd.f32 %v2962, %v519
      %v3710 = vadd.f32 %v3075, %v520
      %v3711 = vadd.f32 %v2965, %v521
      %v3712 = vadd.f32 %v3078, %v522
      %v3713 = vadd.f32 %v2968, %v523
      %v3714 = vadd.f32 %v3081, %v524
      %v3715 = vadd.f32 %v2971, %v525
      %v3716 = vadd.f32 %v3084, %v526
      %v3717 = vadd.f32 %v2974, %v527
      %v3718 = vadd.f32 %v3087, %v528
      %v3719 = vadd.f32 %v2977, %v529
      %v3720 = vadd.f32 %v3090, %v530
      %v3721 = vadd.f32 %v2980, %v531
      %v3722 = vadd.f32 %v3093, %v532
      %v3723 = vadd.f32 %v2983, %v533
      %v3724 = vadd.f32 %v3096, %v534
      %v3725 = vadd.f32 %v2986, %v535
      %v3726 = vadd.f32 %v3099, %v536
      %v3727 = vadd.f32 %v2989, %v537
      %v3728 = vadd.f32 %v3102, %v538
      %v3729 = vadd.f32 %v2992, %v539
      %v3730 = vadd.f32 %v3105, %v540
      %v3731 = vadd.f32 %v2995, %v541
      %v3732 = vadd.f32 %v3108, %v542
      %v3733 = vadd.f32 %v2998, %v543
      %v3734 = vadd.f32 %v3111, %v544
      %v3735 = vadd.f32 %v3001, %v545
      %v3736 = vadd.f32 %v3114, %v546
      %v3737 = vadd.f32 %v3004, %v547
      %v3738 = vadd.f32 %v3117, %v548
      %v3739 = vadd.f32 %v3007, %v549
      %v3740 = vadd.f32 %v3120, %v550
      %v3741 = vadd.f32 %v3010, %v551
      %v3742 = vadd.f32 %v3123, %v552
      %v3743 = vadd.f32 %v3013, %v553
      %v3744 = vadd.f32 %v3126, %v554
      %v3745 = vadd.f32 %v3016, %v555
      %v3746 = vadd.f32 %v3129, %v556
      %v3747 = vadd.f32 %v3019, %v557
      %v3748 = vadd.f32 %v3132, %v558
      %v3749 = vadd.f32 %v3022, %v559
      %v3750 = vadd.f32 %v3135, %v560
      %v3751 = vadd.f32 %v3025, %v561
      %v3752 = vadd.f32 %v3138, %v562
      %v3753 = vadd.f32 %v3028, %v563
      %v3754 = vadd.f32 %v3141, %v564
      %v3755 = vadd.f32 %v3031, %v565
      %v3756 = vadd.f32 %v3144, %v566
      %v3757 = vadd.f32 %v3034, %v567
      %v3758 = vadd.f32 %v3147, %v568
      %v3759 = vadd.f32 %v3037, %v569
      %v3760 = vadd.f32 %v3150, %v570
      %v3761 = vadd.f32 %v3040, %v571
      %v3762 = vadd.f32 %v3153, %v572
      %v3763 = vmax.f32 %v3699, %v3700
      %3764 = vmax.xlane.f32.xlu0 %v3763
      %v3765 = vpop.xlane.xlu0 %3764
      %v3766 = vmax.f32 %v3701, %v3702
      %3767 = vmax.xlane.f32.xlu0 %v3766
      %v3768 = vpop.xlane.xlu0 %3767
      %v3769 = vmax.f32 %v3703, %v3704
      %3770 = vmax.xlane.f32.xlu0 %v3769
      %v3771 = vpop.xlane.xlu0 %3770
      %v3772 = vmax.f32 %v3705, %v3706
      %3773 = vmax.xlane.f32.xlu0 %v3772
      %v3774 = vpop.xlane.xlu0 %3773
      %v3775 = vmax.f32 %v3707, %v3708
      %3776 = vmax.xlane.f32.xlu0 %v3775
      %v3777 = vpop.xlane.xlu0 %3776
      %v3778 = vmax.f32 %v3709, %v3710
      %3779 = vmax.xlane.f32.xlu0 %v3778
      %v3780 = vpop.xlane.xlu0 %3779
      %v3781 = vmax.f32 %v3711, %v3712
      %3782 = vmax.xlane.f32.xlu0 %v3781
      %v3783 = vpop.xlane.xlu0 %3782
      %v3784 = vmax.f32 %v3713, %v3714
      %3785 = vmax.xlane.f32.xlu0 %v3784
      %v3786 = vpop.xlane.xlu0 %3785
      %v3787 = vmax.f32 %v3715, %v3716
      %3788 = vmax.xlane.f32.xlu0 %v3787
      %v3789 = vpop.xlane.xlu0 %3788
      %v3790 = vmax.f32 %v3717, %v3718
      %3791 = vmax.xlane.f32.xlu0 %v3790
      %v3792 = vpop.xlane.xlu0 %3791
      %v3793 = vmax.f32 %v3719, %v3720
      %3794 = vmax.xlane.f32.xlu0 %v3793
      %v3795 = vpop.xlane.xlu0 %3794
      %v3796 = vmax.f32 %v3721, %v3722
      %3797 = vmax.xlane.f32.xlu0 %v3796
      %v3798 = vpop.xlane.xlu0 %3797
      %v3799 = vmax.f32 %v3723, %v3724
      %3800 = vmax.xlane.f32.xlu0 %v3799
      %v3801 = vpop.xlane.xlu0 %3800
      %v3802 = vmax.f32 %v3725, %v3726
      %3803 = vmax.xlane.f32.xlu0 %v3802
      %v3804 = vpop.xlane.xlu0 %3803
      %v3805 = vmax.f32 %v3727, %v3728
      %3806 = vmax.xlane.f32.xlu0 %v3805
      %v3807 = vpop.xlane.xlu0 %3806
      %v3808 = vmax.f32 %v3729, %v3730
      %3809 = vmax.xlane.f32.xlu0 %v3808
      %v3810 = vpop.xlane.xlu0 %3809
      %v3811 = vmax.f32 %v3731, %v3732
      %3812 = vmax.xlane.f32.xlu0 %v3811
      %v3813 = vpop.xlane.xlu0 %3812
      %v3814 = vmax.f32 %v3733, %v3734
      %3815 = vmax.xlane.f32.xlu0 %v3814
      %v3816 = vpop.xlane.xlu0 %3815
      %v3817 = vmax.f32 %v3735, %v3736
      %3818 = vmax.xlane.f32.xlu0 %v3817
      %v3819 = vpop.xlane.xlu0 %3818
      %v3820 = vmax.f32 %v3737, %v3738
      %3821 = vmax.xlane.f32.xlu0 %v3820
      %v3822 = vpop.xlane.xlu0 %3821
      %v3823 = vmax.f32 %v3739, %v3740
      %3824 = vmax.xlane.f32.xlu0 %v3823
      %v3825 = vpop.xlane.xlu0 %3824
      %v3826 = vmax.f32 %v3741, %v3742
      %3827 = vmax.xlane.f32.xlu0 %v3826
      %v3828 = vpop.xlane.xlu0 %3827
      %v3829 = vmax.f32 %v3743, %v3744
      %3830 = vmax.xlane.f32.xlu0 %v3829
      %v3831 = vpop.xlane.xlu0 %3830
      %v3832 = vmax.f32 %v3745, %v3746
      %3833 = vmax.xlane.f32.xlu0 %v3832
      %v3834 = vpop.xlane.xlu0 %3833
      %v3835 = vmax.f32 %v3747, %v3748
      %3836 = vmax.xlane.f32.xlu0 %v3835
      %v3837 = vpop.xlane.xlu0 %3836
      %v3838 = vmax.f32 %v3749, %v3750
      %3839 = vmax.xlane.f32.xlu0 %v3838
      %v3840 = vpop.xlane.xlu0 %3839
      %v3841 = vmax.f32 %v3751, %v3752
      %3842 = vmax.xlane.f32.xlu0 %v3841
      %v3843 = vpop.xlane.xlu0 %3842
      %v3844 = vmax.f32 %v3753, %v3754
      %3845 = vmax.xlane.f32.xlu0 %v3844
      %v3846 = vpop.xlane.xlu0 %3845
      %v3847 = vmax.f32 %v3755, %v3756
      %3848 = vmax.xlane.f32.xlu0 %v3847
      %v3849 = vpop.xlane.xlu0 %3848
      %v3850 = vmax.f32 %v3757, %v3758
      %3851 = vmax.xlane.f32.xlu0 %v3850
      %v3852 = vpop.xlane.xlu0 %3851
      %v3853 = vmax.f32 %v3759, %v3760
      %3854 = vmax.xlane.f32.xlu0 %v3853
      %v3855 = vpop.xlane.xlu0 %3854
      %v3856 = vmax.f32 %v3761, %v3762
      %3857 = vmax.xlane.f32.xlu0 %v3856
      %v3858 = vpop.xlane.xlu0 %3857
      %v3859 = vsub.f32 %v3699, %v3765
      %v3860 = vsub.f32 %v3700, %v3765
      %v3861 = vsub.f32 %v3701, %v3768
      %v3862 = vsub.f32 %v3702, %v3768
      %v3863 = vsub.f32 %v3703, %v3771
      %v3864 = vsub.f32 %v3704, %v3771
      %v3865 = vsub.f32 %v3705, %v3774
      %v3866 = vsub.f32 %v3706, %v3774
      %v3867 = vsub.f32 %v3707, %v3777
      %v3868 = vsub.f32 %v3708, %v3777
      %v3869 = vsub.f32 %v3709, %v3780
      %v3870 = vsub.f32 %v3710, %v3780
      %v3871 = vsub.f32 %v3711, %v3783
      %v3872 = vsub.f32 %v3712, %v3783
      %v3873 = vsub.f32 %v3713, %v3786
      %v3874 = vsub.f32 %v3714, %v3786
      %v3875 = vsub.f32 %v3715, %v3789
      %v3876 = vsub.f32 %v3716, %v3789
      %v3877 = vsub.f32 %v3717, %v3792
      %v3878 = vsub.f32 %v3718, %v3792
      %v3879 = vsub.f32 %v3719, %v3795
      %v3880 = vsub.f32 %v3720, %v3795
      %v3881 = vsub.f32 %v3721, %v3798
      %v3882 = vsub.f32 %v3722, %v3798
      %v3883 = vsub.f32 %v3723, %v3801
      %v3884 = vsub.f32 %v3724, %v3801
      %v3885 = vsub.f32 %v3725, %v3804
      %v3886 = vsub.f32 %v3726, %v3804
      %v3887 = vsub.f32 %v3727, %v3807
      %v3888 = vsub.f32 %v3728, %v3807
      %v3889 = vsub.f32 %v3729, %v3810
      %v3890 = vsub.f32 %v3730, %v3810
      %v3891 = vsub.f32 %v3731, %v3813
      %v3892 = vsub.f32 %v3732, %v3813
      %v3893 = vsub.f32 %v3733, %v3816
      %v3894 = vsub.f32 %v3734, %v3816
      %v3895 = vsub.f32 %v3735, %v3819
      %v3896 = vsub.f32 %v3736, %v3819
      %v3897 = vsub.f32 %v3737, %v3822
      %v3898 = vsub.f32 %v3738, %v3822
      %v3899 = vsub.f32 %v3739, %v3825
      %v3900 = vsub.f32 %v3740, %v3825
      %v3901 = vsub.f32 %v3741, %v3828
      %v3902 = vsub.f32 %v3742, %v3828
      %v3903 = vsub.f32 %v3743, %v3831
      %v3904 = vsub.f32 %v3744, %v3831
      %v3905 = vsub.f32 %v3745, %v3834
      %v3906 = vsub.f32 %v3746, %v3834
      %v3907 = vsub.f32 %v3747, %v3837
      %v3908 = vsub.f32 %v3748, %v3837
      %v3909 = vsub.f32 %v3749, %v3840
      %v3910 = vsub.f32 %v3750, %v3840
      %v3911 = vsub.f32 %v3751, %v3843
      %v3912 = vsub.f32 %v3752, %v3843
      %v3913 = vsub.f32 %v3753, %v3846
      %v3914 = vsub.f32 %v3754, %v3846
      %v3915 = vsub.f32 %v3755, %v3849
      %v3916 = vsub.f32 %v3756, %v3849
      %v3917 = vsub.f32 %v3757, %v3852
      %v3918 = vsub.f32 %v3758, %v3852
      %v3919 = vsub.f32 %v3759, %v3855
      %v3920 = vsub.f32 %v3760, %v3855
      %v3921 = vsub.f32 %v3761, %v3858
      %v3922 = vsub.f32 %v3762, %v3858
      %v3923 = vmul.f32 %v3859, 1.442695
      %v3924 = vpow.pop %v3923
      %v3925 = vmul.f32 %v3860, 1.442695
      %v3926 = vpow.pop %v3925
      %v3927 = vmul.f32 %v3861, 1.442695
      %v3928 = vpow.pop %v3927
      %v3929 = vmul.f32 %v3862, 1.442695
      %v3930 = vpow.pop %v3929
      %v3931 = vmul.f32 %v3863, 1.442695
      %v3932 = vpow.pop %v3931
      %v3933 = vmul.f32 %v3864, 1.442695
      %v3934 = vpow.pop %v3933
      %v3935 = vmul.f32 %v3865, 1.442695
      %v3936 = vpow.pop %v3935
      %v3937 = vmul.f32 %v3866, 1.442695
      %v3938 = vpow.pop %v3937
      %v3939 = vmul.f32 %v3867, 1.442695
      %v3940 = vpow.pop %v3939
      %v3941 = vmul.f32 %v3868, 1.442695
      %v3942 = vpow.pop %v3941
      %v3943 = vmul.f32 %v3869, 1.442695
      %v3944 = vpow.pop %v3943
      %v3945 = vmul.f32 %v3870, 1.442695
      %v3946 = vpow.pop %v3945
      %v3947 = vmul.f32 %v3871, 1.442695
      %v3948 = vpow.pop %v3947
      %v3949 = vmul.f32 %v3872, 1.442695
      %v3950 = vpow.pop %v3949
      %v3951 = vmul.f32 %v3873, 1.442695
      %v3952 = vpow.pop %v3951
      %v3953 = vmul.f32 %v3874, 1.442695
      %v3954 = vpow.pop %v3953
      %v3955 = vmul.f32 %v3875, 1.442695
      %v3956 = vpow.pop %v3955
      %v3957 = vmul.f32 %v3876, 1.442695
      %v3958 = vpow.pop %v3957
      %v3959 = vmul.f32 %v3877, 1.442695
      %v3960 = vpow.pop %v3959
      %v3961 = vmul.f32 %v3878, 1.442695
      %v3962 = vpow.pop %v3961
      %v3963 = vmul.f32 %v3879, 1.442695
      %v3964 = vpow.pop %v3963
      %v3965 = vmul.f32 %v3880, 1.442695
      %v3966 = vpow.pop %v3965
      %v3967 = vmul.f32 %v3881, 1.442695
      %v3968 = vpow.pop %v3967
      %v3969 = vmul.f32 %v3882, 1.442695
      %v3970 = vpow.pop %v3969
      %v3971 = vmul.f32 %v3883, 1.442695
      %v3972 = vpow.pop %v3971
      %v3973 = vmul.f32 %v3884, 1.442695
      %v3974 = vpow.pop %v3973
      %v3975 = vmul.f32 %v3885, 1.442695
      %v3976 = vpow.pop %v3975
      %v3977 = vmul.f32 %v3886, 1.442695
      %v3978 = vpow.pop %v3977
      %v3979 = vmul.f32 %v3887, 1.442695
      %v3980 = vpow.pop %v3979
      %v3981 = vmul.f32 %v3888, 1.442695
      %v3982 = vpow.pop %v3981
      %v3983 = vmul.f32 %v3889, 1.442695
      %v3984 = vpow.pop %v3983
      %v3985 = vmul.f32 %v3890, 1.442695
      %v3986 = vpow.pop %v3985
      %v3987 = vmul.f32 %v3891, 1.442695
      %v3988 = vpow.pop %v3987
      %v3989 = vmul.f32 %v3892, 1.442695
      %v3990 = vpow.pop %v3989
      %v3991 = vmul.f32 %v3893, 1.442695
      %v3992 = vpow.pop %v3991
      %v3993 = vmul.f32 %v3894, 1.442695
      %v3994 = vpow.pop %v3993
      %v3995 = vmul.f32 %v3895, 1.442695
      %v3996 = vpow.pop %v3995
      %v3997 = vmul.f32 %v3896, 1.442695
      %v3998 = vpow.pop %v3997
      %v3999 = vmul.f32 %v3897, 1.442695
      %v4000 = vpow.pop %v3999
      %v4001 = vmul.f32 %v3898, 1.442695
      %v4002 = vpow.pop %v4001
      %v4003 = vmul.f32 %v3899, 1.442695
      %v4004 = vpow.pop %v4003
      %v4005 = vmul.f32 %v3900, 1.442695
      %v4006 = vpow.pop %v4005
      %v4007 = vmul.f32 %v3901, 1.442695
      %v4008 = vpow.pop %v4007
      %v4009 = vmul.f32 %v3902, 1.442695
      %v4010 = vpow.pop %v4009
      %v4011 = vmul.f32 %v3903, 1.442695
      %v4012 = vpow.pop %v4011
      %v4013 = vmul.f32 %v3904, 1.442695
      %v4014 = vpow.pop %v4013
      %v4015 = vmul.f32 %v3905, 1.442695
      %v4016 = vpow.pop %v4015
      %v4017 = vmul.f32 %v3906, 1.442695
      %v4018 = vpow.pop %v4017
      %v4019 = vmul.f32 %v3907, 1.442695
      %v4020 = vpow.pop %v4019
      %v4021 = vmul.f32 %v3908, 1.442695
      %v4022 = vpow.pop %v4021
      %v4023 = vmul.f32 %v3909, 1.442695
      %v4024 = vpow.pop %v4023
      %v4025 = vmul.f32 %v3910, 1.442695
      %v4026 = vpow.pop %v4025
      %v4027 = vmul.f32 %v3911, 1.442695
      %v4028 = vpow.pop %v4027
      %v4029 = vmul.f32 %v3912, 1.442695
      %v4030 = vpow.pop %v4029
      %v4031 = vmul.f32 %v3913, 1.442695
      %v4032 = vpow.pop %v4031
      %v4033 = vmul.f32 %v3914, 1.442695
      %v4034 = vpow.pop %v4033
      %v4035 = vmul.f32 %v3915, 1.442695
      %v4036 = vpow.pop %v4035
      %v4037 = vmul.f32 %v3916, 1.442695
      %v4038 = vpow.pop %v4037
      %v4039 = vmul.f32 %v3917, 1.442695
      %v4040 = vpow.pop %v4039
      %v4041 = vmul.f32 %v3918, 1.442695
      %v4042 = vpow.pop %v4041
      %v4043 = vmul.f32 %v3919, 1.442695
      %v4044 = vpow.pop %v4043
      %v4045 = vmul.f32 %v3920, 1.442695
      %v4046 = vpow.pop %v4045
      %v4047 = vmul.f32 %v3921, 1.442695
      %v4048 = vpow.pop %v4047
      %v4049 = vmul.f32 %v3922, 1.442695
      %v4050 = vpow.pop %v4049
      %v4051 = vadd.f32 %v3924, %v3926
      %4052 = vadd.xlane.f32.xlu0 %v4051
      %v4053 = vpop.xlane.xlu0 %4052
      %v4054 = vadd.f32 %v3928, %v3930
      %4055 = vadd.xlane.f32.xlu0 %v4054
      %v4056 = vpop.xlane.xlu0 %4055
      %v4057 = vadd.f32 %v3932, %v3934
      %4058 = vadd.xlane.f32.xlu0 %v4057
      %v4059 = vpop.xlane.xlu0 %4058
      %v4060 = vadd.f32 %v3936, %v3938
      %4061 = vadd.xlane.f32.xlu0 %v4060
      %v4062 = vpop.xlane.xlu0 %4061
      %v4063 = vadd.f32 %v3940, %v3942
      %4064 = vadd.xlane.f32.xlu0 %v4063
      %v4065 = vpop.xlane.xlu0 %4064
      %v4066 = vadd.f32 %v3944, %v3946
      %4067 = vadd.xlane.f32.xlu0 %v4066
      %v4068 = vpop.xlane.xlu0 %4067
      %v4069 = vadd.f32 %v3948, %v3950
      %4070 = vadd.xlane.f32.xlu0 %v4069
      %v4071 = vpop.xlane.xlu0 %4070
      %v4072 = vadd.f32 %v3952, %v3954
      %4073 = vadd.xlane.f32.xlu0 %v4072
      %v4074 = vpop.xlane.xlu0 %4073
      %v4075 = vadd.f32 %v3956, %v3958
      %4076 = vadd.xlane.f32.xlu0 %v4075
      %v4077 = vpop.xlane.xlu0 %4076
      %v4078 = vadd.f32 %v3960, %v3962
      %4079 = vadd.xlane.f32.xlu0 %v4078
      %v4080 = vpop.xlane.xlu0 %4079
      %v4081 = vadd.f32 %v3964, %v3966
      %4082 = vadd.xlane.f32.xlu0 %v4081
      %v4083 = vpop.xlane.xlu0 %4082
      %v4084 = vadd.f32 %v3968, %v3970
      %4085 = vadd.xlane.f32.xlu0 %v4084
      %v4086 = vpop.xlane.xlu0 %4085
      %v4087 = vadd.f32 %v3972, %v3974
      %4088 = vadd.xlane.f32.xlu0 %v4087
      %v4089 = vpop.xlane.xlu0 %4088
      %v4090 = vadd.f32 %v3976, %v3978
      %4091 = vadd.xlane.f32.xlu0 %v4090
      %v4092 = vpop.xlane.xlu0 %4091
      %v4093 = vadd.f32 %v3980, %v3982
      %4094 = vadd.xlane.f32.xlu0 %v4093
      %v4095 = vpop.xlane.xlu0 %4094
      %v4096 = vadd.f32 %v3984, %v3986
      %4097 = vadd.xlane.f32.xlu0 %v4096
      %v4098 = vpop.xlane.xlu0 %4097
      %v4099 = vadd.f32 %v3988, %v3990
      %4100 = vadd.xlane.f32.xlu0 %v4099
      %v4101 = vpop.xlane.xlu0 %4100
      %v4102 = vadd.f32 %v3992, %v3994
      %4103 = vadd.xlane.f32.xlu0 %v4102
      %v4104 = vpop.xlane.xlu0 %4103
      %v4105 = vadd.f32 %v3996, %v3998
      %4106 = vadd.xlane.f32.xlu0 %v4105
      %v4107 = vpop.xlane.xlu0 %4106
      %v4108 = vadd.f32 %v4000, %v4002
      %4109 = vadd.xlane.f32.xlu0 %v4108
      %v4110 = vpop.xlane.xlu0 %4109
      %v4111 = vadd.f32 %v4004, %v4006
      %4112 = vadd.xlane.f32.xlu0 %v4111
      %v4113 = vpop.xlane.xlu0 %4112
      %v4114 = vadd.f32 %v4008, %v4010
      %4115 = vadd.xlane.f32.xlu0 %v4114
      %v4116 = vpop.xlane.xlu0 %4115
      %v4117 = vadd.f32 %v4012, %v4014
      %4118 = vadd.xlane.f32.xlu0 %v4117
      %v4119 = vpop.xlane.xlu0 %4118
      %v4120 = vadd.f32 %v4016, %v4018
      %4121 = vadd.xlane.f32.xlu0 %v4120
      %v4122 = vpop.xlane.xlu0 %4121
      %v4123 = vadd.f32 %v4020, %v4022
      %4124 = vadd.xlane.f32.xlu0 %v4123
      %v4125 = vpop.xlane.xlu0 %4124
      %v4126 = vadd.f32 %v4024, %v4026
      %4127 = vadd.xlane.f32.xlu0 %v4126
      %v4128 = vpop.xlane.xlu0 %4127
      %v4129 = vadd.f32 %v4028, %v4030
      %4130 = vadd.xlane.f32.xlu0 %v4129
      %v4131 = vpop.xlane.xlu0 %4130
      %v4132 = vadd.f32 %v4032, %v4034
      %4133 = vadd.xlane.f32.xlu0 %v4132
      %v4134 = vpop.xlane.xlu0 %4133
      %v4135 = vadd.f32 %v4036, %v4038
      %4136 = vadd.xlane.f32.xlu0 %v4135
      %v4137 = vpop.xlane.xlu0 %4136
      %v4138 = vadd.f32 %v4040, %v4042
      %4139 = vadd.xlane.f32.xlu0 %v4138
      %v4140 = vpop.xlane.xlu0 %4139
      %v4141 = vadd.f32 %v4044, %v4046
      %4142 = vadd.xlane.f32.xlu0 %v4141
      %v4143 = vpop.xlane.xlu0 %4142
      %v4144 = vadd.f32 %v4048, %v4050
      %4145 = vadd.xlane.f32.xlu0 %v4144
      %v4146 = vpop.xlane.xlu0 %4145
      %v4147 = vrcp.pop %v4053
      %v4148 = vrcp.pop %v4056
      %v4149 = vrcp.pop %v4059
      %v4150 = vrcp.pop %v4062
      %v4151 = vrcp.pop %v4065
      %v4152 = vrcp.pop %v4068
      %v4153 = vrcp.pop %v4071
      %v4154 = vrcp.pop %v4074
      %v4155 = vrcp.pop %v4077
      %v4156 = vrcp.pop %v4080
      %v4157 = vrcp.pop %v4083
      %v4158 = vrcp.pop %v4086
      %v4159 = vrcp.pop %v4089
      %v4160 = vrcp.pop %v4092
      %v4161 = vrcp.pop %v4095
      %v4162 = vrcp.pop %v4098
      %v4163 = vrcp.pop %v4101
      %v4164 = vrcp.pop %v4104
      %v4165 = vrcp.pop %v4107
      %v4166 = vrcp.pop %v4110
      %v4167 = vrcp.pop %v4113
      %v4168 = vrcp.pop %v4116
      %v4169 = vrcp.pop %v4119
      %v4170 = vrcp.pop %v4122
      %v4171 = vrcp.pop %v4125
      %v4172 = vrcp.pop %v4128
      %v4173 = vrcp.pop %v4131
      %v4174 = vrcp.pop %v4134
      %v4175 = vrcp.pop %v4137
      %v4176 = vrcp.pop %v4140
      %v4177 = vrcp.pop %v4143
      %v4178 = vrcp.pop %v4146
      %v4179 = vmul.f32 %v3924, %v4147
      %v4180 = vmul.f32 %v3926, %v4147
      %v4181 = vmul.f32 %v3928, %v4148
      %v4182 = vmul.f32 %v3930, %v4148
      %v4183 = vmul.f32 %v3932, %v4149
      %v4184 = vmul.f32 %v3934, %v4149
      %v4185 = vmul.f32 %v3936, %v4150
      %v4186 = vmul.f32 %v3938, %v4150
      %v4187 = vmul.f32 %v3940, %v4151
      %v4188 = vmul.f32 %v3942, %v4151
      %v4189 = vmul.f32 %v3944, %v4152
      %v4190 = vmul.f32 %v3946, %v4152
      %v4191 = vmul.f32 %v3948, %v4153
      %v4192 = vmul.f32 %v3950, %v4153
      %v4193 = vmul.f32 %v3952, %v4154
      %v4194 = vmul.f32 %v3954, %v4154
      %v4195 = vmul.f32 %v3956, %v4155
      %v4196 = vmul.f32 %v3958, %v4155
      %v4197 = vmul.f32 %v3960, %v4156
      %v4198 = vmul.f32 %v3962, %v4156
      %v4199 = vmul.f32 %v3964, %v4157
      %v4200 = vmul.f32 %v3966, %v4157
      %v4201 = vmul.f32 %v3968, %v4158
      %v4202 = vmul.f32 %v3970, %v4158
      %v4203 = vmul.f32 %v3972, %v4159
      %v4204 = vmul.f32 %v3974, %v4159
      %v4205 = vmul.f32 %v3976, %v4160
      %v4206 = vmul.f32 %v3978, %v4160
      %v4207 = vmul.f32 %v3980, %v4161
      %v4208 = vmul.f32 %v3982, %v4161
      %v4209 = vmul.f32 %v3984, %v4162
      %v4210 = vmul.f32 %v3986, %v4162
      %v4211 = vmul.f32 %v3988, %v4163
      %v4212 = vmul.f32 %v3990, %v4163
      %v4213 = vmul.f32 %v3992, %v4164
      %v4214 = vmul.f32 %v3994, %v4164
      %v4215 = vmul.f32 %v3996, %v4165
      %v4216 = vmul.f32 %v3998, %v4165
      %v4217 = vmul.f32 %v4000, %v4166
      %v4218 = vmul.f32 %v4002, %v4166
      %v4219 = vmul.f32 %v4004, %v4167
      %v4220 = vmul.f32 %v4006, %v4167
      %v4221 = vmul.f32 %v4008, %v4168
      %v4222 = vmul.f32 %v4010, %v4168
      %v4223 = vmul.f32 %v4012, %v4169
      %v4224 = vmul.f32 %v4014, %v4169
      %v4225 = vmul.f32 %v4016, %v4170
      %v4226 = vmul.f32 %v4018, %v4170
      %v4227 = vmul.f32 %v4020, %v4171
      %v4228 = vmul.f32 %v4022, %v4171
      %v4229 = vmul.f32 %v4024, %v4172
      %v4230 = vmul.f32 %v4026, %v4172
      %v4231 = vmul.f32 %v4028, %v4173
      %v4232 = vmul.f32 %v4030, %v4173
      %v4233 = vmul.f32 %v4032, %v4174
      %v4234 = vmul.f32 %v4034, %v4174
      %v4235 = vmul.f32 %v4036, %v4175
      %v4236 = vmul.f32 %v4038, %v4175
      %v4237 = vmul.f32 %v4040, %v4176
      %v4238 = vmul.f32 %v4042, %v4176
      %v4239 = vmul.f32 %v4044, %v4177
      %v4240 = vmul.f32 %v4046, %v4177
      %v4241 = vmul.f32 %v4048, %v4178
      %v4242 = vmul.f32 %v4050, %v4178
      %v4243 = vadd.f32 %v3635, %v4179
      %v4244 = vadd.f32 %v3636, %v4180
      %v4245 = vadd.f32 %v3637, %v4181
      %v4246 = vadd.f32 %v3638, %v4182
      %v4247 = vadd.f32 %v3639, %v4183
      %v4248 = vadd.f32 %v3640, %v4184
      %v4249 = vadd.f32 %v3641, %v4185
      %v4250 = vadd.f32 %v3642, %v4186
      %v4251 = vadd.f32 %v3643, %v4187
      %v4252 = vadd.f32 %v3644, %v4188
      %v4253 = vadd.f32 %v3645, %v4189
      %v4254 = vadd.f32 %v3646, %v4190
      %v4255 = vadd.f32 %v3647, %v4191
      %v4256 = vadd.f32 %v3648, %v4192
      %v4257 = vadd.f32 %v3649, %v4193
      %v4258 = vadd.f32 %v3650, %v4194
      %v4259 = vadd.f32 %v3651, %v4195
      %v4260 = vadd.f32 %v3652, %v4196
      %v4261 = vadd.f32 %v3653, %v4197
      %v4262 = vadd.f32 %v3654, %v4198
      %v4263 = vadd.f32 %v3655, %v4199
      %v4264 = vadd.f32 %v3656, %v4200
      %v4265 = vadd.f32 %v3657, %v4201
      %v4266 = vadd.f32 %v3658, %v4202
      %v4267 = vadd.f32 %v3659, %v4203
      %v4268 = vadd.f32 %v3660, %v4204
      %v4269 = vadd.f32 %v3661, %v4205
      %v4270 = vadd.f32 %v3662, %v4206
      %v4271 = vadd.f32 %v3663, %v4207
      %v4272 = vadd.f32 %v3664, %v4208
      %v4273 = vadd.f32 %v3665, %v4209
      %v4274 = vadd.f32 %v3666, %v4210
      %v4275 = vadd.f32 %v3667, %v4211
      %v4276 = vadd.f32 %v3668, %v4212
      %v4277 = vadd.f32 %v3669, %v4213
      %v4278 = vadd.f32 %v3670, %v4214
      %v4279 = vadd.f32 %v3671, %v4215
      %v4280 = vadd.f32 %v3672, %v4216
      %v4281 = vadd.f32 %v3673, %v4217
      %v4282 = vadd.f32 %v3674, %v4218
      %v4283 = vadd.f32 %v3675, %v4219
      %v4284 = vadd.f32 %v3676, %v4220
      %v4285 = vadd.f32 %v3677, %v4221
      %v4286 = vadd.f32 %v3678, %v4222
      %v4287 = vadd.f32 %v3679, %v4223
      %v4288 = vadd.f32 %v3680, %v4224
      %v4289 = vadd.f32 %v3681, %v4225
      %v4290 = vadd.f32 %v3682, %v4226
      %v4291 = vadd.f32 %v3683, %v4227
      %v4292 = vadd.f32 %v3684, %v4228
      %v4293 = vadd.f32 %v3685, %v4229
      %v4294 = vadd.f32 %v3686, %v4230
      %v4295 = vadd.f32 %v3687, %v4231
      %v4296 = vadd.f32 %v3688, %v4232
      %v4297 = vadd.f32 %v3689, %v4233
      %v4298 = vadd.f32 %v3690, %v4234
      %v4299 = vadd.f32 %v3691, %v4235
      %v4300 = vadd.f32 %v3692, %v4236
      %v4301 = vadd.f32 %v3693, %v4237
      %v4302 = vadd.f32 %v3694, %v4238
      %v4303 = vadd.f32 %v3695, %v4239
      %v4304 = vadd.f32 %v3696, %v4240
      %v4305 = vadd.f32 %v3697, %v4241
      %v4306 = vadd.f32 %v3698, %v4242
      %4307 = vmatpush.msra.mxu0 %v2879
      %4308 = vmatpush.msra.mxu0 %v2876
      %4309 = vmatpush.msra.mxu0 %v2873
      %4310 = vmatpush.msra.mxu0 %v2870
      %4311 = vmatpush.msra.mxu0 %v2867
      %4312 = vmatpush.msra.mxu0 %v2864
      %4313 = vmatpush.msra.mxu0 %v2861
      %4314 = vmatpush.msra.mxu0 %v2858
      %4315 = vmatpush.msra.mxu0 %v2855
      %4316 = vmatpush.msra.mxu0 %v2852
      %4317 = vmatpush.msra.mxu0 %v2849
      %4318 = vmatpush.msra.mxu0 %v2846
      %4319 = vmatpush.msra.mxu0 %v2843
      %4320 = vmatpush.msra.mxu0 %v2840
      %4321 = vmatpush.msra.mxu0 %v2837
      %4322 = vmatpush.msra.mxu0 %v2834
      %4323 = vmatmul.f32.gmra.mxu0 %v4243
      %v4324 = vpop.f32.mrf.mxu0
      %v4325 = vadd.f32 0.0, %v4324
      %4326 = vmatmul.f32.gmra.mxu0 %v4245
      %v4327 = vpop.f32.mrf.mxu0
      %v4328 = vadd.f32 0.0, %v4327
      %4329 = vmatmul.f32.gmra.mxu0 %v4247
      %v4330 = vpop.f32.mrf.mxu0
      %v4331 = vadd.f32 0.0, %v4330
      %4332 = vmatmul.f32.gmra.mxu0 %v4249
      %v4333 = vpop.f32.mrf.mxu0
      %v4334 = vadd.f32 0.0, %v4333
      %4335 = vmatmul.f32.gmra.mxu0 %v4251
      %v4336 = vpop.f32.mrf.mxu0
      %v4337 = vadd.f32 0.0, %v4336
      %4338 = vmatmul.f32.gmra.mxu0 %v4253
      %v4339 = vpop.f32.mrf.mxu0
      %v4340 = vadd.f32 0.0, %v4339
      %4341 = vmatmul.f32.gmra.mxu0 %v4255
      %v4342 = vpop.f32.mrf.mxu0
      %v4343 = vadd.f32 0.0, %v4342
      %4344 = vmatmul.f32.gmra.mxu0 %v4257
      %v4345 = vpop.f32.mrf.mxu0
      %v4346 = vadd.f32 0.0, %v4345
      %4347 = vmatmul.f32.gmra.mxu0 %v4259
      %v4348 = vpop.f32.mrf.mxu0
      %v4349 = vadd.f32 0.0, %v4348
      %4350 = vmatmul.f32.gmra.mxu0 %v4261
      %v4351 = vpop.f32.mrf.mxu0
      %v4352 = vadd.f32 0.0, %v4351
      %4353 = vmatmul.f32.gmra.mxu0 %v4263
      %v4354 = vpop.f32.mrf.mxu0
      %v4355 = vadd.f32 0.0, %v4354
      %4356 = vmatmul.f32.gmra.mxu0 %v4265
      %v4357 = vpop.f32.mrf.mxu0
      %v4358 = vadd.f32 0.0, %v4357
      %4359 = vmatmul.f32.gmra.mxu0 %v4267
      %v4360 = vpop.f32.mrf.mxu0
      %v4361 = vadd.f32 0.0, %v4360
      %4362 = vmatmul.f32.gmra.mxu0 %v4269
      %v4363 = vpop.f32.mrf.mxu0
      %v4364 = vadd.f32 0.0, %v4363
      %4365 = vmatmul.f32.gmra.mxu0 %v4271
      %v4366 = vpop.f32.mrf.mxu0
      %v4367 = vadd.f32 0.0, %v4366
      %4368 = vmatmul.f32.gmra.mxu0 %v4273
      %v4369 = vpop.f32.mrf.mxu0
      %v4370 = vadd.f32 0.0, %v4369
      %4371 = vmatmul.f32.gmra.mxu0 %v4275
      %v4372 = vpop.f32.mrf.mxu0
      %v4373 = vadd.f32 0.0, %v4372
      %4374 = vmatmul.f32.gmra.mxu0 %v4277
      %v4375 = vpop.f32.mrf.mxu0
      %v4376 = vadd.f32 0.0, %v4375
      %4377 = vmatmul.f32.gmra.mxu0 %v4279
      %v4378 = vpop.f32.mrf.mxu0
      %v4379 = vadd.f32 0.0, %v4378
      %4380 = vmatmul.f32.gmra.mxu0 %v4281
      %v4381 = vpop.f32.mrf.mxu0
      %v4382 = vadd.f32 0.0, %v4381
      %4383 = vmatmul.f32.gmra.mxu0 %v4283
      %v4384 = vpop.f32.mrf.mxu0
      %v4385 = vadd.f32 0.0, %v4384
      %4386 = vmatmul.f32.gmra.mxu0 %v4285
      %v4387 = vpop.f32.mrf.mxu0
      %v4388 = vadd.f32 0.0, %v4387
      %4389 = vmatmul.f32.gmra.mxu0 %v4287
      %v4390 = vpop.f32.mrf.mxu0
      %v4391 = vadd.f32 0.0, %v4390
      %4392 = vmatmul.f32.gmra.mxu0 %v4289
      %v4393 = vpop.f32.mrf.mxu0
      %v4394 = vadd.f32 0.0, %v4393
      %4395 = vmatmul.f32.gmra.mxu0 %v4291
      %v4396 = vpop.f32.mrf.mxu0
      %v4397 = vadd.f32 0.0, %v4396
      %4398 = vmatmul.f32.gmra.mxu0 %v4293
      %v4399 = vpop.f32.mrf.mxu0
      %v4400 = vadd.f32 0.0, %v4399
      %4401 = vmatmul.f32.gmra.mxu0 %v4295
      %v4402 = vpop.f32.mrf.mxu0
      %v4403 = vadd.f32 0.0, %v4402
      %4404 = vmatmul.f32.gmra.mxu0 %v4297
      %v4405 = vpop.f32.mrf.mxu0
      %v4406 = vadd.f32 0.0, %v4405
      %4407 = vmatmul.f32.gmra.mxu0 %v4299
      %v4408 = vpop.f32.mrf.mxu0
      %v4409 = vadd.f32 0.0, %v4408
      %4410 = vmatmul.f32.gmra.mxu0 %v4301
      %v4411 = vpop.f32.mrf.mxu0
      %v4412 = vadd.f32 0.0, %v4411
      %4413 = vmatmul.f32.gmra.mxu0 %v4303
      %v4414 = vpop.f32.mrf.mxu0
      %v4415 = vadd.f32 0.0, %v4414
      %4416 = vmatmul.f32.gmra.mxu0 %v4305
      %v4417 = vpop.f32.mrf.mxu0
      %v4418 = vadd.f32 0.0, %v4417
      %4419 = vdwg.mxu0
      %4420 = vmatpush.msra.mxu0 %v2927
      %4421 = vmatpush.msra.mxu0 %v2924
      %4422 = vmatpush.msra.mxu0 %v2921
      %4423 = vmatpush.msra.mxu0 %v2918
      %4424 = vmatpush.msra.mxu0 %v2915
      %4425 = vmatpush.msra.mxu0 %v2912
      %4426 = vmatpush.msra.mxu0 %v2909
      %4427 = vmatpush.msra.mxu0 %v2906
      %4428 = vmatpush.msra.mxu0 %v2903
      %4429 = vmatpush.msra.mxu0 %v2900
      %4430 = vmatpush.msra.mxu0 %v2897
      %4431 = vmatpush.msra.mxu0 %v2894
      %4432 = vmatpush.msra.mxu0 %v2891
      %4433 = vmatpush.msra.mxu0 %v2888
      %4434 = vmatpush.msra.mxu0 %v2885
      %4435 = vmatpush.msra.mxu0 %v2882
      %4436 = vmatmul.f32.gmra.mxu0 %v4244
      %v4437 = vpop.f32.mrf.mxu0
      %v4438 = vadd.f32 %v4325, %v4437
      %4439 = vmatmul.f32.gmra.mxu0 %v4246
      %v4440 = vpop.f32.mrf.mxu0
      %v4441 = vadd.f32 %v4328, %v4440
      %4442 = vmatmul.f32.gmra.mxu0 %v4248
      %v4443 = vpop.f32.mrf.mxu0
      %v4444 = vadd.f32 %v4331, %v4443
      %4445 = vmatmul.f32.gmra.mxu0 %v4250
      %v4446 = vpop.f32.mrf.mxu0
      %v4447 = vadd.f32 %v4334, %v4446
      %4448 = vmatmul.f32.gmra.mxu0 %v4252
      %v4449 = vpop.f32.mrf.mxu0
      %v4450 = vadd.f32 %v4337, %v4449
      %4451 = vmatmul.f32.gmra.mxu0 %v4254
      %v4452 = vpop.f32.mrf.mxu0
      %v4453 = vadd.f32 %v4340, %v4452
      %4454 = vmatmul.f32.gmra.mxu0 %v4256
      %v4455 = vpop.f32.mrf.mxu0
      %v4456 = vadd.f32 %v4343, %v4455
      %4457 = vmatmul.f32.gmra.mxu0 %v4258
      %v4458 = vpop.f32.mrf.mxu0
      %v4459 = vadd.f32 %v4346, %v4458
      %4460 = vmatmul.f32.gmra.mxu0 %v4260
      %v4461 = vpop.f32.mrf.mxu0
      %v4462 = vadd.f32 %v4349, %v4461
      %4463 = vmatmul.f32.gmra.mxu0 %v4262
      %v4464 = vpop.f32.mrf.mxu0
      %v4465 = vadd.f32 %v4352, %v4464
      %4466 = vmatmul.f32.gmra.mxu0 %v4264
      %v4467 = vpop.f32.mrf.mxu0
      %v4468 = vadd.f32 %v4355, %v4467
      %4469 = vmatmul.f32.gmra.mxu0 %v4266
      %v4470 = vpop.f32.mrf.mxu0
      %v4471 = vadd.f32 %v4358, %v4470
      %4472 = vmatmul.f32.gmra.mxu0 %v4268
      %v4473 = vpop.f32.mrf.mxu0
      %v4474 = vadd.f32 %v4361, %v4473
      %4475 = vmatmul.f32.gmra.mxu0 %v4270
      %v4476 = vpop.f32.mrf.mxu0
      %v4477 = vadd.f32 %v4364, %v4476
      %4478 = vmatmul.f32.gmra.mxu0 %v4272
      %v4479 = vpop.f32.mrf.mxu0
      %v4480 = vadd.f32 %v4367, %v4479
      %4481 = vmatmul.f32.gmra.mxu0 %v4274
      %v4482 = vpop.f32.mrf.mxu0
      %v4483 = vadd.f32 %v4370, %v4482
      %4484 = vmatmul.f32.gmra.mxu0 %v4276
      %v4485 = vpop.f32.mrf.mxu0
      %v4486 = vadd.f32 %v4373, %v4485
      %4487 = vmatmul.f32.gmra.mxu0 %v4278
      %v4488 = vpop.f32.mrf.mxu0
      %v4489 = vadd.f32 %v4376, %v4488
      %4490 = vmatmul.f32.gmra.mxu0 %v4280
      %v4491 = vpop.f32.mrf.mxu0
      %v4492 = vadd.f32 %v4379, %v4491
      %4493 = vmatmul.f32.gmra.mxu0 %v4282
      %v4494 = vpop.f32.mrf.mxu0
      %v4495 = vadd.f32 %v4382, %v4494
      %4496 = vmatmul.f32.gmra.mxu0 %v4284
      %v4497 = vpop.f32.mrf.mxu0
      %v4498 = vadd.f32 %v4385, %v4497
      %4499 = vmatmul.f32.gmra.mxu0 %v4286
      %v4500 = vpop.f32.mrf.mxu0
      %v4501 = vadd.f32 %v4388, %v4500
      %4502 = vmatmul.f32.gmra.mxu0 %v4288
      %v4503 = vpop.f32.mrf.mxu0
      %v4504 = vadd.f32 %v4391, %v4503
      %4505 = vmatmul.f32.gmra.mxu0 %v4290
      %v4506 = vpop.f32.mrf.mxu0
      %v4507 = vadd.f32 %v4394, %v4506
      %4508 = vmatmul.f32.gmra.mxu0 %v4292
      %v4509 = vpop.f32.mrf.mxu0
      %v4510 = vadd.f32 %v4397, %v4509
      %4511 = vmatmul.f32.gmra.mxu0 %v4294
      %v4512 = vpop.f32.mrf.mxu0
      %v4513 = vadd.f32 %v4400, %v4512
      %4514 = vmatmul.f32.gmra.mxu0 %v4296
      %v4515 = vpop.f32.mrf.mxu0
      %v4516 = vadd.f32 %v4403, %v4515
      %4517 = vmatmul.f32.gmra.mxu0 %v4298
      %v4518 = vpop.f32.mrf.mxu0
      %v4519 = vadd.f32 %v4406, %v4518
      %4520 = vmatmul.f32.gmra.mxu0 %v4300
      %v4521 = vpop.f32.mrf.mxu0
      %v4522 = vadd.f32 %v4409, %v4521
      %4523 = vmatmul.f32.gmra.mxu0 %v4302
      %v4524 = vpop.f32.mrf.mxu0
      %v4525 = vadd.f32 %v4412, %v4524
      %4526 = vmatmul.f32.gmra.mxu0 %v4304
      %v4527 = vpop.f32.mrf.mxu0
      %v4528 = vadd.f32 %v4415, %v4527
      %4529 = vmatmul.f32.gmra.mxu0 %v4306
      %v4530 = vpop.f32.mrf.mxu0
      %v4531 = vadd.f32 %v4418, %v4530
      %4532 = vdwg.mxu0
      %v4533 = vmul.f32 %v2525, %v4438
      %v4534 = vmul.f32 %v2525, %v4441
      %v4535 = vmul.f32 %v2525, %v4444
      %v4536 = vmul.f32 %v2525, %v4447
      %v4537 = vmul.f32 %v2525, %v4450
      %v4538 = vmul.f32 %v2525, %v4453
      %v4539 = vmul.f32 %v2525, %v4456
      %v4540 = vmul.f32 %v2525, %v4459
      %v4541 = vmul.f32 %v2525, %v4462
      %v4542 = vmul.f32 %v2525, %v4465
      %v4543 = vmul.f32 %v2525, %v4468
      %v4544 = vmul.f32 %v2525, %v4471
      %v4545 = vmul.f32 %v2525, %v4474
      %v4546 = vmul.f32 %v2525, %v4477
      %v4547 = vmul.f32 %v2525, %v4480
      %v4548 = vmul.f32 %v2525, %v4483
      %v4549 = vmul.f32 %v2525, %v4486
      %v4550 = vmul.f32 %v2525, %v4489
      %v4551 = vmul.f32 %v2525, %v4492
      %v4552 = vmul.f32 %v2525, %v4495
      %v4553 = vmul.f32 %v2525, %v4498
      %v4554 = vmul.f32 %v2525, %v4501
      %v4555 = vmul.f32 %v2525, %v4504
      %v4556 = vmul.f32 %v2525, %v4507
      %v4557 = vmul.f32 %v2525, %v4510
      %v4558 = vmul.f32 %v2525, %v4513
      %v4559 = vmul.f32 %v2525, %v4516
      %v4560 = vmul.f32 %v2525, %v4519
      %v4561 = vmul.f32 %v2525, %v4522
      %v4562 = vmul.f32 %v2525, %v4525
      %v4563 = vmul.f32 %v2525, %v4528
      %v4564 = vmul.f32 %v2525, %v4531
      %v4565 = vadd.f32 %v4533, %v2558
      %v4566 = vadd.f32 %v4534, %v2559
      %v4567 = vadd.f32 %v4535, %v2560
      %v4568 = vadd.f32 %v4536, %v2561
      %v4569 = vadd.f32 %v4537, %v2562
      %v4570 = vadd.f32 %v4538, %v2563
      %v4571 = vadd.f32 %v4539, %v2564
      %v4572 = vadd.f32 %v4540, %v2565
      %v4573 = vadd.f32 %v4541, %v2566
      %v4574 = vadd.f32 %v4542, %v2567
      %v4575 = vadd.f32 %v4543, %v2568
      %v4576 = vadd.f32 %v4544, %v2569
      %v4577 = vadd.f32 %v4545, %v2570
      %v4578 = vadd.f32 %v4546, %v2571
      %v4579 = vadd.f32 %v4547, %v2572
      %v4580 = vadd.f32 %v4548, %v2573
      %v4581 = vadd.f32 %v4549, %v2574
      %v4582 = vadd.f32 %v4550, %v2575
      %v4583 = vadd.f32 %v4551, %v2576
      %v4584 = vadd.f32 %v4552, %v2577
      %v4585 = vadd.f32 %v4553, %v2578
      %v4586 = vadd.f32 %v4554, %v2579
      %v4587 = vadd.f32 %v4555, %v2580
      %v4588 = vadd.f32 %v4556, %v2581
      %v4589 = vadd.f32 %v4557, %v2582
      %v4590 = vadd.f32 %v4558, %v2583
      %v4591 = vadd.f32 %v4559, %v2584
      %v4592 = vadd.f32 %v4560, %v2585
      %v4593 = vadd.f32 %v4561, %v2586
      %v4594 = vadd.f32 %v4562, %v2587
      %v4595 = vadd.f32 %v4563, %v2588
      %v4596 = vadd.f32 %v4564, %v2589
      %4597 = vst [vmem:[%s360] sm:$0xff] %v4565
      %4598 = vst [vmem:[%s360 + $0x8] sm:$0xff] %v4566
      %4599 = vst [vmem:[%s360 + $0x10] sm:$0xff] %v4567
      %4600 = vst [vmem:[%s360 + $0x18] sm:$0xff] %v4568
      %4601 = vst [vmem:[%s360 + $0x20] sm:$0xff] %v4569
      %4602 = vst [vmem:[%s360 + $0x28] sm:$0xff] %v4570
      %4603 = vst [vmem:[%s360 + $0x30] sm:$0xff] %v4571
      %4604 = vst [vmem:[%s360 + $0x38] sm:$0xff] %v4572
      %4605 = vst [vmem:[%s360 + $0x40] sm:$0xff] %v4573
      %4606 = vst [vmem:[%s360 + $0x48] sm:$0xff] %v4574
      %4607 = vst [vmem:[%s360 + $0x50] sm:$0xff] %v4575
      %4608 = vst [vmem:[%s360 + $0x58] sm:$0xff] %v4576
      %4609 = vst [vmem:[%s360 + $0x60] sm:$0xff] %v4577
      %4610 = vst [vmem:[%s360 + $0x68] sm:$0xff] %v4578
      %4611 = vst [vmem:[%s360 + $0x70] sm:$0xff] %v4579
      %4612 = vst [vmem:[%s360 + $0x78] sm:$0xff] %v4580
      %4613 = vst [vmem:[%s360 + $0x80] sm:$0xff] %v4581
      %4614 = vst [vmem:[%s360 + $0x88] sm:$0xff] %v4582
      %4615 = vst [vmem:[%s360 + $0x90] sm:$0xff] %v4583
      %4616 = vst [vmem:[%s360 + $0x98] sm:$0xff] %v4584
      %4617 = vst [vmem:[%s360 + $0xa0] sm:$0xff] %v4585
      %4618 = vst [vmem:[%s360 + $0xa8] sm:$0xff] %v4586
      %4619 = vst [vmem:[%s360 + $0xb0] sm:$0xff] %v4587
      %4620 = vst [vmem:[%s360 + $0xb8] sm:$0xff] %v4588
      %4621 = vst [vmem:[%s360 + $0xc0] sm:$0xff] %v4589
      %4622 = vst [vmem:[%s360 + $0xc8] sm:$0xff] %v4590
      %4623 = vst [vmem:[%s360 + $0xd0] sm:$0xff] %v4591
      %4624 = vst [vmem:[%s360 + $0xd8] sm:$0xff] %v4592
      %4625 = vst [vmem:[%s360 + $0xe0] sm:$0xff] %v4593
      %4626 = vst [vmem:[%s360 + $0xe8] sm:$0xff] %v4594
      %4627 = vst [vmem:[%s360 + $0xf0] sm:$0xff] %v4595
      %4628 = vst [vmem:[%s360 + $0xf8] sm:$0xff] %v4596
      %p4629 = scmp.lt.s32.totalorder %s22, 1
      %s4630 = scalar_select %p4629, %s22, 1
      %s4631 = smul.addr %s4630, 32
      %s4632 = smul.addr %s4631, 8
      %s4633 = scalar_lea.vmem %s10, %s4632
      // Predicated region
      $region61: #{recurrent_criss_cross_attention.4} parent=59 // pred_check
        %p4634 = pneg %p255
      $region62: #{recurrent_criss_cross_attention.4} parent=59 // pred_check_branch
        %4636 = sbr.rel (%p4634) target = $region64
      $region63: #{recurrent_criss_cross_attention.4} parent=59 // pred_region
        _
      $region64: #{recurrent_criss_cross_attention.4} parent=59 // pred_fallthru
        _
    $region60: #{recurrent_criss_cross_attention.4} parent=5 // pred_fallthru
      _
    %p4637 = scmp.le.s32.totalorder 2, %s17
    // Predicated region
    $region65: #{recurrent_criss_cross_attention.4} parent=5 // pred_check
      %p4638 = pneg %p4637
    $region66: #{recurrent_criss_cross_attention.4} parent=5 // pred_check_branch
      %4640 = sbr.rel (%p4638) target = $region68
    $region67: #{recurrent_criss_cross_attention.4} parent=5 // pred_region
      %s4641 = ssub.s32 %s17, 2
      // Predicated region
      $region69: #{recurrent_criss_cross_attention.4} parent=67 // pred_check
        %p4642 = pneg %p261
      $region70: #{recurrent_criss_cross_attention.4} parent=67 // pred_check_branch
        %4644 = sbr.rel (%p4642) target = $region72
      $region71: #{recurrent_criss_cross_attention.4} parent=67 // pred_region
        %p4645 = scmp.lt.s32.totalorder %s23, 1
        %s4646 = scalar_select %p4645, %s23, 1
        %s4647 = smul.addr %s4646, 32
        %s4648 = smul.addr %s4647, 8
        %s4649 = scalar_lea.vmem %s10, %s4648
      $region72: #{recurrent_criss_cross_attention.4} parent=67 // pred_fallthru
        _
    $region68: #{recurrent_criss_cross_attention.4} parent=5 // pred_fallthru
      _
  $region6: #{recurrent_criss_cross_attention.4} parent=0 // loop_footer
    %s21 = sadd.s32 1, %s17
  $region7: #{recurrent_criss_cross_attention.4} parent=0 // loop_footer_branch
    %16 = sbr.rel target = $region3
  $region8: #{recurrent_criss_cross_attention.4} parent=0 // loop_exit
    _

</llo_original>
